<compile_context>
chip_gen: v5e
topology: v5e:2x2
jax: 0.10.0
libtpu: 0.0.40
codegen_flags: <defaults>
</compile_context>

<pallas_src>
import math
import functools

import jax
import jax.numpy as jnp
import numpy as np
from jax import lax
from jax.experimental import pallas as pl
from jax.experimental.pallas import tpu as pltpu

NEG_SLOPE = 0.01   # PyTorch LeakyReLU default
BN_EPS = 1e-5
LN_EPS = 1e-5


# ----------------------------------------------------------------------------
# 2D positional encoding (precomputed buffer, exactly as in PositionalEncoding2D)
# ----------------------------------------------------------------------------
def make_pe(d_model, height, width):
    assert d_model % 4 == 0
    y_pos = jnp.tile(jnp.arange(height, dtype=jnp.float32)[:, None], (1, width))
    x_pos = jnp.tile(jnp.arange(width, dtype=jnp.float32)[None, :], (height, 1))
    div_term = jnp.exp(
        jnp.arange(0, d_model // 2, 2, dtype=jnp.float32)
        * -(math.log(10000.0) / (d_model // 2))
    )
    pe = jnp.zeros((d_model, height, width), jnp.float32)
    pe = pe.at[0::4].set(jnp.sin(y_pos[None] * div_term[:, None, None]))
    pe = pe.at[1::4].set(jnp.cos(y_pos[None] * div_term[:, None, None]))
    pe = pe.at[2::4].set(jnp.sin(x_pos[None] * div_term[:, None, None]))
    pe = pe.at[3::4].set(jnp.cos(x_pos[None] * div_term[:, None, None]))
    return pe  # (C, H, W)


def leaky_relu(x):
    return jnp.where(x >= 0, x, NEG_SLOPE * x)


# ----------------------------------------------------------------------------
# Fused per-batch-chunk encoder kernel
#   pos-enc add -> conv1(1x1)+BN+LeakyReLU -> MHA -> conv2(1x1)+BN+LeakyReLU
#   -> residual -> LayerNorm
# ----------------------------------------------------------------------------
def encoder_kernel(x_ref, pe_ref, w1_ref, b1_ref, wqkv_ref, bqkv_ref,
                   wo_ref, bo_ref, w2_ref, b2_ref, g_ref, be_ref,
                   o_ref, qkv_sc, attn_sc, *, nhead, mm_dtype):
    Bt, L, C = x_ref.shape
    dh = C // nhead
    M = Bt * L

    def mm(a, w_ref):
        # (M, K) x (K, N) on the MXU, f32 accumulation; weights already mm_dtype.
        return lax.dot_general(
            a.astype(mm_dtype), w_ref[...],
            dimension_numbers=(((1,), (0,)), ((), ())),
            preferred_element_type=jnp.float32)

    x = x_ref[...]                                    # (Bt, L, C) f32 residual
    h = (x + pe_ref[...][None]).reshape(M, C)         # pos-enc add; batch folded into M
    h = leaky_relu(mm(h, w1_ref) + b1_ref[...])       # conv1(1x1)+BN(eval)+LeakyReLU

    # Fused QKV projection (1/sqrt(dh) folded into Q columns).  Cast the whole
    # (M, 3C) tensor to the matmul dtype ONCE and stage it in VMEM scratch so
    # the per-batch attention loop slices it with no further casts.
    qkv = mm(h, wqkv_ref) + bqkv_ref[...]             # (M, 3C) f32
    qkv_sc[...] = qkv.reshape(Bt, L, 3 * C).astype(qkv_sc.dtype)

    def per_batch(b, carry):
        qkv_b = qkv_sc[b]                             # (L, 3C) mm_dtype
        for hi in range(nhead):                       # static head loop
            q = qkv_b[:, hi * dh:(hi + 1) * dh]              # already scaled
            k = qkv_b[:, C + hi * dh:C + (hi + 1) * dh]
            v = qkv_b[:, 2 * C + hi * dh:2 * C + (hi + 1) * dh]
            # scores: contract last dims of q and k (no explicit k.T copy).
            # TODO(synk): verify with pl.lower_as_mlir that no vxpose of k is
            # inserted here on the production shapes.
            s = lax.dot_general(q, k,
                                dimension_numbers=(((1,), (1,)), ((), ())),
                                preferred_element_type=jnp.float32)   # (L, L)
            s = s - jnp.max(s, axis=-1, keepdims=True)
            p = jnp.exp(s)
            p = p * pl.reciprocal(jnp.sum(p, axis=-1, keepdims=True), approx=True)
            # Write this head's output straight into the scratch accumulator:
            # no concatenate, bounded live ranges.
            attn_sc[b, :, pl.ds(hi * dh, dh)] = jnp.dot(
                p.astype(qkv_b.dtype), v, preferred_element_type=jnp.float32)
        return carry

    lax.fori_loop(0, Bt, per_batch, 0, unroll=True)

    a = attn_sc[...].reshape(M, C)                    # (M, C) lane-dense heads
    y = mm(a, wo_ref) + bo_ref[...]                   # attention out-projection
    z = leaky_relu(mm(y, w2_ref) + b2_ref[...])       # conv2(1x1)+BN(eval)+LeakyReLU

    o = x.reshape(M, C) + z                           # residual (pre pos-enc x)
    mu = jnp.mean(o, axis=-1, keepdims=True)
    var = jnp.mean((o - mu) ** 2, axis=-1, keepdims=True)
    on = (o - mu) * lax.rsqrt(var + LN_EPS)
    o_ref[...] = (on * g_ref[...] + be_ref[...]).reshape(Bt, L, C)


# ----------------------------------------------------------------------------
# Wrappers
# ----------------------------------------------------------------------------
def _pick_block_b(B, L, target_m=256):
    """Batches per grid step: aim for MXU-sized M = Bt*L (256 for v6e/v7x,
    128 for v5e), Bt a divisor of B, and >=2 grid steps when B allows so both
    v7x TensorCores get work."""
    bt = min(B, max(1, -(-target_m // L)))      # ceil(target_m / L), capped at B
    while B % bt:
        bt -= 1
    if B // bt < 2:
        for cand in range(bt - 1, 0, -1):
            if B % cand == 0 and B // cand >= 2 and cand * L >= min(128, target_m):
                bt = cand
                break
    return bt


def encoder_forward_tokens(x_tok, pe_tok, p, nhead, *, mm_dtype=jnp.bfloat16,
                           block_b=None, target_m=256):
    """Fused encoder on token layout: x_tok (B, L, C), pe_tok (L, C) -> (B, L, C)."""
    B, L, C = x_tok.shape
    assert C % 4 == 0 and C % nhead == 0
    dh = C // nhead
    scale = 1.0 / math.sqrt(dh)
    if block_b is None:
        block_b = _pick_block_b(B, L, target_m)
    assert B % block_b == 0

    def bn_affine(g, beta, m, v):
        s = g / jnp.sqrt(v + BN_EPS)
        return s, beta - m * s

    s1, t1 = bn_affine(p["bn1_g"], p["bn1_b"], p["bn1_m"], p["bn1_v"])
    s2, t2 = bn_affine(p["bn2_g"], p["bn2_b"], p["bn2_m"], p["bn2_v"])

    # Fold BN(eval) into the 1x1-conv weights/biases host-side; fold the
    # attention scale into the Q weight/bias; cast weights once to mm_dtype.
    w1f = (p["w1"] * s1[None, :]).astype(mm_dtype)
    b1f = (p["b1"] * s1 + t1).reshape(1, C).astype(jnp.float32)
    w2f = (p["w2"] * s2[None, :]).astype(mm_dtype)
    b2f = (p["b2"] * s2 + t2).reshape(1, C).astype(jnp.float32)
    wqkv = jnp.concatenate([p["wq"] * scale, p["wk"], p["wv"]],
                           axis=1).astype(mm_dtype)                   # (C, 3C)
    bqkv = jnp.concatenate([p["bq"] * scale, p["bk"], p["bv"]]
                           ).reshape(1, 3 * C).astype(jnp.float32)
    wo = p["wo"].astype(mm_dtype)
    bo = p["bo"].reshape(1, C).astype(jnp.float32)
    ln_g = p["ln_g"].reshape(1, C).astype(jnp.float32)
    ln_b = p["ln_b"].reshape(1, C).astype(jnp.float32)

    operands = (x_tok, pe_tok, w1f, b1f, wqkv, bqkv, wo, bo, w2f, b2f, ln_g, ln_b)

    # Advisory cost estimate (projections dominate: 12*C^2 FLOPs/token).
    flops = 2 * B * L * (6 * C * C + 2 * L * C)
    transcendentals = B * nhead * L * L + 2 * B * L
    w_bytes = int(jnp.dtype(mm_dtype).itemsize) * 6 * C * C
    bytes_accessed = 4 * (2 * B * L * C + L * C + 10 * C) + w_bytes

    tok_spec = pl.BlockSpec((block_b, L, C), lambda b: (b, 0, 0))

    def build(weight_buffers):
        def cst(shape):      # grid-invariant blocks (weights, biases, pos-enc)
            if weight_buffers is None:
                return pl.BlockSpec(shape, lambda b: (0, 0))
            return pl.BlockSpec(shape, lambda b: (0, 0),
                                pipeline_mode=pl.Buffered(weight_buffers))
        return pl.pallas_call(
            functools.partial(encoder_kernel, nhead=nhead, mm_dtype=mm_dtype),
            out_shape=jax.ShapeDtypeStruct((B, L, C), jnp.float32),
            grid=(B // block_b,),
            in_specs=[
                tok_spec,                           # tokens (residual source)
                cst((L, C)),                        # positional encoding
                cst((C, C)), cst((1, C)),           # conv1 weight/bias (BN folded)
                cst((C, 3 * C)), cst((1, 3 * C)),   # fused QKV (scale folded)
                cst((C, C)), cst((1, C)),           # attention out-proj
                cst((C, C)), cst((1, C)),           # conv2 weight/bias (BN folded)
                cst((1, C)), cst((1, C)),           # LayerNorm gamma/beta
            ],
            out_specs=tok_spec,
            scratch_shapes=[
                pltpu.VMEM((block_b, L, 3 * C), mm_dtype),   # staged QKV (one cast)
                pltpu.VMEM((block_b, L, C), jnp.float32),    # per-head attn output
            ],
            compiler_params=pltpu.CompilerParams(
                dimension_semantics=("parallel",),
                vmem_limit_bytes=64 * 1024 * 1024),
            cost_estimate=pl.CostEstimate(
                flops=int(flops), transcendentals=int(transcendentals),
                bytes_accessed=int(bytes_accessed)),
        )

    try:
        # Single-buffer the grid-invariant weights (saves ~half the weight VMEM;
        # matters most on v7x's 64 MiB VMEM).
        return build(1)(*operands)
    except Exception:
        # Fallback: default double-buffered weights (functionally identical).
        return build(None)(*operands)


def encoder_forward(x, p, nhead, *, mm_dtype=jnp.bfloat16, block_b=None):
    """PyTorch-compatible NCHW entry point.  NOTE: a fused multi-layer model
    should stay in (B, L, C) token layout (encoder_forward_tokens) and skip
    these two full-tensor HBM transposes."""
    B, C, H, W = x.shape
    L = H * W
    x_tok = jnp.transpose(x, (0, 2, 3, 1)).reshape(B, L, C)
    pe_tok = make_pe(C, H, W).reshape(C, L).T
    out_tok = encoder_forward_tokens(x_tok, pe_tok, p, nhead,
                                     mm_dtype=mm_dtype, block_b=block_b)
    return out_tok.reshape(B, H, W, C).transpose(0, 3, 1, 2)


# ----------------------------------------------------------------------------
# Pure-JAX reference (same math, no Pallas) for a sanity check
# ----------------------------------------------------------------------------
def encoder_reference(x, p, nhead):
    B, C, H, W = x.shape
    L = H * W
    dh = C // nhead
    x_tok = jnp.transpose(x, (0, 2, 3, 1)).reshape(B, L, C)
    pe_tok = make_pe(C, H, W).reshape(C, L).T

    def bn(v, g, b, m, var):
        return (v - m) / jnp.sqrt(var + BN_EPS) * g + b

    h = x_tok + pe_tok[None]
    h = leaky_relu(bn(h @ p["w1"] + p["b1"], p["bn1_g"], p["bn1_b"],
                      p["bn1_m"], p["bn1_v"]))
    q = (h @ p["wq"] + p["bq"]).reshape(B, L, nhead, dh).transpose(0, 2, 1, 3)
    k = (h @ p["wk"] + p["bk"]).reshape(B, L, nhead, dh).transpose(0, 2, 1, 3)
    v = (h @ p["wv"] + p["bv"]).reshape(B, L, nhead, dh).transpose(0, 2, 1, 3)
    s = jnp.einsum("bhqd,bhkd->bhqk", q / math.sqrt(dh), k)
    pw = jax.nn.softmax(s, axis=-1)
    a = jnp.einsum("bhqk,bhkd->bhqd", pw, v).transpose(0, 2, 1, 3).reshape(B, L, C)
    y = a @ p["wo"] + p["bo"]
    z = leaky_relu(bn(y @ p["w2"] + p["b2"], p["bn2_g"], p["bn2_b"],
                      p["bn2_m"], p["bn2_v"]))
    o = x_tok + z
    mu = o.mean(-1, keepdims=True)
    var = ((o - mu) ** 2).mean(-1, keepdims=True)
    o = (o - mu) / jnp.sqrt(var + LN_EPS) * p["ln_g"] + p["ln_b"]
    return o.reshape(B, H, W, C).transpose(0, 3, 1, 2)


# ----------------------------------------------------------------------------
def init_params(key, d_model):
    C = d_model
    ks = jax.random.split(key, 22)
    n = lambda k, shp, s=0.05: (s * jax.random.normal(k, shp)).astype(jnp.float32)
    return dict(
        w1=n(ks[0], (C, C)), b1=n(ks[1], (C,)),
        bn1_g=1.0 + n(ks[2], (C,)), bn1_b=n(ks[3], (C,)),
        bn1_m=n(ks[4], (C,)), bn1_v=1.0 + 0.1 * jnp.abs(n(ks[5], (C,))),
        wq=n(ks[6], (C, C)), bq=n(ks[7], (C,)),
        wk=n(ks[8], (C, C)), bk=n(ks[9], (C,)),
        wv=n(ks[10], (C, C)), bv=n(ks[11], (C,)),
        wo=n(ks[12], (C, C)), bo=n(ks[13], (C,)),
        w2=n(ks[14], (C, C)), b2=n(ks[15], (C,)),
        bn2_g=1.0 + n(ks[16], (C,)), bn2_b=n(ks[17], (C,)),
        bn2_m=n(ks[18], (C,)), bn2_v=1.0 + 0.1 * jnp.abs(n(ks[19], (C,))),
        ln_g=1.0 + n(ks[20], (C,)), ln_b=n(ks[21], (C,)),
    )


if __name__ == "__main__":
    # Small shapes consistent with the module (d_model % 4 == 0, % nhead == 0).
    # C = 128 keeps every minor dim lane-dense; L = H*W = 64 and Bt = 2 batches
    # per grid step give a (128, 128) projection tile with a 2-step parallel grid.
    B, C, H, W = 4, 128, 8, 8
    nhead = 4

    key = jax.random.PRNGKey(0)
    kx, kp = jax.random.split(key)
    x = jax.random.normal(kx, (B, C, H, W), dtype=jnp.float32)
    params = init_params(kp, C)

    ref = jax.block_until_ready(encoder_reference(x, params, nhead))

    # Strict numerics check: f32 MXU inputs.
    out_f32 = jax.block_until_ready(
        encoder_forward(x, params, nhead, mm_dtype=jnp.float32))
    assert out_f32.shape == (B, C, H, W), out_f32.shape
    np.testing.assert_allclose(np.asarray(out_f32), np.asarray(ref),
                               rtol=3e-3, atol=3e-3)

    # Production path (default): bf16 MXU inputs, f32 accumulation + f32
    # softmax / LeakyReLU / LayerNorm math.
    out_bf16 = jax.block_until_ready(encoder_forward(x, params, nhead))
    assert out_bf16.shape == (B, C, H, W), out_bf16.shape
    np.testing.assert_allclose(np.asarray(out_bf16), np.asarray(ref),
                               rtol=5e-2, atol=5e-2)

    print("KERNEL_OK")
</pallas_src>

<mosaic_0001>
module attributes {stable_mosaic.version = 11 : i64} {
  func.func @encoder_kernel(%arg0: i32, %arg1: memref<2x64x128xf32, #tpu.memory_space<vmem>>, %arg2: memref<64x128xf32, #tpu.memory_space<vmem>>, %arg3: memref<128x128xf32, #tpu.memory_space<vmem>>, %arg4: memref<1x128xf32, #tpu.memory_space<vmem>>, %arg5: memref<128x384xf32, #tpu.memory_space<vmem>>, %arg6: memref<1x384xf32, #tpu.memory_space<vmem>>, %arg7: memref<128x128xf32, #tpu.memory_space<vmem>>, %arg8: memref<1x128xf32, #tpu.memory_space<vmem>>, %arg9: memref<128x128xf32, #tpu.memory_space<vmem>>, %arg10: memref<1x128xf32, #tpu.memory_space<vmem>>, %arg11: memref<1x128xf32, #tpu.memory_space<vmem>>, %arg12: memref<1x128xf32, #tpu.memory_space<vmem>>, %arg13: memref<2x64x128xf32, #tpu.memory_space<vmem>>, %arg14: memref<2x64x384xf32, #tpu.memory_space<vmem>>, %arg15: memref<2x64x128xf32, #tpu.memory_space<vmem>>) attributes {dimension_semantics = [#tpu.dimension_semantics<parallel>], iteration_bounds = array<i64: 2>, scalar_prefetch = 0 : i64, scratch_operands = 2 : i64, tpu.core_type = #tpu.core_type<tc>, window_params = [{transform_indices = @transform_0, window_bounds = array<i64: 2, 64, 128>}, {pipeline_mode = #tpu.pipeline_mode<synchronous>, transform_indices = @transform_1, window_bounds = array<i64: 64, 128>}, {pipeline_mode = #tpu.pipeline_mode<synchronous>, transform_indices = @transform_2, window_bounds = array<i64: 128, 128>}, {pipeline_mode = #tpu.pipeline_mode<synchronous>, transform_indices = @transform_3, window_bounds = array<i64: 1, 128>}, {pipeline_mode = #tpu.pipeline_mode<synchronous>, transform_indices = @transform_4, window_bounds = array<i64: 128, 384>}, {pipeline_mode = #tpu.pipeline_mode<synchronous>, transform_indices = @transform_5, window_bounds = array<i64: 1, 384>}, {pipeline_mode = #tpu.pipeline_mode<synchronous>, transform_indices = @transform_6, window_bounds = array<i64: 128, 128>}, {pipeline_mode = #tpu.pipeline_mode<synchronous>, transform_indices = @transform_7, window_bounds = array<i64: 1, 128>}, {pipeline_mode = #tpu.pipeline_mode<synchronous>, transform_indices = @transform_8, window_bounds = array<i64: 128, 128>}, {pipeline_mode = #tpu.pipeline_mode<synchronous>, transform_indices = @transform_9, window_bounds = array<i64: 1, 128>}, {pipeline_mode = #tpu.pipeline_mode<synchronous>, transform_indices = @transform_10, window_bounds = array<i64: 1, 128>}, {pipeline_mode = #tpu.pipeline_mode<synchronous>, transform_indices = @transform_11, window_bounds = array<i64: 1, 128>}, {transform_indices = @transform_12, window_bounds = array<i64: 2, 64, 128>}]} {
    %c0 = arith.constant 0 : index
    %c0_0 = arith.constant 0 : index
    %c0_1 = arith.constant 0 : index
    %0 = vector.load %arg1[%c0, %c0_0, %c0_1] : memref<2x64x128xf32, #tpu.memory_space<vmem>>, vector<2x64x128xf32>
    %c0_2 = arith.constant 0 : index
    %c0_3 = arith.constant 0 : index
    %1 = vector.load %arg2[%c0_2, %c0_3] : memref<64x128xf32, #tpu.memory_space<vmem>>, vector<64x128xf32>
    %2 = vector.shape_cast %1 : vector<64x128xf32> to vector<1x64x128xf32>
    %3 = vector.broadcast %2 : vector<1x64x128xf32> to vector<2x64x128xf32>
    %4 = arith.addf %0, %3 : vector<2x64x128xf32>
    %5 = vector.shape_cast %4 : vector<2x64x128xf32> to vector<128x128xf32>
    %c0_4 = arith.constant 0 : index
    %c0_5 = arith.constant 0 : index
    %6 = vector.load %arg3[%c0_4, %c0_5] : memref<128x128xf32, #tpu.memory_space<vmem>>, vector<128x128xf32>
    %cst = arith.constant dense<0.000000e+00> : vector<128x128xf32>
    %7 = tpu.matmul %5, %6, %cst {dimension_numbers = #tpu.dot_dimension_numbers<[1], [0], [0], [1], [0, 0, 1, 1], [], []>} : vector<128x128xf32>, vector<128x128xf32>, vector<128x128xf32> -> vector<128x128xf32>
    %c0_6 = arith.constant 0 : index
    %c0_7 = arith.constant 0 : index
    %8 = vector.load %arg4[%c0_6, %c0_7] : memref<1x128xf32, #tpu.memory_space<vmem>>, vector<1x128xf32>
    %9 = vector.broadcast %8 : vector<1x128xf32> to vector<128x128xf32>
    %10 = arith.addf %7, %9 : vector<128x128xf32>
    %cst_8 = arith.constant 0.000000e+00 : f32
    %11 = vector.broadcast %cst_8 : f32 to vector<128x128xf32>
    %12 = arith.cmpf oge, %10, %11 : vector<128x128xf32>
    %cst_9 = arith.constant 0.00999999977 : f32
    %13 = vector.broadcast %cst_9 : f32 to vector<128x128xf32>
    %14 = arith.mulf %13, %10 : vector<128x128xf32>
    %15 = arith.select %12, %10, %14 : vector<128x128xi1>, vector<128x128xf32>
    %c0_10 = arith.constant 0 : index
    %c0_11 = arith.constant 0 : index
    %16 = vector.load %arg5[%c0_10, %c0_11] : memref<128x384xf32, #tpu.memory_space<vmem>>, vector<128x384xf32>
    %cst_12 = arith.constant dense<0.000000e+00> : vector<128x384xf32>
    %17 = tpu.matmul %15, %16, %cst_12 {dimension_numbers = #tpu.dot_dimension_numbers<[1], [0], [0], [1], [0, 0, 1, 1], [], []>} : vector<128x128xf32>, vector<128x384xf32>, vector<128x384xf32> -> vector<128x384xf32>
    %c0_13 = arith.constant 0 : index
    %c0_14 = arith.constant 0 : index
    %18 = vector.load %arg6[%c0_13, %c0_14] : memref<1x384xf32, #tpu.memory_space<vmem>>, vector<1x384xf32>
    %19 = vector.broadcast %18 : vector<1x384xf32> to vector<128x384xf32>
    %20 = arith.addf %17, %19 : vector<128x384xf32>
    %21 = vector.shape_cast %20 : vector<128x384xf32> to vector<2x64x384xf32>
    %c0_15 = arith.constant 0 : index
    %c0_16 = arith.constant 0 : index
    %c0_17 = arith.constant 0 : index
    %22 = vector.load %arg14[%c0_15, %c0_16, %c0_17] : memref<2x64x384xf32, #tpu.memory_space<vmem>>, vector<2x64x384xf32>
    tpu.vector_store %arg14[%c0_15, %c0_16, %c0_17], %21 {strides = array<i32>} : memref<2x64x384xf32, #tpu.memory_space<vmem>>, vector<2x64x384xf32>,
    %c0_i32 = arith.constant 0 : i32
    %23 = arith.index_cast %c0_i32 : i32 to index
    %c0_18 = arith.constant 0 : index
    %c0_19 = arith.constant 0 : index
    %24 = vector.load %arg14[%23, %c0_18, %c0_19] : memref<2x64x384xf32, #tpu.memory_space<vmem>>, vector<1x64x384xf32>
    %25 = vector.shape_cast %24 : vector<1x64x384xf32> to vector<64x384xf32>
    %26 = vector.extract_strided_slice %25 {offsets = [0, 0], sizes = [64, 32], strides = [1, 1]} : vector<64x384xf32> to vector<64x32xf32>
    %27 = vector.extract_strided_slice %25 {offsets = [0, 128], sizes = [64, 32], strides = [1, 1]} : vector<64x384xf32> to vector<64x32xf32>
    %28 = vector.extract_strided_slice %25 {offsets = [0, 256], sizes = [64, 32], strides = [1, 1]} : vector<64x384xf32> to vector<64x32xf32>
    %cst_20 = arith.constant dense<0.000000e+00> : vector<64x64xf32>
    %29 = tpu.matmul %26, %27, %cst_20 {dimension_numbers = #tpu.dot_dimension_numbers<[1], [1], [0], [0], [0, 0, 1, 0], [], []>} : vector<64x32xf32>, vector<64x32xf32>, vector<64x64xf32> -> vector<64x64xf32>
    %cst_21 = arith.constant dense<0xFF800000> : vector<64xf32>
    %30 = vector.multi_reduction <maximumf>, %29, %cst_21 [1] : vector<64x64xf32> to vector<64xf32>
    %31 = vector.shape_cast %30 : vector<64xf32> to vector<64x1xf32>
    %32 = vector.broadcast %31 : vector<64x1xf32> to vector<64x64xf32>
    %33 = arith.subf %29, %32 : vector<64x64xf32>
    %34 = math.exp %33 : vector<64x64xf32>
    %cst_22 = arith.constant dense<0.000000e+00> : vector<64xf32>
    %35 = vector.multi_reduction <add>, %34, %cst_22 [1] : vector<64x64xf32> to vector<64xf32>
    %36 = vector.shape_cast %35 : vector<64xf32> to vector<64x1xf32>
    %37 = tpu.reciprocal %36 {approx = true} : vector<64x1xf32> -> vector<64x1xf32>
    %38 = vector.broadcast %37 : vector<64x1xf32> to vector<64x64xf32>
    %39 = arith.mulf %34, %38 : vector<64x64xf32>
    %cst_23 = arith.constant dense<0.000000e+00> : vector<64x32xf32>
    %40 = tpu.matmul %39, %28, %cst_23 {dimension_numbers = #tpu.dot_dimension_numbers<[1], [0], [0], [1], [0, 0, 1, 1], [], []>} : vector<64x64xf32>, vector<64x32xf32>, vector<64x32xf32> -> vector<64x32xf32>
    %41 = arith.index_cast %c0_i32 : i32 to index
    %c0_24 = arith.constant 0 : index
    %c0_25 = arith.constant 0 : index
    %42 = vector.load %arg15[%41, %c0_24, %c0_25] : memref<2x64x128xf32, #tpu.memory_space<vmem>>, vector<1x64x32xf32>
    %43 = vector.shape_cast %42 : vector<1x64x32xf32> to vector<64x32xf32>
    %44 = vector.shape_cast %40 : vector<64x32xf32> to vector<1x64x32xf32>
    tpu.vector_store %arg15[%41, %c0_24, %c0_25], %44 {strides = array<i32>} : memref<2x64x128xf32, #tpu.memory_space<vmem>>, vector<1x64x32xf32>,
    %45 = vector.extract_strided_slice %25 {offsets = [0, 32], sizes = [64, 32], strides = [1, 1]} : vector<64x384xf32> to vector<64x32xf32>
    %46 = vector.extract_strided_slice %25 {offsets = [0, 160], sizes = [64, 32], strides = [1, 1]} : vector<64x384xf32> to vector<64x32xf32>
    %47 = vector.extract_strided_slice %25 {offsets = [0, 288], sizes = [64, 32], strides = [1, 1]} : vector<64x384xf32> to vector<64x32xf32>
    %cst_26 = arith.constant dense<0.000000e+00> : vector<64x64xf32>
    %48 = tpu.matmul %45, %46, %cst_26 {dimension_numbers = #tpu.dot_dimension_numbers<[1], [1], [0], [0], [0, 0, 1, 0], [], []>} : vector<64x32xf32>, vector<64x32xf32>, vector<64x64xf32> -> vector<64x64xf32>
    %cst_27 = arith.constant dense<0xFF800000> : vector<64xf32>
    %49 = vector.multi_reduction <maximumf>, %48, %cst_27 [1] : vector<64x64xf32> to vector<64xf32>
    %50 = vector.shape_cast %49 : vector<64xf32> to vector<64x1xf32>
    %51 = vector.broadcast %50 : vector<64x1xf32> to vector<64x64xf32>
    %52 = arith.subf %48, %51 : vector<64x64xf32>
    %53 = math.exp %52 : vector<64x64xf32>
    %cst_28 = arith.constant dense<0.000000e+00> : vector<64xf32>
    %54 = vector.multi_reduction <add>, %53, %cst_28 [1] : vector<64x64xf32> to vector<64xf32>
    %55 = vector.shape_cast %54 : vector<64xf32> to vector<64x1xf32>
    %56 = tpu.reciprocal %55 {approx = true} : vector<64x1xf32> -> vector<64x1xf32>
    %57 = vector.broadcast %56 : vector<64x1xf32> to vector<64x64xf32>
    %58 = arith.mulf %53, %57 : vector<64x64xf32>
    %cst_29 = arith.constant dense<0.000000e+00> : vector<64x32xf32>
    %59 = tpu.matmul %58, %47, %cst_29 {dimension_numbers = #tpu.dot_dimension_numbers<[1], [0], [0], [1], [0, 0, 1, 1], [], []>} : vector<64x64xf32>, vector<64x32xf32>, vector<64x32xf32> -> vector<64x32xf32>
    %60 = arith.index_cast %c0_i32 : i32 to index
    %c0_30 = arith.constant 0 : index
    %c32 = arith.constant 32 : index
    %61 = vector.load %arg15[%60, %c0_30, %c32] : memref<2x64x128xf32, #tpu.memory_space<vmem>>, vector<1x64x32xf32>
    %62 = vector.shape_cast %61 : vector<1x64x32xf32> to vector<64x32xf32>
    %63 = vector.shape_cast %59 : vector<64x32xf32> to vector<1x64x32xf32>
    tpu.vector_store %arg15[%60, %c0_30, %c32], %63 {strides = array<i32>} : memref<2x64x128xf32, #tpu.memory_space<vmem>>, vector<1x64x32xf32>,
    %64 = vector.extract_strided_slice %25 {offsets = [0, 64], sizes = [64, 32], strides = [1, 1]} : vector<64x384xf32> to vector<64x32xf32>
    %65 = vector.extract_strided_slice %25 {offsets = [0, 192], sizes = [64, 32], strides = [1, 1]} : vector<64x384xf32> to vector<64x32xf32>
    %66 = vector.extract_strided_slice %25 {offsets = [0, 320], sizes = [64, 32], strides = [1, 1]} : vector<64x384xf32> to vector<64x32xf32>
    %cst_31 = arith.constant dense<0.000000e+00> : vector<64x64xf32>
    %67 = tpu.matmul %64, %65, %cst_31 {dimension_numbers = #tpu.dot_dimension_numbers<[1], [1], [0], [0], [0, 0, 1, 0], [], []>} : vector<64x32xf32>, vector<64x32xf32>, vector<64x64xf32> -> vector<64x64xf32>
    %cst_32 = arith.constant dense<0xFF800000> : vector<64xf32>
    %68 = vector.multi_reduction <maximumf>, %67, %cst_32 [1] : vector<64x64xf32> to vector<64xf32>
    %69 = vector.shape_cast %68 : vector<64xf32> to vector<64x1xf32>
    %70 = vector.broadcast %69 : vector<64x1xf32> to vector<64x64xf32>
    %71 = arith.subf %67, %70 : vector<64x64xf32>
    %72 = math.exp %71 : vector<64x64xf32>
    %cst_33 = arith.constant dense<0.000000e+00> : vector<64xf32>
    %73 = vector.multi_reduction <add>, %72, %cst_33 [1] : vector<64x64xf32> to vector<64xf32>
    %74 = vector.shape_cast %73 : vector<64xf32> to vector<64x1xf32>
    %75 = tpu.reciprocal %74 {approx = true} : vector<64x1xf32> -> vector<64x1xf32>
    %76 = vector.broadcast %75 : vector<64x1xf32> to vector<64x64xf32>
    %77 = arith.mulf %72, %76 : vector<64x64xf32>
    %cst_34 = arith.constant dense<0.000000e+00> : vector<64x32xf32>
    %78 = tpu.matmul %77, %66, %cst_34 {dimension_numbers = #tpu.dot_dimension_numbers<[1], [0], [0], [1], [0, 0, 1, 1], [], []>} : vector<64x64xf32>, vector<64x32xf32>, vector<64x32xf32> -> vector<64x32xf32>
    %79 = arith.index_cast %c0_i32 : i32 to index
    %c0_35 = arith.constant 0 : index
    %c64 = arith.constant 64 : index
    %80 = vector.load %arg15[%79, %c0_35, %c64] : memref<2x64x128xf32, #tpu.memory_space<vmem>>, vector<1x64x32xf32>
    %81 = vector.shape_cast %80 : vector<1x64x32xf32> to vector<64x32xf32>
    %82 = vector.shape_cast %78 : vector<64x32xf32> to vector<1x64x32xf32>
    tpu.vector_store %arg15[%79, %c0_35, %c64], %82 {strides = array<i32>} : memref<2x64x128xf32, #tpu.memory_space<vmem>>, vector<1x64x32xf32>,
    %83 = vector.extract_strided_slice %25 {offsets = [0, 96], sizes = [64, 32], strides = [1, 1]} : vector<64x384xf32> to vector<64x32xf32>
    %84 = vector.extract_strided_slice %25 {offsets = [0, 224], sizes = [64, 32], strides = [1, 1]} : vector<64x384xf32> to vector<64x32xf32>
    %85 = vector.extract_strided_slice %25 {offsets = [0, 352], sizes = [64, 32], strides = [1, 1]} : vector<64x384xf32> to vector<64x32xf32>
    %cst_36 = arith.constant dense<0.000000e+00> : vector<64x64xf32>
    %86 = tpu.matmul %83, %84, %cst_36 {dimension_numbers = #tpu.dot_dimension_numbers<[1], [1], [0], [0], [0, 0, 1, 0], [], []>} : vector<64x32xf32>, vector<64x32xf32>, vector<64x64xf32> -> vector<64x64xf32>
    %cst_37 = arith.constant dense<0xFF800000> : vector<64xf32>
    %87 = vector.multi_reduction <maximumf>, %86, %cst_37 [1] : vector<64x64xf32> to vector<64xf32>
    %88 = vector.shape_cast %87 : vector<64xf32> to vector<64x1xf32>
    %89 = vector.broadcast %88 : vector<64x1xf32> to vector<64x64xf32>
    %90 = arith.subf %86, %89 : vector<64x64xf32>
    %91 = math.exp %90 : vector<64x64xf32>
    %cst_38 = arith.constant dense<0.000000e+00> : vector<64xf32>
    %92 = vector.multi_reduction <add>, %91, %cst_38 [1] : vector<64x64xf32> to vector<64xf32>
    %93 = vector.shape_cast %92 : vector<64xf32> to vector<64x1xf32>
    %94 = tpu.reciprocal %93 {approx = true} : vector<64x1xf32> -> vector<64x1xf32>
    %95 = vector.broadcast %94 : vector<64x1xf32> to vector<64x64xf32>
    %96 = arith.mulf %91, %95 : vector<64x64xf32>
    %cst_39 = arith.constant dense<0.000000e+00> : vector<64x32xf32>
    %97 = tpu.matmul %96, %85, %cst_39 {dimension_numbers = #tpu.dot_dimension_numbers<[1], [0], [0], [1], [0, 0, 1, 1], [], []>} : vector<64x64xf32>, vector<64x32xf32>, vector<64x32xf32> -> vector<64x32xf32>
    %98 = arith.index_cast %c0_i32 : i32 to index
    %c0_40 = arith.constant 0 : index
    %c96 = arith.constant 96 : index
    %99 = vector.load %arg15[%98, %c0_40, %c96] : memref<2x64x128xf32, #tpu.memory_space<vmem>>, vector<1x64x32xf32>
    %100 = vector.shape_cast %99 : vector<1x64x32xf32> to vector<64x32xf32>
    %101 = vector.shape_cast %97 : vector<64x32xf32> to vector<1x64x32xf32>
    tpu.vector_store %arg15[%98, %c0_40, %c96], %101 {strides = array<i32>} : memref<2x64x128xf32, #tpu.memory_space<vmem>>, vector<1x64x32xf32>,
    %c1_i32 = arith.constant 1 : i32
    %102 = arith.index_cast %c1_i32 : i32 to index
    %c0_41 = arith.constant 0 : index
    %c0_42 = arith.constant 0 : index
    %103 = vector.load %arg14[%102, %c0_41, %c0_42] : memref<2x64x384xf32, #tpu.memory_space<vmem>>, vector<1x64x384xf32>
    %104 = vector.shape_cast %103 : vector<1x64x384xf32> to vector<64x384xf32>
    %105 = vector.extract_strided_slice %104 {offsets = [0, 0], sizes = [64, 32], strides = [1, 1]} : vector<64x384xf32> to vector<64x32xf32>
    %106 = vector.extract_strided_slice %104 {offsets = [0, 128], sizes = [64, 32], strides = [1, 1]} : vector<64x384xf32> to vector<64x32xf32>
    %107 = vector.extract_strided_slice %104 {offsets = [0, 256], sizes = [64, 32], strides = [1, 1]} : vector<64x384xf32> to vector<64x32xf32>
    %cst_43 = arith.constant dense<0.000000e+00> : vector<64x64xf32>
    %108 = tpu.matmul %105, %106, %cst_43 {dimension_numbers = #tpu.dot_dimension_numbers<[1], [1], [0], [0], [0, 0, 1, 0], [], []>} : vector<64x32xf32>, vector<64x32xf32>, vector<64x64xf32> -> vector<64x64xf32>
    %cst_44 = arith.constant dense<0xFF800000> : vector<64xf32>
    %109 = vector.multi_reduction <maximumf>, %108, %cst_44 [1] : vector<64x64xf32> to vector<64xf32>
    %110 = vector.shape_cast %109 : vector<64xf32> to vector<64x1xf32>
    %111 = vector.broadcast %110 : vector<64x1xf32> to vector<64x64xf32>
    %112 = arith.subf %108, %111 : vector<64x64xf32>
    %113 = math.exp %112 : vector<64x64xf32>
    %cst_45 = arith.constant dense<0.000000e+00> : vector<64xf32>
    %114 = vector.multi_reduction <add>, %113, %cst_45 [1] : vector<64x64xf32> to vector<64xf32>
    %115 = vector.shape_cast %114 : vector<64xf32> to vector<64x1xf32>
    %116 = tpu.reciprocal %115 {approx = true} : vector<64x1xf32> -> vector<64x1xf32>
    %117 = vector.broadcast %116 : vector<64x1xf32> to vector<64x64xf32>
    %118 = arith.mulf %113, %117 : vector<64x64xf32>
    %cst_46 = arith.constant dense<0.000000e+00> : vector<64x32xf32>
    %119 = tpu.matmul %118, %107, %cst_46 {dimension_numbers = #tpu.dot_dimension_numbers<[1], [0], [0], [1], [0, 0, 1, 1], [], []>} : vector<64x64xf32>, vector<64x32xf32>, vector<64x32xf32> -> vector<64x32xf32>
    %120 = arith.index_cast %c1_i32 : i32 to index
    %c0_47 = arith.constant 0 : index
    %c0_48 = arith.constant 0 : index
    %121 = vector.load %arg15[%120, %c0_47, %c0_48] : memref<2x64x128xf32, #tpu.memory_space<vmem>>, vector<1x64x32xf32>
    %122 = vector.shape_cast %121 : vector<1x64x32xf32> to vector<64x32xf32>
    %123 = vector.shape_cast %119 : vector<64x32xf32> to vector<1x64x32xf32>
    tpu.vector_store %arg15[%120, %c0_47, %c0_48], %123 {strides = array<i32>} : memref<2x64x128xf32, #tpu.memory_space<vmem>>, vector<1x64x32xf32>,
    %124 = vector.extract_strided_slice %104 {offsets = [0, 32], sizes = [64, 32], strides = [1, 1]} : vector<64x384xf32> to vector<64x32xf32>
    %125 = vector.extract_strided_slice %104 {offsets = [0, 160], sizes = [64, 32], strides = [1, 1]} : vector<64x384xf32> to vector<64x32xf32>
    %126 = vector.extract_strided_slice %104 {offsets = [0, 288], sizes = [64, 32], strides = [1, 1]} : vector<64x384xf32> to vector<64x32xf32>
    %cst_49 = arith.constant dense<0.000000e+00> : vector<64x64xf32>
    %127 = tpu.matmul %124, %125, %cst_49 {dimension_numbers = #tpu.dot_dimension_numbers<[1], [1], [0], [0], [0, 0, 1, 0], [], []>} : vector<64x32xf32>, vector<64x32xf32>, vector<64x64xf32> -> vector<64x64xf32>
    %cst_50 = arith.constant dense<0xFF800000> : vector<64xf32>
    %128 = vector.multi_reduction <maximumf>, %127, %cst_50 [1] : vector<64x64xf32> to vector<64xf32>
    %129 = vector.shape_cast %128 : vector<64xf32> to vector<64x1xf32>
    %130 = vector.broadcast %129 : vector<64x1xf32> to vector<64x64xf32>
    %131 = arith.subf %127, %130 : vector<64x64xf32>
    %132 = math.exp %131 : vector<64x64xf32>
    %cst_51 = arith.constant dense<0.000000e+00> : vector<64xf32>
    %133 = vector.multi_reduction <add>, %132, %cst_51 [1] : vector<64x64xf32> to vector<64xf32>
    %134 = vector.shape_cast %133 : vector<64xf32> to vector<64x1xf32>
    %135 = tpu.reciprocal %134 {approx = true} : vector<64x1xf32> -> vector<64x1xf32>
    %136 = vector.broadcast %135 : vector<64x1xf32> to vector<64x64xf32>
    %137 = arith.mulf %132, %136 : vector<64x64xf32>
    %cst_52 = arith.constant dense<0.000000e+00> : vector<64x32xf32>
    %138 = tpu.matmul %137, %126, %cst_52 {dimension_numbers = #tpu.dot_dimension_numbers<[1], [0], [0], [1], [0, 0, 1, 1], [], []>} : vector<64x64xf32>, vector<64x32xf32>, vector<64x32xf32> -> vector<64x32xf32>
    %139 = arith.index_cast %c1_i32 : i32 to index
    %c0_53 = arith.constant 0 : index
    %c32_54 = arith.constant 32 : index
    %140 = vector.load %arg15[%139, %c0_53, %c32_54] : memref<2x64x128xf32, #tpu.memory_space<vmem>>, vector<1x64x32xf32>
    %141 = vector.shape_cast %140 : vector<1x64x32xf32> to vector<64x32xf32>
    %142 = vector.shape_cast %138 : vector<64x32xf32> to vector<1x64x32xf32>
    tpu.vector_store %arg15[%139, %c0_53, %c32_54], %142 {strides = array<i32>} : memref<2x64x128xf32, #tpu.memory_space<vmem>>, vector<1x64x32xf32>,
    %143 = vector.extract_strided_slice %104 {offsets = [0, 64], sizes = [64, 32], strides = [1, 1]} : vector<64x384xf32> to vector<64x32xf32>
    %144 = vector.extract_strided_slice %104 {offsets = [0, 192], sizes = [64, 32], strides = [1, 1]} : vector<64x384xf32> to vector<64x32xf32>
    %145 = vector.extract_strided_slice %104 {offsets = [0, 320], sizes = [64, 32], strides = [1, 1]} : vector<64x384xf32> to vector<64x32xf32>
    %cst_55 = arith.constant dense<0.000000e+00> : vector<64x64xf32>
    %146 = tpu.matmul %143, %144, %cst_55 {dimension_numbers = #tpu.dot_dimension_numbers<[1], [1], [0], [0], [0, 0, 1, 0], [], []>} : vector<64x32xf32>, vector<64x32xf32>, vector<64x64xf32> -> vector<64x64xf32>
    %cst_56 = arith.constant dense<0xFF800000> : vector<64xf32>
    %147 = vector.multi_reduction <maximumf>, %146, %cst_56 [1] : vector<64x64xf32> to vector<64xf32>
    %148 = vector.shape_cast %147 : vector<64xf32> to vector<64x1xf32>
    %149 = vector.broadcast %148 : vector<64x1xf32> to vector<64x64xf32>
    %150 = arith.subf %146, %149 : vector<64x64xf32>
    %151 = math.exp %150 : vector<64x64xf32>
    %cst_57 = arith.constant dense<0.000000e+00> : vector<64xf32>
    %152 = vector.multi_reduction <add>, %151, %cst_57 [1] : vector<64x64xf32> to vector<64xf32>
    %153 = vector.shape_cast %152 : vector<64xf32> to vector<64x1xf32>
    %154 = tpu.reciprocal %153 {approx = true} : vector<64x1xf32> -> vector<64x1xf32>
    %155 = vector.broadcast %154 : vector<64x1xf32> to vector<64x64xf32>
    %156 = arith.mulf %151, %155 : vector<64x64xf32>
    %cst_58 = arith.constant dense<0.000000e+00> : vector<64x32xf32>
    %157 = tpu.matmul %156, %145, %cst_58 {dimension_numbers = #tpu.dot_dimension_numbers<[1], [0], [0], [1], [0, 0, 1, 1], [], []>} : vector<64x64xf32>, vector<64x32xf32>, vector<64x32xf32> -> vector<64x32xf32>
    %158 = arith.index_cast %c1_i32 : i32 to index
    %c0_59 = arith.constant 0 : index
    %c64_60 = arith.constant 64 : index
    %159 = vector.load %arg15[%158, %c0_59, %c64_60] : memref<2x64x128xf32, #tpu.memory_space<vmem>>, vector<1x64x32xf32>
    %160 = vector.shape_cast %159 : vector<1x64x32xf32> to vector<64x32xf32>
    %161 = vector.shape_cast %157 : vector<64x32xf32> to vector<1x64x32xf32>
    tpu.vector_store %arg15[%158, %c0_59, %c64_60], %161 {strides = array<i32>} : memref<2x64x128xf32, #tpu.memory_space<vmem>>, vector<1x64x32xf32>,
    %162 = vector.extract_strided_slice %104 {offsets = [0, 96], sizes = [64, 32], strides = [1, 1]} : vector<64x384xf32> to vector<64x32xf32>
    %163 = vector.extract_strided_slice %104 {offsets = [0, 224], sizes = [64, 32], strides = [1, 1]} : vector<64x384xf32> to vector<64x32xf32>
    %164 = vector.extract_strided_slice %104 {offsets = [0, 352], sizes = [64, 32], strides = [1, 1]} : vector<64x384xf32> to vector<64x32xf32>
    %cst_61 = arith.constant dense<0.000000e+00> : vector<64x64xf32>
    %165 = tpu.matmul %162, %163, %cst_61 {dimension_numbers = #tpu.dot_dimension_numbers<[1], [1], [0], [0], [0, 0, 1, 0], [], []>} : vector<64x32xf32>, vector<64x32xf32>, vector<64x64xf32> -> vector<64x64xf32>
    %cst_62 = arith.constant dense<0xFF800000> : vector<64xf32>
    %166 = vector.multi_reduction <maximumf>, %165, %cst_62 [1] : vector<64x64xf32> to vector<64xf32>
    %167 = vector.shape_cast %166 : vector<64xf32> to vector<64x1xf32>
    %168 = vector.broadcast %167 : vector<64x1xf32> to vector<64x64xf32>
    %169 = arith.subf %165, %168 : vector<64x64xf32>
    %170 = math.exp %169 : vector<64x64xf32>
    %cst_63 = arith.constant dense<0.000000e+00> : vector<64xf32>
    %171 = vector.multi_reduction <add>, %170, %cst_63 [1] : vector<64x64xf32> to vector<64xf32>
    %172 = vector.shape_cast %171 : vector<64xf32> to vector<64x1xf32>
    %173 = tpu.reciprocal %172 {approx = true} : vector<64x1xf32> -> vector<64x1xf32>
    %174 = vector.broadcast %173 : vector<64x1xf32> to vector<64x64xf32>
    %175 = arith.mulf %170, %174 : vector<64x64xf32>
    %cst_64 = arith.constant dense<0.000000e+00> : vector<64x32xf32>
    %176 = tpu.matmul %175, %164, %cst_64 {dimension_numbers = #tpu.dot_dimension_numbers<[1], [0], [0], [1], [0, 0, 1, 1], [], []>} : vector<64x64xf32>, vector<64x32xf32>, vector<64x32xf32> -> vector<64x32xf32>
    %177 = arith.index_cast %c1_i32 : i32 to index
    %c0_65 = arith.constant 0 : index
    %c96_66 = arith.constant 96 : index
    %178 = vector.load %arg15[%177, %c0_65, %c96_66] : memref<2x64x128xf32, #tpu.memory_space<vmem>>, vector<1x64x32xf32>
    %179 = vector.shape_cast %178 : vector<1x64x32xf32> to vector<64x32xf32>
    %180 = vector.shape_cast %176 : vector<64x32xf32> to vector<1x64x32xf32>
    tpu.vector_store %arg15[%177, %c0_65, %c96_66], %180 {strides = array<i32>} : memref<2x64x128xf32, #tpu.memory_space<vmem>>, vector<1x64x32xf32>,
    %c2_i32 = arith.constant 2 : i32
    %c0_67 = arith.constant 0 : index
    %c0_68 = arith.constant 0 : index
    %c0_69 = arith.constant 0 : index
    %181 = vector.load %arg15[%c0_67, %c0_68, %c0_69] : memref<2x64x128xf32, #tpu.memory_space<vmem>>, vector<2x64x128xf32>
    %182 = vector.shape_cast %181 : vector<2x64x128xf32> to vector<128x128xf32>
    %c0_70 = arith.constant 0 : index
    %c0_71 = arith.constant 0 : index
    %183 = vector.load %arg7[%c0_70, %c0_71] : memref<128x128xf32, #tpu.memory_space<vmem>>, vector<128x128xf32>
    %cst_72 = arith.constant dense<0.000000e+00> : vector<128x128xf32>
    %184 = tpu.matmul %182, %183, %cst_72 {dimension_numbers = #tpu.dot_dimension_numbers<[1], [0], [0], [1], [0, 0, 1, 1], [], []>} : vector<128x128xf32>, vector<128x128xf32>, vector<128x128xf32> -> vector<128x128xf32>
    %c0_73 = arith.constant 0 : index
    %c0_74 = arith.constant 0 : index
    %185 = vector.load %arg8[%c0_73, %c0_74] : memref<1x128xf32, #tpu.memory_space<vmem>>, vector<1x128xf32>
    %186 = vector.broadcast %185 : vector<1x128xf32> to vector<128x128xf32>
    %187 = arith.addf %184, %186 : vector<128x128xf32>
    %c0_75 = arith.constant 0 : index
    %c0_76 = arith.constant 0 : index
    %188 = vector.load %arg9[%c0_75, %c0_76] : memref<128x128xf32, #tpu.memory_space<vmem>>, vector<128x128xf32>
    %cst_77 = arith.constant dense<0.000000e+00> : vector<128x128xf32>
    %189 = tpu.matmul %187, %188, %cst_77 {dimension_numbers = #tpu.dot_dimension_numbers<[1], [0], [0], [1], [0, 0, 1, 1], [], []>} : vector<128x128xf32>, vector<128x128xf32>, vector<128x128xf32> -> vector<128x128xf32>
    %c0_78 = arith.constant 0 : index
    %c0_79 = arith.constant 0 : index
    %190 = vector.load %arg10[%c0_78, %c0_79] : memref<1x128xf32, #tpu.memory_space<vmem>>, vector<1x128xf32>
    %191 = vector.broadcast %190 : vector<1x128xf32> to vector<128x128xf32>
    %192 = arith.addf %189, %191 : vector<128x128xf32>
    %cst_80 = arith.constant 0.000000e+00 : f32
    %193 = vector.broadcast %cst_80 : f32 to vector<128x128xf32>
    %194 = arith.cmpf oge, %192, %193 : vector<128x128xf32>
    %cst_81 = arith.constant 0.00999999977 : f32
    %195 = vector.broadcast %cst_81 : f32 to vector<128x128xf32>
    %196 = arith.mulf %195, %192 : vector<128x128xf32>
    %197 = arith.select %194, %192, %196 : vector<128x128xi1>, vector<128x128xf32>
    %198 = vector.shape_cast %0 : vector<2x64x128xf32> to vector<128x128xf32>
    %199 = arith.addf %198, %197 : vector<128x128xf32>
    %cst_82 = arith.constant dense<0.000000e+00> : vector<128xf32>
    %200 = vector.multi_reduction <add>, %199, %cst_82 [1] : vector<128x128xf32> to vector<128xf32>
    %201 = vector.shape_cast %200 : vector<128xf32> to vector<128x1xf32>
    %cst_83 = arith.constant 1.280000e+02 : f32
    %202 = vector.broadcast %cst_83 : f32 to vector<128x1xf32>
    %203 = arith.divf %201, %202 : vector<128x1xf32>
    %204 = vector.broadcast %203 : vector<128x1xf32> to vector<128x128xf32>
    %205 = arith.subf %199, %204 : vector<128x128xf32>
    %206 = arith.mulf %205, %205 : vector<128x128xf32>
    %cst_84 = arith.constant dense<0.000000e+00> : vector<128xf32>
    %207 = vector.multi_reduction <add>, %206, %cst_84 [1] : vector<128x128xf32> to vector<128xf32>
    %208 = vector.shape_cast %207 : vector<128xf32> to vector<128x1xf32>
    %cst_85 = arith.constant 1.280000e+02 : f32
    %209 = vector.broadcast %cst_85 : f32 to vector<128x1xf32>
    %210 = arith.divf %208, %209 : vector<128x1xf32>
    %211 = vector.broadcast %203 : vector<128x1xf32> to vector<128x128xf32>
    %212 = arith.subf %199, %211 : vector<128x128xf32>
    %cst_86 = arith.constant 9.99999974E-6 : f32
    %213 = vector.broadcast %cst_86 : f32 to vector<128x1xf32>
    %214 = arith.addf %210, %213 : vector<128x1xf32>
    %215 = math.rsqrt %214 : vector<128x1xf32>
    %216 = vector.broadcast %215 : vector<128x1xf32> to vector<128x128xf32>
    %217 = arith.mulf %212, %216 : vector<128x128xf32>
    %c0_87 = arith.constant 0 : index
    %c0_88 = arith.constant 0 : index
    %218 = vector.load %arg11[%c0_87, %c0_88] : memref<1x128xf32, #tpu.memory_space<vmem>>, vector<1x128xf32>
    %219 = vector.broadcast %218 : vector<1x128xf32> to vector<128x128xf32>
    %220 = arith.mulf %217, %219 : vector<128x128xf32>
    %c0_89 = arith.constant 0 : index
    %c0_90 = arith.constant 0 : index
    %221 = vector.load %arg12[%c0_89, %c0_90] : memref<1x128xf32, #tpu.memory_space<vmem>>, vector<1x128xf32>
    %222 = vector.broadcast %221 : vector<1x128xf32> to vector<128x128xf32>
    %223 = arith.addf %220, %222 : vector<128x128xf32>
    %224 = vector.shape_cast %223 : vector<128x128xf32> to vector<2x64x128xf32>
    %c0_91 = arith.constant 0 : index
    %c0_92 = arith.constant 0 : index
    %c0_93 = arith.constant 0 : index
    %225 = vector.load %arg13[%c0_91, %c0_92, %c0_93] : memref<2x64x128xf32, #tpu.memory_space<vmem>>, vector<2x64x128xf32>
    tpu.vector_store %arg13[%c0_91, %c0_92, %c0_93], %224 {strides = array<i32>} : memref<2x64x128xf32, #tpu.memory_space<vmem>>, vector<2x64x128xf32>,
    return
  }
  func.func @transform_0(%arg0: i32) -> (i32, i32, i32) {
    %c0_i32 = arith.constant 0 : i32
    %c0_i32_0 = arith.constant 0 : i32
    %c0_i32_1 = arith.constant 0 : i32
    return %arg0, %c0_i32, %c0_i32_0 : i32, i32, i32
  }
  func.func @transform_1(%arg0: i32) -> (i32, i32) {
    %c0_i32 = arith.constant 0 : i32
    %c0_i32_0 = arith.constant 0 : i32
    %c0_i32_1 = arith.constant 0 : i32
    return %c0_i32, %c0_i32_0 : i32, i32
  }
  func.func @transform_2(%arg0: i32) -> (i32, i32) {
    %c0_i32 = arith.constant 0 : i32
    %c0_i32_0 = arith.constant 0 : i32
    %c0_i32_1 = arith.constant 0 : i32
    return %c0_i32, %c0_i32_0 : i32, i32
  }
  func.func @transform_3(%arg0: i32) -> (i32, i32) {
    %c0_i32 = arith.constant 0 : i32
    %c0_i32_0 = arith.constant 0 : i32
    %c0_i32_1 = arith.constant 0 : i32
    return %c0_i32, %c0_i32_0 : i32, i32
  }
  func.func @transform_4(%arg0: i32) -> (i32, i32) {
    %c0_i32 = arith.constant 0 : i32
    %c0_i32_0 = arith.constant 0 : i32
    %c0_i32_1 = arith.constant 0 : i32
    return %c0_i32, %c0_i32_0 : i32, i32
  }
  func.func @transform_5(%arg0: i32) -> (i32, i32) {
    %c0_i32 = arith.constant 0 : i32
    %c0_i32_0 = arith.constant 0 : i32
    %c0_i32_1 = arith.constant 0 : i32
    return %c0_i32, %c0_i32_0 : i32, i32
  }
  func.func @transform_6(%arg0: i32) -> (i32, i32) {
    %c0_i32 = arith.constant 0 : i32
    %c0_i32_0 = arith.constant 0 : i32
    %c0_i32_1 = arith.constant 0 : i32
    return %c0_i32, %c0_i32_0 : i32, i32
  }
  func.func @transform_7(%arg0: i32) -> (i32, i32) {
    %c0_i32 = arith.constant 0 : i32
    %c0_i32_0 = arith.constant 0 : i32
    %c0_i32_1 = arith.constant 0 : i32
    return %c0_i32, %c0_i32_0 : i32, i32
  }
  func.func @transform_8(%arg0: i32) -> (i32, i32) {
    %c0_i32 = arith.constant 0 : i32
    %c0_i32_0 = arith.constant 0 : i32
    %c0_i32_1 = arith.constant 0 : i32
    return %c0_i32, %c0_i32_0 : i32, i32
  }
  func.func @transform_9(%arg0: i32) -> (i32, i32) {
    %c0_i32 = arith.constant 0 : i32
    %c0_i32_0 = arith.constant 0 : i32
    %c0_i32_1 = arith.constant 0 : i32
    return %c0_i32, %c0_i32_0 : i32, i32
  }
  func.func @transform_10(%arg0: i32) -> (i32, i32) {
    %c0_i32 = arith.constant 0 : i32
    %c0_i32_0 = arith.constant 0 : i32
    %c0_i32_1 = arith.constant 0 : i32
    return %c0_i32, %c0_i32_0 : i32, i32
  }
  func.func @transform_11(%arg0: i32) -> (i32, i32) {
    %c0_i32 = arith.constant 0 : i32
    %c0_i32_0 = arith.constant 0 : i32
    %c0_i32_1 = arith.constant 0 : i32
    return %c0_i32, %c0_i32_0 : i32, i32
  }
  func.func @transform_12(%arg0: i32) -> (i32, i32, i32) {
    %c0_i32 = arith.constant 0 : i32
    %c0_i32_0 = arith.constant 0 : i32
    %c0_i32_1 = arith.constant 0 : i32
    return %arg0, %c0_i32, %c0_i32_0 : i32, i32, i32
  }
}

module attributes {stable_mosaic.version = 11 : i64} {
  func.func @encoder_kernel(%arg0: i32, %arg1: memref<2x64x128xf32, #tpu.memory_space<vmem>>, %arg2: memref<64x128xf32, #tpu.memory_space<vmem>>, %arg3: memref<128x128xf32, #tpu.memory_space<vmem>>, %arg4: memref<1x128xf32, #tpu.memory_space<vmem>>, %arg5: memref<128x384xf32, #tpu.memory_space<vmem>>, %arg6: memref<1x384xf32, #tpu.memory_space<vmem>>, %arg7: memref<128x128xf32, #tpu.memory_space<vmem>>, %arg8: memref<1x128xf32, #tpu.memory_space<vmem>>, %arg9: memref<128x128xf32, #tpu.memory_space<vmem>>, %arg10: memref<1x128xf32, #tpu.memory_space<vmem>>, %arg11: memref<1x128xf32, #tpu.memory_space<vmem>>, %arg12: memref<1x128xf32, #tpu.memory_space<vmem>>, %arg13: memref<2x64x128xf32, #tpu.memory_space<vmem>>, %arg14: memref<2x64x384xf32, #tpu.memory_space<vmem>>, %arg15: memref<2x64x128xf32, #tpu.memory_space<vmem>>) attributes {dimension_semantics = [#tpu.dimension_semantics<parallel>], iteration_bounds = array<i64: 2>, scalar_prefetch = 0 : i64, scratch_operands = 2 : i64, tpu.core_type = #tpu.core_type<tc>, window_params = [{transform_indices = @transform_0, window_bounds = array<i64: 2, 64, 128>}, {pipeline_mode = #tpu.pipeline_mode<synchronous>, transform_indices = @transform_1, window_bounds = array<i64: 64, 128>}, {pipeline_mode = #tpu.pipeline_mode<synchronous>, transform_indices = @transform_2, window_bounds = array<i64: 128, 128>}, {pipeline_mode = #tpu.pipeline_mode<synchronous>, transform_indices = @transform_3, window_bounds = array<i64: 1, 128>}, {pipeline_mode = #tpu.pipeline_mode<synchronous>, transform_indices = @transform_4, window_bounds = array<i64: 128, 384>}, {pipeline_mode = #tpu.pipeline_mode<synchronous>, transform_indices = @transform_5, window_bounds = array<i64: 1, 384>}, {pipeline_mode = #tpu.pipeline_mode<synchronous>, transform_indices = @transform_6, window_bounds = array<i64: 128, 128>}, {pipeline_mode = #tpu.pipeline_mode<synchronous>, transform_indices = @transform_7, window_bounds = array<i64: 1, 128>}, {pipeline_mode = #tpu.pipeline_mode<synchronous>, transform_indices = @transform_8, window_bounds = array<i64: 128, 128>}, {pipeline_mode = #tpu.pipeline_mode<synchronous>, transform_indices = @transform_9, window_bounds = array<i64: 1, 128>}, {pipeline_mode = #tpu.pipeline_mode<synchronous>, transform_indices = @transform_10, window_bounds = array<i64: 1, 128>}, {pipeline_mode = #tpu.pipeline_mode<synchronous>, transform_indices = @transform_11, window_bounds = array<i64: 1, 128>}, {transform_indices = @transform_12, window_bounds = array<i64: 2, 64, 128>}]} {
    %c0 = arith.constant 0 : index
    %c0_0 = arith.constant 0 : index
    %c0_1 = arith.constant 0 : index
    %0 = vector.load %arg1[%c0, %c0_0, %c0_1] : memref<2x64x128xf32, #tpu.memory_space<vmem>>, vector<2x64x128xf32>
    %c0_2 = arith.constant 0 : index
    %c0_3 = arith.constant 0 : index
    %1 = vector.load %arg2[%c0_2, %c0_3] : memref<64x128xf32, #tpu.memory_space<vmem>>, vector<64x128xf32>
    %2 = vector.shape_cast %1 : vector<64x128xf32> to vector<1x64x128xf32>
    %3 = vector.broadcast %2 : vector<1x64x128xf32> to vector<2x64x128xf32>
    %4 = arith.addf %0, %3 : vector<2x64x128xf32>
    %5 = vector.shape_cast %4 : vector<2x64x128xf32> to vector<128x128xf32>
    %c0_4 = arith.constant 0 : index
    %c0_5 = arith.constant 0 : index
    %6 = vector.load %arg3[%c0_4, %c0_5] : memref<128x128xf32, #tpu.memory_space<vmem>>, vector<128x128xf32>
    %cst = arith.constant dense<0.000000e+00> : vector<128x128xf32>
    %7 = tpu.matmul %5, %6, %cst {dimension_numbers = #tpu.dot_dimension_numbers<[1], [0], [0], [1], [0, 0, 1, 1], [], []>} : vector<128x128xf32>, vector<128x128xf32>, vector<128x128xf32> -> vector<128x128xf32>
    %c0_6 = arith.constant 0 : index
    %c0_7 = arith.constant 0 : index
    %8 = vector.load %arg4[%c0_6, %c0_7] : memref<1x128xf32, #tpu.memory_space<vmem>>, vector<1x128xf32>
    %9 = vector.broadcast %8 : vector<1x128xf32> to vector<128x128xf32>
    %10 = arith.addf %7, %9 : vector<128x128xf32>
    %cst_8 = arith.constant 0.000000e+00 : f32
    %11 = vector.broadcast %cst_8 : f32 to vector<128x128xf32>
    %12 = arith.cmpf oge, %10, %11 : vector<128x128xf32>
    %cst_9 = arith.constant 0.00999999977 : f32
    %13 = vector.broadcast %cst_9 : f32 to vector<128x128xf32>
    %14 = arith.mulf %13, %10 : vector<128x128xf32>
    %15 = arith.select %12, %10, %14 : vector<128x128xi1>, vector<128x128xf32>
    %c0_10 = arith.constant 0 : index
    %c0_11 = arith.constant 0 : index
    %16 = vector.load %arg5[%c0_10, %c0_11] : memref<128x384xf32, #tpu.memory_space<vmem>>, vector<128x384xf32>
    %cst_12 = arith.constant dense<0.000000e+00> : vector<128x384xf32>
    %17 = tpu.matmul %15, %16, %cst_12 {dimension_numbers = #tpu.dot_dimension_numbers<[1], [0], [0], [1], [0, 0, 1, 1], [], []>} : vector<128x128xf32>, vector<128x384xf32>, vector<128x384xf32> -> vector<128x384xf32>
    %c0_13 = arith.constant 0 : index
    %c0_14 = arith.constant 0 : index
    %18 = vector.load %arg6[%c0_13, %c0_14] : memref<1x384xf32, #tpu.memory_space<vmem>>, vector<1x384xf32>
    %19 = vector.broadcast %18 : vector<1x384xf32> to vector<128x384xf32>
    %20 = arith.addf %17, %19 : vector<128x384xf32>
    %21 = vector.shape_cast %20 : vector<128x384xf32> to vector<2x64x384xf32>
    %c0_15 = arith.constant 0 : index
    %c0_16 = arith.constant 0 : index
    %c0_17 = arith.constant 0 : index
    %22 = vector.load %arg14[%c0_15, %c0_16, %c0_17] : memref<2x64x384xf32, #tpu.memory_space<vmem>>, vector<2x64x384xf32>
    tpu.vector_store %arg14[%c0_15, %c0_16, %c0_17], %21 {strides = array<i32>} : memref<2x64x384xf32, #tpu.memory_space<vmem>>, vector<2x64x384xf32>,
    %c0_i32 = arith.constant 0 : i32
    %23 = arith.index_cast %c0_i32 : i32 to index
    %c0_18 = arith.constant 0 : index
    %c0_19 = arith.constant 0 : index
    %24 = vector.load %arg14[%23, %c0_18, %c0_19] : memref<2x64x384xf32, #tpu.memory_space<vmem>>, vector<1x64x384xf32>
    %25 = vector.shape_cast %24 : vector<1x64x384xf32> to vector<64x384xf32>
    %26 = vector.extract_strided_slice %25 {offsets = [0, 0], sizes = [64, 32], strides = [1, 1]} : vector<64x384xf32> to vector<64x32xf32>
    %27 = vector.extract_strided_slice %25 {offsets = [0, 128], sizes = [64, 32], strides = [1, 1]} : vector<64x384xf32> to vector<64x32xf32>
    %28 = vector.extract_strided_slice %25 {offsets = [0, 256], sizes = [64, 32], strides = [1, 1]} : vector<64x384xf32> to vector<64x32xf32>
    %cst_20 = arith.constant dense<0.000000e+00> : vector<64x64xf32>
    %29 = tpu.matmul %26, %27, %cst_20 {dimension_numbers = #tpu.dot_dimension_numbers<[1], [1], [0], [0], [0, 0, 1, 0], [], []>} : vector<64x32xf32>, vector<64x32xf32>, vector<64x64xf32> -> vector<64x64xf32>
    %cst_21 = arith.constant dense<0xFF800000> : vector<64xf32>
    %30 = vector.multi_reduction <maximumf>, %29, %cst_21 [1] : vector<64x64xf32> to vector<64xf32>
    %31 = vector.shape_cast %30 : vector<64xf32> to vector<64x1xf32>
    %32 = vector.broadcast %31 : vector<64x1xf32> to vector<64x64xf32>
    %33 = arith.subf %29, %32 : vector<64x64xf32>
    %34 = math.exp %33 : vector<64x64xf32>
    %cst_22 = arith.constant dense<0.000000e+00> : vector<64xf32>
    %35 = vector.multi_reduction <add>, %34, %cst_22 [1] : vector<64x64xf32> to vector<64xf32>
    %36 = vector.shape_cast %35 : vector<64xf32> to vector<64x1xf32>
    %37 = tpu.reciprocal %36 {approx = true} : vector<64x1xf32> -> vector<64x1xf32>
    %38 = vector.broadcast %37 : vector<64x1xf32> to vector<64x64xf32>
    %39 = arith.mulf %34, %38 : vector<64x64xf32>
    %cst_23 = arith.constant dense<0.000000e+00> : vector<64x32xf32>
    %40 = tpu.matmul %39, %28, %cst_23 {dimension_numbers = #tpu.dot_dimension_numbers<[1], [0], [0], [1], [0, 0, 1, 1], [], []>} : vector<64x64xf32>, vector<64x32xf32>, vector<64x32xf32> -> vector<64x32xf32>
    %41 = arith.index_cast %c0_i32 : i32 to index
    %c0_24 = arith.constant 0 : index
    %c0_25 = arith.constant 0 : index
    %42 = vector.load %arg15[%41, %c0_24, %c0_25] : memref<2x64x128xf32, #tpu.memory_space<vmem>>, vector<1x64x32xf32>
    %43 = vector.shape_cast %42 : vector<1x64x32xf32> to vector<64x32xf32>
    %44 = vector.shape_cast %40 : vector<64x32xf32> to vector<1x64x32xf32>
    tpu.vector_store %arg15[%41, %c0_24, %c0_25], %44 {strides = array<i32>} : memref<2x64x128xf32, #tpu.memory_space<vmem>>, vector<1x64x32xf32>,
    %45 = vector.extract_strided_slice %25 {offsets = [0, 32], sizes = [64, 32], strides = [1, 1]} : vector<64x384xf32> to vector<64x32xf32>
    %46 = vector.extract_strided_slice %25 {offsets = [0, 160], sizes = [64, 32], strides = [1, 1]} : vector<64x384xf32> to vector<64x32xf32>
    %47 = vector.extract_strided_slice %25 {offsets = [0, 288], sizes = [64, 32], strides = [1, 1]} : vector<64x384xf32> to vector<64x32xf32>
    %cst_26 = arith.constant dense<0.000000e+00> : vector<64x64xf32>
    %48 = tpu.matmul %45, %46, %cst_26 {dimension_numbers = #tpu.dot_dimension_numbers<[1], [1], [0], [0], [0, 0, 1, 0], [], []>} : vector<64x32xf32>, vector<64x32xf32>, vector<64x64xf32> -> vector<64x64xf32>
    %cst_27 = arith.constant dense<0xFF800000> : vector<64xf32>
    %49 = vector.multi_reduction <maximumf>, %48, %cst_27 [1] : vector<64x64xf32> to vector<64xf32>
    %50 = vector.shape_cast %49 : vector<64xf32> to vector<64x1xf32>
    %51 = vector.broadcast %50 : vector<64x1xf32> to vector<64x64xf32>
    %52 = arith.subf %48, %51 : vector<64x64xf32>
    %53 = math.exp %52 : vector<64x64xf32>
    %cst_28 = arith.constant dense<0.000000e+00> : vector<64xf32>
    %54 = vector.multi_reduction <add>, %53, %cst_28 [1] : vector<64x64xf32> to vector<64xf32>
    %55 = vector.shape_cast %54 : vector<64xf32> to vector<64x1xf32>
    %56 = tpu.reciprocal %55 {approx = true} : vector<64x1xf32> -> vector<64x1xf32>
    %57 = vector.broadcast %56 : vector<64x1xf32> to vector<64x64xf32>
    %58 = arith.mulf %53, %57 : vector<64x64xf32>
    %cst_29 = arith.constant dense<0.000000e+00> : vector<64x32xf32>
    %59 = tpu.matmul %58, %47, %cst_29 {dimension_numbers = #tpu.dot_dimension_numbers<[1], [0], [0], [1], [0, 0, 1, 1], [], []>} : vector<64x64xf32>, vector<64x32xf32>, vector<64x32xf32> -> vector<64x32xf32>
    %60 = arith.index_cast %c0_i32 : i32 to index
    %c0_30 = arith.constant 0 : index
    %c32 = arith.constant 32 : index
    %61 = vector.load %arg15[%60, %c0_30, %c32] : memref<2x64x128xf32, #tpu.memory_space<vmem>>, vector<1x64x32xf32>
    %62 = vector.shape_cast %61 : vector<1x64x32xf32> to vector<64x32xf32>
    %63 = vector.shape_cast %59 : vector<64x32xf32> to vector<1x64x32xf32>
    tpu.vector_store %arg15[%60, %c0_30, %c32], %63 {strides = array<i32>} : memref<2x64x128xf32, #tpu.memory_space<vmem>>, vector<1x64x32xf32>,
    %64 = vector.extract_strided_slice %25 {offsets = [0, 64], sizes = [64, 32], strides = [1, 1]} : vector<64x384xf32> to vector<64x32xf32>
    %65 = vector.extract_strided_slice %25 {offsets = [0, 192], sizes = [64, 32], strides = [1, 1]} : vector<64x384xf32> to vector<64x32xf32>
    %66 = vector.extract_strided_slice %25 {offsets = [0, 320], sizes = [64, 32], strides = [1, 1]} : vector<64x384xf32> to vector<64x32xf32>
    %cst_31 = arith.constant dense<0.000000e+00> : vector<64x64xf32>
    %67 = tpu.matmul %64, %65, %cst_31 {dimension_numbers = #tpu.dot_dimension_numbers<[1], [1], [0], [0], [0, 0, 1, 0], [], []>} : vector<64x32xf32>, vector<64x32xf32>, vector<64x64xf32> -> vector<64x64xf32>
    %cst_32 = arith.constant dense<0xFF800000> : vector<64xf32>
    %68 = vector.multi_reduction <maximumf>, %67, %cst_32 [1] : vector<64x64xf32> to vector<64xf32>
    %69 = vector.shape_cast %68 : vector<64xf32> to vector<64x1xf32>
    %70 = vector.broadcast %69 : vector<64x1xf32> to vector<64x64xf32>
    %71 = arith.subf %67, %70 : vector<64x64xf32>
    %72 = math.exp %71 : vector<64x64xf32>
    %cst_33 = arith.constant dense<0.000000e+00> : vector<64xf32>
    %73 = vector.multi_reduction <add>, %72, %cst_33 [1] : vector<64x64xf32> to vector<64xf32>
    %74 = vector.shape_cast %73 : vector<64xf32> to vector<64x1xf32>
    %75 = tpu.reciprocal %74 {approx = true} : vector<64x1xf32> -> vector<64x1xf32>
    %76 = vector.broadcast %75 : vector<64x1xf32> to vector<64x64xf32>
    %77 = arith.mulf %72, %76 : vector<64x64xf32>
    %cst_34 = arith.constant dense<0.000000e+00> : vector<64x32xf32>
    %78 = tpu.matmul %77, %66, %cst_34 {dimension_numbers = #tpu.dot_dimension_numbers<[1], [0], [0], [1], [0, 0, 1, 1], [], []>} : vector<64x64xf32>, vector<64x32xf32>, vector<64x32xf32> -> vector<64x32xf32>
    %79 = arith.index_cast %c0_i32 : i32 to index
    %c0_35 = arith.constant 0 : index
    %c64 = arith.constant 64 : index
    %80 = vector.load %arg15[%79, %c0_35, %c64] : memref<2x64x128xf32, #tpu.memory_space<vmem>>, vector<1x64x32xf32>
    %81 = vector.shape_cast %80 : vector<1x64x32xf32> to vector<64x32xf32>
    %82 = vector.shape_cast %78 : vector<64x32xf32> to vector<1x64x32xf32>
    tpu.vector_store %arg15[%79, %c0_35, %c64], %82 {strides = array<i32>} : memref<2x64x128xf32, #tpu.memory_space<vmem>>, vector<1x64x32xf32>,
    %83 = vector.extract_strided_slice %25 {offsets = [0, 96], sizes = [64, 32], strides = [1, 1]} : vector<64x384xf32> to vector<64x32xf32>
    %84 = vector.extract_strided_slice %25 {offsets = [0, 224], sizes = [64, 32], strides = [1, 1]} : vector<64x384xf32> to vector<64x32xf32>
    %85 = vector.extract_strided_slice %25 {offsets = [0, 352], sizes = [64, 32], strides = [1, 1]} : vector<64x384xf32> to vector<64x32xf32>
    %cst_36 = arith.constant dense<0.000000e+00> : vector<64x64xf32>
    %86 = tpu.matmul %83, %84, %cst_36 {dimension_numbers = #tpu.dot_dimension_numbers<[1], [1], [0], [0], [0, 0, 1, 0], [], []>} : vector<64x32xf32>, vector<64x32xf32>, vector<64x64xf32> -> vector<64x64xf32>
    %cst_37 = arith.constant dense<0xFF800000> : vector<64xf32>
    %87 = vector.multi_reduction <maximumf>, %86, %cst_37 [1] : vector<64x64xf32> to vector<64xf32>
    %88 = vector.shape_cast %87 : vector<64xf32> to vector<64x1xf32>
    %89 = vector.broadcast %88 : vector<64x1xf32> to vector<64x64xf32>
    %90 = arith.subf %86, %89 : vector<64x64xf32>
    %91 = math.exp %90 : vector<64x64xf32>
    %cst_38 = arith.constant dense<0.000000e+00> : vector<64xf32>
    %92 = vector.multi_reduction <add>, %91, %cst_38 [1] : vector<64x64xf32> to vector<64xf32>
    %93 = vector.shape_cast %92 : vector<64xf32> to vector<64x1xf32>
    %94 = tpu.reciprocal %93 {approx = true} : vector<64x1xf32> -> vector<64x1xf32>
    %95 = vector.broadcast %94 : vector<64x1xf32> to vector<64x64xf32>
    %96 = arith.mulf %91, %95 : vector<64x64xf32>
    %cst_39 = arith.constant dense<0.000000e+00> : vector<64x32xf32>
    %97 = tpu.matmul %96, %85, %cst_39 {dimension_numbers = #tpu.dot_dimension_numbers<[1], [0], [0], [1], [0, 0, 1, 1], [], []>} : vector<64x64xf32>, vector<64x32xf32>, vector<64x32xf32> -> vector<64x32xf32>
    %98 = arith.index_cast %c0_i32 : i32 to index
    %c0_40 = arith.constant 0 : index
    %c96 = arith.constant 96 : index
    %99 = vector.load %arg15[%98, %c0_40, %c96] : memref<2x64x128xf32, #tpu.memory_space<vmem>>, vector<1x64x32xf32>
    %100 = vector.shape_cast %99 : vector<1x64x32xf32> to vector<64x32xf32>
    %101 = vector.shape_cast %97 : vector<64x32xf32> to vector<1x64x32xf32>
    tpu.vector_store %arg15[%98, %c0_40, %c96], %101 {strides = array<i32>} : memref<2x64x128xf32, #tpu.memory_space<vmem>>, vector<1x64x32xf32>,
    %c1_i32 = arith.constant 1 : i32
    %102 = arith.index_cast %c1_i32 : i32 to index
    %c0_41 = arith.constant 0 : index
    %c0_42 = arith.constant 0 : index
    %103 = vector.load %arg14[%102, %c0_41, %c0_42] : memref<2x64x384xf32, #tpu.memory_space<vmem>>, vector<1x64x384xf32>
    %104 = vector.shape_cast %103 : vector<1x64x384xf32> to vector<64x384xf32>
    %105 = vector.extract_strided_slice %104 {offsets = [0, 0], sizes = [64, 32], strides = [1, 1]} : vector<64x384xf32> to vector<64x32xf32>
    %106 = vector.extract_strided_slice %104 {offsets = [0, 128], sizes = [64, 32], strides = [1, 1]} : vector<64x384xf32> to vector<64x32xf32>
    %107 = vector.extract_strided_slice %104 {offsets = [0, 256], sizes = [64, 32], strides = [1, 1]} : vector<64x384xf32> to vector<64x32xf32>
    %cst_43 = arith.constant dense<0.000000e+00> : vector<64x64xf32>
    %108 = tpu.matmul %105, %106, %cst_43 {dimension_numbers = #tpu.dot_dimension_numbers<[1], [1], [0], [0], [0, 0, 1, 0], [], []>} : vector<64x32xf32>, vector<64x32xf32>, vector<64x64xf32> -> vector<64x64xf32>
    %cst_44 = arith.constant dense<0xFF800000> : vector<64xf32>
    %109 = vector.multi_reduction <maximumf>, %108, %cst_44 [1] : vector<64x64xf32> to vector<64xf32>
    %110 = vector.shape_cast %109 : vector<64xf32> to vector<64x1xf32>
    %111 = vector.broadcast %110 : vector<64x1xf32> to vector<64x64xf32>
    %112 = arith.subf %108, %111 : vector<64x64xf32>
    %113 = math.exp %112 : vector<64x64xf32>
    %cst_45 = arith.constant dense<0.000000e+00> : vector<64xf32>
    %114 = vector.multi_reduction <add>, %113, %cst_45 [1] : vector<64x64xf32> to vector<64xf32>
    %115 = vector.shape_cast %114 : vector<64xf32> to vector<64x1xf32>
    %116 = tpu.reciprocal %115 {approx = true} : vector<64x1xf32> -> vector<64x1xf32>
    %117 = vector.broadcast %116 : vector<64x1xf32> to vector<64x64xf32>
    %118 = arith.mulf %113, %117 : vector<64x64xf32>
    %cst_46 = arith.constant dense<0.000000e+00> : vector<64x32xf32>
    %119 = tpu.matmul %118, %107, %cst_46 {dimension_numbers = #tpu.dot_dimension_numbers<[1], [0], [0], [1], [0, 0, 1, 1], [], []>} : vector<64x64xf32>, vector<64x32xf32>, vector<64x32xf32> -> vector<64x32xf32>
    %120 = arith.index_cast %c1_i32 : i32 to index
    %c0_47 = arith.constant 0 : index
    %c0_48 = arith.constant 0 : index
    %121 = vector.load %arg15[%120, %c0_47, %c0_48] : memref<2x64x128xf32, #tpu.memory_space<vmem>>, vector<1x64x32xf32>
    %122 = vector.shape_cast %121 : vector<1x64x32xf32> to vector<64x32xf32>
    %123 = vector.shape_cast %119 : vector<64x32xf32> to vector<1x64x32xf32>
    tpu.vector_store %arg15[%120, %c0_47, %c0_48], %123 {strides = array<i32>} : memref<2x64x128xf32, #tpu.memory_space<vmem>>, vector<1x64x32xf32>,
    %124 = vector.extract_strided_slice %104 {offsets = [0, 32], sizes = [64, 32], strides = [1, 1]} : vector<64x384xf32> to vector<64x32xf32>
    %125 = vector.extract_strided_slice %104 {offsets = [0, 160], sizes = [64, 32], strides = [1, 1]} : vector<64x384xf32> to vector<64x32xf32>
    %126 = vector.extract_strided_slice %104 {offsets = [0, 288], sizes = [64, 32], strides = [1, 1]} : vector<64x384xf32> to vector<64x32xf32>
    %cst_49 = arith.constant dense<0.000000e+00> : vector<64x64xf32>
    %127 = tpu.matmul %124, %125, %cst_49 {dimension_numbers = #tpu.dot_dimension_numbers<[1], [1], [0], [0], [0, 0, 1, 0], [], []>} : vector<64x32xf32>, vector<64x32xf32>, vector<64x64xf32> -> vector<64x64xf32>
    %cst_50 = arith.constant dense<0xFF800000> : vector<64xf32>
    %128 = vector.multi_reduction <maximumf>, %127, %cst_50 [1] : vector<64x64xf32> to vector<64xf32>
    %129 = vector.shape_cast %128 : vector<64xf32> to vector<64x1xf32>
    %130 = vector.broadcast %129 : vector<64x1xf32> to vector<64x64xf32>
    %131 = arith.subf %127, %130 : vector<64x64xf32>
    %132 = math.exp %131 : vector<64x64xf32>
    %cst_51 = arith.constant dense<0.000000e+00> : vector<64xf32>
    %133 = vector.multi_reduction <add>, %132, %cst_51 [1] : vector<64x64xf32> to vector<64xf32>
    %134 = vector.shape_cast %133 : vector<64xf32> to vector<64x1xf32>
    %135 = tpu.reciprocal %134 {approx = true} : vector<64x1xf32> -> vector<64x1xf32>
    %136 = vector.broadcast %135 : vector<64x1xf32> to vector<64x64xf32>
    %137 = arith.mulf %132, %136 : vector<64x64xf32>
    %cst_52 = arith.constant dense<0.000000e+00> : vector<64x32xf32>
    %138 = tpu.matmul %137, %126, %cst_52 {dimension_numbers = #tpu.dot_dimension_numbers<[1], [0], [0], [1], [0, 0, 1, 1], [], []>} : vector<64x64xf32>, vector<64x32xf32>, vector<64x32xf32> -> vector<64x32xf32>
    %139 = arith.index_cast %c1_i32 : i32 to index
    %c0_53 = arith.constant 0 : index
    %c32_54 = arith.constant 32 : index
    %140 = vector.load %arg15[%139, %c0_53, %c32_54] : memref<2x64x128xf32, #tpu.memory_space<vmem>>, vector<1x64x32xf32>
    %141 = vector.shape_cast %140 : vector<1x64x32xf32> to vector<64x32xf32>
    %142 = vector.shape_cast %138 : vector<64x32xf32> to vector<1x64x32xf32>
    tpu.vector_store %arg15[%139, %c0_53, %c32_54], %142 {strides = array<i32>} : memref<2x64x128xf32, #tpu.memory_space<vmem>>, vector<1x64x32xf32>,
    %143 = vector.extract_strided_slice %104 {offsets = [0, 64], sizes = [64, 32], strides = [1, 1]} : vector<64x384xf32> to vector<64x32xf32>
    %144 = vector.extract_strided_slice %104 {offsets = [0, 192], sizes = [64, 32], strides = [1, 1]} : vector<64x384xf32> to vector<64x32xf32>
    %145 = vector.extract_strided_slice %104 {offsets = [0, 320], sizes = [64, 32], strides = [1, 1]} : vector<64x384xf32> to vector<64x32xf32>
    %cst_55 = arith.constant dense<0.000000e+00> : vector<64x64xf32>
    %146 = tpu.matmul %143, %144, %cst_55 {dimension_numbers = #tpu.dot_dimension_numbers<[1], [1], [0], [0], [0, 0, 1, 0], [], []>} : vector<64x32xf32>, vector<64x32xf32>, vector<64x64xf32> -> vector<64x64xf32>
    %cst_56 = arith.constant dense<0xFF800000> : vector<64xf32>
    %147 = vector.multi_reduction <maximumf>, %146, %cst_56 [1] : vector<64x64xf32> to vector<64xf32>
    %148 = vector.shape_cast %147 : vector<64xf32> to vector<64x1xf32>
    %149 = vector.broadcast %148 : vector<64x1xf32> to vector<64x64xf32>
    %150 = arith.subf %146, %149 : vector<64x64xf32>
    %151 = math.exp %150 : vector<64x64xf32>
    %cst_57 = arith.constant dense<0.000000e+00> : vector<64xf32>
    %152 = vector.multi_reduction <add>, %151, %cst_57 [1] : vector<64x64xf32> to vector<64xf32>
    %153 = vector.shape_cast %152 : vector<64xf32> to vector<64x1xf32>
    %154 = tpu.reciprocal %153 {approx = true} : vector<64x1xf32> -> vector<64x1xf32>
    %155 = vector.broadcast %154 : vector<64x1xf32> to vector<64x64xf32>
    %156 = arith.mulf %151, %155 : vector<64x64xf32>
    %cst_58 = arith.constant dense<0.000000e+00> : vector<64x32xf32>
    %157 = tpu.matmul %156, %145, %cst_58 {dimension_numbers = #tpu.dot_dimension_numbers<[1], [0], [0], [1], [0, 0, 1, 1], [], []>} : vector<64x64xf32>, vector<64x32xf32>, vector<64x32xf32> -> vector<64x32xf32>
    %158 = arith.index_cast %c1_i32 : i32 to index
    %c0_59 = arith.constant 0 : index
    %c64_60 = arith.constant 64 : index
    %159 = vector.load %arg15[%158, %c0_59, %c64_60] : memref<2x64x128xf32, #tpu.memory_space<vmem>>, vector<1x64x32xf32>
    %160 = vector.shape_cast %159 : vector<1x64x32xf32> to vector<64x32xf32>
    %161 = vector.shape_cast %157 : vector<64x32xf32> to vector<1x64x32xf32>
    tpu.vector_store %arg15[%158, %c0_59, %c64_60], %161 {strides = array<i32>} : memref<2x64x128xf32, #tpu.memory_space<vmem>>, vector<1x64x32xf32>,
    %162 = vector.extract_strided_slice %104 {offsets = [0, 96], sizes = [64, 32], strides = [1, 1]} : vector<64x384xf32> to vector<64x32xf32>
    %163 = vector.extract_strided_slice %104 {offsets = [0, 224], sizes = [64, 32], strides = [1, 1]} : vector<64x384xf32> to vector<64x32xf32>
    %164 = vector.extract_strided_slice %104 {offsets = [0, 352], sizes = [64, 32], strides = [1, 1]} : vector<64x384xf32> to vector<64x32xf32>
    %cst_61 = arith.constant dense<0.000000e+00> : vector<64x64xf32>
    %165 = tpu.matmul %162, %163, %cst_61 {dimension_numbers = #tpu.dot_dimension_numbers<[1], [1], [0], [0], [0, 0, 1, 0], [], []>} : vector<64x32xf32>, vector<64x32xf32>, vector<64x64xf32> -> vector<64x64xf32>
    %cst_62 = arith.constant dense<0xFF800000> : vector<64xf32>
    %166 = vector.multi_reduction <maximumf>, %165, %cst_62 [1] : vector<64x64xf32> to vector<64xf32>
    %167 = vector.shape_cast %166 : vector<64xf32> to vector<64x1xf32>
    %168 = vector.broadcast %167 : vector<64x1xf32> to vector<64x64xf32>
    %169 = arith.subf %165, %168 : vector<64x64xf32>
    %170 = math.exp %169 : vector<64x64xf32>
    %cst_63 = arith.constant dense<0.000000e+00> : vector<64xf32>
    %171 = vector.multi_reduction <add>, %170, %cst_63 [1] : vector<64x64xf32> to vector<64xf32>
    %172 = vector.shape_cast %171 : vector<64xf32> to vector<64x1xf32>
    %173 = tpu.reciprocal %172 {approx = true} : vector<64x1xf32> -> vector<64x1xf32>
    %174 = vector.broadcast %173 : vector<64x1xf32> to vector<64x64xf32>
    %175 = arith.mulf %170, %174 : vector<64x64xf32>
    %cst_64 = arith.constant dense<0.000000e+00> : vector<64x32xf32>
    %176 = tpu.matmul %175, %164, %cst_64 {dimension_numbers = #tpu.dot_dimension_numbers<[1], [0], [0], [1], [0, 0, 1, 1], [], []>} : vector<64x64xf32>, vector<64x32xf32>, vector<64x32xf32> -> vector<64x32xf32>
    %177 = arith.index_cast %c1_i32 : i32 to index
    %c0_65 = arith.constant 0 : index
    %c96_66 = arith.constant 96 : index
    %178 = vector.load %arg15[%177, %c0_65, %c96_66] : memref<2x64x128xf32, #tpu.memory_space<vmem>>, vector<1x64x32xf32>
    %179 = vector.shape_cast %178 : vector<1x64x32xf32> to vector<64x32xf32>
    %180 = vector.shape_cast %176 : vector<64x32xf32> to vector<1x64x32xf32>
    tpu.vector_store %arg15[%177, %c0_65, %c96_66], %180 {strides = array<i32>} : memref<2x64x128xf32, #tpu.memory_space<vmem>>, vector<1x64x32xf32>,
    %c2_i32 = arith.constant 2 : i32
    %c0_67 = arith.constant 0 : index
    %c0_68 = arith.constant 0 : index
    %c0_69 = arith.constant 0 : index
    %181 = vector.load %arg15[%c0_67, %c0_68, %c0_69] : memref<2x64x128xf32, #tpu.memory_space<vmem>>, vector<2x64x128xf32>
    %182 = vector.shape_cast %181 : vector<2x64x128xf32> to vector<128x128xf32>
    %c0_70 = arith.constant 0 : index
    %c0_71 = arith.constant 0 : index
    %183 = vector.load %arg7[%c0_70, %c0_71] : memref<128x128xf32, #tpu.memory_space<vmem>>, vector<128x128xf32>
    %cst_72 = arith.constant dense<0.000000e+00> : vector<128x128xf32>
    %184 = tpu.matmul %182, %183, %cst_72 {dimension_numbers = #tpu.dot_dimension_numbers<[1], [0], [0], [1], [0, 0, 1, 1], [], []>} : vector<128x128xf32>, vector<128x128xf32>, vector<128x128xf32> -> vector<128x128xf32>
    %c0_73 = arith.constant 0 : index
    %c0_74 = arith.constant 0 : index
    %185 = vector.load %arg8[%c0_73, %c0_74] : memref<1x128xf32, #tpu.memory_space<vmem>>, vector<1x128xf32>
    %186 = vector.broadcast %185 : vector<1x128xf32> to vector<128x128xf32>
    %187 = arith.addf %184, %186 : vector<128x128xf32>
    %c0_75 = arith.constant 0 : index
    %c0_76 = arith.constant 0 : index
    %188 = vector.load %arg9[%c0_75, %c0_76] : memref<128x128xf32, #tpu.memory_space<vmem>>, vector<128x128xf32>
    %cst_77 = arith.constant dense<0.000000e+00> : vector<128x128xf32>
    %189 = tpu.matmul %187, %188, %cst_77 {dimension_numbers = #tpu.dot_dimension_numbers<[1], [0], [0], [1], [0, 0, 1, 1], [], []>} : vector<128x128xf32>, vector<128x128xf32>, vector<128x128xf32> -> vector<128x128xf32>
    %c0_78 = arith.constant 0 : index
    %c0_79 = arith.constant 0 : index
    %190 = vector.load %arg10[%c0_78, %c0_79] : memref<1x128xf32, #tpu.memory_space<vmem>>, vector<1x128xf32>
    %191 = vector.broadcast %190 : vector<1x128xf32> to vector<128x128xf32>
    %192 = arith.addf %189, %191 : vector<128x128xf32>
    %cst_80 = arith.constant 0.000000e+00 : f32
    %193 = vector.broadcast %cst_80 : f32 to vector<128x128xf32>
    %194 = arith.cmpf oge, %192, %193 : vector<128x128xf32>
    %cst_81 = arith.constant 0.00999999977 : f32
    %195 = vector.broadcast %cst_81 : f32 to vector<128x128xf32>
    %196 = arith.mulf %195, %192 : vector<128x128xf32>
    %197 = arith.select %194, %192, %196 : vector<128x128xi1>, vector<128x128xf32>
    %198 = vector.shape_cast %0 : vector<2x64x128xf32> to vector<128x128xf32>
    %199 = arith.addf %198, %197 : vector<128x128xf32>
    %cst_82 = arith.constant dense<0.000000e+00> : vector<128xf32>
    %200 = vector.multi_reduction <add>, %199, %cst_82 [1] : vector<128x128xf32> to vector<128xf32>
    %201 = vector.shape_cast %200 : vector<128xf32> to vector<128x1xf32>
    %cst_83 = arith.constant 1.280000e+02 : f32
    %202 = vector.broadcast %cst_83 : f32 to vector<128x1xf32>
    %203 = arith.divf %201, %202 : vector<128x1xf32>
    %204 = vector.broadcast %203 : vector<128x1xf32> to vector<128x128xf32>
    %205 = arith.subf %199, %204 : vector<128x128xf32>
    %206 = arith.mulf %205, %205 : vector<128x128xf32>
    %cst_84 = arith.constant dense<0.000000e+00> : vector<128xf32>
    %207 = vector.multi_reduction <add>, %206, %cst_84 [1] : vector<128x128xf32> to vector<128xf32>
    %208 = vector.shape_cast %207 : vector<128xf32> to vector<128x1xf32>
    %cst_85 = arith.constant 1.280000e+02 : f32
    %209 = vector.broadcast %cst_85 : f32 to vector<128x1xf32>
    %210 = arith.divf %208, %209 : vector<128x1xf32>
    %211 = vector.broadcast %203 : vector<128x1xf32> to vector<128x128xf32>
    %212 = arith.subf %199, %211 : vector<128x128xf32>
    %cst_86 = arith.constant 9.99999974E-6 : f32
    %213 = vector.broadcast %cst_86 : f32 to vector<128x1xf32>
    %214 = arith.addf %210, %213 : vector<128x1xf32>
    %215 = math.rsqrt %214 : vector<128x1xf32>
    %216 = vector.broadcast %215 : vector<128x1xf32> to vector<128x128xf32>
    %217 = arith.mulf %212, %216 : vector<128x128xf32>
    %c0_87 = arith.constant 0 : index
    %c0_88 = arith.constant 0 : index
    %218 = vector.load %arg11[%c0_87, %c0_88] : memref<1x128xf32, #tpu.memory_space<vmem>>, vector<1x128xf32>
    %219 = vector.broadcast %218 : vector<1x128xf32> to vector<128x128xf32>
    %220 = arith.mulf %217, %219 : vector<128x128xf32>
    %c0_89 = arith.constant 0 : index
    %c0_90 = arith.constant 0 : index
    %221 = vector.load %arg12[%c0_89, %c0_90] : memref<1x128xf32, #tpu.memory_space<vmem>>, vector<1x128xf32>
    %222 = vector.broadcast %221 : vector<1x128xf32> to vector<128x128xf32>
    %223 = arith.addf %220, %222 : vector<128x128xf32>
    %224 = vector.shape_cast %223 : vector<128x128xf32> to vector<2x64x128xf32>
    %c0_91 = arith.constant 0 : index
    %c0_92 = arith.constant 0 : index
    %c0_93 = arith.constant 0 : index
    %225 = vector.load %arg13[%c0_91, %c0_92, %c0_93] : memref<2x64x128xf32, #tpu.memory_space<vmem>>, vector<2x64x128xf32>
    tpu.vector_store %arg13[%c0_91, %c0_92, %c0_93], %224 {strides = array<i32>} : memref<2x64x128xf32, #tpu.memory_space<vmem>>, vector<2x64x128xf32>,
    return
  }
  func.func @transform_0(%arg0: i32) -> (i32, i32, i32) {
    %c0_i32 = arith.constant 0 : i32
    %c0_i32_0 = arith.constant 0 : i32
    %c0_i32_1 = arith.constant 0 : i32
    return %arg0, %c0_i32, %c0_i32_0 : i32, i32, i32
  }
  func.func @transform_1(%arg0: i32) -> (i32, i32) {
    %c0_i32 = arith.constant 0 : i32
    %c0_i32_0 = arith.constant 0 : i32
    %c0_i32_1 = arith.constant 0 : i32
    return %c0_i32, %c0_i32_0 : i32, i32
  }
  func.func @transform_2(%arg0: i32) -> (i32, i32) {
    %c0_i32 = arith.constant 0 : i32
    %c0_i32_0 = arith.constant 0 : i32
    %c0_i32_1 = arith.constant 0 : i32
    return %c0_i32, %c0_i32_0 : i32, i32
  }
  func.func @transform_3(%arg0: i32) -> (i32, i32) {
    %c0_i32 = arith.constant 0 : i32
    %c0_i32_0 = arith.constant 0 : i32
    %c0_i32_1 = arith.constant 0 : i32
    return %c0_i32, %c0_i32_0 : i32, i32
  }
  func.func @transform_4(%arg0: i32) -> (i32, i32) {
    %c0_i32 = arith.constant 0 : i32
    %c0_i32_0 = arith.constant 0 : i32
    %c0_i32_1 = arith.constant 0 : i32
    return %c0_i32, %c0_i32_0 : i32, i32
  }
  func.func @transform_5(%arg0: i32) -> (i32, i32) {
    %c0_i32 = arith.constant 0 : i32
    %c0_i32_0 = arith.constant 0 : i32
    %c0_i32_1 = arith.constant 0 : i32
    return %c0_i32, %c0_i32_0 : i32, i32
  }
  func.func @transform_6(%arg0: i32) -> (i32, i32) {
    %c0_i32 = arith.constant 0 : i32
    %c0_i32_0 = arith.constant 0 : i32
    %c0_i32_1 = arith.constant 0 : i32
    return %c0_i32, %c0_i32_0 : i32, i32
  }
  func.func @transform_7(%arg0: i32) -> (i32, i32) {
    %c0_i32 = arith.constant 0 : i32
    %c0_i32_0 = arith.constant 0 : i32
    %c0_i32_1 = arith.constant 0 : i32
    return %c0_i32, %c0_i32_0 : i32, i32
  }
  func.func @transform_8(%arg0: i32) -> (i32, i32) {
    %c0_i32 = arith.constant 0 : i32
    %c0_i32_0 = arith.constant 0 : i32
    %c0_i32_1 = arith.constant 0 : i32
    return %c0_i32, %c0_i32_0 : i32, i32
  }
  func.func @transform_9(%arg0: i32) -> (i32, i32) {
    %c0_i32 = arith.constant 0 : i32
    %c0_i32_0 = arith.constant 0 : i32
    %c0_i32_1 = arith.constant 0 : i32
    return %c0_i32, %c0_i32_0 : i32, i32
  }
  func.func @transform_10(%arg0: i32) -> (i32, i32) {
    %c0_i32 = arith.constant 0 : i32
    %c0_i32_0 = arith.constant 0 : i32
    %c0_i32_1 = arith.constant 0 : i32
    return %c0_i32, %c0_i32_0 : i32, i32
  }
  func.func @transform_11(%arg0: i32) -> (i32, i32) {
    %c0_i32 = arith.constant 0 : i32
    %c0_i32_0 = arith.constant 0 : i32
    %c0_i32_1 = arith.constant 0 : i32
    return %c0_i32, %c0_i32_0 : i32, i32
  }
  func.func @transform_12(%arg0: i32) -> (i32, i32, i32) {
    %c0_i32 = arith.constant 0 : i32
    %c0_i32_0 = arith.constant 0 : i32
    %c0_i32_1 = arith.constant 0 : i32
    return %arg0, %c0_i32, %c0_i32_0 : i32, i32, i32
  }
}

</mosaic_0001>

<llo_original>
// kernel: tpu_custom_call.1
$region0: #{tpu_custom_call.1}
  #allocation0 [shape = 'u32[]', space=smem, size = 0x4, offset = 0x4, fixed_abs, tag = 'smem constant byte address 0x4 - core index']
  #allocation1 [shape = 'u32[72,128]{1,0:T(1,128)}', space=vmem, size = 0x9000, scoped, tag = 'internal scratch']
  #allocation2 [shape = 'f32[2,64,384]{2,1,0:T(8,128)}', space=vmem, size = 0x30000, scoped, tag = 'scratch operand']
  #allocation3 [shape = 'f32[2,64,128]{2,1,0:T(8,128)}', space=vmem, size = 0x10000, scoped, tag = 'scratch operand']
  %s0 = inlined_call_operand.hbm [shape: f32[4,64,128], index: 0, kind: input, shape index: {}]
  %s1 = inlined_call_operand.hbm [shape: f32[64,128], index: 1, kind: input, shape index: {}]
  %s2 = inlined_call_operand.hbm [shape: f32[128,128], index: 2, kind: input, shape index: {}]
  %s3 = inlined_call_operand.vmem [shape: f32[1,128], index: 3, kind: input, shape index: {}]
  %s4 = inlined_call_operand.hbm [shape: f32[128,384], index: 4, kind: input, shape index: {}]
  %s5 = inlined_call_operand.vmem [shape: f32[1,384], index: 5, kind: input, shape index: {}]
  %s6 = inlined_call_operand.hbm [shape: f32[128,128], index: 6, kind: input, shape index: {}]
  %s7 = inlined_call_operand.vmem [shape: f32[1,128], index: 7, kind: input, shape index: {}]
  %s8 = inlined_call_operand.hbm [shape: f32[128,128], index: 8, kind: input, shape index: {}]
  %s9 = inlined_call_operand.vmem [shape: f32[1,128], index: 9, kind: input, shape index: {}]
  %s10 = inlined_call_operand.vmem [shape: f32[1,128], index: 10, kind: input, shape index: {}]
  %s11 = inlined_call_operand.vmem [shape: f32[1,128], index: 11, kind: input, shape index: {}]
  %s12 = inlined_call_operand.hbm [shape: f32[4,64,128], index: 12, kind: output, shape index: {}]
  %s13 = sld [smem:[#allocation0]]
  $region105: #{tpu_custom_call.1} parent=0
    _
  %s15 = ssub.s32 1, %s13
  %s16 = scalar_select 0, %s15, %s13
  $region1: #{tpu_custom_call.1} parent=0
    #allocation4 [shape = 'u8[131072]{0}', space=vmem, size = 0x20000, scoped, tag = 'input window, operand 0']
    #allocation5 [shape = 's32[2]{0}', space=sflag, size = 0x8, scoped, tag = 'scoped memory for tpu_custom_call.1']
    #allocation6 [shape = 's32[2]{0}', space=sflag, size = 0x8, scoped, tag = 'scoped memory for tpu_custom_call.1']
    #allocation7 [shape = 'u8[32768]{0}', space=vmem, size = 0x8000, scoped, tag = 'input window, operand 1, single buffered']
    #allocation8 [shape = 's32[1]{0}', space=sflag, size = 0x4, scoped, tag = 'scoped memory for tpu_custom_call.1']
    #allocation9 [shape = 'u8[65536]{0}', space=vmem, size = 0x10000, scoped, tag = 'input window, operand 2, single buffered']
    #allocation10 [shape = 'u8[196608]{0}', space=vmem, size = 0x30000, scoped, tag = 'input window, operand 4, single buffered']
    #allocation11 [shape = 's32[1]{0}', space=sflag, size = 0x4, scoped, tag = 'scoped memory for tpu_custom_call.1']
    #allocation12 [shape = 'u8[65536]{0}', space=vmem, size = 0x10000, scoped, tag = 'input window, operand 6, single buffered']
    #allocation13 [shape = 'u8[65536]{0}', space=vmem, size = 0x10000, scoped, tag = 'input window, operand 8, single buffered']
    #allocation14 [shape = 's32[1]{0}', space=sflag, size = 0x4, scoped, tag = 'scoped memory for tpu_custom_call.1']
    #allocation15 [shape = 'u8[131072]{0}', space=vmem, size = 0x20000, scoped, tag = 'output window, operand 0']
    %17 = vsyncpa [#allocation5], 0
    %s18 = scalar_lea.sflag [#allocation5], 1
    %19 = vsyncpa %s18, 0
    %20 = vsyncpa [#allocation8], 0
    %21 = vsyncpa [#allocation11], 0
    %22 = vsyncpa [#allocation14], 0
    %23 = vsyncpa [#allocation6], 0
    %s24 = scalar_lea.sflag [#allocation6], 1
    %25 = vsyncpa %s24, 0
    loop: start=0, step=1, limit=4
    $region2: #{tpu_custom_call.1} parent=1 // loop_pre_header
      _
    $region3: #{tpu_custom_call.1} parent=1 // loop_header
      %s27 = sphi 0, %s31
      %p28 = scmp.ge.s32.totalorder %s27, 4
      %s37 = sphi 0, %s39
      %s40 = sphi 0, %s37
      %s41 = sphi 0, %s40
      %s57 = sphi 0, %s41
      %s61 = sphi 0, %s61
      %s63 = sphi 0, %s61
      %s64 = sphi 0, %s63
      %s78 = sphi 0, %s64
      %s82 = sphi 0, %s82
      %s84 = sphi 0, %s82
      %s85 = sphi 0, %s84
      %s99 = sphi 0, %s85
      %s103 = sphi 0, %s103
      %s105 = sphi 0, %s103
      %s106 = sphi 0, %s105
      %s120 = sphi 0, %s106
      %s124 = sphi 0, %s124
      %s126 = sphi 0, %s124
      %s127 = sphi 0, %s126
      %s141 = sphi 0, %s127
      %s145 = sphi 0, %s145
      %s147 = sphi 0, %s145
      %s148 = sphi 0, %s147
      %s162 = sphi 0, %s148
      %s166 = sphi 0, %s166
      %s168 = sphi 0, %s166
      %s169 = sphi 0, %s168
      %s183 = sphi 0, %s169
      %s187 = sphi 0, %s187
      %s189 = sphi 0, %s187
      %s190 = sphi 0, %s189
      %s204 = sphi 0, %s190
      %s208 = sphi 0, %s208
      %s210 = sphi 0, %s208
      %s211 = sphi 0, %s210
      %s225 = sphi 0, %s211
      %s229 = sphi 0, %s229
      %s231 = sphi 0, %s229
      %s232 = sphi 0, %s231
      %s246 = sphi 0, %s232
      %s250 = sphi 0, %s250
      %s252 = sphi 0, %s250
      %s253 = sphi 0, %s252
      %s267 = sphi 0, %s253
      %s271 = sphi 0, %s271
      %s273 = sphi 0, %s271
      %s274 = sphi 0, %s273
      %s288 = sphi 0, %s274
      %s294 = sphi 0, %s296
      %s297 = sphi 0, %s294
      %s298 = sphi 0, %s297
      %s314 = sphi 0, %s298
    $region4: #{tpu_custom_call.1} parent=1 // loop_header_branch
      %30 = sbr.rel (%p28) target = $region8
    $region5: #{tpu_custom_call.1} parent=1 // loop_body
      %s32 = ssub.s32 %s27, 1
      %s33 = ssub.s32 %s27, 2
      %s34 = sadd.s32 %s27, 1
      %s35 = ssub.s32 %s27, %s34
      %p36 = scmp.eq.s32.totalorder %s35, 0
      %s38 = sadd.s32 %s37, 1
      %s39 = scalar_select %p36, %s37, %s38
      %p42 = pneg %p36
      %p43 = scmp.eq.s32.totalorder %s27, 1
      %p44 = por %p42, %p43
      %p45 = scmp.ne.s32.totalorder %s37, %s40
      %p46 = scmp.eq.s32.totalorder %s27, 0
      %p47 = por %p45, %p46
      %p48 = scmp.ne.s32.totalorder %s37, %s40
      %p49 = scmp.eq.s32.totalorder %s32, 1
      %p50 = por %p48, %p49
      %p51 = scmp.ne.s32.totalorder %s40, %s41
      %p52 = scmp.eq.s32.totalorder %s32, 0
      %p53 = por %p51, %p52
      %p54 = scmp.ne.s32.totalorder %s40, %s41
      %p55 = scmp.eq.s32.totalorder %s33, 1
      %p56 = por %p54, %p55
      %p58 = scmp.ne.s32.totalorder %s41, %s57
      %p59 = scmp.eq.s32.totalorder %s33, 0
      %p60 = por %p58, %p59
      %s62 = sadd.s32 %s61, 1
      %p65 = scmp.eq.s32.totalorder %s27, 1
      %p66 = scmp.ne.s32.totalorder %s61, %s63
      %p67 = scmp.eq.s32.totalorder %s27, 0
      %p68 = por %p66, %p67
      %p69 = scmp.ne.s32.totalorder %s61, %s63
      %p70 = scmp.eq.s32.totalorder %s32, 1
      %p71 = por %p69, %p70
      %p72 = scmp.ne.s32.totalorder %s63, %s64
      %p73 = scmp.eq.s32.totalorder %s32, 0
      %p74 = por %p72, %p73
      %p75 = scmp.ne.s32.totalorder %s63, %s64
      %p76 = scmp.eq.s32.totalorder %s33, 1
      %p77 = por %p75, %p76
      %p79 = scmp.ne.s32.totalorder %s64, %s78
      %p80 = scmp.eq.s32.totalorder %s33, 0
      %p81 = por %p79, %p80
      %s83 = sadd.s32 %s82, 1
      %p86 = scmp.eq.s32.totalorder %s27, 1
      %p87 = scmp.ne.s32.totalorder %s82, %s84
      %p88 = scmp.eq.s32.totalorder %s27, 0
      %p89 = por %p87, %p88
      %p90 = scmp.ne.s32.totalorder %s82, %s84
      %p91 = scmp.eq.s32.totalorder %s32, 1
      %p92 = por %p90, %p91
      %p93 = scmp.ne.s32.totalorder %s84, %s85
      %p94 = scmp.eq.s32.totalorder %s32, 0
      %p95 = por %p93, %p94
      %p96 = scmp.ne.s32.totalorder %s84, %s85
      %p97 = scmp.eq.s32.totalorder %s33, 1
      %p98 = por %p96, %p97
      %p100 = scmp.ne.s32.totalorder %s85, %s99
      %p101 = scmp.eq.s32.totalorder %s33, 0
      %p102 = por %p100, %p101
      %s104 = sadd.s32 %s103, 1
      %p107 = scmp.eq.s32.totalorder %s27, 1
      %p108 = scmp.ne.s32.totalorder %s103, %s105
      %p109 = scmp.eq.s32.totalorder %s27, 0
      %p110 = por %p108, %p109
      %p111 = scmp.ne.s32.totalorder %s103, %s105
      %p112 = scmp.eq.s32.totalorder %s32, 1
      %p113 = por %p111, %p112
      %p114 = scmp.ne.s32.totalorder %s105, %s106
      %p115 = scmp.eq.s32.totalorder %s32, 0
      %p116 = por %p114, %p115
      %p117 = scmp.ne.s32.totalorder %s105, %s106
      %p118 = scmp.eq.s32.totalorder %s33, 1
      %p119 = por %p117, %p118
      %p121 = scmp.ne.s32.totalorder %s106, %s120
      %p122 = scmp.eq.s32.totalorder %s33, 0
      %p123 = por %p121, %p122
      %s125 = sadd.s32 %s124, 1
      %p128 = scmp.eq.s32.totalorder %s27, 1
      %p129 = scmp.ne.s32.totalorder %s124, %s126
      %p130 = scmp.eq.s32.totalorder %s27, 0
      %p131 = por %p129, %p130
      %p132 = scmp.ne.s32.totalorder %s124, %s126
      %p133 = scmp.eq.s32.totalorder %s32, 1
      %p134 = por %p132, %p133
      %p135 = scmp.ne.s32.totalorder %s126, %s127
      %p136 = scmp.eq.s32.totalorder %s32, 0
      %p137 = por %p135, %p136
      %p138 = scmp.ne.s32.totalorder %s126, %s127
      %p139 = scmp.eq.s32.totalorder %s33, 1
      %p140 = por %p138, %p139
      %p142 = scmp.ne.s32.totalorder %s127, %s141
      %p143 = scmp.eq.s32.totalorder %s33, 0
      %p144 = por %p142, %p143
      %s146 = sadd.s32 %s145, 1
      %p149 = scmp.eq.s32.totalorder %s27, 1
      %p150 = scmp.ne.s32.totalorder %s145, %s147
      %p151 = scmp.eq.s32.totalorder %s27, 0
      %p152 = por %p150, %p151
      %p153 = scmp.ne.s32.totalorder %s145, %s147
      %p154 = scmp.eq.s32.totalorder %s32, 1
      %p155 = por %p153, %p154
      %p156 = scmp.ne.s32.totalorder %s147, %s148
      %p157 = scmp.eq.s32.totalorder %s32, 0
      %p158 = por %p156, %p157
      %p159 = scmp.ne.s32.totalorder %s147, %s148
      %p160 = scmp.eq.s32.totalorder %s33, 1
      %p161 = por %p159, %p160
      %p163 = scmp.ne.s32.totalorder %s148, %s162
      %p164 = scmp.eq.s32.totalorder %s33, 0
      %p165 = por %p163, %p164
      %s167 = sadd.s32 %s166, 1
      %p170 = scmp.eq.s32.totalorder %s27, 1
      %p171 = scmp.ne.s32.totalorder %s166, %s168
      %p172 = scmp.eq.s32.totalorder %s27, 0
      %p173 = por %p171, %p172
      %p174 = scmp.ne.s32.totalorder %s166, %s168
      %p175 = scmp.eq.s32.totalorder %s32, 1
      %p176 = por %p174, %p175
      %p177 = scmp.ne.s32.totalorder %s168, %s169
      %p178 = scmp.eq.s32.totalorder %s32, 0
      %p179 = por %p177, %p178
      %p180 = scmp.ne.s32.totalorder %s168, %s169
      %p181 = scmp.eq.s32.totalorder %s33, 1
      %p182 = por %p180, %p181
      %p184 = scmp.ne.s32.totalorder %s169, %s183
      %p185 = scmp.eq.s32.totalorder %s33, 0
      %p186 = por %p184, %p185
      %s188 = sadd.s32 %s187, 1
      %p191 = scmp.eq.s32.totalorder %s27, 1
      %p192 = scmp.ne.s32.totalorder %s187, %s189
      %p193 = scmp.eq.s32.totalorder %s27, 0
      %p194 = por %p192, %p193
      %p195 = scmp.ne.s32.totalorder %s187, %s189
      %p196 = scmp.eq.s32.totalorder %s32, 1
      %p197 = por %p195, %p196
      %p198 = scmp.ne.s32.totalorder %s189, %s190
      %p199 = scmp.eq.s32.totalorder %s32, 0
      %p200 = por %p198, %p199
      %p201 = scmp.ne.s32.totalorder %s189, %s190
      %p202 = scmp.eq.s32.totalorder %s33, 1
      %p203 = por %p201, %p202
      %p205 = scmp.ne.s32.totalorder %s190, %s204
      %p206 = scmp.eq.s32.totalorder %s33, 0
      %p207 = por %p205, %p206
      %s209 = sadd.s32 %s208, 1
      %p212 = scmp.eq.s32.totalorder %s27, 1
      %p213 = scmp.ne.s32.totalorder %s208, %s210
      %p214 = scmp.eq.s32.totalorder %s27, 0
      %p215 = por %p213, %p214
      %p216 = scmp.ne.s32.totalorder %s208, %s210
      %p217 = scmp.eq.s32.totalorder %s32, 1
      %p218 = por %p216, %p217
      %p219 = scmp.ne.s32.totalorder %s210, %s211
      %p220 = scmp.eq.s32.totalorder %s32, 0
      %p221 = por %p219, %p220
      %p222 = scmp.ne.s32.totalorder %s210, %s211
      %p223 = scmp.eq.s32.totalorder %s33, 1
      %p224 = por %p222, %p223
      %p226 = scmp.ne.s32.totalorder %s211, %s225
      %p227 = scmp.eq.s32.totalorder %s33, 0
      %p228 = por %p226, %p227
      %s230 = sadd.s32 %s229, 1
      %p233 = scmp.eq.s32.totalorder %s27, 1
      %p234 = scmp.ne.s32.totalorder %s229, %s231
      %p235 = scmp.eq.s32.totalorder %s27, 0
      %p236 = por %p234, %p235
      %p237 = scmp.ne.s32.totalorder %s229, %s231
      %p238 = scmp.eq.s32.totalorder %s32, 1
      %p239 = por %p237, %p238
      %p240 = scmp.ne.s32.totalorder %s231, %s232
      %p241 = scmp.eq.s32.totalorder %s32, 0
      %p242 = por %p240, %p241
      %p243 = scmp.ne.s32.totalorder %s231, %s232
      %p244 = scmp.eq.s32.totalorder %s33, 1
      %p245 = por %p243, %p244
      %p247 = scmp.ne.s32.totalorder %s232, %s246
      %p248 = scmp.eq.s32.totalorder %s33, 0
      %p249 = por %p247, %p248
      %s251 = sadd.s32 %s250, 1
      %p254 = scmp.eq.s32.totalorder %s27, 1
      %p255 = scmp.ne.s32.totalorder %s250, %s252
      %p256 = scmp.eq.s32.totalorder %s27, 0
      %p257 = por %p255, %p256
      %p258 = scmp.ne.s32.totalorder %s250, %s252
      %p259 = scmp.eq.s32.totalorder %s32, 1
      %p260 = por %p258, %p259
      %p261 = scmp.ne.s32.totalorder %s252, %s253
      %p262 = scmp.eq.s32.totalorder %s32, 0
      %p263 = por %p261, %p262
      %p264 = scmp.ne.s32.totalorder %s252, %s253
      %p265 = scmp.eq.s32.totalorder %s33, 1
      %p266 = por %p264, %p265
      %p268 = scmp.ne.s32.totalorder %s253, %s267
      %p269 = scmp.eq.s32.totalorder %s33, 0
      %p270 = por %p268, %p269
      %s272 = sadd.s32 %s271, 1
      %p275 = scmp.eq.s32.totalorder %s27, 1
      %p276 = scmp.ne.s32.totalorder %s271, %s273
      %p277 = scmp.eq.s32.totalorder %s27, 0
      %p278 = por %p276, %p277
      %p279 = scmp.ne.s32.totalorder %s271, %s273
      %p280 = scmp.eq.s32.totalorder %s32, 1
      %p281 = por %p279, %p280
      %p282 = scmp.ne.s32.totalorder %s273, %s274
      %p283 = scmp.eq.s32.totalorder %s32, 0
      %p284 = por %p282, %p283
      %p285 = scmp.ne.s32.totalorder %s273, %s274
      %p286 = scmp.eq.s32.totalorder %s33, 1
      %p287 = por %p285, %p286
      %p289 = scmp.ne.s32.totalorder %s274, %s288
      %p290 = scmp.eq.s32.totalorder %s33, 0
      %p291 = por %p289, %p290
      %s292 = ssub.s32 %s27, %s34
      %p293 = scmp.eq.s32.totalorder %s292, 0
      %s295 = sadd.s32 %s294, 1
      %s296 = scalar_select %p293, %s294, %s295
      %p299 = pneg %p293
      %p300 = scmp.eq.s32.totalorder %s27, 1
      %p301 = por %p299, %p300
      %p302 = scmp.ne.s32.totalorder %s294, %s297
      %p303 = scmp.eq.s32.totalorder %s27, 0
      %p304 = por %p302, %p303
      %p305 = scmp.ne.s32.totalorder %s294, %s297
      %p306 = scmp.eq.s32.totalorder %s32, 1
      %p307 = por %p305, %p306
      %p308 = scmp.ne.s32.totalorder %s297, %s298
      %p309 = scmp.eq.s32.totalorder %s32, 0
      %p310 = por %p308, %p309
      %p311 = scmp.ne.s32.totalorder %s297, %s298
      %p312 = scmp.eq.s32.totalorder %s33, 1
      %p313 = por %p311, %p312
      %p315 = scmp.ne.s32.totalorder %s298, %s314
      %p316 = scmp.eq.s32.totalorder %s33, 0
      %p317 = por %p315, %p316
      %p318 = scmp.le.s32.totalorder 1, %s27
      %p319 = scmp.lt.s32.totalorder %s27, 3
      %p320 = pnand %p318, %p319
      %p321 = pneg %p320
      // Predicated region
      $region9: #{tpu_custom_call.1} parent=5 // pred_check
        _
      $region10: #{tpu_custom_call.1} parent=5 // pred_check_branch
        %323 = sbr.rel (%p320) target = $region12
      $region11: #{tpu_custom_call.1} parent=5 // pred_region
        %s324 = ssub.s32 %s27, 1
        // Predicated region
        $region13: #{tpu_custom_call.1} parent=11 // pred_check
          %p325 = pneg %p74
        $region14: #{tpu_custom_call.1} parent=11 // pred_check_branch
          %327 = sbr.rel (%p325) target = $region16
        $region15: #{tpu_custom_call.1} parent=11 // pred_region
          %329 = vsyncadd [#allocation8], 0
          %s330 = sshll.u32 %s1, 4
          %s331 = int_to_ptr.hbm [resolvable:$true] %s330
          %s332 = sshll.u32 [#allocation7], 4
          %s333 = int_to_ptr.vmem [resolvable:$true] %s332
          %338 = dma.hbm_to_vmem [thread:$0]  %s331, 1024, %s333, [#allocation8], 128, 128, 8
        $region16: #{tpu_custom_call.1} parent=11 // pred_fallthru
          _
        // Predicated region
        $region17: #{tpu_custom_call.1} parent=11 // pred_check
          %p339 = pneg %p95
        $region18: #{tpu_custom_call.1} parent=11 // pred_check_branch
          %341 = sbr.rel (%p339) target = $region20
        $region19: #{tpu_custom_call.1} parent=11 // pred_region
          %343 = vsyncadd [#allocation8], 0
          %s344 = sshll.u32 %s2, 4
          %s345 = int_to_ptr.hbm [resolvable:$true] %s344
          %s346 = sshll.u32 [#allocation9], 4
          %s347 = int_to_ptr.vmem [resolvable:$true] %s346
          %352 = dma.hbm_to_vmem [thread:$0]  %s345, 2048, %s347, [#allocation8], 128, 128, 8
        $region20: #{tpu_custom_call.1} parent=11 // pred_fallthru
          _
        // Predicated region
        $region21: #{tpu_custom_call.1} parent=11 // pred_check
          %p353 = pneg %p116
        $region22: #{tpu_custom_call.1} parent=11 // pred_check_branch
          %355 = sbr.rel (%p353) target = $region24
        $region23: #{tpu_custom_call.1} parent=11 // pred_region
          _
        $region24: #{tpu_custom_call.1} parent=11 // pred_fallthru
          _
        // Predicated region
        $region25: #{tpu_custom_call.1} parent=11 // pred_check
          %p356 = pneg %p137
        $region26: #{tpu_custom_call.1} parent=11 // pred_check_branch
          %358 = sbr.rel (%p356) target = $region28
        $region27: #{tpu_custom_call.1} parent=11 // pred_region
          %360 = vsyncadd [#allocation11], 0
          %s361 = sshll.u32 %s4, 4
          %s362 = int_to_ptr.hbm [resolvable:$true] %s361
          %s363 = sshll.u32 [#allocation10], 4
          %s364 = int_to_ptr.vmem [resolvable:$true] %s363
          %369 = dma.hbm_to_vmem [thread:$0]  %s362, 6144, %s364, [#allocation11], 384, 384, 24
        $region28: #{tpu_custom_call.1} parent=11 // pred_fallthru
          _
        // Predicated region
        $region29: #{tpu_custom_call.1} parent=11 // pred_check
          %p370 = pneg %p158
        $region30: #{tpu_custom_call.1} parent=11 // pred_check_branch
          %372 = sbr.rel (%p370) target = $region32
        $region31: #{tpu_custom_call.1} parent=11 // pred_region
          _
        $region32: #{tpu_custom_call.1} parent=11 // pred_fallthru
          _
        // Predicated region
        $region33: #{tpu_custom_call.1} parent=11 // pred_check
          %p373 = pneg %p179
        $region34: #{tpu_custom_call.1} parent=11 // pred_check_branch
          %375 = sbr.rel (%p373) target = $region36
        $region35: #{tpu_custom_call.1} parent=11 // pred_region
          %377 = vsyncadd [#allocation11], 0
          %s378 = sshll.u32 %s6, 4
          %s379 = int_to_ptr.hbm [resolvable:$true] %s378
          %s380 = sshll.u32 [#allocation12], 4
          %s381 = int_to_ptr.vmem [resolvable:$true] %s380
          %386 = dma.hbm_to_vmem [thread:$0]  %s379, 2048, %s381, [#allocation11], 128, 128, 8
        $region36: #{tpu_custom_call.1} parent=11 // pred_fallthru
          _
        // Predicated region
        $region37: #{tpu_custom_call.1} parent=11 // pred_check
          %p387 = pneg %p200
        $region38: #{tpu_custom_call.1} parent=11 // pred_check_branch
          %389 = sbr.rel (%p387) target = $region40
        $region39: #{tpu_custom_call.1} parent=11 // pred_region
          _
        $region40: #{tpu_custom_call.1} parent=11 // pred_fallthru
          _
        // Predicated region
        $region41: #{tpu_custom_call.1} parent=11 // pred_check
          %p390 = pneg %p221
        $region42: #{tpu_custom_call.1} parent=11 // pred_check_branch
          %392 = sbr.rel (%p390) target = $region44
        $region43: #{tpu_custom_call.1} parent=11 // pred_region
          %394 = vsyncadd [#allocation14], 0
          %s395 = sshll.u32 %s8, 4
          %s396 = int_to_ptr.hbm [resolvable:$true] %s395
          %s397 = sshll.u32 [#allocation13], 4
          %s398 = int_to_ptr.vmem [resolvable:$true] %s397
          %403 = dma.hbm_to_vmem [thread:$0]  %s396, 2048, %s398, [#allocation14], 128, 128, 8
        $region44: #{tpu_custom_call.1} parent=11 // pred_fallthru
          _
        // Predicated region
        $region45: #{tpu_custom_call.1} parent=11 // pred_check
          %p404 = pneg %p242
        $region46: #{tpu_custom_call.1} parent=11 // pred_check_branch
          %406 = sbr.rel (%p404) target = $region48
        $region47: #{tpu_custom_call.1} parent=11 // pred_region
          _
        $region48: #{tpu_custom_call.1} parent=11 // pred_fallthru
          _
        // Predicated region
        $region49: #{tpu_custom_call.1} parent=11 // pred_check
          %p407 = pneg %p263
        $region50: #{tpu_custom_call.1} parent=11 // pred_check_branch
          %409 = sbr.rel (%p407) target = $region52
        $region51: #{tpu_custom_call.1} parent=11 // pred_region
          _
        $region52: #{tpu_custom_call.1} parent=11 // pred_fallthru
          _
        // Predicated region
        $region53: #{tpu_custom_call.1} parent=11 // pred_check
          %p410 = pneg %p284
        $region54: #{tpu_custom_call.1} parent=11 // pred_check_branch
          %412 = sbr.rel (%p410) target = $region56
        $region55: #{tpu_custom_call.1} parent=11 // pred_region
          _
        $region56: #{tpu_custom_call.1} parent=11 // pred_fallthru
          _
      $region12: #{tpu_custom_call.1} parent=5 // pred_fallthru
        _
      %p413 = scmp.lt.s32.totalorder %s27, 2
      // Predicated region
      $region57: #{tpu_custom_call.1} parent=5 // pred_check
        %p414 = pneg %p413
      $region58: #{tpu_custom_call.1} parent=5 // pred_check_branch
        %416 = sbr.rel (%p414) target = $region60
      $region59: #{tpu_custom_call.1} parent=5 // pred_region
        // Predicated region
        $region61: #{tpu_custom_call.1} parent=59 // pred_check
          %p417 = pneg %p47
        $region62: #{tpu_custom_call.1} parent=59 // pred_check_branch
          %419 = sbr.rel (%p417) target = $region64
        $region63: #{tpu_custom_call.1} parent=59 // pred_region
          %s420 = sand.u32 %s37, 1
          %s421 = scalar_lea.sflag [#allocation5], %s420
          %s422 = sand.u32 %s37, 1
          %s423 = smul.addr %s422, 128
          %s424 = scalar_lea.vmem [#allocation4], %s423
          %s425 = smul.u32 2, %s27
          %427 = vsyncadd %s421, 0
          %s428 = smul.addr %s425, 8
          %s429 = smul.addr %s428, 8
          %s430 = scalar_lea.hbm %s0, %s429
          %s431 = sshll.u32 %s430, 4
          %s432 = int_to_ptr.hbm [resolvable:$true] %s431
          %s433 = sshll.u32 %s424, 4
          %s434 = int_to_ptr.vmem [resolvable:$true] %s433
          %439 = dma.hbm_to_vmem [thread:$0]  %s432, 2048, %s434, %s421, 128, 128, 8
        $region64: #{tpu_custom_call.1} parent=59 // pred_fallthru
          _
      $region60: #{tpu_custom_call.1} parent=5 // pred_fallthru
        _
      %p440 = scmp.le.s32.totalorder 1, %s27
      %p441 = scmp.lt.s32.totalorder %s27, 3
      %p442 = pnand %p440, %p441
      %p443 = pneg %p442
      // Predicated region
      $region65: #{tpu_custom_call.1} parent=5 // pred_check
        _
      $region66: #{tpu_custom_call.1} parent=5 // pred_check_branch
        %445 = sbr.rel (%p442) target = $region68
      $region67: #{tpu_custom_call.1} parent=5 // pred_region
        %s446 = ssub.s32 %s27, 1
        %s447 = sand.u32 %s40, 1
        %s448 = scalar_lea.sflag [#allocation5], %s447
        %s449 = sand.u32 %s40, 1
        %s450 = smul.addr %s449, 128
        %s451 = scalar_lea.vmem [#allocation4], %s450
        // Predicated region
        $region69: #{tpu_custom_call.1} parent=67 // pred_check
          %p452 = pneg %p53
        $region70: #{tpu_custom_call.1} parent=67 // pred_check_branch
          %454 = sbr.rel (%p452) target = $region72
        $region71: #{tpu_custom_call.1} parent=67 // pred_region
          %456 = dma.done %s448, 2048
        $region72: #{tpu_custom_call.1} parent=67 // pred_fallthru
          _
        // Predicated region
        $region73: #{tpu_custom_call.1} parent=67 // pred_check
          %p457 = pneg %p74
        $region74: #{tpu_custom_call.1} parent=67 // pred_check_branch
          %459 = sbr.rel (%p457) target = $region76
        $region75: #{tpu_custom_call.1} parent=67 // pred_region
          %461 = dma.done [#allocation8], 1024
        $region76: #{tpu_custom_call.1} parent=67 // pred_fallthru
          _
        // Predicated region
        $region77: #{tpu_custom_call.1} parent=67 // pred_check
          %p462 = pneg %p95
        $region78: #{tpu_custom_call.1} parent=67 // pred_check_branch
          %464 = sbr.rel (%p462) target = $region80
        $region79: #{tpu_custom_call.1} parent=67 // pred_region
          %466 = dma.done [#allocation8], 2048
        $region80: #{tpu_custom_call.1} parent=67 // pred_fallthru
          _
        // Predicated region
        $region81: #{tpu_custom_call.1} parent=67 // pred_check
          %p467 = pneg %p137
        $region82: #{tpu_custom_call.1} parent=67 // pred_check_branch
          %469 = sbr.rel (%p467) target = $region84
        $region83: #{tpu_custom_call.1} parent=67 // pred_region
          %471 = dma.done [#allocation11], 6144
        $region84: #{tpu_custom_call.1} parent=67 // pred_fallthru
          _
        // Predicated region
        $region85: #{tpu_custom_call.1} parent=67 // pred_check
          %p472 = pneg %p179
        $region86: #{tpu_custom_call.1} parent=67 // pred_check_branch
          %474 = sbr.rel (%p472) target = $region88
        $region87: #{tpu_custom_call.1} parent=67 // pred_region
          %476 = dma.done [#allocation11], 2048
        $region88: #{tpu_custom_call.1} parent=67 // pred_fallthru
          _
        // Predicated region
        $region89: #{tpu_custom_call.1} parent=67 // pred_check
          %p477 = pneg %p221
        $region90: #{tpu_custom_call.1} parent=67 // pred_check_branch
          %479 = sbr.rel (%p477) target = $region92
        $region91: #{tpu_custom_call.1} parent=67 // pred_region
          %481 = dma.done [#allocation14], 2048
        $region92: #{tpu_custom_call.1} parent=67 // pred_fallthru
          _
        %s482 = sand.u32 %s40, 1
        %s483 = scalar_lea.sflag [#allocation5], %s482
        %s484 = sand.u32 %s40, 1
        %s485 = smul.addr %s484, 128
        %s486 = scalar_lea.vmem [#allocation4], %s485
        %p487 = pneg %p53
        %p488 = pneg %p50
        %p489 = pneg %p74
        %p490 = pneg %p71
        %p491 = pneg %p95
        %p492 = pneg %p92
        %p493 = pneg %p116
        %p494 = pneg %p113
        %p495 = pneg %p137
        %p496 = pneg %p134
        %p497 = pneg %p158
        %p498 = pneg %p155
        %p499 = pneg %p179
        %p500 = pneg %p176
        %p501 = pneg %p200
        %p502 = pneg %p197
        %p503 = pneg %p221
        %p504 = pneg %p218
        %p505 = pneg %p242
        %p506 = pneg %p239
        %p507 = pneg %p263
        %p508 = pneg %p260
        %p509 = pneg %p284
        %p510 = pneg %p281
        %p511 = pneg %p310
        %p512 = pneg %p307
        %s513 = sand.u32 %s297, 1
        %s514 = scalar_lea.sflag [#allocation6], %s513
        %s515 = sand.u32 %s297, 1
        %s516 = smul.addr %s515, 128
        %s517 = scalar_lea.vmem [#allocation15], %s516
        %s518 = smul.u32 2, %s32
        %s519 = smul.u32 2, %s32
        %v520 = vld [vmem:[%s451] sm:$0xff]
        %v521 = vld [vmem:[%s451 + $0x8] sm:$0xff]
        %v522 = vld [vmem:[%s451 + $0x10] sm:$0xff]
        %v523 = vld [vmem:[%s451 + $0x18] sm:$0xff]
        %v524 = vld [vmem:[%s451 + $0x20] sm:$0xff]
        %v525 = vld [vmem:[%s451 + $0x28] sm:$0xff]
        %v526 = vld [vmem:[%s451 + $0x30] sm:$0xff]
        %v527 = vld [vmem:[%s451 + $0x38] sm:$0xff]
        %v528 = vld [vmem:[%s451 + $0x40] sm:$0xff]
        %v529 = vld [vmem:[%s451 + $0x48] sm:$0xff]
        %v530 = vld [vmem:[%s451 + $0x50] sm:$0xff]
        %v531 = vld [vmem:[%s451 + $0x58] sm:$0xff]
        %v532 = vld [vmem:[%s451 + $0x60] sm:$0xff]
        %v533 = vld [vmem:[%s451 + $0x68] sm:$0xff]
        %v534 = vld [vmem:[%s451 + $0x70] sm:$0xff]
        %v535 = vld [vmem:[%s451 + $0x78] sm:$0xff]
        %v536 = vld [vmem:[#allocation7] sm:$0xff]
        %v537 = vld [vmem:[#allocation7 + $0x8] sm:$0xff]
        %v538 = vld [vmem:[#allocation7 + $0x10] sm:$0xff]
        %v539 = vld [vmem:[#allocation7 + $0x18] sm:$0xff]
        %v540 = vld [vmem:[#allocation7 + $0x20] sm:$0xff]
        %v541 = vld [vmem:[#allocation7 + $0x28] sm:$0xff]
        %v542 = vld [vmem:[#allocation7 + $0x30] sm:$0xff]
        %v543 = vld [vmem:[#allocation7 + $0x38] sm:$0xff]
        %v544 = vadd.f32 %v520, %v536
        %v545 = vadd.f32 %v521, %v537
        %v546 = vadd.f32 %v522, %v538
        %v547 = vadd.f32 %v523, %v539
        %v548 = vadd.f32 %v524, %v540
        %v549 = vadd.f32 %v525, %v541
        %v550 = vadd.f32 %v526, %v542
        %v551 = vadd.f32 %v527, %v543
        %v552 = vadd.f32 %v528, %v536
        %v553 = vadd.f32 %v529, %v537
        %v554 = vadd.f32 %v530, %v538
        %v555 = vadd.f32 %v531, %v539
        %v556 = vadd.f32 %v532, %v540
        %v557 = vadd.f32 %v533, %v541
        %v558 = vadd.f32 %v534, %v542
        %v559 = vadd.f32 %v535, %v543
        %v560 = vld [vmem:[#allocation9] sm:$0xff]
        %v561 = vld [vmem:[#allocation9 + $0x8] sm:$0xff]
        %v562 = vld [vmem:[#allocation9 + $0x10] sm:$0xff]
        %v563 = vld [vmem:[#allocation9 + $0x18] sm:$0xff]
        %v564 = vld [vmem:[#allocation9 + $0x20] sm:$0xff]
        %v565 = vld [vmem:[#allocation9 + $0x28] sm:$0xff]
        %v566 = vld [vmem:[#allocation9 + $0x30] sm:$0xff]
        %v567 = vld [vmem:[#allocation9 + $0x38] sm:$0xff]
        %v568 = vld [vmem:[#allocation9 + $0x40] sm:$0xff]
        %v569 = vld [vmem:[#allocation9 + $0x48] sm:$0xff]
        %v570 = vld [vmem:[#allocation9 + $0x50] sm:$0xff]
        %v571 = vld [vmem:[#allocation9 + $0x58] sm:$0xff]
        %v572 = vld [vmem:[#allocation9 + $0x60] sm:$0xff]
        %v573 = vld [vmem:[#allocation9 + $0x68] sm:$0xff]
        %v574 = vld [vmem:[#allocation9 + $0x70] sm:$0xff]
        %v575 = vld [vmem:[#allocation9 + $0x78] sm:$0xff]
        %v576 = vld [vmem:[%s3] sm:$0x1]
        %v578 = vperm.slane %v576, 0
        %580 = vmatpush.msra.mxu0 %v575
        %581 = vmatpush.msra.mxu0 %v574
        %582 = vmatpush.msra.mxu0 %v573
        %583 = vmatpush.msra.mxu0 %v572
        %584 = vmatpush.msra.mxu0 %v571
        %585 = vmatpush.msra.mxu0 %v570
        %586 = vmatpush.msra.mxu0 %v569
        %587 = vmatpush.msra.mxu0 %v568
        %588 = vmatpush.msra.mxu0 %v567
        %589 = vmatpush.msra.mxu0 %v566
        %590 = vmatpush.msra.mxu0 %v565
        %591 = vmatpush.msra.mxu0 %v564
        %592 = vmatpush.msra.mxu0 %v563
        %593 = vmatpush.msra.mxu0 %v562
        %594 = vmatpush.msra.mxu0 %v561
        %595 = vmatpush.msra.mxu0 %v560
        %596 = vmatmul.f32.gmra.mxu0 %v544
        %v597 = vpop.f32.mrf.mxu0
        %v598 = vadd.f32 %v578, %v597
        %599 = vmatmul.f32.gmra.mxu0 %v545
        %v600 = vpop.f32.mrf.mxu0
        %v601 = vadd.f32 %v578, %v600
        %602 = vmatmul.f32.gmra.mxu0 %v546
        %v603 = vpop.f32.mrf.mxu0
        %v604 = vadd.f32 %v578, %v603
        %605 = vmatmul.f32.gmra.mxu0 %v547
        %v606 = vpop.f32.mrf.mxu0
        %v607 = vadd.f32 %v578, %v606
        %608 = vmatmul.f32.gmra.mxu0 %v548
        %v609 = vpop.f32.mrf.mxu0
        %v610 = vadd.f32 %v578, %v609
        %611 = vmatmul.f32.gmra.mxu0 %v549
        %v612 = vpop.f32.mrf.mxu0
        %v613 = vadd.f32 %v578, %v612
        %614 = vmatmul.f32.gmra.mxu0 %v550
        %v615 = vpop.f32.mrf.mxu0
        %v616 = vadd.f32 %v578, %v615
        %617 = vmatmul.f32.gmra.mxu0 %v551
        %v618 = vpop.f32.mrf.mxu0
        %v619 = vadd.f32 %v578, %v618
        %620 = vmatmul.f32.gmra.mxu0 %v552
        %v621 = vpop.f32.mrf.mxu0
        %v622 = vadd.f32 %v578, %v621
        %623 = vmatmul.f32.gmra.mxu0 %v553
        %v624 = vpop.f32.mrf.mxu0
        %v625 = vadd.f32 %v578, %v624
        %626 = vmatmul.f32.gmra.mxu0 %v554
        %v627 = vpop.f32.mrf.mxu0
        %v628 = vadd.f32 %v578, %v627
        %629 = vmatmul.f32.gmra.mxu0 %v555
        %v630 = vpop.f32.mrf.mxu0
        %v631 = vadd.f32 %v578, %v630
        %632 = vmatmul.f32.gmra.mxu0 %v556
        %v633 = vpop.f32.mrf.mxu0
        %v634 = vadd.f32 %v578, %v633
        %635 = vmatmul.f32.gmra.mxu0 %v557
        %v636 = vpop.f32.mrf.mxu0
        %v637 = vadd.f32 %v578, %v636
        %638 = vmatmul.f32.gmra.mxu0 %v558
        %v639 = vpop.f32.mrf.mxu0
        %v640 = vadd.f32 %v578, %v639
        %641 = vmatmul.f32.gmra.mxu0 %v559
        %v642 = vpop.f32.mrf.mxu0
        %v643 = vadd.f32 %v578, %v642
        %644 = vdwg.mxu0
        %vm645 = vcmp.ge.f32.partialorder %v598, 0.0
        %vm646 = vcmp.ge.f32.partialorder %v601, 0.0
        %vm647 = vcmp.ge.f32.partialorder %v604, 0.0
        %vm648 = vcmp.ge.f32.partialorder %v607, 0.0
        %vm649 = vcmp.ge.f32.partialorder %v610, 0.0
        %vm650 = vcmp.ge.f32.partialorder %v613, 0.0
        %vm651 = vcmp.ge.f32.partialorder %v616, 0.0
        %vm652 = vcmp.ge.f32.partialorder %v619, 0.0
        %vm653 = vcmp.ge.f32.partialorder %v622, 0.0
        %vm654 = vcmp.ge.f32.partialorder %v625, 0.0
        %vm655 = vcmp.ge.f32.partialorder %v628, 0.0
        %vm656 = vcmp.ge.f32.partialorder %v631, 0.0
        %vm657 = vcmp.ge.f32.partialorder %v634, 0.0
        %vm658 = vcmp.ge.f32.partialorder %v637, 0.0
        %vm659 = vcmp.ge.f32.partialorder %v640, 0.0
        %vm660 = vcmp.ge.f32.partialorder %v643, 0.0
        %v661 = vmul.f32 %v598, 0.01
        %v662 = vmul.f32 %v601, 0.01
        %v663 = vmul.f32 %v604, 0.01
        %v664 = vmul.f32 %v607, 0.01
        %v665 = vmul.f32 %v610, 0.01
        %v666 = vmul.f32 %v613, 0.01
        %v667 = vmul.f32 %v616, 0.01
        %v668 = vmul.f32 %v619, 0.01
        %v669 = vmul.f32 %v622, 0.01
        %v670 = vmul.f32 %v625, 0.01
        %v671 = vmul.f32 %v628, 0.01
        %v672 = vmul.f32 %v631, 0.01
        %v673 = vmul.f32 %v634, 0.01
        %v674 = vmul.f32 %v637, 0.01
        %v675 = vmul.f32 %v640, 0.01
        %v676 = vmul.f32 %v643, 0.01
        %v677 = vsel %vm645, %v598, %v661
        %v678 = vsel %vm646, %v601, %v662
        %v679 = vsel %vm647, %v604, %v663
        %v680 = vsel %vm648, %v607, %v664
        %v681 = vsel %vm649, %v610, %v665
        %v682 = vsel %vm650, %v613, %v666
        %v683 = vsel %vm651, %v616, %v667
        %v684 = vsel %vm652, %v619, %v668
        %v685 = vsel %vm653, %v622, %v669
        %v686 = vsel %vm654, %v625, %v670
        %v687 = vsel %vm655, %v628, %v671
        %v688 = vsel %vm656, %v631, %v672
        %v689 = vsel %vm657, %v634, %v673
        %v690 = vsel %vm658, %v637, %v674
        %v691 = vsel %vm659, %v640, %v675
        %v692 = vsel %vm660, %v643, %v676
        %v693 = vld [vmem:[#allocation10] sm:$0xff]
        %v694 = vld [vmem:[#allocation10 + $0x8] sm:$0xff]
        %v695 = vld [vmem:[#allocation10 + $0x10] sm:$0xff]
        %v696 = vld [vmem:[#allocation10 + $0x18] sm:$0xff]
        %v697 = vld [vmem:[#allocation10 + $0x20] sm:$0xff]
        %v698 = vld [vmem:[#allocation10 + $0x28] sm:$0xff]
        %v699 = vld [vmem:[#allocation10 + $0x30] sm:$0xff]
        %v700 = vld [vmem:[#allocation10 + $0x38] sm:$0xff]
        %v701 = vld [vmem:[#allocation10 + $0x40] sm:$0xff]
        %v702 = vld [vmem:[#allocation10 + $0x48] sm:$0xff]
        %v703 = vld [vmem:[#allocation10 + $0x50] sm:$0xff]
        %v704 = vld [vmem:[#allocation10 + $0x58] sm:$0xff]
        %v705 = vld [vmem:[#allocation10 + $0x60] sm:$0xff]
        %v706 = vld [vmem:[#allocation10 + $0x68] sm:$0xff]
        %v707 = vld [vmem:[#allocation10 + $0x70] sm:$0xff]
        %v708 = vld [vmem:[#allocation10 + $0x78] sm:$0xff]
        %v709 = vld [vmem:[#allocation10 + $0x80] sm:$0xff]
        %v710 = vld [vmem:[#allocation10 + $0x88] sm:$0xff]
        %v711 = vld [vmem:[#allocation10 + $0x90] sm:$0xff]
        %v712 = vld [vmem:[#allocation10 + $0x98] sm:$0xff]
        %v713 = vld [vmem:[#allocation10 + $0xa0] sm:$0xff]
        %v714 = vld [vmem:[#allocation10 + $0xa8] sm:$0xff]
        %v715 = vld [vmem:[#allocation10 + $0xb0] sm:$0xff]
        %v716 = vld [vmem:[#allocation10 + $0xb8] sm:$0xff]
        %v717 = vld [vmem:[#allocation10 + $0xc0] sm:$0xff]
        %v718 = vld [vmem:[#allocation10 + $0xc8] sm:$0xff]
        %v719 = vld [vmem:[#allocation10 + $0xd0] sm:$0xff]
        %v720 = vld [vmem:[#allocation10 + $0xd8] sm:$0xff]
        %v721 = vld [vmem:[#allocation10 + $0xe0] sm:$0xff]
        %v722 = vld [vmem:[#allocation10 + $0xe8] sm:$0xff]
        %v723 = vld [vmem:[#allocation10 + $0xf0] sm:$0xff]
        %v724 = vld [vmem:[#allocation10 + $0xf8] sm:$0xff]
        %v725 = vld [vmem:[#allocation10 + $0x100] sm:$0xff]
        %v726 = vld [vmem:[#allocation10 + $0x108] sm:$0xff]
        %v727 = vld [vmem:[#allocation10 + $0x110] sm:$0xff]
        %v728 = vld [vmem:[#allocation10 + $0x118] sm:$0xff]
        %v729 = vld [vmem:[#allocation10 + $0x120] sm:$0xff]
        %v730 = vld [vmem:[#allocation10 + $0x128] sm:$0xff]
        %v731 = vld [vmem:[#allocation10 + $0x130] sm:$0xff]
        %v732 = vld [vmem:[#allocation10 + $0x138] sm:$0xff]
        %v733 = vld [vmem:[#allocation10 + $0x140] sm:$0xff]
        %v734 = vld [vmem:[#allocation10 + $0x148] sm:$0xff]
        %v735 = vld [vmem:[#allocation10 + $0x150] sm:$0xff]
        %v736 = vld [vmem:[#allocation10 + $0x158] sm:$0xff]
        %v737 = vld [vmem:[#allocation10 + $0x160] sm:$0xff]
        %v738 = vld [vmem:[#allocation10 + $0x168] sm:$0xff]
        %v739 = vld [vmem:[#allocation10 + $0x170] sm:$0xff]
        %v740 = vld [vmem:[#allocation10 + $0x178] sm:$0xff]
        %v741 = vld [vmem:[%s5] sm:$0x7]
        %v743 = vperm.slane %v741, 0
        %v744 = vperm.slane %v741, 1
        %v745 = vperm.slane %v741, 2
        %749 = vmatpush.msra.mxu0 %v738
        %750 = vmatpush.msra.mxu0 %v735
        %751 = vmatpush.msra.mxu0 %v732
        %752 = vmatpush.msra.mxu0 %v729
        %753 = vmatpush.msra.mxu0 %v726
        %754 = vmatpush.msra.mxu0 %v723
        %755 = vmatpush.msra.mxu0 %v720
        %756 = vmatpush.msra.mxu0 %v717
        %757 = vmatpush.msra.mxu0 %v714
        %758 = vmatpush.msra.mxu0 %v711
        %759 = vmatpush.msra.mxu0 %v708
        %760 = vmatpush.msra.mxu0 %v705
        %761 = vmatpush.msra.mxu0 %v702
        %762 = vmatpush.msra.mxu0 %v699
        %763 = vmatpush.msra.mxu0 %v696
        %764 = vmatpush.msra.mxu0 %v693
        %765 = vmatmul.f32.gmra.mxu0 %v677
        %v766 = vpop.f32.mrf.mxu0
        %v767 = vadd.f32 %v743, %v766
        %768 = vmatmul.f32.gmra.mxu0 %v678
        %v769 = vpop.f32.mrf.mxu0
        %v770 = vadd.f32 %v743, %v769
        %771 = vmatmul.f32.gmra.mxu0 %v679
        %v772 = vpop.f32.mrf.mxu0
        %v773 = vadd.f32 %v743, %v772
        %774 = vmatmul.f32.gmra.mxu0 %v680
        %v775 = vpop.f32.mrf.mxu0
        %v776 = vadd.f32 %v743, %v775
        %777 = vmatmul.f32.gmra.mxu0 %v681
        %v778 = vpop.f32.mrf.mxu0
        %v779 = vadd.f32 %v743, %v778
        %780 = vmatmul.f32.gmra.mxu0 %v682
        %v781 = vpop.f32.mrf.mxu0
        %v782 = vadd.f32 %v743, %v781
        %783 = vmatmul.f32.gmra.mxu0 %v683
        %v784 = vpop.f32.mrf.mxu0
        %v785 = vadd.f32 %v743, %v784
        %786 = vmatmul.f32.gmra.mxu0 %v684
        %v787 = vpop.f32.mrf.mxu0
        %v788 = vadd.f32 %v743, %v787
        %789 = vmatmul.f32.gmra.mxu0 %v685
        %v790 = vpop.f32.mrf.mxu0
        %v791 = vadd.f32 %v743, %v790
        %792 = vmatmul.f32.gmra.mxu0 %v686
        %v793 = vpop.f32.mrf.mxu0
        %v794 = vadd.f32 %v743, %v793
        %795 = vmatmul.f32.gmra.mxu0 %v687
        %v796 = vpop.f32.mrf.mxu0
        %v797 = vadd.f32 %v743, %v796
        %798 = vmatmul.f32.gmra.mxu0 %v688
        %v799 = vpop.f32.mrf.mxu0
        %v800 = vadd.f32 %v743, %v799
        %801 = vmatmul.f32.gmra.mxu0 %v689
        %v802 = vpop.f32.mrf.mxu0
        %v803 = vadd.f32 %v743, %v802
        %804 = vmatmul.f32.gmra.mxu0 %v690
        %v805 = vpop.f32.mrf.mxu0
        %v806 = vadd.f32 %v743, %v805
        %807 = vmatmul.f32.gmra.mxu0 %v691
        %v808 = vpop.f32.mrf.mxu0
        %v809 = vadd.f32 %v743, %v808
        %810 = vmatmul.f32.gmra.mxu0 %v692
        %v811 = vpop.f32.mrf.mxu0
        %v812 = vadd.f32 %v743, %v811
        %813 = vdwg.mxu0
        %814 = vmatpush.msra.mxu0 %v739
        %815 = vmatpush.msra.mxu0 %v736
        %816 = vmatpush.msra.mxu0 %v733
        %817 = vmatpush.msra.mxu0 %v730
        %818 = vmatpush.msra.mxu0 %v727
        %819 = vmatpush.msra.mxu0 %v724
        %820 = vmatpush.msra.mxu0 %v721
        %821 = vmatpush.msra.mxu0 %v718
        %822 = vmatpush.msra.mxu0 %v715
        %823 = vmatpush.msra.mxu0 %v712
        %824 = vmatpush.msra.mxu0 %v709
        %825 = vmatpush.msra.mxu0 %v706
        %826 = vmatpush.msra.mxu0 %v703
        %827 = vmatpush.msra.mxu0 %v700
        %828 = vmatpush.msra.mxu0 %v697
        %829 = vmatpush.msra.mxu0 %v694
        %830 = vmatmul.f32.gmra.mxu0 %v677
        %v831 = vpop.f32.mrf.mxu0
        %v832 = vadd.f32 %v744, %v831
        %833 = vmatmul.f32.gmra.mxu0 %v678
        %v834 = vpop.f32.mrf.mxu0
        %v835 = vadd.f32 %v744, %v834
        %836 = vmatmul.f32.gmra.mxu0 %v679
        %v837 = vpop.f32.mrf.mxu0
        %v838 = vadd.f32 %v744, %v837
        %839 = vmatmul.f32.gmra.mxu0 %v680
        %v840 = vpop.f32.mrf.mxu0
        %v841 = vadd.f32 %v744, %v840
        %842 = vmatmul.f32.gmra.mxu0 %v681
        %v843 = vpop.f32.mrf.mxu0
        %v844 = vadd.f32 %v744, %v843
        %845 = vmatmul.f32.gmra.mxu0 %v682
        %v846 = vpop.f32.mrf.mxu0
        %v847 = vadd.f32 %v744, %v846
        %848 = vmatmul.f32.gmra.mxu0 %v683
        %v849 = vpop.f32.mrf.mxu0
        %v850 = vadd.f32 %v744, %v849
        %851 = vmatmul.f32.gmra.mxu0 %v684
        %v852 = vpop.f32.mrf.mxu0
        %v853 = vadd.f32 %v744, %v852
        %854 = vmatmul.f32.gmra.mxu0 %v685
        %v855 = vpop.f32.mrf.mxu0
        %v856 = vadd.f32 %v744, %v855
        %857 = vmatmul.f32.gmra.mxu0 %v686
        %v858 = vpop.f32.mrf.mxu0
        %v859 = vadd.f32 %v744, %v858
        %860 = vmatmul.f32.gmra.mxu0 %v687
        %v861 = vpop.f32.mrf.mxu0
        %v862 = vadd.f32 %v744, %v861
        %863 = vmatmul.f32.gmra.mxu0 %v688
        %v864 = vpop.f32.mrf.mxu0
        %v865 = vadd.f32 %v744, %v864
        %866 = vmatmul.f32.gmra.mxu0 %v689
        %v867 = vpop.f32.mrf.mxu0
        %v868 = vadd.f32 %v744, %v867
        %869 = vmatmul.f32.gmra.mxu0 %v690
        %v870 = vpop.f32.mrf.mxu0
        %v871 = vadd.f32 %v744, %v870
        %872 = vmatmul.f32.gmra.mxu0 %v691
        %v873 = vpop.f32.mrf.mxu0
        %v874 = vadd.f32 %v744, %v873
        %875 = vmatmul.f32.gmra.mxu0 %v692
        %v876 = vpop.f32.mrf.mxu0
        %v877 = vadd.f32 %v744, %v876
        %878 = vdwg.mxu0
        %879 = vmatpush.msra.mxu0 %v740
        %880 = vmatpush.msra.mxu0 %v737
        %881 = vmatpush.msra.mxu0 %v734
        %882 = vmatpush.msra.mxu0 %v731
        %883 = vmatpush.msra.mxu0 %v728
        %884 = vmatpush.msra.mxu0 %v725
        %885 = vmatpush.msra.mxu0 %v722
        %886 = vmatpush.msra.mxu0 %v719
        %887 = vmatpush.msra.mxu0 %v716
        %888 = vmatpush.msra.mxu0 %v713
        %889 = vmatpush.msra.mxu0 %v710
        %890 = vmatpush.msra.mxu0 %v707
        %891 = vmatpush.msra.mxu0 %v704
        %892 = vmatpush.msra.mxu0 %v701
        %893 = vmatpush.msra.mxu0 %v698
        %894 = vmatpush.msra.mxu0 %v695
        %895 = vmatmul.f32.gmra.mxu0 %v677
        %v896 = vpop.f32.mrf.mxu0
        %v897 = vadd.f32 %v745, %v896
        %898 = vmatmul.f32.gmra.mxu0 %v678
        %v899 = vpop.f32.mrf.mxu0
        %v900 = vadd.f32 %v745, %v899
        %901 = vmatmul.f32.gmra.mxu0 %v679
        %v902 = vpop.f32.mrf.mxu0
        %v903 = vadd.f32 %v745, %v902
        %904 = vmatmul.f32.gmra.mxu0 %v680
        %v905 = vpop.f32.mrf.mxu0
        %v906 = vadd.f32 %v745, %v905
        %907 = vmatmul.f32.gmra.mxu0 %v681
        %v908 = vpop.f32.mrf.mxu0
        %v909 = vadd.f32 %v745, %v908
        %910 = vmatmul.f32.gmra.mxu0 %v682
        %v911 = vpop.f32.mrf.mxu0
        %v912 = vadd.f32 %v745, %v911
        %913 = vmatmul.f32.gmra.mxu0 %v683
        %v914 = vpop.f32.mrf.mxu0
        %v915 = vadd.f32 %v745, %v914
        %916 = vmatmul.f32.gmra.mxu0 %v684
        %v917 = vpop.f32.mrf.mxu0
        %v918 = vadd.f32 %v745, %v917
        %919 = vmatmul.f32.gmra.mxu0 %v685
        %v920 = vpop.f32.mrf.mxu0
        %v921 = vadd.f32 %v745, %v920
        %922 = vmatmul.f32.gmra.mxu0 %v686
        %v923 = vpop.f32.mrf.mxu0
        %v924 = vadd.f32 %v745, %v923
        %925 = vmatmul.f32.gmra.mxu0 %v687
        %v926 = vpop.f32.mrf.mxu0
        %v927 = vadd.f32 %v745, %v926
        %928 = vmatmul.f32.gmra.mxu0 %v688
        %v929 = vpop.f32.mrf.mxu0
        %v930 = vadd.f32 %v745, %v929
        %931 = vmatmul.f32.gmra.mxu0 %v689
        %v932 = vpop.f32.mrf.mxu0
        %v933 = vadd.f32 %v745, %v932
        %934 = vmatmul.f32.gmra.mxu0 %v690
        %v935 = vpop.f32.mrf.mxu0
        %v936 = vadd.f32 %v745, %v935
        %937 = vmatmul.f32.gmra.mxu0 %v691
        %v938 = vpop.f32.mrf.mxu0
        %v939 = vadd.f32 %v745, %v938
        %940 = vmatmul.f32.gmra.mxu0 %v692
        %v941 = vpop.f32.mrf.mxu0
        %v942 = vadd.f32 %v745, %v941
        %943 = vdwg.mxu0
        %944 = vst [vmem:[#allocation2] sm:$0xff] %v767
        %945 = vst [vmem:[#allocation2 + $0x8] sm:$0xff] %v832
        %946 = vst [vmem:[#allocation2 + $0x10] sm:$0xff] %v897
        %947 = vst [vmem:[#allocation2 + $0x18] sm:$0xff] %v770
        %948 = vst [vmem:[#allocation2 + $0x20] sm:$0xff] %v835
        %949 = vst [vmem:[#allocation2 + $0x28] sm:$0xff] %v900
        %950 = vst [vmem:[#allocation2 + $0x30] sm:$0xff] %v773
        %951 = vst [vmem:[#allocation2 + $0x38] sm:$0xff] %v838
        %952 = vst [vmem:[#allocation2 + $0x40] sm:$0xff] %v903
        %953 = vst [vmem:[#allocation2 + $0x48] sm:$0xff] %v776
        %954 = vst [vmem:[#allocation2 + $0x50] sm:$0xff] %v841
        %955 = vst [vmem:[#allocation2 + $0x58] sm:$0xff] %v906
        %956 = vst [vmem:[#allocation2 + $0x60] sm:$0xff] %v779
        %957 = vst [vmem:[#allocation2 + $0x68] sm:$0xff] %v844
        %958 = vst [vmem:[#allocation2 + $0x70] sm:$0xff] %v909
        %959 = vst [vmem:[#allocation2 + $0x78] sm:$0xff] %v782
        %960 = vst [vmem:[#allocation2 + $0x80] sm:$0xff] %v847
        %961 = vst [vmem:[#allocation2 + $0x88] sm:$0xff] %v912
        %962 = vst [vmem:[#allocation2 + $0x90] sm:$0xff] %v785
        %963 = vst [vmem:[#allocation2 + $0x98] sm:$0xff] %v850
        %964 = vst [vmem:[#allocation2 + $0xa0] sm:$0xff] %v915
        %965 = vst [vmem:[#allocation2 + $0xa8] sm:$0xff] %v788
        %966 = vst [vmem:[#allocation2 + $0xb0] sm:$0xff] %v853
        %967 = vst [vmem:[#allocation2 + $0xb8] sm:$0xff] %v918
        %968 = vst [vmem:[#allocation2 + $0xc0] sm:$0xff] %v791
        %969 = vst [vmem:[#allocation2 + $0xc8] sm:$0xff] %v856
        %970 = vst [vmem:[#allocation2 + $0xd0] sm:$0xff] %v921
        %971 = vst [vmem:[#allocation2 + $0xd8] sm:$0xff] %v794
        %972 = vst [vmem:[#allocation2 + $0xe0] sm:$0xff] %v859
        %973 = vst [vmem:[#allocation2 + $0xe8] sm:$0xff] %v924
        %974 = vst [vmem:[#allocation2 + $0xf0] sm:$0xff] %v797
        %975 = vst [vmem:[#allocation2 + $0xf8] sm:$0xff] %v862
        %976 = vst [vmem:[#allocation2 + $0x100] sm:$0xff] %v927
        %977 = vst [vmem:[#allocation2 + $0x108] sm:$0xff] %v800
        %978 = vst [vmem:[#allocation2 + $0x110] sm:$0xff] %v865
        %979 = vst [vmem:[#allocation2 + $0x118] sm:$0xff] %v930
        %980 = vst [vmem:[#allocation2 + $0x120] sm:$0xff] %v803
        %981 = vst [vmem:[#allocation2 + $0x128] sm:$0xff] %v868
        %982 = vst [vmem:[#allocation2 + $0x130] sm:$0xff] %v933
        %983 = vst [vmem:[#allocation2 + $0x138] sm:$0xff] %v806
        %984 = vst [vmem:[#allocation2 + $0x140] sm:$0xff] %v871
        %985 = vst [vmem:[#allocation2 + $0x148] sm:$0xff] %v936
        %986 = vst [vmem:[#allocation2 + $0x150] sm:$0xff] %v809
        %987 = vst [vmem:[#allocation2 + $0x158] sm:$0xff] %v874
        %988 = vst [vmem:[#allocation2 + $0x160] sm:$0xff] %v939
        %989 = vst [vmem:[#allocation2 + $0x168] sm:$0xff] %v812
        %990 = vst [vmem:[#allocation2 + $0x170] sm:$0xff] %v877
        %991 = vst [vmem:[#allocation2 + $0x178] sm:$0xff] %v942
        %v992 = vld [vmem:[#allocation2] sm:$0xff]
        %v993 = vld [vmem:[#allocation2 + $0x8] sm:$0xff]
        %v994 = vld [vmem:[#allocation2 + $0x10] sm:$0xff]
        %v995 = vld [vmem:[#allocation2 + $0x18] sm:$0xff]
        %v996 = vld [vmem:[#allocation2 + $0x20] sm:$0xff]
        %v997 = vld [vmem:[#allocation2 + $0x28] sm:$0xff]
        %v998 = vld [vmem:[#allocation2 + $0x30] sm:$0xff]
        %v999 = vld [vmem:[#allocation2 + $0x38] sm:$0xff]
        %v1000 = vld [vmem:[#allocation2 + $0x40] sm:$0xff]
        %v1001 = vld [vmem:[#allocation2 + $0x48] sm:$0xff]
        %v1002 = vld [vmem:[#allocation2 + $0x50] sm:$0xff]
        %v1003 = vld [vmem:[#allocation2 + $0x58] sm:$0xff]
        %v1004 = vld [vmem:[#allocation2 + $0x60] sm:$0xff]
        %v1005 = vld [vmem:[#allocation2 + $0x68] sm:$0xff]
        %v1006 = vld [vmem:[#allocation2 + $0x70] sm:$0xff]
        %v1007 = vld [vmem:[#allocation2 + $0x78] sm:$0xff]
        %v1008 = vld [vmem:[#allocation2 + $0x80] sm:$0xff]
        %v1009 = vld [vmem:[#allocation2 + $0x88] sm:$0xff]
        %v1010 = vld [vmem:[#allocation2 + $0x90] sm:$0xff]
        %v1011 = vld [vmem:[#allocation2 + $0x98] sm:$0xff]
        %v1012 = vld [vmem:[#allocation2 + $0xa0] sm:$0xff]
        %v1013 = vld [vmem:[#allocation2 + $0xa8] sm:$0xff]
        %v1014 = vld [vmem:[#allocation2 + $0xb0] sm:$0xff]
        %v1015 = vld [vmem:[#allocation2 + $0xb8] sm:$0xff]
        %vm1016 = vcmask 261120
        %v1018 = vsel %vm1016, %v992, 0
        %v1021 = vsel %vm1016, %v995, 0
        %v1024 = vsel %vm1016, %v998, 0
        %v1027 = vsel %vm1016, %v1001, 0
        %v1030 = vsel %vm1016, %v1004, 0
        %v1033 = vsel %vm1016, %v1007, 0
        %v1036 = vsel %vm1016, %v1010, 0
        %v1039 = vsel %vm1016, %v1013, 0
        %v1042 = vsel %vm1016, %v993, 0
        %v1045 = vsel %vm1016, %v996, 0
        %v1048 = vsel %vm1016, %v999, 0
        %v1051 = vsel %vm1016, %v1002, 0
        %v1054 = vsel %vm1016, %v1005, 0
        %v1057 = vsel %vm1016, %v1008, 0
        %v1060 = vsel %vm1016, %v1011, 0
        %v1063 = vsel %vm1016, %v1014, 0
        %1065 = vmatpush.xpose.msra.mxu0 0.0
        %1066 = vmatpush.xpose.msra.mxu0 0.0
        %1067 = vmatpush.xpose.msra.mxu0 0.0
        %1068 = vmatpush.xpose.msra.mxu0 0.0
        %1069 = vmatpush.xpose.msra.mxu0 0.0
        %1070 = vmatpush.xpose.msra.mxu0 0.0
        %1071 = vmatpush.xpose.msra.mxu0 0.0
        %1072 = vmatpush.xpose.msra.mxu0 0.0
        %1073 = vmatpush.xpose.msra.mxu0 %v1063
        %1074 = vmatpush.xpose.msra.mxu0 %v1060
        %1075 = vmatpush.xpose.msra.mxu0 %v1057
        %1076 = vmatpush.xpose.msra.mxu0 %v1054
        %1077 = vmatpush.xpose.msra.mxu0 %v1051
        %1078 = vmatpush.xpose.msra.mxu0 %v1048
        %1079 = vmatpush.xpose.msra.mxu0 %v1045
        %1080 = vmatpush.xpose.msra.mxu0 %v1042
        %1081 = vmatmul.f32.gmra.mxu0 %v1018
        %v1082 = vpop.f32.mrf.mxu0
        %v1083 = vadd.f32 0.0, %v1082
        %1084 = vmatmul.f32.gmra.mxu0 %v1021
        %v1085 = vpop.f32.mrf.mxu0
        %v1086 = vadd.f32 0.0, %v1085
        %1087 = vmatmul.f32.gmra.mxu0 %v1024
        %v1088 = vpop.f32.mrf.mxu0
        %v1089 = vadd.f32 0.0, %v1088
        %1090 = vmatmul.f32.gmra.mxu0 %v1027
        %v1091 = vpop.f32.mrf.mxu0
        %v1092 = vadd.f32 0.0, %v1091
        %1093 = vmatmul.f32.gmra.mxu0 %v1030
        %v1094 = vpop.f32.mrf.mxu0
        %v1095 = vadd.f32 0.0, %v1094
        %1096 = vmatmul.f32.gmra.mxu0 %v1033
        %v1097 = vpop.f32.mrf.mxu0
        %v1098 = vadd.f32 0.0, %v1097
        %1099 = vmatmul.f32.gmra.mxu0 %v1036
        %v1100 = vpop.f32.mrf.mxu0
        %v1101 = vadd.f32 0.0, %v1100
        %1102 = vmatmul.f32.gmra.mxu0 %v1039
        %v1103 = vpop.f32.mrf.mxu0
        %v1104 = vadd.f32 0.0, %v1103
        %1105 = vdwg.mxu0
        %vm1106 = vcmask 523264
        %v1107 = vsel %vm1106, %v1083, -inf
        %1108 = vmax.xlane.f32.xlu0 %v1107
        %v1109 = vpop.xlane.xlu0 %1108
        %v1110 = vsel %vm1106, %v1086, -inf
        %1111 = vmax.xlane.f32.xlu0 %v1110
        %v1112 = vpop.xlane.xlu0 %1111
        %v1113 = vsel %vm1106, %v1089, -inf
        %1114 = vmax.xlane.f32.xlu0 %v1113
        %v1115 = vpop.xlane.xlu0 %1114
        %v1116 = vsel %vm1106, %v1092, -inf
        %1117 = vmax.xlane.f32.xlu0 %v1116
        %v1118 = vpop.xlane.xlu0 %1117
        %v1119 = vsel %vm1106, %v1095, -inf
        %1120 = vmax.xlane.f32.xlu0 %v1119
        %v1121 = vpop.xlane.xlu0 %1120
        %v1122 = vsel %vm1106, %v1098, -inf
        %1123 = vmax.xlane.f32.xlu0 %v1122
        %v1124 = vpop.xlane.xlu0 %1123
        %v1125 = vsel %vm1106, %v1101, -inf
        %1126 = vmax.xlane.f32.xlu0 %v1125
        %v1127 = vpop.xlane.xlu0 %1126
        %v1128 = vsel %vm1106, %v1104, -inf
        %1129 = vmax.xlane.f32.xlu0 %v1128
        %v1130 = vpop.xlane.xlu0 %1129
        %v1131 = vsub.f32 %v1083, %v1109
        %v1132 = vsub.f32 %v1086, %v1112
        %v1133 = vsub.f32 %v1089, %v1115
        %v1134 = vsub.f32 %v1092, %v1118
        %v1135 = vsub.f32 %v1095, %v1121
        %v1136 = vsub.f32 %v1098, %v1124
        %v1137 = vsub.f32 %v1101, %v1127
        %v1138 = vsub.f32 %v1104, %v1130
        %v1139 = vmul.f32 %v1131, 1.442695
        %v1140 = vpow.pop %v1139
        %v1141 = vmul.f32 %v1132, 1.442695
        %v1142 = vpow.pop %v1141
        %v1143 = vmul.f32 %v1133, 1.442695
        %v1144 = vpow.pop %v1143
        %v1145 = vmul.f32 %v1134, 1.442695
        %v1146 = vpow.pop %v1145
        %v1147 = vmul.f32 %v1135, 1.442695
        %v1148 = vpow.pop %v1147
        %v1149 = vmul.f32 %v1136, 1.442695
        %v1150 = vpow.pop %v1149
        %v1151 = vmul.f32 %v1137, 1.442695
        %v1152 = vpow.pop %v1151
        %v1153 = vmul.f32 %v1138, 1.442695
        %v1154 = vpow.pop %v1153
        %v1155 = vsel %vm1106, %v1140, 0.0
        %1156 = vadd.xlane.f32.xlu0 %v1155
        %v1157 = vpop.xlane.xlu0 %1156
        %v1158 = vsel %vm1106, %v1142, 0.0
        %1159 = vadd.xlane.f32.xlu0 %v1158
        %v1160 = vpop.xlane.xlu0 %1159
        %v1161 = vsel %vm1106, %v1144, 0.0
        %1162 = vadd.xlane.f32.xlu0 %v1161
        %v1163 = vpop.xlane.xlu0 %1162
        %v1164 = vsel %vm1106, %v1146, 0.0
        %1165 = vadd.xlane.f32.xlu0 %v1164
        %v1166 = vpop.xlane.xlu0 %1165
        %v1167 = vsel %vm1106, %v1148, 0.0
        %1168 = vadd.xlane.f32.xlu0 %v1167
        %v1169 = vpop.xlane.xlu0 %1168
        %v1170 = vsel %vm1106, %v1150, 0.0
        %1171 = vadd.xlane.f32.xlu0 %v1170
        %v1172 = vpop.xlane.xlu0 %1171
        %v1173 = vsel %vm1106, %v1152, 0.0
        %1174 = vadd.xlane.f32.xlu0 %v1173
        %v1175 = vpop.xlane.xlu0 %1174
        %v1176 = vsel %vm1106, %v1154, 0.0
        %1177 = vadd.xlane.f32.xlu0 %v1176
        %v1178 = vpop.xlane.xlu0 %1177
        %v1179 = vrcp.pop %v1157
        %v1180 = vrcp.pop %v1160
        %v1181 = vrcp.pop %v1163
        %v1182 = vrcp.pop %v1166
        %v1183 = vrcp.pop %v1169
        %v1184 = vrcp.pop %v1172
        %v1185 = vrcp.pop %v1175
        %v1186 = vrcp.pop %v1178
        %v1187 = vmul.f32 %v1140, %v1179
        %v1188 = vmul.f32 %v1142, %v1180
        %v1189 = vmul.f32 %v1144, %v1181
        %v1190 = vmul.f32 %v1146, %v1182
        %v1191 = vmul.f32 %v1148, %v1183
        %v1192 = vmul.f32 %v1150, %v1184
        %v1193 = vmul.f32 %v1152, %v1185
        %v1194 = vmul.f32 %v1154, %v1186
        %v1196 = vsel %vm1106, %v1187, 0
        %v1199 = vsel %vm1106, %v1188, 0
        %v1202 = vsel %vm1106, %v1189, 0
        %v1205 = vsel %vm1106, %v1190, 0
        %v1208 = vsel %vm1106, %v1191, 0
        %v1211 = vsel %vm1106, %v1192, 0
        %v1214 = vsel %vm1106, %v1193, 0
        %v1217 = vsel %vm1106, %v1194, 0
        %1219 = vmatpush.msra.mxu0 0.0
        %1220 = vmatpush.msra.mxu0 0.0
        %1221 = vmatpush.msra.mxu0 0.0
        %1222 = vmatpush.msra.mxu0 0.0
        %1223 = vmatpush.msra.mxu0 0.0
        %1224 = vmatpush.msra.mxu0 0.0
        %1225 = vmatpush.msra.mxu0 0.0
        %1226 = vmatpush.msra.mxu0 0.0
        %1227 = vmatpush.msra.mxu0 %v1015
        %1228 = vmatpush.msra.mxu0 %v1012
        %1229 = vmatpush.msra.mxu0 %v1009
        %1230 = vmatpush.msra.mxu0 %v1006
        %1231 = vmatpush.msra.mxu0 %v1003
        %1232 = vmatpush.msra.mxu0 %v1000
        %1233 = vmatpush.msra.mxu0 %v997
        %1234 = vmatpush.msra.mxu0 %v994
        %1235 = vmatmul.f32.gmra.mxu0 %v1196
        %v1236 = vpop.f32.mrf.mxu0
        %v1237 = vadd.f32 0.0, %v1236
        %1238 = vmatmul.f32.gmra.mxu0 %v1199
        %v1239 = vpop.f32.mrf.mxu0
        %v1240 = vadd.f32 0.0, %v1239
        %1241 = vmatmul.f32.gmra.mxu0 %v1202
        %v1242 = vpop.f32.mrf.mxu0
        %v1243 = vadd.f32 0.0, %v1242
        %1244 = vmatmul.f32.gmra.mxu0 %v1205
        %v1245 = vpop.f32.mrf.mxu0
        %v1246 = vadd.f32 0.0, %v1245
        %1247 = vmatmul.f32.gmra.mxu0 %v1208
        %v1248 = vpop.f32.mrf.mxu0
        %v1249 = vadd.f32 0.0, %v1248
        %1250 = vmatmul.f32.gmra.mxu0 %v1211
        %v1251 = vpop.f32.mrf.mxu0
        %v1252 = vadd.f32 0.0, %v1251
        %1253 = vmatmul.f32.gmra.mxu0 %v1214
        %v1254 = vpop.f32.mrf.mxu0
        %v1255 = vadd.f32 0.0, %v1254
        %1256 = vmatmul.f32.gmra.mxu0 %v1217
        %v1257 = vpop.f32.mrf.mxu0
        %v1258 = vadd.f32 0.0, %v1257
        %1259 = vdwg.mxu0
        %1260 = vst.msk [vmem:[#allocation3] sm:$0xff] %vm1016, %v1237
        %1261 = vst.msk [vmem:[#allocation3 + $0x8] sm:$0xff] %vm1016, %v1240
        %1262 = vst.msk [vmem:[#allocation3 + $0x10] sm:$0xff] %vm1016, %v1243
        %1263 = vst.msk [vmem:[#allocation3 + $0x18] sm:$0xff] %vm1016, %v1246
        %1264 = vst.msk [vmem:[#allocation3 + $0x20] sm:$0xff] %vm1016, %v1249
        %1265 = vst.msk [vmem:[#allocation3 + $0x28] sm:$0xff] %vm1016, %v1252
        %1266 = vst.msk [vmem:[#allocation3 + $0x30] sm:$0xff] %vm1016, %v1255
        %1267 = vst.msk [vmem:[#allocation3 + $0x38] sm:$0xff] %vm1016, %v1258
        %1268 = vrot.lane.b32.xlu0 %v992, 96
        %v1269 = vpop.permute.xlu0 %1268
        %1270 = vrot.lane.b32.xlu0 %v995, 96
        %v1271 = vpop.permute.xlu0 %1270
        %1272 = vrot.lane.b32.xlu0 %v998, 96
        %v1273 = vpop.permute.xlu0 %1272
        %1274 = vrot.lane.b32.xlu0 %v1001, 96
        %v1275 = vpop.permute.xlu0 %1274
        %1276 = vrot.lane.b32.xlu0 %v1004, 96
        %v1277 = vpop.permute.xlu0 %1276
        %1278 = vrot.lane.b32.xlu0 %v1007, 96
        %v1279 = vpop.permute.xlu0 %1278
        %1280 = vrot.lane.b32.xlu0 %v1010, 96
        %v1281 = vpop.permute.xlu0 %1280
        %1282 = vrot.lane.b32.xlu0 %v1013, 96
        %v1283 = vpop.permute.xlu0 %1282
        %1284 = vrot.lane.b32.xlu0 %v993, 96
        %v1285 = vpop.permute.xlu0 %1284
        %1286 = vrot.lane.b32.xlu0 %v996, 96
        %v1287 = vpop.permute.xlu0 %1286
        %1288 = vrot.lane.b32.xlu0 %v999, 96
        %v1289 = vpop.permute.xlu0 %1288
        %1290 = vrot.lane.b32.xlu0 %v1002, 96
        %v1291 = vpop.permute.xlu0 %1290
        %1292 = vrot.lane.b32.xlu0 %v1005, 96
        %v1293 = vpop.permute.xlu0 %1292
        %1294 = vrot.lane.b32.xlu0 %v1008, 96
        %v1295 = vpop.permute.xlu0 %1294
        %1296 = vrot.lane.b32.xlu0 %v1011, 96
        %v1297 = vpop.permute.xlu0 %1296
        %1298 = vrot.lane.b32.xlu0 %v1014, 96
        %v1299 = vpop.permute.xlu0 %1298
        %v1300 = vsel %vm1016, %v1269, 0
        %v1302 = vsel %vm1016, %v1271, 0
        %v1304 = vsel %vm1016, %v1273, 0
        %v1306 = vsel %vm1016, %v1275, 0
        %v1308 = vsel %vm1016, %v1277, 0
        %v1310 = vsel %vm1016, %v1279, 0
        %v1312 = vsel %vm1016, %v1281, 0
        %v1314 = vsel %vm1016, %v1283, 0
        %v1316 = vsel %vm1016, %v1285, 0
        %v1318 = vsel %vm1016, %v1287, 0
        %v1320 = vsel %vm1016, %v1289, 0
        %v1322 = vsel %vm1016, %v1291, 0
        %v1324 = vsel %vm1016, %v1293, 0
        %v1326 = vsel %vm1016, %v1295, 0
        %v1328 = vsel %vm1016, %v1297, 0
        %v1330 = vsel %vm1016, %v1299, 0
        %1332 = vmatpush.xpose.msra.mxu0 0.0
        %1333 = vmatpush.xpose.msra.mxu0 0.0
        %1334 = vmatpush.xpose.msra.mxu0 0.0
        %1335 = vmatpush.xpose.msra.mxu0 0.0
        %1336 = vmatpush.xpose.msra.mxu0 0.0
        %1337 = vmatpush.xpose.msra.mxu0 0.0
        %1338 = vmatpush.xpose.msra.mxu0 0.0
        %1339 = vmatpush.xpose.msra.mxu0 0.0
        %1340 = vmatpush.xpose.msra.mxu0 %v1330
        %1341 = vmatpush.xpose.msra.mxu0 %v1328
        %1342 = vmatpush.xpose.msra.mxu0 %v1326
        %1343 = vmatpush.xpose.msra.mxu0 %v1324
        %1344 = vmatpush.xpose.msra.mxu0 %v1322
        %1345 = vmatpush.xpose.msra.mxu0 %v1320
        %1346 = vmatpush.xpose.msra.mxu0 %v1318
        %1347 = vmatpush.xpose.msra.mxu0 %v1316
        %1348 = vmatmul.f32.gmra.mxu0 %v1300
        %v1349 = vpop.f32.mrf.mxu0
        %v1350 = vadd.f32 0.0, %v1349
        %1351 = vmatmul.f32.gmra.mxu0 %v1302
        %v1352 = vpop.f32.mrf.mxu0
        %v1353 = vadd.f32 0.0, %v1352
        %1354 = vmatmul.f32.gmra.mxu0 %v1304
        %v1355 = vpop.f32.mrf.mxu0
        %v1356 = vadd.f32 0.0, %v1355
        %1357 = vmatmul.f32.gmra.mxu0 %v1306
        %v1358 = vpop.f32.mrf.mxu0
        %v1359 = vadd.f32 0.0, %v1358
        %1360 = vmatmul.f32.gmra.mxu0 %v1308
        %v1361 = vpop.f32.mrf.mxu0
        %v1362 = vadd.f32 0.0, %v1361
        %1363 = vmatmul.f32.gmra.mxu0 %v1310
        %v1364 = vpop.f32.mrf.mxu0
        %v1365 = vadd.f32 0.0, %v1364
        %1366 = vmatmul.f32.gmra.mxu0 %v1312
        %v1367 = vpop.f32.mrf.mxu0
        %v1368 = vadd.f32 0.0, %v1367
        %1369 = vmatmul.f32.gmra.mxu0 %v1314
        %v1370 = vpop.f32.mrf.mxu0
        %v1371 = vadd.f32 0.0, %v1370
        %1372 = vdwg.mxu0
        %v1373 = vsel %vm1106, %v1350, -inf
        %1374 = vmax.xlane.f32.xlu0 %v1373
        %v1375 = vpop.xlane.xlu0 %1374
        %v1376 = vsel %vm1106, %v1353, -inf
        %1377 = vmax.xlane.f32.xlu0 %v1376
        %v1378 = vpop.xlane.xlu0 %1377
        %v1379 = vsel %vm1106, %v1356, -inf
        %1380 = vmax.xlane.f32.xlu0 %v1379
        %v1381 = vpop.xlane.xlu0 %1380
        %v1382 = vsel %vm1106, %v1359, -inf
        %1383 = vmax.xlane.f32.xlu0 %v1382
        %v1384 = vpop.xlane.xlu0 %1383
        %v1385 = vsel %vm1106, %v1362, -inf
        %1386 = vmax.xlane.f32.xlu0 %v1385
        %v1387 = vpop.xlane.xlu0 %1386
        %v1388 = vsel %vm1106, %v1365, -inf
        %1389 = vmax.xlane.f32.xlu0 %v1388
        %v1390 = vpop.xlane.xlu0 %1389
        %v1391 = vsel %vm1106, %v1368, -inf
        %1392 = vmax.xlane.f32.xlu0 %v1391
        %v1393 = vpop.xlane.xlu0 %1392
        %v1394 = vsel %vm1106, %v1371, -inf
        %1395 = vmax.xlane.f32.xlu0 %v1394
        %v1396 = vpop.xlane.xlu0 %1395
        %v1397 = vsub.f32 %v1350, %v1375
        %v1398 = vsub.f32 %v1353, %v1378
        %v1399 = vsub.f32 %v1356, %v1381
        %v1400 = vsub.f32 %v1359, %v1384
        %v1401 = vsub.f32 %v1362, %v1387
        %v1402 = vsub.f32 %v1365, %v1390
        %v1403 = vsub.f32 %v1368, %v1393
        %v1404 = vsub.f32 %v1371, %v1396
        %v1405 = vmul.f32 %v1397, 1.442695
        %v1406 = vpow.pop %v1405
        %v1407 = vmul.f32 %v1398, 1.442695
        %v1408 = vpow.pop %v1407
        %v1409 = vmul.f32 %v1399, 1.442695
        %v1410 = vpow.pop %v1409
        %v1411 = vmul.f32 %v1400, 1.442695
        %v1412 = vpow.pop %v1411
        %v1413 = vmul.f32 %v1401, 1.442695
        %v1414 = vpow.pop %v1413
        %v1415 = vmul.f32 %v1402, 1.442695
        %v1416 = vpow.pop %v1415
        %v1417 = vmul.f32 %v1403, 1.442695
        %v1418 = vpow.pop %v1417
        %v1419 = vmul.f32 %v1404, 1.442695
        %v1420 = vpow.pop %v1419
        %v1421 = vsel %vm1106, %v1406, 0.0
        %1422 = vadd.xlane.f32.xlu0 %v1421
        %v1423 = vpop.xlane.xlu0 %1422
        %v1424 = vsel %vm1106, %v1408, 0.0
        %1425 = vadd.xlane.f32.xlu0 %v1424
        %v1426 = vpop.xlane.xlu0 %1425
        %v1427 = vsel %vm1106, %v1410, 0.0
        %1428 = vadd.xlane.f32.xlu0 %v1427
        %v1429 = vpop.xlane.xlu0 %1428
        %v1430 = vsel %vm1106, %v1412, 0.0
        %1431 = vadd.xlane.f32.xlu0 %v1430
        %v1432 = vpop.xlane.xlu0 %1431
        %v1433 = vsel %vm1106, %v1414, 0.0
        %1434 = vadd.xlane.f32.xlu0 %v1433
        %v1435 = vpop.xlane.xlu0 %1434
        %v1436 = vsel %vm1106, %v1416, 0.0
        %1437 = vadd.xlane.f32.xlu0 %v1436
        %v1438 = vpop.xlane.xlu0 %1437
        %v1439 = vsel %vm1106, %v1418, 0.0
        %1440 = vadd.xlane.f32.xlu0 %v1439
        %v1441 = vpop.xlane.xlu0 %1440
        %v1442 = vsel %vm1106, %v1420, 0.0
        %1443 = vadd.xlane.f32.xlu0 %v1442
        %v1444 = vpop.xlane.xlu0 %1443
        %v1445 = vrcp.pop %v1423
        %v1446 = vrcp.pop %v1426
        %v1447 = vrcp.pop %v1429
        %v1448 = vrcp.pop %v1432
        %v1449 = vrcp.pop %v1435
        %v1450 = vrcp.pop %v1438
        %v1451 = vrcp.pop %v1441
        %v1452 = vrcp.pop %v1444
        %v1453 = vmul.f32 %v1406, %v1445
        %v1454 = vmul.f32 %v1408, %v1446
        %v1455 = vmul.f32 %v1410, %v1447
        %v1456 = vmul.f32 %v1412, %v1448
        %v1457 = vmul.f32 %v1414, %v1449
        %v1458 = vmul.f32 %v1416, %v1450
        %v1459 = vmul.f32 %v1418, %v1451
        %v1460 = vmul.f32 %v1420, %v1452
        %1469 = vrot.lane.b32.xlu0 %v994, 96
        %v1470 = vpop.permute.xlu0 %1469
        %1471 = vrot.lane.b32.xlu0 %v997, 96
        %v1472 = vpop.permute.xlu0 %1471
        %1473 = vrot.lane.b32.xlu0 %v1000, 96
        %v1474 = vpop.permute.xlu0 %1473
        %1475 = vrot.lane.b32.xlu0 %v1003, 96
        %v1476 = vpop.permute.xlu0 %1475
        %1477 = vrot.lane.b32.xlu0 %v1006, 96
        %v1478 = vpop.permute.xlu0 %1477
        %1479 = vrot.lane.b32.xlu0 %v1009, 96
        %v1480 = vpop.permute.xlu0 %1479
        %1481 = vrot.lane.b32.xlu0 %v1012, 96
        %v1482 = vpop.permute.xlu0 %1481
        %1483 = vrot.lane.b32.xlu0 %v1015, 96
        %v1484 = vpop.permute.xlu0 %1483
        %v1494 = vsel %vm1106, %v1453, 0
        %v1497 = vsel %vm1106, %v1454, 0
        %v1500 = vsel %vm1106, %v1455, 0
        %v1503 = vsel %vm1106, %v1456, 0
        %v1506 = vsel %vm1106, %v1457, 0
        %v1509 = vsel %vm1106, %v1458, 0
        %v1512 = vsel %vm1106, %v1459, 0
        %v1515 = vsel %vm1106, %v1460, 0
        %1517 = vmatpush.msra.mxu0 0.0
        %1518 = vmatpush.msra.mxu0 0.0
        %1519 = vmatpush.msra.mxu0 0.0
        %1520 = vmatpush.msra.mxu0 0.0
        %1521 = vmatpush.msra.mxu0 0.0
        %1522 = vmatpush.msra.mxu0 0.0
        %1523 = vmatpush.msra.mxu0 0.0
        %1524 = vmatpush.msra.mxu0 0.0
        %1525 = vmatpush.msra.mxu0 %v1484
        %1526 = vmatpush.msra.mxu0 %v1482
        %1527 = vmatpush.msra.mxu0 %v1480
        %1528 = vmatpush.msra.mxu0 %v1478
        %1529 = vmatpush.msra.mxu0 %v1476
        %1530 = vmatpush.msra.mxu0 %v1474
        %1531 = vmatpush.msra.mxu0 %v1472
        %1532 = vmatpush.msra.mxu0 %v1470
        %1533 = vmatmul.f32.gmra.mxu0 %v1494
        %v1534 = vpop.f32.mrf.mxu0
        %v1535 = vadd.f32 0.0, %v1534
        %1536 = vmatmul.f32.gmra.mxu0 %v1497
        %v1537 = vpop.f32.mrf.mxu0
        %v1538 = vadd.f32 0.0, %v1537
        %1539 = vmatmul.f32.gmra.mxu0 %v1500
        %v1540 = vpop.f32.mrf.mxu0
        %v1541 = vadd.f32 0.0, %v1540
        %1542 = vmatmul.f32.gmra.mxu0 %v1503
        %v1543 = vpop.f32.mrf.mxu0
        %v1544 = vadd.f32 0.0, %v1543
        %1545 = vmatmul.f32.gmra.mxu0 %v1506
        %v1546 = vpop.f32.mrf.mxu0
        %v1547 = vadd.f32 0.0, %v1546
        %1548 = vmatmul.f32.gmra.mxu0 %v1509
        %v1549 = vpop.f32.mrf.mxu0
        %v1550 = vadd.f32 0.0, %v1549
        %1551 = vmatmul.f32.gmra.mxu0 %v1512
        %v1552 = vpop.f32.mrf.mxu0
        %v1553 = vadd.f32 0.0, %v1552
        %1554 = vmatmul.f32.gmra.mxu0 %v1515
        %v1555 = vpop.f32.mrf.mxu0
        %v1556 = vadd.f32 0.0, %v1555
        %1557 = vdwg.mxu0
        %1566 = vrot.lane.b32.xlu0 %v1535, 32
        %v1567 = vpop.permute.xlu0 %1566
        %1568 = vrot.lane.b32.xlu0 %v1538, 32
        %v1569 = vpop.permute.xlu0 %1568
        %1570 = vrot.lane.b32.xlu0 %v1541, 32
        %v1571 = vpop.permute.xlu0 %1570
        %1572 = vrot.lane.b32.xlu0 %v1544, 32
        %v1573 = vpop.permute.xlu0 %1572
        %1574 = vrot.lane.b32.xlu0 %v1547, 32
        %v1575 = vpop.permute.xlu0 %1574
        %1576 = vrot.lane.b32.xlu0 %v1550, 32
        %v1577 = vpop.permute.xlu0 %1576
        %1578 = vrot.lane.b32.xlu0 %v1553, 32
        %v1579 = vpop.permute.xlu0 %1578
        %1580 = vrot.lane.b32.xlu0 %v1556, 32
        %v1581 = vpop.permute.xlu0 %1580
        %vm1590 = vcmask 523520
        %1591 = vst.msk [vmem:[#allocation3] sm:$0xff] %vm1590, %v1567
        %1592 = vst.msk [vmem:[#allocation3 + $0x8] sm:$0xff] %vm1590, %v1569
        %1593 = vst.msk [vmem:[#allocation3 + $0x10] sm:$0xff] %vm1590, %v1571
        %1594 = vst.msk [vmem:[#allocation3 + $0x18] sm:$0xff] %vm1590, %v1573
        %1595 = vst.msk [vmem:[#allocation3 + $0x20] sm:$0xff] %vm1590, %v1575
        %1596 = vst.msk [vmem:[#allocation3 + $0x28] sm:$0xff] %vm1590, %v1577
        %1597 = vst.msk [vmem:[#allocation3 + $0x30] sm:$0xff] %vm1590, %v1579
        %1598 = vst.msk [vmem:[#allocation3 + $0x38] sm:$0xff] %vm1590, %v1581
        %1599 = vrot.lane.b32.xlu0 %v992, 64
        %v1600 = vpop.permute.xlu0 %1599
        %1601 = vrot.lane.b32.xlu0 %v995, 64
        %v1602 = vpop.permute.xlu0 %1601
        %1603 = vrot.lane.b32.xlu0 %v998, 64
        %v1604 = vpop.permute.xlu0 %1603
        %1605 = vrot.lane.b32.xlu0 %v1001, 64
        %v1606 = vpop.permute.xlu0 %1605
        %1607 = vrot.lane.b32.xlu0 %v1004, 64
        %v1608 = vpop.permute.xlu0 %1607
        %1609 = vrot.lane.b32.xlu0 %v1007, 64
        %v1610 = vpop.permute.xlu0 %1609
        %1611 = vrot.lane.b32.xlu0 %v1010, 64
        %v1612 = vpop.permute.xlu0 %1611
        %1613 = vrot.lane.b32.xlu0 %v1013, 64
        %v1614 = vpop.permute.xlu0 %1613
        %1615 = vrot.lane.b32.xlu0 %v993, 64
        %v1616 = vpop.permute.xlu0 %1615
        %1617 = vrot.lane.b32.xlu0 %v996, 64
        %v1618 = vpop.permute.xlu0 %1617
        %1619 = vrot.lane.b32.xlu0 %v999, 64
        %v1620 = vpop.permute.xlu0 %1619
        %1621 = vrot.lane.b32.xlu0 %v1002, 64
        %v1622 = vpop.permute.xlu0 %1621
        %1623 = vrot.lane.b32.xlu0 %v1005, 64
        %v1624 = vpop.permute.xlu0 %1623
        %1625 = vrot.lane.b32.xlu0 %v1008, 64
        %v1626 = vpop.permute.xlu0 %1625
        %1627 = vrot.lane.b32.xlu0 %v1011, 64
        %v1628 = vpop.permute.xlu0 %1627
        %1629 = vrot.lane.b32.xlu0 %v1014, 64
        %v1630 = vpop.permute.xlu0 %1629
        %v1631 = vsel %vm1016, %v1600, 0
        %v1633 = vsel %vm1016, %v1602, 0
        %v1635 = vsel %vm1016, %v1604, 0
        %v1637 = vsel %vm1016, %v1606, 0
        %v1639 = vsel %vm1016, %v1608, 0
        %v1641 = vsel %vm1016, %v1610, 0
        %v1643 = vsel %vm1016, %v1612, 0
        %v1645 = vsel %vm1016, %v1614, 0
        %v1647 = vsel %vm1016, %v1616, 0
        %v1649 = vsel %vm1016, %v1618, 0
        %v1651 = vsel %vm1016, %v1620, 0
        %v1653 = vsel %vm1016, %v1622, 0
        %v1655 = vsel %vm1016, %v1624, 0
        %v1657 = vsel %vm1016, %v1626, 0
        %v1659 = vsel %vm1016, %v1628, 0
        %v1661 = vsel %vm1016, %v1630, 0
        %1663 = vmatpush.xpose.msra.mxu0 0.0
        %1664 = vmatpush.xpose.msra.mxu0 0.0
        %1665 = vmatpush.xpose.msra.mxu0 0.0
        %1666 = vmatpush.xpose.msra.mxu0 0.0
        %1667 = vmatpush.xpose.msra.mxu0 0.0
        %1668 = vmatpush.xpose.msra.mxu0 0.0
        %1669 = vmatpush.xpose.msra.mxu0 0.0
        %1670 = vmatpush.xpose.msra.mxu0 0.0
        %1671 = vmatpush.xpose.msra.mxu0 %v1661
        %1672 = vmatpush.xpose.msra.mxu0 %v1659
        %1673 = vmatpush.xpose.msra.mxu0 %v1657
        %1674 = vmatpush.xpose.msra.mxu0 %v1655
        %1675 = vmatpush.xpose.msra.mxu0 %v1653
        %1676 = vmatpush.xpose.msra.mxu0 %v1651
        %1677 = vmatpush.xpose.msra.mxu0 %v1649
        %1678 = vmatpush.xpose.msra.mxu0 %v1647
        %1679 = vmatmul.f32.gmra.mxu0 %v1631
        %v1680 = vpop.f32.mrf.mxu0
        %v1681 = vadd.f32 0.0, %v1680
        %1682 = vmatmul.f32.gmra.mxu0 %v1633
        %v1683 = vpop.f32.mrf.mxu0
        %v1684 = vadd.f32 0.0, %v1683
        %1685 = vmatmul.f32.gmra.mxu0 %v1635
        %v1686 = vpop.f32.mrf.mxu0
        %v1687 = vadd.f32 0.0, %v1686
        %1688 = vmatmul.f32.gmra.mxu0 %v1637
        %v1689 = vpop.f32.mrf.mxu0
        %v1690 = vadd.f32 0.0, %v1689
        %1691 = vmatmul.f32.gmra.mxu0 %v1639
        %v1692 = vpop.f32.mrf.mxu0
        %v1693 = vadd.f32 0.0, %v1692
        %1694 = vmatmul.f32.gmra.mxu0 %v1641
        %v1695 = vpop.f32.mrf.mxu0
        %v1696 = vadd.f32 0.0, %v1695
        %1697 = vmatmul.f32.gmra.mxu0 %v1643
        %v1698 = vpop.f32.mrf.mxu0
        %v1699 = vadd.f32 0.0, %v1698
        %1700 = vmatmul.f32.gmra.mxu0 %v1645
        %v1701 = vpop.f32.mrf.mxu0
        %v1702 = vadd.f32 0.0, %v1701
        %1703 = vdwg.mxu0
        %v1704 = vsel %vm1106, %v1681, -inf
        %1705 = vmax.xlane.f32.xlu0 %v1704
        %v1706 = vpop.xlane.xlu0 %1705
        %v1707 = vsel %vm1106, %v1684, -inf
        %1708 = vmax.xlane.f32.xlu0 %v1707
        %v1709 = vpop.xlane.xlu0 %1708
        %v1710 = vsel %vm1106, %v1687, -inf
        %1711 = vmax.xlane.f32.xlu0 %v1710
        %v1712 = vpop.xlane.xlu0 %1711
        %v1713 = vsel %vm1106, %v1690, -inf
        %1714 = vmax.xlane.f32.xlu0 %v1713
        %v1715 = vpop.xlane.xlu0 %1714
        %v1716 = vsel %vm1106, %v1693, -inf
        %1717 = vmax.xlane.f32.xlu0 %v1716
        %v1718 = vpop.xlane.xlu0 %1717
        %v1719 = vsel %vm1106, %v1696, -inf
        %1720 = vmax.xlane.f32.xlu0 %v1719
        %v1721 = vpop.xlane.xlu0 %1720
        %v1722 = vsel %vm1106, %v1699, -inf
        %1723 = vmax.xlane.f32.xlu0 %v1722
        %v1724 = vpop.xlane.xlu0 %1723
        %v1725 = vsel %vm1106, %v1702, -inf
        %1726 = vmax.xlane.f32.xlu0 %v1725
        %v1727 = vpop.xlane.xlu0 %1726
        %v1728 = vsub.f32 %v1681, %v1706
        %v1729 = vsub.f32 %v1684, %v1709
        %v1730 = vsub.f32 %v1687, %v1712
        %v1731 = vsub.f32 %v1690, %v1715
        %v1732 = vsub.f32 %v1693, %v1718
        %v1733 = vsub.f32 %v1696, %v1721
        %v1734 = vsub.f32 %v1699, %v1724
        %v1735 = vsub.f32 %v1702, %v1727
        %v1736 = vmul.f32 %v1728, 1.442695
        %v1737 = vpow.pop %v1736
        %v1738 = vmul.f32 %v1729, 1.442695
        %v1739 = vpow.pop %v1738
        %v1740 = vmul.f32 %v1730, 1.442695
        %v1741 = vpow.pop %v1740
        %v1742 = vmul.f32 %v1731, 1.442695
        %v1743 = vpow.pop %v1742
        %v1744 = vmul.f32 %v1732, 1.442695
        %v1745 = vpow.pop %v1744
        %v1746 = vmul.f32 %v1733, 1.442695
        %v1747 = vpow.pop %v1746
        %v1748 = vmul.f32 %v1734, 1.442695
        %v1749 = vpow.pop %v1748
        %v1750 = vmul.f32 %v1735, 1.442695
        %v1751 = vpow.pop %v1750
        %v1752 = vsel %vm1106, %v1737, 0.0
        %1753 = vadd.xlane.f32.xlu0 %v1752
        %v1754 = vpop.xlane.xlu0 %1753
        %v1755 = vsel %vm1106, %v1739, 0.0
        %1756 = vadd.xlane.f32.xlu0 %v1755
        %v1757 = vpop.xlane.xlu0 %1756
        %v1758 = vsel %vm1106, %v1741, 0.0
        %1759 = vadd.xlane.f32.xlu0 %v1758
        %v1760 = vpop.xlane.xlu0 %1759
        %v1761 = vsel %vm1106, %v1743, 0.0
        %1762 = vadd.xlane.f32.xlu0 %v1761
        %v1763 = vpop.xlane.xlu0 %1762
        %v1764 = vsel %vm1106, %v1745, 0.0
        %1765 = vadd.xlane.f32.xlu0 %v1764
        %v1766 = vpop.xlane.xlu0 %1765
        %v1767 = vsel %vm1106, %v1747, 0.0
        %1768 = vadd.xlane.f32.xlu0 %v1767
        %v1769 = vpop.xlane.xlu0 %1768
        %v1770 = vsel %vm1106, %v1749, 0.0
        %1771 = vadd.xlane.f32.xlu0 %v1770
        %v1772 = vpop.xlane.xlu0 %1771
        %v1773 = vsel %vm1106, %v1751, 0.0
        %1774 = vadd.xlane.f32.xlu0 %v1773
        %v1775 = vpop.xlane.xlu0 %1774
        %v1776 = vrcp.pop %v1754
        %v1777 = vrcp.pop %v1757
        %v1778 = vrcp.pop %v1760
        %v1779 = vrcp.pop %v1763
        %v1780 = vrcp.pop %v1766
        %v1781 = vrcp.pop %v1769
        %v1782 = vrcp.pop %v1772
        %v1783 = vrcp.pop %v1775
        %v1784 = vmul.f32 %v1737, %v1776
        %v1785 = vmul.f32 %v1739, %v1777
        %v1786 = vmul.f32 %v1741, %v1778
        %v1787 = vmul.f32 %v1743, %v1779
        %v1788 = vmul.f32 %v1745, %v1780
        %v1789 = vmul.f32 %v1747, %v1781
        %v1790 = vmul.f32 %v1749, %v1782
        %v1791 = vmul.f32 %v1751, %v1783
        %1792 = vrot.lane.b32.xlu0 %v994, 64
        %v1793 = vpop.permute.xlu0 %1792
        %1794 = vrot.lane.b32.xlu0 %v997, 64
        %v1795 = vpop.permute.xlu0 %1794
        %1796 = vrot.lane.b32.xlu0 %v1000, 64
        %v1797 = vpop.permute.xlu0 %1796
        %1798 = vrot.lane.b32.xlu0 %v1003, 64
        %v1799 = vpop.permute.xlu0 %1798
        %1800 = vrot.lane.b32.xlu0 %v1006, 64
        %v1801 = vpop.permute.xlu0 %1800
        %1802 = vrot.lane.b32.xlu0 %v1009, 64
        %v1803 = vpop.permute.xlu0 %1802
        %1804 = vrot.lane.b32.xlu0 %v1012, 64
        %v1805 = vpop.permute.xlu0 %1804
        %1806 = vrot.lane.b32.xlu0 %v1015, 64
        %v1807 = vpop.permute.xlu0 %1806
        %v1817 = vsel %vm1106, %v1784, 0
        %v1820 = vsel %vm1106, %v1785, 0
        %v1823 = vsel %vm1106, %v1786, 0
        %v1826 = vsel %vm1106, %v1787, 0
        %v1829 = vsel %vm1106, %v1788, 0
        %v1832 = vsel %vm1106, %v1789, 0
        %v1835 = vsel %vm1106, %v1790, 0
        %v1838 = vsel %vm1106, %v1791, 0
        %1840 = vmatpush.msra.mxu0 0.0
        %1841 = vmatpush.msra.mxu0 0.0
        %1842 = vmatpush.msra.mxu0 0.0
        %1843 = vmatpush.msra.mxu0 0.0
        %1844 = vmatpush.msra.mxu0 0.0
        %1845 = vmatpush.msra.mxu0 0.0
        %1846 = vmatpush.msra.mxu0 0.0
        %1847 = vmatpush.msra.mxu0 0.0
        %1848 = vmatpush.msra.mxu0 %v1807
        %1849 = vmatpush.msra.mxu0 %v1805
        %1850 = vmatpush.msra.mxu0 %v1803
        %1851 = vmatpush.msra.mxu0 %v1801
        %1852 = vmatpush.msra.mxu0 %v1799
        %1853 = vmatpush.msra.mxu0 %v1797
        %1854 = vmatpush.msra.mxu0 %v1795
        %1855 = vmatpush.msra.mxu0 %v1793
        %1856 = vmatmul.f32.gmra.mxu0 %v1817
        %v1857 = vpop.f32.mrf.mxu0
        %v1858 = vadd.f32 0.0, %v1857
        %1859 = vmatmul.f32.gmra.mxu0 %v1820
        %v1860 = vpop.f32.mrf.mxu0
        %v1861 = vadd.f32 0.0, %v1860
        %1862 = vmatmul.f32.gmra.mxu0 %v1823
        %v1863 = vpop.f32.mrf.mxu0
        %v1864 = vadd.f32 0.0, %v1863
        %1865 = vmatmul.f32.gmra.mxu0 %v1826
        %v1866 = vpop.f32.mrf.mxu0
        %v1867 = vadd.f32 0.0, %v1866
        %1868 = vmatmul.f32.gmra.mxu0 %v1829
        %v1869 = vpop.f32.mrf.mxu0
        %v1870 = vadd.f32 0.0, %v1869
        %1871 = vmatmul.f32.gmra.mxu0 %v1832
        %v1872 = vpop.f32.mrf.mxu0
        %v1873 = vadd.f32 0.0, %v1872
        %1874 = vmatmul.f32.gmra.mxu0 %v1835
        %v1875 = vpop.f32.mrf.mxu0
        %v1876 = vadd.f32 0.0, %v1875
        %1877 = vmatmul.f32.gmra.mxu0 %v1838
        %v1878 = vpop.f32.mrf.mxu0
        %v1879 = vadd.f32 0.0, %v1878
        %1880 = vdwg.mxu0
        %1889 = vrot.lane.b32.xlu0 %v1858, 64
        %v1890 = vpop.permute.xlu0 %1889
        %1891 = vrot.lane.b32.xlu0 %v1861, 64
        %v1892 = vpop.permute.xlu0 %1891
        %1893 = vrot.lane.b32.xlu0 %v1864, 64
        %v1894 = vpop.permute.xlu0 %1893
        %1895 = vrot.lane.b32.xlu0 %v1867, 64
        %v1896 = vpop.permute.xlu0 %1895
        %1897 = vrot.lane.b32.xlu0 %v1870, 64
        %v1898 = vpop.permute.xlu0 %1897
        %1899 = vrot.lane.b32.xlu0 %v1873, 64
        %v1900 = vpop.permute.xlu0 %1899
        %1901 = vrot.lane.b32.xlu0 %v1876, 64
        %v1902 = vpop.permute.xlu0 %1901
        %1903 = vrot.lane.b32.xlu0 %v1879, 64
        %v1904 = vpop.permute.xlu0 %1903
        %vm1913 = vcmask 785920
        %1914 = vst.msk [vmem:[#allocation3] sm:$0xff] %vm1913, %v1890
        %1915 = vst.msk [vmem:[#allocation3 + $0x8] sm:$0xff] %vm1913, %v1892
        %1916 = vst.msk [vmem:[#allocation3 + $0x10] sm:$0xff] %vm1913, %v1894
        %1917 = vst.msk [vmem:[#allocation3 + $0x18] sm:$0xff] %vm1913, %v1896
        %1918 = vst.msk [vmem:[#allocation3 + $0x20] sm:$0xff] %vm1913, %v1898
        %1919 = vst.msk [vmem:[#allocation3 + $0x28] sm:$0xff] %vm1913, %v1900
        %1920 = vst.msk [vmem:[#allocation3 + $0x30] sm:$0xff] %vm1913, %v1902
        %1921 = vst.msk [vmem:[#allocation3 + $0x38] sm:$0xff] %vm1913, %v1904
        %1922 = vrot.lane.b32.xlu0 %v992, 32
        %v1923 = vpop.permute.xlu0 %1922
        %1924 = vrot.lane.b32.xlu0 %v995, 32
        %v1925 = vpop.permute.xlu0 %1924
        %1926 = vrot.lane.b32.xlu0 %v998, 32
        %v1927 = vpop.permute.xlu0 %1926
        %1928 = vrot.lane.b32.xlu0 %v1001, 32
        %v1929 = vpop.permute.xlu0 %1928
        %1930 = vrot.lane.b32.xlu0 %v1004, 32
        %v1931 = vpop.permute.xlu0 %1930
        %1932 = vrot.lane.b32.xlu0 %v1007, 32
        %v1933 = vpop.permute.xlu0 %1932
        %1934 = vrot.lane.b32.xlu0 %v1010, 32
        %v1935 = vpop.permute.xlu0 %1934
        %1936 = vrot.lane.b32.xlu0 %v1013, 32
        %v1937 = vpop.permute.xlu0 %1936
        %1938 = vrot.lane.b32.xlu0 %v993, 32
        %v1939 = vpop.permute.xlu0 %1938
        %1940 = vrot.lane.b32.xlu0 %v996, 32
        %v1941 = vpop.permute.xlu0 %1940
        %1942 = vrot.lane.b32.xlu0 %v999, 32
        %v1943 = vpop.permute.xlu0 %1942
        %1944 = vrot.lane.b32.xlu0 %v1002, 32
        %v1945 = vpop.permute.xlu0 %1944
        %1946 = vrot.lane.b32.xlu0 %v1005, 32
        %v1947 = vpop.permute.xlu0 %1946
        %1948 = vrot.lane.b32.xlu0 %v1008, 32
        %v1949 = vpop.permute.xlu0 %1948
        %1950 = vrot.lane.b32.xlu0 %v1011, 32
        %v1951 = vpop.permute.xlu0 %1950
        %1952 = vrot.lane.b32.xlu0 %v1014, 32
        %v1953 = vpop.permute.xlu0 %1952
        %v1954 = vsel %vm1016, %v1923, 0
        %v1956 = vsel %vm1016, %v1925, 0
        %v1958 = vsel %vm1016, %v1927, 0
        %v1960 = vsel %vm1016, %v1929, 0
        %v1962 = vsel %vm1016, %v1931, 0
        %v1964 = vsel %vm1016, %v1933, 0
        %v1966 = vsel %vm1016, %v1935, 0
        %v1968 = vsel %vm1016, %v1937, 0
        %v1970 = vsel %vm1016, %v1939, 0
        %v1972 = vsel %vm1016, %v1941, 0
        %v1974 = vsel %vm1016, %v1943, 0
        %v1976 = vsel %vm1016, %v1945, 0
        %v1978 = vsel %vm1016, %v1947, 0
        %v1980 = vsel %vm1016, %v1949, 0
        %v1982 = vsel %vm1016, %v1951, 0
        %v1984 = vsel %vm1016, %v1953, 0
        %1986 = vmatpush.xpose.msra.mxu0 0.0
        %1987 = vmatpush.xpose.msra.mxu0 0.0
        %1988 = vmatpush.xpose.msra.mxu0 0.0
        %1989 = vmatpush.xpose.msra.mxu0 0.0
        %1990 = vmatpush.xpose.msra.mxu0 0.0
        %1991 = vmatpush.xpose.msra.mxu0 0.0
        %1992 = vmatpush.xpose.msra.mxu0 0.0
        %1993 = vmatpush.xpose.msra.mxu0 0.0
        %1994 = vmatpush.xpose.msra.mxu0 %v1984
        %1995 = vmatpush.xpose.msra.mxu0 %v1982
        %1996 = vmatpush.xpose.msra.mxu0 %v1980
        %1997 = vmatpush.xpose.msra.mxu0 %v1978
        %1998 = vmatpush.xpose.msra.mxu0 %v1976
        %1999 = vmatpush.xpose.msra.mxu0 %v1974
        %2000 = vmatpush.xpose.msra.mxu0 %v1972
        %2001 = vmatpush.xpose.msra.mxu0 %v1970
        %2002 = vmatmul.f32.gmra.mxu0 %v1954
        %v2003 = vpop.f32.mrf.mxu0
        %v2004 = vadd.f32 0.0, %v2003
        %2005 = vmatmul.f32.gmra.mxu0 %v1956
        %v2006 = vpop.f32.mrf.mxu0
        %v2007 = vadd.f32 0.0, %v2006
        %2008 = vmatmul.f32.gmra.mxu0 %v1958
        %v2009 = vpop.f32.mrf.mxu0
        %v2010 = vadd.f32 0.0, %v2009
        %2011 = vmatmul.f32.gmra.mxu0 %v1960
        %v2012 = vpop.f32.mrf.mxu0
        %v2013 = vadd.f32 0.0, %v2012
        %2014 = vmatmul.f32.gmra.mxu0 %v1962
        %v2015 = vpop.f32.mrf.mxu0
        %v2016 = vadd.f32 0.0, %v2015
        %2017 = vmatmul.f32.gmra.mxu0 %v1964
        %v2018 = vpop.f32.mrf.mxu0
        %v2019 = vadd.f32 0.0, %v2018
        %2020 = vmatmul.f32.gmra.mxu0 %v1966
        %v2021 = vpop.f32.mrf.mxu0
        %v2022 = vadd.f32 0.0, %v2021
        %2023 = vmatmul.f32.gmra.mxu0 %v1968
        %v2024 = vpop.f32.mrf.mxu0
        %v2025 = vadd.f32 0.0, %v2024
        %2026 = vdwg.mxu0
        %v2027 = vsel %vm1106, %v2004, -inf
        %2028 = vmax.xlane.f32.xlu0 %v2027
        %v2029 = vpop.xlane.xlu0 %2028
        %v2030 = vsel %vm1106, %v2007, -inf
        %2031 = vmax.xlane.f32.xlu0 %v2030
        %v2032 = vpop.xlane.xlu0 %2031
        %v2033 = vsel %vm1106, %v2010, -inf
        %2034 = vmax.xlane.f32.xlu0 %v2033
        %v2035 = vpop.xlane.xlu0 %2034
        %v2036 = vsel %vm1106, %v2013, -inf
        %2037 = vmax.xlane.f32.xlu0 %v2036
        %v2038 = vpop.xlane.xlu0 %2037
        %v2039 = vsel %vm1106, %v2016, -inf
        %2040 = vmax.xlane.f32.xlu0 %v2039
        %v2041 = vpop.xlane.xlu0 %2040
        %v2042 = vsel %vm1106, %v2019, -inf
        %2043 = vmax.xlane.f32.xlu0 %v2042
        %v2044 = vpop.xlane.xlu0 %2043
        %v2045 = vsel %vm1106, %v2022, -inf
        %2046 = vmax.xlane.f32.xlu0 %v2045
        %v2047 = vpop.xlane.xlu0 %2046
        %v2048 = vsel %vm1106, %v2025, -inf
        %2049 = vmax.xlane.f32.xlu0 %v2048
        %v2050 = vpop.xlane.xlu0 %2049
        %v2051 = vsub.f32 %v2004, %v2029
        %v2052 = vsub.f32 %v2007, %v2032
        %v2053 = vsub.f32 %v2010, %v2035
        %v2054 = vsub.f32 %v2013, %v2038
        %v2055 = vsub.f32 %v2016, %v2041
        %v2056 = vsub.f32 %v2019, %v2044
        %v2057 = vsub.f32 %v2022, %v2047
        %v2058 = vsub.f32 %v2025, %v2050
        %v2059 = vmul.f32 %v2051, 1.442695
        %v2060 = vpow.pop %v2059
        %v2061 = vmul.f32 %v2052, 1.442695
        %v2062 = vpow.pop %v2061
        %v2063 = vmul.f32 %v2053, 1.442695
        %v2064 = vpow.pop %v2063
        %v2065 = vmul.f32 %v2054, 1.442695
        %v2066 = vpow.pop %v2065
        %v2067 = vmul.f32 %v2055, 1.442695
        %v2068 = vpow.pop %v2067
        %v2069 = vmul.f32 %v2056, 1.442695
        %v2070 = vpow.pop %v2069
        %v2071 = vmul.f32 %v2057, 1.442695
        %v2072 = vpow.pop %v2071
        %v2073 = vmul.f32 %v2058, 1.442695
        %v2074 = vpow.pop %v2073
        %v2075 = vsel %vm1106, %v2060, 0.0
        %2076 = vadd.xlane.f32.xlu0 %v2075
        %v2077 = vpop.xlane.xlu0 %2076
        %v2078 = vsel %vm1106, %v2062, 0.0
        %2079 = vadd.xlane.f32.xlu0 %v2078
        %v2080 = vpop.xlane.xlu0 %2079
        %v2081 = vsel %vm1106, %v2064, 0.0
        %2082 = vadd.xlane.f32.xlu0 %v2081
        %v2083 = vpop.xlane.xlu0 %2082
        %v2084 = vsel %vm1106, %v2066, 0.0
        %2085 = vadd.xlane.f32.xlu0 %v2084
        %v2086 = vpop.xlane.xlu0 %2085
        %v2087 = vsel %vm1106, %v2068, 0.0
        %2088 = vadd.xlane.f32.xlu0 %v2087
        %v2089 = vpop.xlane.xlu0 %2088
        %v2090 = vsel %vm1106, %v2070, 0.0
        %2091 = vadd.xlane.f32.xlu0 %v2090
        %v2092 = vpop.xlane.xlu0 %2091
        %v2093 = vsel %vm1106, %v2072, 0.0
        %2094 = vadd.xlane.f32.xlu0 %v2093
        %v2095 = vpop.xlane.xlu0 %2094
        %v2096 = vsel %vm1106, %v2074, 0.0
        %2097 = vadd.xlane.f32.xlu0 %v2096
        %v2098 = vpop.xlane.xlu0 %2097
        %v2099 = vrcp.pop %v2077
        %v2100 = vrcp.pop %v2080
        %v2101 = vrcp.pop %v2083
        %v2102 = vrcp.pop %v2086
        %v2103 = vrcp.pop %v2089
        %v2104 = vrcp.pop %v2092
        %v2105 = vrcp.pop %v2095
        %v2106 = vrcp.pop %v2098
        %v2107 = vmul.f32 %v2060, %v2099
        %v2108 = vmul.f32 %v2062, %v2100
        %v2109 = vmul.f32 %v2064, %v2101
        %v2110 = vmul.f32 %v2066, %v2102
        %v2111 = vmul.f32 %v2068, %v2103
        %v2112 = vmul.f32 %v2070, %v2104
        %v2113 = vmul.f32 %v2072, %v2105
        %v2114 = vmul.f32 %v2074, %v2106
        %2115 = vrot.lane.b32.xlu0 %v994, 32
        %v2116 = vpop.permute.xlu0 %2115
        %2117 = vrot.lane.b32.xlu0 %v997, 32
        %v2118 = vpop.permute.xlu0 %2117
        %2119 = vrot.lane.b32.xlu0 %v1000, 32
        %v2120 = vpop.permute.xlu0 %2119
        %2121 = vrot.lane.b32.xlu0 %v1003, 32
        %v2122 = vpop.permute.xlu0 %2121
        %2123 = vrot.lane.b32.xlu0 %v1006, 32
        %v2124 = vpop.permute.xlu0 %2123
        %2125 = vrot.lane.b32.xlu0 %v1009, 32
        %v2126 = vpop.permute.xlu0 %2125
        %2127 = vrot.lane.b32.xlu0 %v1012, 32
        %v2128 = vpop.permute.xlu0 %2127
        %2129 = vrot.lane.b32.xlu0 %v1015, 32
        %v2130 = vpop.permute.xlu0 %2129
        %v2140 = vsel %vm1106, %v2107, 0
        %v2143 = vsel %vm1106, %v2108, 0
        %v2146 = vsel %vm1106, %v2109, 0
        %v2149 = vsel %vm1106, %v2110, 0
        %v2152 = vsel %vm1106, %v2111, 0
        %v2155 = vsel %vm1106, %v2112, 0
        %v2158 = vsel %vm1106, %v2113, 0
        %v2161 = vsel %vm1106, %v2114, 0
        %2163 = vmatpush.msra.mxu0 0.0
        %2164 = vmatpush.msra.mxu0 0.0
        %2165 = vmatpush.msra.mxu0 0.0
        %2166 = vmatpush.msra.mxu0 0.0
        %2167 = vmatpush.msra.mxu0 0.0
        %2168 = vmatpush.msra.mxu0 0.0
        %2169 = vmatpush.msra.mxu0 0.0
        %2170 = vmatpush.msra.mxu0 0.0
        %2171 = vmatpush.msra.mxu0 %v2130
        %2172 = vmatpush.msra.mxu0 %v2128
        %2173 = vmatpush.msra.mxu0 %v2126
        %2174 = vmatpush.msra.mxu0 %v2124
        %2175 = vmatpush.msra.mxu0 %v2122
        %2176 = vmatpush.msra.mxu0 %v2120
        %2177 = vmatpush.msra.mxu0 %v2118
        %2178 = vmatpush.msra.mxu0 %v2116
        %2179 = vmatmul.f32.gmra.mxu0 %v2140
        %v2180 = vpop.f32.mrf.mxu0
        %v2181 = vadd.f32 0.0, %v2180
        %2182 = vmatmul.f32.gmra.mxu0 %v2143
        %v2183 = vpop.f32.mrf.mxu0
        %v2184 = vadd.f32 0.0, %v2183
        %2185 = vmatmul.f32.gmra.mxu0 %v2146
        %v2186 = vpop.f32.mrf.mxu0
        %v2187 = vadd.f32 0.0, %v2186
        %2188 = vmatmul.f32.gmra.mxu0 %v2149
        %v2189 = vpop.f32.mrf.mxu0
        %v2190 = vadd.f32 0.0, %v2189
        %2191 = vmatmul.f32.gmra.mxu0 %v2152
        %v2192 = vpop.f32.mrf.mxu0
        %v2193 = vadd.f32 0.0, %v2192
        %2194 = vmatmul.f32.gmra.mxu0 %v2155
        %v2195 = vpop.f32.mrf.mxu0
        %v2196 = vadd.f32 0.0, %v2195
        %2197 = vmatmul.f32.gmra.mxu0 %v2158
        %v2198 = vpop.f32.mrf.mxu0
        %v2199 = vadd.f32 0.0, %v2198
        %2200 = vmatmul.f32.gmra.mxu0 %v2161
        %v2201 = vpop.f32.mrf.mxu0
        %v2202 = vadd.f32 0.0, %v2201
        %2203 = vdwg.mxu0
        %2212 = vrot.lane.b32.xlu0 %v2181, 96
        %v2213 = vpop.permute.xlu0 %2212
        %2214 = vrot.lane.b32.xlu0 %v2184, 96
        %v2215 = vpop.permute.xlu0 %2214
        %2216 = vrot.lane.b32.xlu0 %v2187, 96
        %v2217 = vpop.permute.xlu0 %2216
        %2218 = vrot.lane.b32.xlu0 %v2190, 96
        %v2219 = vpop.permute.xlu0 %2218
        %2220 = vrot.lane.b32.xlu0 %v2193, 96
        %v2221 = vpop.permute.xlu0 %2220
        %2222 = vrot.lane.b32.xlu0 %v2196, 96
        %v2223 = vpop.permute.xlu0 %2222
        %2224 = vrot.lane.b32.xlu0 %v2199, 96
        %v2225 = vpop.permute.xlu0 %2224
        %2226 = vrot.lane.b32.xlu0 %v2202, 96
        %v2227 = vpop.permute.xlu0 %2226
        %vm2236 = vcmask 1048320
        %2237 = vst.msk [vmem:[#allocation3] sm:$0xff] %vm2236, %v2213
        %2238 = vst.msk [vmem:[#allocation3 + $0x8] sm:$0xff] %vm2236, %v2215
        %2239 = vst.msk [vmem:[#allocation3 + $0x10] sm:$0xff] %vm2236, %v2217
        %2240 = vst.msk [vmem:[#allocation3 + $0x18] sm:$0xff] %vm2236, %v2219
        %2241 = vst.msk [vmem:[#allocation3 + $0x20] sm:$0xff] %vm2236, %v2221
        %2242 = vst.msk [vmem:[#allocation3 + $0x28] sm:$0xff] %vm2236, %v2223
        %2243 = vst.msk [vmem:[#allocation3 + $0x30] sm:$0xff] %vm2236, %v2225
        %2244 = vst.msk [vmem:[#allocation3 + $0x38] sm:$0xff] %vm2236, %v2227
        %s2245 = scalar_lea.vmem [#allocation2], 192
        %v2246 = vld [vmem:[%s2245] sm:$0xff]
        %v2247 = vld [vmem:[%s2245 + $0x8] sm:$0xff]
        %v2248 = vld [vmem:[%s2245 + $0x10] sm:$0xff]
        %v2249 = vld [vmem:[%s2245 + $0x18] sm:$0xff]
        %v2250 = vld [vmem:[%s2245 + $0x20] sm:$0xff]
        %v2251 = vld [vmem:[%s2245 + $0x28] sm:$0xff]
        %v2252 = vld [vmem:[%s2245 + $0x30] sm:$0xff]
        %v2253 = vld [vmem:[%s2245 + $0x38] sm:$0xff]
        %v2254 = vld [vmem:[%s2245 + $0x40] sm:$0xff]
        %v2255 = vld [vmem:[%s2245 + $0x48] sm:$0xff]
        %v2256 = vld [vmem:[%s2245 + $0x50] sm:$0xff]
        %v2257 = vld [vmem:[%s2245 + $0x58] sm:$0xff]
        %v2258 = vld [vmem:[%s2245 + $0x60] sm:$0xff]
        %v2259 = vld [vmem:[%s2245 + $0x68] sm:$0xff]
        %v2260 = vld [vmem:[%s2245 + $0x70] sm:$0xff]
        %v2261 = vld [vmem:[%s2245 + $0x78] sm:$0xff]
        %v2262 = vld [vmem:[%s2245 + $0x80] sm:$0xff]
        %v2263 = vld [vmem:[%s2245 + $0x88] sm:$0xff]
        %v2264 = vld [vmem:[%s2245 + $0x90] sm:$0xff]
        %v2265 = vld [vmem:[%s2245 + $0x98] sm:$0xff]
        %v2266 = vld [vmem:[%s2245 + $0xa0] sm:$0xff]
        %v2267 = vld [vmem:[%s2245 + $0xa8] sm:$0xff]
        %v2268 = vld [vmem:[%s2245 + $0xb0] sm:$0xff]
        %v2269 = vld [vmem:[%s2245 + $0xb8] sm:$0xff]
        %v2271 = vsel %vm1016, %v2246, 0
        %v2274 = vsel %vm1016, %v2249, 0
        %v2277 = vsel %vm1016, %v2252, 0
        %v2280 = vsel %vm1016, %v2255, 0
        %v2283 = vsel %vm1016, %v2258, 0
        %v2286 = vsel %vm1016, %v2261, 0
        %v2289 = vsel %vm1016, %v2264, 0
        %v2292 = vsel %vm1016, %v2267, 0
        %v2295 = vsel %vm1016, %v2247, 0
        %v2298 = vsel %vm1016, %v2250, 0
        %v2301 = vsel %vm1016, %v2253, 0
        %v2304 = vsel %vm1016, %v2256, 0
        %v2307 = vsel %vm1016, %v2259, 0
        %v2310 = vsel %vm1016, %v2262, 0
        %v2313 = vsel %vm1016, %v2265, 0
        %v2316 = vsel %vm1016, %v2268, 0
        %2318 = vmatpush.xpose.msra.mxu0 0.0
        %2319 = vmatpush.xpose.msra.mxu0 0.0
        %2320 = vmatpush.xpose.msra.mxu0 0.0
        %2321 = vmatpush.xpose.msra.mxu0 0.0
        %2322 = vmatpush.xpose.msra.mxu0 0.0
        %2323 = vmatpush.xpose.msra.mxu0 0.0
        %2324 = vmatpush.xpose.msra.mxu0 0.0
        %2325 = vmatpush.xpose.msra.mxu0 0.0
        %2326 = vmatpush.xpose.msra.mxu0 %v2316
        %2327 = vmatpush.xpose.msra.mxu0 %v2313
        %2328 = vmatpush.xpose.msra.mxu0 %v2310
        %2329 = vmatpush.xpose.msra.mxu0 %v2307
        %2330 = vmatpush.xpose.msra.mxu0 %v2304
        %2331 = vmatpush.xpose.msra.mxu0 %v2301
        %2332 = vmatpush.xpose.msra.mxu0 %v2298
        %2333 = vmatpush.xpose.msra.mxu0 %v2295
        %2334 = vmatmul.f32.gmra.mxu0 %v2271
        %v2335 = vpop.f32.mrf.mxu0
        %v2336 = vadd.f32 0.0, %v2335
        %2337 = vmatmul.f32.gmra.mxu0 %v2274
        %v2338 = vpop.f32.mrf.mxu0
        %v2339 = vadd.f32 0.0, %v2338
        %2340 = vmatmul.f32.gmra.mxu0 %v2277
        %v2341 = vpop.f32.mrf.mxu0
        %v2342 = vadd.f32 0.0, %v2341
        %2343 = vmatmul.f32.gmra.mxu0 %v2280
        %v2344 = vpop.f32.mrf.mxu0
        %v2345 = vadd.f32 0.0, %v2344
        %2346 = vmatmul.f32.gmra.mxu0 %v2283
        %v2347 = vpop.f32.mrf.mxu0
        %v2348 = vadd.f32 0.0, %v2347
        %2349 = vmatmul.f32.gmra.mxu0 %v2286
        %v2350 = vpop.f32.mrf.mxu0
        %v2351 = vadd.f32 0.0, %v2350
        %2352 = vmatmul.f32.gmra.mxu0 %v2289
        %v2353 = vpop.f32.mrf.mxu0
        %v2354 = vadd.f32 0.0, %v2353
        %2355 = vmatmul.f32.gmra.mxu0 %v2292
        %v2356 = vpop.f32.mrf.mxu0
        %v2357 = vadd.f32 0.0, %v2356
        %2358 = vdwg.mxu0
        %v2359 = vsel %vm1106, %v2336, -inf
        %2360 = vmax.xlane.f32.xlu0 %v2359
        %v2361 = vpop.xlane.xlu0 %2360
        %v2362 = vsel %vm1106, %v2339, -inf
        %2363 = vmax.xlane.f32.xlu0 %v2362
        %v2364 = vpop.xlane.xlu0 %2363
        %v2365 = vsel %vm1106, %v2342, -inf
        %2366 = vmax.xlane.f32.xlu0 %v2365
        %v2367 = vpop.xlane.xlu0 %2366
        %v2368 = vsel %vm1106, %v2345, -inf
        %2369 = vmax.xlane.f32.xlu0 %v2368
        %v2370 = vpop.xlane.xlu0 %2369
        %v2371 = vsel %vm1106, %v2348, -inf
        %2372 = vmax.xlane.f32.xlu0 %v2371
        %v2373 = vpop.xlane.xlu0 %2372
        %v2374 = vsel %vm1106, %v2351, -inf
        %2375 = vmax.xlane.f32.xlu0 %v2374
        %v2376 = vpop.xlane.xlu0 %2375
        %v2377 = vsel %vm1106, %v2354, -inf
        %2378 = vmax.xlane.f32.xlu0 %v2377
        %v2379 = vpop.xlane.xlu0 %2378
        %v2380 = vsel %vm1106, %v2357, -inf
        %2381 = vmax.xlane.f32.xlu0 %v2380
        %v2382 = vpop.xlane.xlu0 %2381
        %v2383 = vsub.f32 %v2336, %v2361
        %v2384 = vsub.f32 %v2339, %v2364
        %v2385 = vsub.f32 %v2342, %v2367
        %v2386 = vsub.f32 %v2345, %v2370
        %v2387 = vsub.f32 %v2348, %v2373
        %v2388 = vsub.f32 %v2351, %v2376
        %v2389 = vsub.f32 %v2354, %v2379
        %v2390 = vsub.f32 %v2357, %v2382
        %v2391 = vmul.f32 %v2383, 1.442695
        %v2392 = vpow.pop %v2391
        %v2393 = vmul.f32 %v2384, 1.442695
        %v2394 = vpow.pop %v2393
        %v2395 = vmul.f32 %v2385, 1.442695
        %v2396 = vpow.pop %v2395
        %v2397 = vmul.f32 %v2386, 1.442695
        %v2398 = vpow.pop %v2397
        %v2399 = vmul.f32 %v2387, 1.442695
        %v2400 = vpow.pop %v2399
        %v2401 = vmul.f32 %v2388, 1.442695
        %v2402 = vpow.pop %v2401
        %v2403 = vmul.f32 %v2389, 1.442695
        %v2404 = vpow.pop %v2403
        %v2405 = vmul.f32 %v2390, 1.442695
        %v2406 = vpow.pop %v2405
        %v2407 = vsel %vm1106, %v2392, 0.0
        %2408 = vadd.xlane.f32.xlu0 %v2407
        %v2409 = vpop.xlane.xlu0 %2408
        %v2410 = vsel %vm1106, %v2394, 0.0
        %2411 = vadd.xlane.f32.xlu0 %v2410
        %v2412 = vpop.xlane.xlu0 %2411
        %v2413 = vsel %vm1106, %v2396, 0.0
        %2414 = vadd.xlane.f32.xlu0 %v2413
        %v2415 = vpop.xlane.xlu0 %2414
        %v2416 = vsel %vm1106, %v2398, 0.0
        %2417 = vadd.xlane.f32.xlu0 %v2416
        %v2418 = vpop.xlane.xlu0 %2417
        %v2419 = vsel %vm1106, %v2400, 0.0
        %2420 = vadd.xlane.f32.xlu0 %v2419
        %v2421 = vpop.xlane.xlu0 %2420
        %v2422 = vsel %vm1106, %v2402, 0.0
        %2423 = vadd.xlane.f32.xlu0 %v2422
        %v2424 = vpop.xlane.xlu0 %2423
        %v2425 = vsel %vm1106, %v2404, 0.0
        %2426 = vadd.xlane.f32.xlu0 %v2425
        %v2427 = vpop.xlane.xlu0 %2426
        %v2428 = vsel %vm1106, %v2406, 0.0
        %2429 = vadd.xlane.f32.xlu0 %v2428
        %v2430 = vpop.xlane.xlu0 %2429
        %v2431 = vrcp.pop %v2409
        %v2432 = vrcp.pop %v2412
        %v2433 = vrcp.pop %v2415
        %v2434 = vrcp.pop %v2418
        %v2435 = vrcp.pop %v2421
        %v2436 = vrcp.pop %v2424
        %v2437 = vrcp.pop %v2427
        %v2438 = vrcp.pop %v2430
        %v2439 = vmul.f32 %v2392, %v2431
        %v2440 = vmul.f32 %v2394, %v2432
        %v2441 = vmul.f32 %v2396, %v2433
        %v2442 = vmul.f32 %v2398, %v2434
        %v2443 = vmul.f32 %v2400, %v2435
        %v2444 = vmul.f32 %v2402, %v2436
        %v2445 = vmul.f32 %v2404, %v2437
        %v2446 = vmul.f32 %v2406, %v2438
        %v2448 = vsel %vm1106, %v2439, 0
        %v2451 = vsel %vm1106, %v2440, 0
        %v2454 = vsel %vm1106, %v2441, 0
        %v2457 = vsel %vm1106, %v2442, 0
        %v2460 = vsel %vm1106, %v2443, 0
        %v2463 = vsel %vm1106, %v2444, 0
        %v2466 = vsel %vm1106, %v2445, 0
        %v2469 = vsel %vm1106, %v2446, 0
        %2471 = vmatpush.msra.mxu0 0.0
        %2472 = vmatpush.msra.mxu0 0.0
        %2473 = vmatpush.msra.mxu0 0.0
        %2474 = vmatpush.msra.mxu0 0.0
        %2475 = vmatpush.msra.mxu0 0.0
        %2476 = vmatpush.msra.mxu0 0.0
        %2477 = vmatpush.msra.mxu0 0.0
        %2478 = vmatpush.msra.mxu0 0.0
        %2479 = vmatpush.msra.mxu0 %v2269
        %2480 = vmatpush.msra.mxu0 %v2266
        %2481 = vmatpush.msra.mxu0 %v2263
        %2482 = vmatpush.msra.mxu0 %v2260
        %2483 = vmatpush.msra.mxu0 %v2257
        %2484 = vmatpush.msra.mxu0 %v2254
        %2485 = vmatpush.msra.mxu0 %v2251
        %2486 = vmatpush.msra.mxu0 %v2248
        %2487 = vmatmul.f32.gmra.mxu0 %v2448
        %v2488 = vpop.f32.mrf.mxu0
        %v2489 = vadd.f32 0.0, %v2488
        %2490 = vmatmul.f32.gmra.mxu0 %v2451
        %v2491 = vpop.f32.mrf.mxu0
        %v2492 = vadd.f32 0.0, %v2491
        %2493 = vmatmul.f32.gmra.mxu0 %v2454
        %v2494 = vpop.f32.mrf.mxu0
        %v2495 = vadd.f32 0.0, %v2494
        %2496 = vmatmul.f32.gmra.mxu0 %v2457
        %v2497 = vpop.f32.mrf.mxu0
        %v2498 = vadd.f32 0.0, %v2497
        %2499 = vmatmul.f32.gmra.mxu0 %v2460
        %v2500 = vpop.f32.mrf.mxu0
        %v2501 = vadd.f32 0.0, %v2500
        %2502 = vmatmul.f32.gmra.mxu0 %v2463
        %v2503 = vpop.f32.mrf.mxu0
        %v2504 = vadd.f32 0.0, %v2503
        %2505 = vmatmul.f32.gmra.mxu0 %v2466
        %v2506 = vpop.f32.mrf.mxu0
        %v2507 = vadd.f32 0.0, %v2506
        %2508 = vmatmul.f32.gmra.mxu0 %v2469
        %v2509 = vpop.f32.mrf.mxu0
        %v2510 = vadd.f32 0.0, %v2509
        %2511 = vdwg.mxu0
        %s2512 = scalar_lea.vmem [#allocation3], 64
        %2513 = vst.msk [vmem:[%s2512] sm:$0xff] %vm1016, %v2489
        %2514 = vst.msk [vmem:[%s2512 + $0x8] sm:$0xff] %vm1016, %v2492
        %2515 = vst.msk [vmem:[%s2512 + $0x10] sm:$0xff] %vm1016, %v2495
        %2516 = vst.msk [vmem:[%s2512 + $0x18] sm:$0xff] %vm1016, %v2498
        %2517 = vst.msk [vmem:[%s2512 + $0x20] sm:$0xff] %vm1016, %v2501
        %2518 = vst.msk [vmem:[%s2512 + $0x28] sm:$0xff] %vm1016, %v2504
        %2519 = vst.msk [vmem:[%s2512 + $0x30] sm:$0xff] %vm1016, %v2507
        %2520 = vst.msk [vmem:[%s2512 + $0x38] sm:$0xff] %vm1016, %v2510
        %2521 = vrot.lane.b32.xlu0 %v2246, 96
        %v2522 = vpop.permute.xlu0 %2521
        %2523 = vrot.lane.b32.xlu0 %v2249, 96
        %v2524 = vpop.permute.xlu0 %2523
        %2525 = vrot.lane.b32.xlu0 %v2252, 96
        %v2526 = vpop.permute.xlu0 %2525
        %2527 = vrot.lane.b32.xlu0 %v2255, 96
        %v2528 = vpop.permute.xlu0 %2527
        %2529 = vrot.lane.b32.xlu0 %v2258, 96
        %v2530 = vpop.permute.xlu0 %2529
        %2531 = vrot.lane.b32.xlu0 %v2261, 96
        %v2532 = vpop.permute.xlu0 %2531
        %2533 = vrot.lane.b32.xlu0 %v2264, 96
        %v2534 = vpop.permute.xlu0 %2533
        %2535 = vrot.lane.b32.xlu0 %v2267, 96
        %v2536 = vpop.permute.xlu0 %2535
        %2537 = vrot.lane.b32.xlu0 %v2247, 96
        %v2538 = vpop.permute.xlu0 %2537
        %2539 = vrot.lane.b32.xlu0 %v2250, 96
        %v2540 = vpop.permute.xlu0 %2539
        %2541 = vrot.lane.b32.xlu0 %v2253, 96
        %v2542 = vpop.permute.xlu0 %2541
        %2543 = vrot.lane.b32.xlu0 %v2256, 96
        %v2544 = vpop.permute.xlu0 %2543
        %2545 = vrot.lane.b32.xlu0 %v2259, 96
        %v2546 = vpop.permute.xlu0 %2545
        %2547 = vrot.lane.b32.xlu0 %v2262, 96
        %v2548 = vpop.permute.xlu0 %2547
        %2549 = vrot.lane.b32.xlu0 %v2265, 96
        %v2550 = vpop.permute.xlu0 %2549
        %2551 = vrot.lane.b32.xlu0 %v2268, 96
        %v2552 = vpop.permute.xlu0 %2551
        %v2553 = vsel %vm1016, %v2522, 0
        %v2555 = vsel %vm1016, %v2524, 0
        %v2557 = vsel %vm1016, %v2526, 0
        %v2559 = vsel %vm1016, %v2528, 0
        %v2561 = vsel %vm1016, %v2530, 0
        %v2563 = vsel %vm1016, %v2532, 0
        %v2565 = vsel %vm1016, %v2534, 0
        %v2567 = vsel %vm1016, %v2536, 0
        %v2569 = vsel %vm1016, %v2538, 0
        %v2571 = vsel %vm1016, %v2540, 0
        %v2573 = vsel %vm1016, %v2542, 0
        %v2575 = vsel %vm1016, %v2544, 0
        %v2577 = vsel %vm1016, %v2546, 0
        %v2579 = vsel %vm1016, %v2548, 0
        %v2581 = vsel %vm1016, %v2550, 0
        %v2583 = vsel %vm1016, %v2552, 0
        %2585 = vmatpush.xpose.msra.mxu0 0.0
        %2586 = vmatpush.xpose.msra.mxu0 0.0
        %2587 = vmatpush.xpose.msra.mxu0 0.0
        %2588 = vmatpush.xpose.msra.mxu0 0.0
        %2589 = vmatpush.xpose.msra.mxu0 0.0
        %2590 = vmatpush.xpose.msra.mxu0 0.0
        %2591 = vmatpush.xpose.msra.mxu0 0.0
        %2592 = vmatpush.xpose.msra.mxu0 0.0
        %2593 = vmatpush.xpose.msra.mxu0 %v2583
        %2594 = vmatpush.xpose.msra.mxu0 %v2581
        %2595 = vmatpush.xpose.msra.mxu0 %v2579
        %2596 = vmatpush.xpose.msra.mxu0 %v2577
        %2597 = vmatpush.xpose.msra.mxu0 %v2575
        %2598 = vmatpush.xpose.msra.mxu0 %v2573
        %2599 = vmatpush.xpose.msra.mxu0 %v2571
        %2600 = vmatpush.xpose.msra.mxu0 %v2569
        %2601 = vmatmul.f32.gmra.mxu0 %v2553
        %v2602 = vpop.f32.mrf.mxu0
        %v2603 = vadd.f32 0.0, %v2602
        %2604 = vmatmul.f32.gmra.mxu0 %v2555
        %v2605 = vpop.f32.mrf.mxu0
        %v2606 = vadd.f32 0.0, %v2605
        %2607 = vmatmul.f32.gmra.mxu0 %v2557
        %v2608 = vpop.f32.mrf.mxu0
        %v2609 = vadd.f32 0.0, %v2608
        %2610 = vmatmul.f32.gmra.mxu0 %v2559
        %v2611 = vpop.f32.mrf.mxu0
        %v2612 = vadd.f32 0.0, %v2611
        %2613 = vmatmul.f32.gmra.mxu0 %v2561
        %v2614 = vpop.f32.mrf.mxu0
        %v2615 = vadd.f32 0.0, %v2614
        %2616 = vmatmul.f32.gmra.mxu0 %v2563
        %v2617 = vpop.f32.mrf.mxu0
        %v2618 = vadd.f32 0.0, %v2617
        %2619 = vmatmul.f32.gmra.mxu0 %v2565
        %v2620 = vpop.f32.mrf.mxu0
        %v2621 = vadd.f32 0.0, %v2620
        %2622 = vmatmul.f32.gmra.mxu0 %v2567
        %v2623 = vpop.f32.mrf.mxu0
        %v2624 = vadd.f32 0.0, %v2623
        %2625 = vdwg.mxu0
        %v2626 = vsel %vm1106, %v2603, -inf
        %2627 = vmax.xlane.f32.xlu0 %v2626
        %v2628 = vpop.xlane.xlu0 %2627
        %v2629 = vsel %vm1106, %v2606, -inf
        %2630 = vmax.xlane.f32.xlu0 %v2629
        %v2631 = vpop.xlane.xlu0 %2630
        %v2632 = vsel %vm1106, %v2609, -inf
        %2633 = vmax.xlane.f32.xlu0 %v2632
        %v2634 = vpop.xlane.xlu0 %2633
        %v2635 = vsel %vm1106, %v2612, -inf
        %2636 = vmax.xlane.f32.xlu0 %v2635
        %v2637 = vpop.xlane.xlu0 %2636
        %v2638 = vsel %vm1106, %v2615, -inf
        %2639 = vmax.xlane.f32.xlu0 %v2638
        %v2640 = vpop.xlane.xlu0 %2639
        %v2641 = vsel %vm1106, %v2618, -inf
        %2642 = vmax.xlane.f32.xlu0 %v2641
        %v2643 = vpop.xlane.xlu0 %2642
        %v2644 = vsel %vm1106, %v2621, -inf
        %2645 = vmax.xlane.f32.xlu0 %v2644
        %v2646 = vpop.xlane.xlu0 %2645
        %v2647 = vsel %vm1106, %v2624, -inf
        %2648 = vmax.xlane.f32.xlu0 %v2647
        %v2649 = vpop.xlane.xlu0 %2648
        %v2650 = vsub.f32 %v2603, %v2628
        %v2651 = vsub.f32 %v2606, %v2631
        %v2652 = vsub.f32 %v2609, %v2634
        %v2653 = vsub.f32 %v2612, %v2637
        %v2654 = vsub.f32 %v2615, %v2640
        %v2655 = vsub.f32 %v2618, %v2643
        %v2656 = vsub.f32 %v2621, %v2646
        %v2657 = vsub.f32 %v2624, %v2649
        %v2658 = vmul.f32 %v2650, 1.442695
        %v2659 = vpow.pop %v2658
        %v2660 = vmul.f32 %v2651, 1.442695
        %v2661 = vpow.pop %v2660
        %v2662 = vmul.f32 %v2652, 1.442695
        %v2663 = vpow.pop %v2662
        %v2664 = vmul.f32 %v2653, 1.442695
        %v2665 = vpow.pop %v2664
        %v2666 = vmul.f32 %v2654, 1.442695
        %v2667 = vpow.pop %v2666
        %v2668 = vmul.f32 %v2655, 1.442695
        %v2669 = vpow.pop %v2668
        %v2670 = vmul.f32 %v2656, 1.442695
        %v2671 = vpow.pop %v2670
        %v2672 = vmul.f32 %v2657, 1.442695
        %v2673 = vpow.pop %v2672
        %v2674 = vsel %vm1106, %v2659, 0.0
        %2675 = vadd.xlane.f32.xlu0 %v2674
        %v2676 = vpop.xlane.xlu0 %2675
        %v2677 = vsel %vm1106, %v2661, 0.0
        %2678 = vadd.xlane.f32.xlu0 %v2677
        %v2679 = vpop.xlane.xlu0 %2678
        %v2680 = vsel %vm1106, %v2663, 0.0
        %2681 = vadd.xlane.f32.xlu0 %v2680
        %v2682 = vpop.xlane.xlu0 %2681
        %v2683 = vsel %vm1106, %v2665, 0.0
        %2684 = vadd.xlane.f32.xlu0 %v2683
        %v2685 = vpop.xlane.xlu0 %2684
        %v2686 = vsel %vm1106, %v2667, 0.0
        %2687 = vadd.xlane.f32.xlu0 %v2686
        %v2688 = vpop.xlane.xlu0 %2687
        %v2689 = vsel %vm1106, %v2669, 0.0
        %2690 = vadd.xlane.f32.xlu0 %v2689
        %v2691 = vpop.xlane.xlu0 %2690
        %v2692 = vsel %vm1106, %v2671, 0.0
        %2693 = vadd.xlane.f32.xlu0 %v2692
        %v2694 = vpop.xlane.xlu0 %2693
        %v2695 = vsel %vm1106, %v2673, 0.0
        %2696 = vadd.xlane.f32.xlu0 %v2695
        %v2697 = vpop.xlane.xlu0 %2696
        %v2698 = vrcp.pop %v2676
        %v2699 = vrcp.pop %v2679
        %v2700 = vrcp.pop %v2682
        %v2701 = vrcp.pop %v2685
        %v2702 = vrcp.pop %v2688
        %v2703 = vrcp.pop %v2691
        %v2704 = vrcp.pop %v2694
        %v2705 = vrcp.pop %v2697
        %v2706 = vmul.f32 %v2659, %v2698
        %v2707 = vmul.f32 %v2661, %v2699
        %v2708 = vmul.f32 %v2663, %v2700
        %v2709 = vmul.f32 %v2665, %v2701
        %v2710 = vmul.f32 %v2667, %v2702
        %v2711 = vmul.f32 %v2669, %v2703
        %v2712 = vmul.f32 %v2671, %v2704
        %v2713 = vmul.f32 %v2673, %v2705
        %2722 = vrot.lane.b32.xlu0 %v2248, 96
        %v2723 = vpop.permute.xlu0 %2722
        %2724 = vrot.lane.b32.xlu0 %v2251, 96
        %v2725 = vpop.permute.xlu0 %2724
        %2726 = vrot.lane.b32.xlu0 %v2254, 96
        %v2727 = vpop.permute.xlu0 %2726
        %2728 = vrot.lane.b32.xlu0 %v2257, 96
        %v2729 = vpop.permute.xlu0 %2728
        %2730 = vrot.lane.b32.xlu0 %v2260, 96
        %v2731 = vpop.permute.xlu0 %2730
        %2732 = vrot.lane.b32.xlu0 %v2263, 96
        %v2733 = vpop.permute.xlu0 %2732
        %2734 = vrot.lane.b32.xlu0 %v2266, 96
        %v2735 = vpop.permute.xlu0 %2734
        %2736 = vrot.lane.b32.xlu0 %v2269, 96
        %v2737 = vpop.permute.xlu0 %2736
        %v2747 = vsel %vm1106, %v2706, 0
        %v2750 = vsel %vm1106, %v2707, 0
        %v2753 = vsel %vm1106, %v2708, 0
        %v2756 = vsel %vm1106, %v2709, 0
        %v2759 = vsel %vm1106, %v2710, 0
        %v2762 = vsel %vm1106, %v2711, 0
        %v2765 = vsel %vm1106, %v2712, 0
        %v2768 = vsel %vm1106, %v2713, 0
        %2770 = vmatpush.msra.mxu0 0.0
        %2771 = vmatpush.msra.mxu0 0.0
        %2772 = vmatpush.msra.mxu0 0.0
        %2773 = vmatpush.msra.mxu0 0.0
        %2774 = vmatpush.msra.mxu0 0.0
        %2775 = vmatpush.msra.mxu0 0.0
        %2776 = vmatpush.msra.mxu0 0.0
        %2777 = vmatpush.msra.mxu0 0.0
        %2778 = vmatpush.msra.mxu0 %v2737
        %2779 = vmatpush.msra.mxu0 %v2735
        %2780 = vmatpush.msra.mxu0 %v2733
        %2781 = vmatpush.msra.mxu0 %v2731
        %2782 = vmatpush.msra.mxu0 %v2729
        %2783 = vmatpush.msra.mxu0 %v2727
        %2784 = vmatpush.msra.mxu0 %v2725
        %2785 = vmatpush.msra.mxu0 %v2723
        %2786 = vmatmul.f32.gmra.mxu0 %v2747
        %v2787 = vpop.f32.mrf.mxu0
        %v2788 = vadd.f32 0.0, %v2787
        %2789 = vmatmul.f32.gmra.mxu0 %v2750
        %v2790 = vpop.f32.mrf.mxu0
        %v2791 = vadd.f32 0.0, %v2790
        %2792 = vmatmul.f32.gmra.mxu0 %v2753
        %v2793 = vpop.f32.mrf.mxu0
        %v2794 = vadd.f32 0.0, %v2793
        %2795 = vmatmul.f32.gmra.mxu0 %v2756
        %v2796 = vpop.f32.mrf.mxu0
        %v2797 = vadd.f32 0.0, %v2796
        %2798 = vmatmul.f32.gmra.mxu0 %v2759
        %v2799 = vpop.f32.mrf.mxu0
        %v2800 = vadd.f32 0.0, %v2799
        %2801 = vmatmul.f32.gmra.mxu0 %v2762
        %v2802 = vpop.f32.mrf.mxu0
        %v2803 = vadd.f32 0.0, %v2802
        %2804 = vmatmul.f32.gmra.mxu0 %v2765
        %v2805 = vpop.f32.mrf.mxu0
        %v2806 = vadd.f32 0.0, %v2805
        %2807 = vmatmul.f32.gmra.mxu0 %v2768
        %v2808 = vpop.f32.mrf.mxu0
        %v2809 = vadd.f32 0.0, %v2808
        %2810 = vdwg.mxu0
        %2819 = vrot.lane.b32.xlu0 %v2788, 32
        %v2820 = vpop.permute.xlu0 %2819
        %2821 = vrot.lane.b32.xlu0 %v2791, 32
        %v2822 = vpop.permute.xlu0 %2821
        %2823 = vrot.lane.b32.xlu0 %v2794, 32
        %v2824 = vpop.permute.xlu0 %2823
        %2825 = vrot.lane.b32.xlu0 %v2797, 32
        %v2826 = vpop.permute.xlu0 %2825
        %2827 = vrot.lane.b32.xlu0 %v2800, 32
        %v2828 = vpop.permute.xlu0 %2827
        %2829 = vrot.lane.b32.xlu0 %v2803, 32
        %v2830 = vpop.permute.xlu0 %2829
        %2831 = vrot.lane.b32.xlu0 %v2806, 32
        %v2832 = vpop.permute.xlu0 %2831
        %2833 = vrot.lane.b32.xlu0 %v2809, 32
        %v2834 = vpop.permute.xlu0 %2833
        %2843 = vst.msk [vmem:[%s2512] sm:$0xff] %vm1590, %v2820
        %2844 = vst.msk [vmem:[%s2512 + $0x8] sm:$0xff] %vm1590, %v2822
        %2845 = vst.msk [vmem:[%s2512 + $0x10] sm:$0xff] %vm1590, %v2824
        %2846 = vst.msk [vmem:[%s2512 + $0x18] sm:$0xff] %vm1590, %v2826
        %2847 = vst.msk [vmem:[%s2512 + $0x20] sm:$0xff] %vm1590, %v2828
        %2848 = vst.msk [vmem:[%s2512 + $0x28] sm:$0xff] %vm1590, %v2830
        %2849 = vst.msk [vmem:[%s2512 + $0x30] sm:$0xff] %vm1590, %v2832
        %2850 = vst.msk [vmem:[%s2512 + $0x38] sm:$0xff] %vm1590, %v2834
        %2851 = vrot.lane.b32.xlu0 %v2246, 64
        %v2852 = vpop.permute.xlu0 %2851
        %2853 = vrot.lane.b32.xlu0 %v2249, 64
        %v2854 = vpop.permute.xlu0 %2853
        %2855 = vrot.lane.b32.xlu0 %v2252, 64
        %v2856 = vpop.permute.xlu0 %2855
        %2857 = vrot.lane.b32.xlu0 %v2255, 64
        %v2858 = vpop.permute.xlu0 %2857
        %2859 = vrot.lane.b32.xlu0 %v2258, 64
        %v2860 = vpop.permute.xlu0 %2859
        %2861 = vrot.lane.b32.xlu0 %v2261, 64
        %v2862 = vpop.permute.xlu0 %2861
        %2863 = vrot.lane.b32.xlu0 %v2264, 64
        %v2864 = vpop.permute.xlu0 %2863
        %2865 = vrot.lane.b32.xlu0 %v2267, 64
        %v2866 = vpop.permute.xlu0 %2865
        %2867 = vrot.lane.b32.xlu0 %v2247, 64
        %v2868 = vpop.permute.xlu0 %2867
        %2869 = vrot.lane.b32.xlu0 %v2250, 64
        %v2870 = vpop.permute.xlu0 %2869
        %2871 = vrot.lane.b32.xlu0 %v2253, 64
        %v2872 = vpop.permute.xlu0 %2871
        %2873 = vrot.lane.b32.xlu0 %v2256, 64
        %v2874 = vpop.permute.xlu0 %2873
        %2875 = vrot.lane.b32.xlu0 %v2259, 64
        %v2876 = vpop.permute.xlu0 %2875
        %2877 = vrot.lane.b32.xlu0 %v2262, 64
        %v2878 = vpop.permute.xlu0 %2877
        %2879 = vrot.lane.b32.xlu0 %v2265, 64
        %v2880 = vpop.permute.xlu0 %2879
        %2881 = vrot.lane.b32.xlu0 %v2268, 64
        %v2882 = vpop.permute.xlu0 %2881
        %v2883 = vsel %vm1016, %v2852, 0
        %v2885 = vsel %vm1016, %v2854, 0
        %v2887 = vsel %vm1016, %v2856, 0
        %v2889 = vsel %vm1016, %v2858, 0
        %v2891 = vsel %vm1016, %v2860, 0
        %v2893 = vsel %vm1016, %v2862, 0
        %v2895 = vsel %vm1016, %v2864, 0
        %v2897 = vsel %vm1016, %v2866, 0
        %v2899 = vsel %vm1016, %v2868, 0
        %v2901 = vsel %vm1016, %v2870, 0
        %v2903 = vsel %vm1016, %v2872, 0
        %v2905 = vsel %vm1016, %v2874, 0
        %v2907 = vsel %vm1016, %v2876, 0
        %v2909 = vsel %vm1016, %v2878, 0
        %v2911 = vsel %vm1016, %v2880, 0
        %v2913 = vsel %vm1016, %v2882, 0
        %2915 = vmatpush.xpose.msra.mxu0 0.0
        %2916 = vmatpush.xpose.msra.mxu0 0.0
        %2917 = vmatpush.xpose.msra.mxu0 0.0
        %2918 = vmatpush.xpose.msra.mxu0 0.0
        %2919 = vmatpush.xpose.msra.mxu0 0.0
        %2920 = vmatpush.xpose.msra.mxu0 0.0
        %2921 = vmatpush.xpose.msra.mxu0 0.0
        %2922 = vmatpush.xpose.msra.mxu0 0.0
        %2923 = vmatpush.xpose.msra.mxu0 %v2913
        %2924 = vmatpush.xpose.msra.mxu0 %v2911
        %2925 = vmatpush.xpose.msra.mxu0 %v2909
        %2926 = vmatpush.xpose.msra.mxu0 %v2907
        %2927 = vmatpush.xpose.msra.mxu0 %v2905
        %2928 = vmatpush.xpose.msra.mxu0 %v2903
        %2929 = vmatpush.xpose.msra.mxu0 %v2901
        %2930 = vmatpush.xpose.msra.mxu0 %v2899
        %2931 = vmatmul.f32.gmra.mxu0 %v2883
        %v2932 = vpop.f32.mrf.mxu0
        %v2933 = vadd.f32 0.0, %v2932
        %2934 = vmatmul.f32.gmra.mxu0 %v2885
        %v2935 = vpop.f32.mrf.mxu0
        %v2936 = vadd.f32 0.0, %v2935
        %2937 = vmatmul.f32.gmra.mxu0 %v2887
        %v2938 = vpop.f32.mrf.mxu0
        %v2939 = vadd.f32 0.0, %v2938
        %2940 = vmatmul.f32.gmra.mxu0 %v2889
        %v2941 = vpop.f32.mrf.mxu0
        %v2942 = vadd.f32 0.0, %v2941
        %2943 = vmatmul.f32.gmra.mxu0 %v2891
        %v2944 = vpop.f32.mrf.mxu0
        %v2945 = vadd.f32 0.0, %v2944
        %2946 = vmatmul.f32.gmra.mxu0 %v2893
        %v2947 = vpop.f32.mrf.mxu0
        %v2948 = vadd.f32 0.0, %v2947
        %2949 = vmatmul.f32.gmra.mxu0 %v2895
        %v2950 = vpop.f32.mrf.mxu0
        %v2951 = vadd.f32 0.0, %v2950
        %2952 = vmatmul.f32.gmra.mxu0 %v2897
        %v2953 = vpop.f32.mrf.mxu0
        %v2954 = vadd.f32 0.0, %v2953
        %2955 = vdwg.mxu0
        %v2956 = vsel %vm1106, %v2933, -inf
        %2957 = vmax.xlane.f32.xlu0 %v2956
        %v2958 = vpop.xlane.xlu0 %2957
        %v2959 = vsel %vm1106, %v2936, -inf
        %2960 = vmax.xlane.f32.xlu0 %v2959
        %v2961 = vpop.xlane.xlu0 %2960
        %v2962 = vsel %vm1106, %v2939, -inf
        %2963 = vmax.xlane.f32.xlu0 %v2962
        %v2964 = vpop.xlane.xlu0 %2963
        %v2965 = vsel %vm1106, %v2942, -inf
        %2966 = vmax.xlane.f32.xlu0 %v2965
        %v2967 = vpop.xlane.xlu0 %2966
        %v2968 = vsel %vm1106, %v2945, -inf
        %2969 = vmax.xlane.f32.xlu0 %v2968
        %v2970 = vpop.xlane.xlu0 %2969
        %v2971 = vsel %vm1106, %v2948, -inf
        %2972 = vmax.xlane.f32.xlu0 %v2971
        %v2973 = vpop.xlane.xlu0 %2972
        %v2974 = vsel %vm1106, %v2951, -inf
        %2975 = vmax.xlane.f32.xlu0 %v2974
        %v2976 = vpop.xlane.xlu0 %2975
        %v2977 = vsel %vm1106, %v2954, -inf
        %2978 = vmax.xlane.f32.xlu0 %v2977
        %v2979 = vpop.xlane.xlu0 %2978
        %v2980 = vsub.f32 %v2933, %v2958
        %v2981 = vsub.f32 %v2936, %v2961
        %v2982 = vsub.f32 %v2939, %v2964
        %v2983 = vsub.f32 %v2942, %v2967
        %v2984 = vsub.f32 %v2945, %v2970
        %v2985 = vsub.f32 %v2948, %v2973
        %v2986 = vsub.f32 %v2951, %v2976
        %v2987 = vsub.f32 %v2954, %v2979
        %v2988 = vmul.f32 %v2980, 1.442695
        %v2989 = vpow.pop %v2988
        %v2990 = vmul.f32 %v2981, 1.442695
        %v2991 = vpow.pop %v2990
        %v2992 = vmul.f32 %v2982, 1.442695
        %v2993 = vpow.pop %v2992
        %v2994 = vmul.f32 %v2983, 1.442695
        %v2995 = vpow.pop %v2994
        %v2996 = vmul.f32 %v2984, 1.442695
        %v2997 = vpow.pop %v2996
        %v2998 = vmul.f32 %v2985, 1.442695
        %v2999 = vpow.pop %v2998
        %v3000 = vmul.f32 %v2986, 1.442695
        %v3001 = vpow.pop %v3000
        %v3002 = vmul.f32 %v2987, 1.442695
        %v3003 = vpow.pop %v3002
        %v3004 = vsel %vm1106, %v2989, 0.0
        %3005 = vadd.xlane.f32.xlu0 %v3004
        %v3006 = vpop.xlane.xlu0 %3005
        %v3007 = vsel %vm1106, %v2991, 0.0
        %3008 = vadd.xlane.f32.xlu0 %v3007
        %v3009 = vpop.xlane.xlu0 %3008
        %v3010 = vsel %vm1106, %v2993, 0.0
        %3011 = vadd.xlane.f32.xlu0 %v3010
        %v3012 = vpop.xlane.xlu0 %3011
        %v3013 = vsel %vm1106, %v2995, 0.0
        %3014 = vadd.xlane.f32.xlu0 %v3013
        %v3015 = vpop.xlane.xlu0 %3014
        %v3016 = vsel %vm1106, %v2997, 0.0
        %3017 = vadd.xlane.f32.xlu0 %v3016
        %v3018 = vpop.xlane.xlu0 %3017
        %v3019 = vsel %vm1106, %v2999, 0.0
        %3020 = vadd.xlane.f32.xlu0 %v3019
        %v3021 = vpop.xlane.xlu0 %3020
        %v3022 = vsel %vm1106, %v3001, 0.0
        %3023 = vadd.xlane.f32.xlu0 %v3022
        %v3024 = vpop.xlane.xlu0 %3023
        %v3025 = vsel %vm1106, %v3003, 0.0
        %3026 = vadd.xlane.f32.xlu0 %v3025
        %v3027 = vpop.xlane.xlu0 %3026
        %v3028 = vrcp.pop %v3006
        %v3029 = vrcp.pop %v3009
        %v3030 = vrcp.pop %v3012
        %v3031 = vrcp.pop %v3015
        %v3032 = vrcp.pop %v3018
        %v3033 = vrcp.pop %v3021
        %v3034 = vrcp.pop %v3024
        %v3035 = vrcp.pop %v3027
        %v3036 = vmul.f32 %v2989, %v3028
        %v3037 = vmul.f32 %v2991, %v3029
        %v3038 = vmul.f32 %v2993, %v3030
        %v3039 = vmul.f32 %v2995, %v3031
        %v3040 = vmul.f32 %v2997, %v3032
        %v3041 = vmul.f32 %v2999, %v3033
        %v3042 = vmul.f32 %v3001, %v3034
        %v3043 = vmul.f32 %v3003, %v3035
        %3044 = vrot.lane.b32.xlu0 %v2248, 64
        %v3045 = vpop.permute.xlu0 %3044
        %3046 = vrot.lane.b32.xlu0 %v2251, 64
        %v3047 = vpop.permute.xlu0 %3046
        %3048 = vrot.lane.b32.xlu0 %v2254, 64
        %v3049 = vpop.permute.xlu0 %3048
        %3050 = vrot.lane.b32.xlu0 %v2257, 64
        %v3051 = vpop.permute.xlu0 %3050
        %3052 = vrot.lane.b32.xlu0 %v2260, 64
        %v3053 = vpop.permute.xlu0 %3052
        %3054 = vrot.lane.b32.xlu0 %v2263, 64
        %v3055 = vpop.permute.xlu0 %3054
        %3056 = vrot.lane.b32.xlu0 %v2266, 64
        %v3057 = vpop.permute.xlu0 %3056
        %3058 = vrot.lane.b32.xlu0 %v2269, 64
        %v3059 = vpop.permute.xlu0 %3058
        %v3069 = vsel %vm1106, %v3036, 0
        %v3072 = vsel %vm1106, %v3037, 0
        %v3075 = vsel %vm1106, %v3038, 0
        %v3078 = vsel %vm1106, %v3039, 0
        %v3081 = vsel %vm1106, %v3040, 0
        %v3084 = vsel %vm1106, %v3041, 0
        %v3087 = vsel %vm1106, %v3042, 0
        %v3090 = vsel %vm1106, %v3043, 0
        %3092 = vmatpush.msra.mxu0 0.0
        %3093 = vmatpush.msra.mxu0 0.0
        %3094 = vmatpush.msra.mxu0 0.0
        %3095 = vmatpush.msra.mxu0 0.0
        %3096 = vmatpush.msra.mxu0 0.0
        %3097 = vmatpush.msra.mxu0 0.0
        %3098 = vmatpush.msra.mxu0 0.0
        %3099 = vmatpush.msra.mxu0 0.0
        %3100 = vmatpush.msra.mxu0 %v3059
        %3101 = vmatpush.msra.mxu0 %v3057
        %3102 = vmatpush.msra.mxu0 %v3055
        %3103 = vmatpush.msra.mxu0 %v3053
        %3104 = vmatpush.msra.mxu0 %v3051
        %3105 = vmatpush.msra.mxu0 %v3049
        %3106 = vmatpush.msra.mxu0 %v3047
        %3107 = vmatpush.msra.mxu0 %v3045
        %3108 = vmatmul.f32.gmra.mxu0 %v3069
        %v3109 = vpop.f32.mrf.mxu0
        %v3110 = vadd.f32 0.0, %v3109
        %3111 = vmatmul.f32.gmra.mxu0 %v3072
        %v3112 = vpop.f32.mrf.mxu0
        %v3113 = vadd.f32 0.0, %v3112
        %3114 = vmatmul.f32.gmra.mxu0 %v3075
        %v3115 = vpop.f32.mrf.mxu0
        %v3116 = vadd.f32 0.0, %v3115
        %3117 = vmatmul.f32.gmra.mxu0 %v3078
        %v3118 = vpop.f32.mrf.mxu0
        %v3119 = vadd.f32 0.0, %v3118
        %3120 = vmatmul.f32.gmra.mxu0 %v3081
        %v3121 = vpop.f32.mrf.mxu0
        %v3122 = vadd.f32 0.0, %v3121
        %3123 = vmatmul.f32.gmra.mxu0 %v3084
        %v3124 = vpop.f32.mrf.mxu0
        %v3125 = vadd.f32 0.0, %v3124
        %3126 = vmatmul.f32.gmra.mxu0 %v3087
        %v3127 = vpop.f32.mrf.mxu0
        %v3128 = vadd.f32 0.0, %v3127
        %3129 = vmatmul.f32.gmra.mxu0 %v3090
        %v3130 = vpop.f32.mrf.mxu0
        %v3131 = vadd.f32 0.0, %v3130
        %3132 = vdwg.mxu0
        %3141 = vrot.lane.b32.xlu0 %v3110, 64
        %v3142 = vpop.permute.xlu0 %3141
        %3143 = vrot.lane.b32.xlu0 %v3113, 64
        %v3144 = vpop.permute.xlu0 %3143
        %3145 = vrot.lane.b32.xlu0 %v3116, 64
        %v3146 = vpop.permute.xlu0 %3145
        %3147 = vrot.lane.b32.xlu0 %v3119, 64
        %v3148 = vpop.permute.xlu0 %3147
        %3149 = vrot.lane.b32.xlu0 %v3122, 64
        %v3150 = vpop.permute.xlu0 %3149
        %3151 = vrot.lane.b32.xlu0 %v3125, 64
        %v3152 = vpop.permute.xlu0 %3151
        %3153 = vrot.lane.b32.xlu0 %v3128, 64
        %v3154 = vpop.permute.xlu0 %3153
        %3155 = vrot.lane.b32.xlu0 %v3131, 64
        %v3156 = vpop.permute.xlu0 %3155
        %3165 = vst.msk [vmem:[%s2512] sm:$0xff] %vm1913, %v3142
        %3166 = vst.msk [vmem:[%s2512 + $0x8] sm:$0xff] %vm1913, %v3144
        %3167 = vst.msk [vmem:[%s2512 + $0x10] sm:$0xff] %vm1913, %v3146
        %3168 = vst.msk [vmem:[%s2512 + $0x18] sm:$0xff] %vm1913, %v3148
        %3169 = vst.msk [vmem:[%s2512 + $0x20] sm:$0xff] %vm1913, %v3150
        %3170 = vst.msk [vmem:[%s2512 + $0x28] sm:$0xff] %vm1913, %v3152
        %3171 = vst.msk [vmem:[%s2512 + $0x30] sm:$0xff] %vm1913, %v3154
        %3172 = vst.msk [vmem:[%s2512 + $0x38] sm:$0xff] %vm1913, %v3156
        %3173 = vrot.lane.b32.xlu0 %v2246, 32
        %v3174 = vpop.permute.xlu0 %3173
        %3175 = vrot.lane.b32.xlu0 %v2249, 32
        %v3176 = vpop.permute.xlu0 %3175
        %3177 = vrot.lane.b32.xlu0 %v2252, 32
        %v3178 = vpop.permute.xlu0 %3177
        %3179 = vrot.lane.b32.xlu0 %v2255, 32
        %v3180 = vpop.permute.xlu0 %3179
        %3181 = vrot.lane.b32.xlu0 %v2258, 32
        %v3182 = vpop.permute.xlu0 %3181
        %3183 = vrot.lane.b32.xlu0 %v2261, 32
        %v3184 = vpop.permute.xlu0 %3183
        %3185 = vrot.lane.b32.xlu0 %v2264, 32
        %v3186 = vpop.permute.xlu0 %3185
        %3187 = vrot.lane.b32.xlu0 %v2267, 32
        %v3188 = vpop.permute.xlu0 %3187
        %3189 = vrot.lane.b32.xlu0 %v2247, 32
        %v3190 = vpop.permute.xlu0 %3189
        %3191 = vrot.lane.b32.xlu0 %v2250, 32
        %v3192 = vpop.permute.xlu0 %3191
        %3193 = vrot.lane.b32.xlu0 %v2253, 32
        %v3194 = vpop.permute.xlu0 %3193
        %3195 = vrot.lane.b32.xlu0 %v2256, 32
        %v3196 = vpop.permute.xlu0 %3195
        %3197 = vrot.lane.b32.xlu0 %v2259, 32
        %v3198 = vpop.permute.xlu0 %3197
        %3199 = vrot.lane.b32.xlu0 %v2262, 32
        %v3200 = vpop.permute.xlu0 %3199
        %3201 = vrot.lane.b32.xlu0 %v2265, 32
        %v3202 = vpop.permute.xlu0 %3201
        %3203 = vrot.lane.b32.xlu0 %v2268, 32
        %v3204 = vpop.permute.xlu0 %3203
        %v3205 = vsel %vm1016, %v3174, 0
        %v3207 = vsel %vm1016, %v3176, 0
        %v3209 = vsel %vm1016, %v3178, 0
        %v3211 = vsel %vm1016, %v3180, 0
        %v3213 = vsel %vm1016, %v3182, 0
        %v3215 = vsel %vm1016, %v3184, 0
        %v3217 = vsel %vm1016, %v3186, 0
        %v3219 = vsel %vm1016, %v3188, 0
        %v3221 = vsel %vm1016, %v3190, 0
        %v3223 = vsel %vm1016, %v3192, 0
        %v3225 = vsel %vm1016, %v3194, 0
        %v3227 = vsel %vm1016, %v3196, 0
        %v3229 = vsel %vm1016, %v3198, 0
        %v3231 = vsel %vm1016, %v3200, 0
        %v3233 = vsel %vm1016, %v3202, 0
        %v3235 = vsel %vm1016, %v3204, 0
        %3237 = vmatpush.xpose.msra.mxu0 0.0
        %3238 = vmatpush.xpose.msra.mxu0 0.0
        %3239 = vmatpush.xpose.msra.mxu0 0.0
        %3240 = vmatpush.xpose.msra.mxu0 0.0
        %3241 = vmatpush.xpose.msra.mxu0 0.0
        %3242 = vmatpush.xpose.msra.mxu0 0.0
        %3243 = vmatpush.xpose.msra.mxu0 0.0
        %3244 = vmatpush.xpose.msra.mxu0 0.0
        %3245 = vmatpush.xpose.msra.mxu0 %v3235
        %3246 = vmatpush.xpose.msra.mxu0 %v3233
        %3247 = vmatpush.xpose.msra.mxu0 %v3231
        %3248 = vmatpush.xpose.msra.mxu0 %v3229
        %3249 = vmatpush.xpose.msra.mxu0 %v3227
        %3250 = vmatpush.xpose.msra.mxu0 %v3225
        %3251 = vmatpush.xpose.msra.mxu0 %v3223
        %3252 = vmatpush.xpose.msra.mxu0 %v3221
        %3253 = vmatmul.f32.gmra.mxu0 %v3205
        %v3254 = vpop.f32.mrf.mxu0
        %v3255 = vadd.f32 0.0, %v3254
        %3256 = vmatmul.f32.gmra.mxu0 %v3207
        %v3257 = vpop.f32.mrf.mxu0
        %v3258 = vadd.f32 0.0, %v3257
        %3259 = vmatmul.f32.gmra.mxu0 %v3209
        %v3260 = vpop.f32.mrf.mxu0
        %v3261 = vadd.f32 0.0, %v3260
        %3262 = vmatmul.f32.gmra.mxu0 %v3211
        %v3263 = vpop.f32.mrf.mxu0
        %v3264 = vadd.f32 0.0, %v3263
        %3265 = vmatmul.f32.gmra.mxu0 %v3213
        %v3266 = vpop.f32.mrf.mxu0
        %v3267 = vadd.f32 0.0, %v3266
        %3268 = vmatmul.f32.gmra.mxu0 %v3215
        %v3269 = vpop.f32.mrf.mxu0
        %v3270 = vadd.f32 0.0, %v3269
        %3271 = vmatmul.f32.gmra.mxu0 %v3217
        %v3272 = vpop.f32.mrf.mxu0
        %v3273 = vadd.f32 0.0, %v3272
        %3274 = vmatmul.f32.gmra.mxu0 %v3219
        %v3275 = vpop.f32.mrf.mxu0
        %v3276 = vadd.f32 0.0, %v3275
        %3277 = vdwg.mxu0
        %v3278 = vsel %vm1106, %v3255, -inf
        %3279 = vmax.xlane.f32.xlu0 %v3278
        %v3280 = vpop.xlane.xlu0 %3279
        %v3281 = vsel %vm1106, %v3258, -inf
        %3282 = vmax.xlane.f32.xlu0 %v3281
        %v3283 = vpop.xlane.xlu0 %3282
        %v3284 = vsel %vm1106, %v3261, -inf
        %3285 = vmax.xlane.f32.xlu0 %v3284
        %v3286 = vpop.xlane.xlu0 %3285
        %v3287 = vsel %vm1106, %v3264, -inf
        %3288 = vmax.xlane.f32.xlu0 %v3287
        %v3289 = vpop.xlane.xlu0 %3288
        %v3290 = vsel %vm1106, %v3267, -inf
        %3291 = vmax.xlane.f32.xlu0 %v3290
        %v3292 = vpop.xlane.xlu0 %3291
        %v3293 = vsel %vm1106, %v3270, -inf
        %3294 = vmax.xlane.f32.xlu0 %v3293
        %v3295 = vpop.xlane.xlu0 %3294
        %v3296 = vsel %vm1106, %v3273, -inf
        %3297 = vmax.xlane.f32.xlu0 %v3296
        %v3298 = vpop.xlane.xlu0 %3297
        %v3299 = vsel %vm1106, %v3276, -inf
        %3300 = vmax.xlane.f32.xlu0 %v3299
        %v3301 = vpop.xlane.xlu0 %3300
        %v3302 = vsub.f32 %v3255, %v3280
        %v3303 = vsub.f32 %v3258, %v3283
        %v3304 = vsub.f32 %v3261, %v3286
        %v3305 = vsub.f32 %v3264, %v3289
        %v3306 = vsub.f32 %v3267, %v3292
        %v3307 = vsub.f32 %v3270, %v3295
        %v3308 = vsub.f32 %v3273, %v3298
        %v3309 = vsub.f32 %v3276, %v3301
        %v3310 = vmul.f32 %v3302, 1.442695
        %v3311 = vpow.pop %v3310
        %v3312 = vmul.f32 %v3303, 1.442695
        %v3313 = vpow.pop %v3312
        %v3314 = vmul.f32 %v3304, 1.442695
        %v3315 = vpow.pop %v3314
        %v3316 = vmul.f32 %v3305, 1.442695
        %v3317 = vpow.pop %v3316
        %v3318 = vmul.f32 %v3306, 1.442695
        %v3319 = vpow.pop %v3318
        %v3320 = vmul.f32 %v3307, 1.442695
        %v3321 = vpow.pop %v3320
        %v3322 = vmul.f32 %v3308, 1.442695
        %v3323 = vpow.pop %v3322
        %v3324 = vmul.f32 %v3309, 1.442695
        %v3325 = vpow.pop %v3324
        %v3326 = vsel %vm1106, %v3311, 0.0
        %3327 = vadd.xlane.f32.xlu0 %v3326
        %v3328 = vpop.xlane.xlu0 %3327
        %v3329 = vsel %vm1106, %v3313, 0.0
        %3330 = vadd.xlane.f32.xlu0 %v3329
        %v3331 = vpop.xlane.xlu0 %3330
        %v3332 = vsel %vm1106, %v3315, 0.0
        %3333 = vadd.xlane.f32.xlu0 %v3332
        %v3334 = vpop.xlane.xlu0 %3333
        %v3335 = vsel %vm1106, %v3317, 0.0
        %3336 = vadd.xlane.f32.xlu0 %v3335
        %v3337 = vpop.xlane.xlu0 %3336
        %v3338 = vsel %vm1106, %v3319, 0.0
        %3339 = vadd.xlane.f32.xlu0 %v3338
        %v3340 = vpop.xlane.xlu0 %3339
        %v3341 = vsel %vm1106, %v3321, 0.0
        %3342 = vadd.xlane.f32.xlu0 %v3341
        %v3343 = vpop.xlane.xlu0 %3342
        %v3344 = vsel %vm1106, %v3323, 0.0
        %3345 = vadd.xlane.f32.xlu0 %v3344
        %v3346 = vpop.xlane.xlu0 %3345
        %v3347 = vsel %vm1106, %v3325, 0.0
        %3348 = vadd.xlane.f32.xlu0 %v3347
        %v3349 = vpop.xlane.xlu0 %3348
        %v3350 = vrcp.pop %v3328
        %v3351 = vrcp.pop %v3331
        %v3352 = vrcp.pop %v3334
        %v3353 = vrcp.pop %v3337
        %v3354 = vrcp.pop %v3340
        %v3355 = vrcp.pop %v3343
        %v3356 = vrcp.pop %v3346
        %v3357 = vrcp.pop %v3349
        %v3358 = vmul.f32 %v3311, %v3350
        %v3359 = vmul.f32 %v3313, %v3351
        %v3360 = vmul.f32 %v3315, %v3352
        %v3361 = vmul.f32 %v3317, %v3353
        %v3362 = vmul.f32 %v3319, %v3354
        %v3363 = vmul.f32 %v3321, %v3355
        %v3364 = vmul.f32 %v3323, %v3356
        %v3365 = vmul.f32 %v3325, %v3357
        %3366 = vrot.lane.b32.xlu0 %v2248, 32
        %v3367 = vpop.permute.xlu0 %3366
        %3368 = vrot.lane.b32.xlu0 %v2251, 32
        %v3369 = vpop.permute.xlu0 %3368
        %3370 = vrot.lane.b32.xlu0 %v2254, 32
        %v3371 = vpop.permute.xlu0 %3370
        %3372 = vrot.lane.b32.xlu0 %v2257, 32
        %v3373 = vpop.permute.xlu0 %3372
        %3374 = vrot.lane.b32.xlu0 %v2260, 32
        %v3375 = vpop.permute.xlu0 %3374
        %3376 = vrot.lane.b32.xlu0 %v2263, 32
        %v3377 = vpop.permute.xlu0 %3376
        %3378 = vrot.lane.b32.xlu0 %v2266, 32
        %v3379 = vpop.permute.xlu0 %3378
        %3380 = vrot.lane.b32.xlu0 %v2269, 32
        %v3381 = vpop.permute.xlu0 %3380
        %v3391 = vsel %vm1106, %v3358, 0
        %v3394 = vsel %vm1106, %v3359, 0
        %v3397 = vsel %vm1106, %v3360, 0
        %v3400 = vsel %vm1106, %v3361, 0
        %v3403 = vsel %vm1106, %v3362, 0
        %v3406 = vsel %vm1106, %v3363, 0
        %v3409 = vsel %vm1106, %v3364, 0
        %v3412 = vsel %vm1106, %v3365, 0
        %3414 = vmatpush.msra.mxu0 0.0
        %3415 = vmatpush.msra.mxu0 0.0
        %3416 = vmatpush.msra.mxu0 0.0
        %3417 = vmatpush.msra.mxu0 0.0
        %3418 = vmatpush.msra.mxu0 0.0
        %3419 = vmatpush.msra.mxu0 0.0
        %3420 = vmatpush.msra.mxu0 0.0
        %3421 = vmatpush.msra.mxu0 0.0
        %3422 = vmatpush.msra.mxu0 %v3381
        %3423 = vmatpush.msra.mxu0 %v3379
        %3424 = vmatpush.msra.mxu0 %v3377
        %3425 = vmatpush.msra.mxu0 %v3375
        %3426 = vmatpush.msra.mxu0 %v3373
        %3427 = vmatpush.msra.mxu0 %v3371
        %3428 = vmatpush.msra.mxu0 %v3369
        %3429 = vmatpush.msra.mxu0 %v3367
        %3430 = vmatmul.f32.gmra.mxu0 %v3391
        %v3431 = vpop.f32.mrf.mxu0
        %v3432 = vadd.f32 0.0, %v3431
        %3433 = vmatmul.f32.gmra.mxu0 %v3394
        %v3434 = vpop.f32.mrf.mxu0
        %v3435 = vadd.f32 0.0, %v3434
        %3436 = vmatmul.f32.gmra.mxu0 %v3397
        %v3437 = vpop.f32.mrf.mxu0
        %v3438 = vadd.f32 0.0, %v3437
        %3439 = vmatmul.f32.gmra.mxu0 %v3400
        %v3440 = vpop.f32.mrf.mxu0
        %v3441 = vadd.f32 0.0, %v3440
        %3442 = vmatmul.f32.gmra.mxu0 %v3403
        %v3443 = vpop.f32.mrf.mxu0
        %v3444 = vadd.f32 0.0, %v3443
        %3445 = vmatmul.f32.gmra.mxu0 %v3406
        %v3446 = vpop.f32.mrf.mxu0
        %v3447 = vadd.f32 0.0, %v3446
        %3448 = vmatmul.f32.gmra.mxu0 %v3409
        %v3449 = vpop.f32.mrf.mxu0
        %v3450 = vadd.f32 0.0, %v3449
        %3451 = vmatmul.f32.gmra.mxu0 %v3412
        %v3452 = vpop.f32.mrf.mxu0
        %v3453 = vadd.f32 0.0, %v3452
        %3454 = vdwg.mxu0
        %3463 = vrot.lane.b32.xlu0 %v3432, 96
        %v3464 = vpop.permute.xlu0 %3463
        %3465 = vrot.lane.b32.xlu0 %v3435, 96
        %v3466 = vpop.permute.xlu0 %3465
        %3467 = vrot.lane.b32.xlu0 %v3438, 96
        %v3468 = vpop.permute.xlu0 %3467
        %3469 = vrot.lane.b32.xlu0 %v3441, 96
        %v3470 = vpop.permute.xlu0 %3469
        %3471 = vrot.lane.b32.xlu0 %v3444, 96
        %v3472 = vpop.permute.xlu0 %3471
        %3473 = vrot.lane.b32.xlu0 %v3447, 96
        %v3474 = vpop.permute.xlu0 %3473
        %3475 = vrot.lane.b32.xlu0 %v3450, 96
        %v3476 = vpop.permute.xlu0 %3475
        %3477 = vrot.lane.b32.xlu0 %v3453, 96
        %v3478 = vpop.permute.xlu0 %3477
        %3487 = vst.msk [vmem:[%s2512] sm:$0xff] %vm2236, %v3464
        %3488 = vst.msk [vmem:[%s2512 + $0x8] sm:$0xff] %vm2236, %v3466
        %3489 = vst.msk [vmem:[%s2512 + $0x10] sm:$0xff] %vm2236, %v3468
        %3490 = vst.msk [vmem:[%s2512 + $0x18] sm:$0xff] %vm2236, %v3470
        %3491 = vst.msk [vmem:[%s2512 + $0x20] sm:$0xff] %vm2236, %v3472
        %3492 = vst.msk [vmem:[%s2512 + $0x28] sm:$0xff] %vm2236, %v3474
        %3493 = vst.msk [vmem:[%s2512 + $0x30] sm:$0xff] %vm2236, %v3476
        %3494 = vst.msk [vmem:[%s2512 + $0x38] sm:$0xff] %vm2236, %v3478
        %v3495 = vld [vmem:[#allocation3] sm:$0xff]
        %v3496 = vld [vmem:[#allocation3 + $0x8] sm:$0xff]
        %v3497 = vld [vmem:[#allocation3 + $0x10] sm:$0xff]
        %v3498 = vld [vmem:[#allocation3 + $0x18] sm:$0xff]
        %v3499 = vld [vmem:[#allocation3 + $0x20] sm:$0xff]
        %v3500 = vld [vmem:[#allocation3 + $0x28] sm:$0xff]
        %v3501 = vld [vmem:[#allocation3 + $0x30] sm:$0xff]
        %v3502 = vld [vmem:[#allocation3 + $0x38] sm:$0xff]
        %v3503 = vld [vmem:[#allocation3 + $0x40] sm:$0xff]
        %v3504 = vld [vmem:[#allocation3 + $0x48] sm:$0xff]
        %v3505 = vld [vmem:[#allocation3 + $0x50] sm:$0xff]
        %v3506 = vld [vmem:[#allocation3 + $0x58] sm:$0xff]
        %v3507 = vld [vmem:[#allocation3 + $0x60] sm:$0xff]
        %v3508 = vld [vmem:[#allocation3 + $0x68] sm:$0xff]
        %v3509 = vld [vmem:[#allocation3 + $0x70] sm:$0xff]
        %v3510 = vld [vmem:[#allocation3 + $0x78] sm:$0xff]
        %v3511 = vld [vmem:[#allocation12] sm:$0xff]
        %v3512 = vld [vmem:[#allocation12 + $0x8] sm:$0xff]
        %v3513 = vld [vmem:[#allocation12 + $0x10] sm:$0xff]
        %v3514 = vld [vmem:[#allocation12 + $0x18] sm:$0xff]
        %v3515 = vld [vmem:[#allocation12 + $0x20] sm:$0xff]
        %v3516 = vld [vmem:[#allocation12 + $0x28] sm:$0xff]
        %v3517 = vld [vmem:[#allocation12 + $0x30] sm:$0xff]
        %v3518 = vld [vmem:[#allocation12 + $0x38] sm:$0xff]
        %v3519 = vld [vmem:[#allocation12 + $0x40] sm:$0xff]
        %v3520 = vld [vmem:[#allocation12 + $0x48] sm:$0xff]
        %v3521 = vld [vmem:[#allocation12 + $0x50] sm:$0xff]
        %v3522 = vld [vmem:[#allocation12 + $0x58] sm:$0xff]
        %v3523 = vld [vmem:[#allocation12 + $0x60] sm:$0xff]
        %v3524 = vld [vmem:[#allocation12 + $0x68] sm:$0xff]
        %v3525 = vld [vmem:[#allocation12 + $0x70] sm:$0xff]
        %v3526 = vld [vmem:[#allocation12 + $0x78] sm:$0xff]
        %v3527 = vld [vmem:[%s7] sm:$0x1]
        %v3529 = vperm.slane %v3527, 0
        %3531 = vmatpush.msra.mxu0 %v3526
        %3532 = vmatpush.msra.mxu0 %v3525
        %3533 = vmatpush.msra.mxu0 %v3524
        %3534 = vmatpush.msra.mxu0 %v3523
        %3535 = vmatpush.msra.mxu0 %v3522
        %3536 = vmatpush.msra.mxu0 %v3521
        %3537 = vmatpush.msra.mxu0 %v3520
        %3538 = vmatpush.msra.mxu0 %v3519
        %3539 = vmatpush.msra.mxu0 %v3518
        %3540 = vmatpush.msra.mxu0 %v3517
        %3541 = vmatpush.msra.mxu0 %v3516
        %3542 = vmatpush.msra.mxu0 %v3515
        %3543 = vmatpush.msra.mxu0 %v3514
        %3544 = vmatpush.msra.mxu0 %v3513
        %3545 = vmatpush.msra.mxu0 %v3512
        %3546 = vmatpush.msra.mxu0 %v3511
        %3547 = vmatmul.f32.gmra.mxu0 %v3495
        %v3548 = vpop.f32.mrf.mxu0
        %v3549 = vadd.f32 %v3529, %v3548
        %3550 = vmatmul.f32.gmra.mxu0 %v3496
        %v3551 = vpop.f32.mrf.mxu0
        %v3552 = vadd.f32 %v3529, %v3551
        %3553 = vmatmul.f32.gmra.mxu0 %v3497
        %v3554 = vpop.f32.mrf.mxu0
        %v3555 = vadd.f32 %v3529, %v3554
        %3556 = vmatmul.f32.gmra.mxu0 %v3498
        %v3557 = vpop.f32.mrf.mxu0
        %v3558 = vadd.f32 %v3529, %v3557
        %3559 = vmatmul.f32.gmra.mxu0 %v3499
        %v3560 = vpop.f32.mrf.mxu0
        %v3561 = vadd.f32 %v3529, %v3560
        %3562 = vmatmul.f32.gmra.mxu0 %v3500
        %v3563 = vpop.f32.mrf.mxu0
        %v3564 = vadd.f32 %v3529, %v3563
        %3565 = vmatmul.f32.gmra.mxu0 %v3501
        %v3566 = vpop.f32.mrf.mxu0
        %v3567 = vadd.f32 %v3529, %v3566
        %3568 = vmatmul.f32.gmra.mxu0 %v3502
        %v3569 = vpop.f32.mrf.mxu0
        %v3570 = vadd.f32 %v3529, %v3569
        %3571 = vmatmul.f32.gmra.mxu0 %v3503
        %v3572 = vpop.f32.mrf.mxu0
        %v3573 = vadd.f32 %v3529, %v3572
        %3574 = vmatmul.f32.gmra.mxu0 %v3504
        %v3575 = vpop.f32.mrf.mxu0
        %v3576 = vadd.f32 %v3529, %v3575
        %3577 = vmatmul.f32.gmra.mxu0 %v3505
        %v3578 = vpop.f32.mrf.mxu0
        %v3579 = vadd.f32 %v3529, %v3578
        %3580 = vmatmul.f32.gmra.mxu0 %v3506
        %v3581 = vpop.f32.mrf.mxu0
        %v3582 = vadd.f32 %v3529, %v3581
        %3583 = vmatmul.f32.gmra.mxu0 %v3507
        %v3584 = vpop.f32.mrf.mxu0
        %v3585 = vadd.f32 %v3529, %v3584
        %3586 = vmatmul.f32.gmra.mxu0 %v3508
        %v3587 = vpop.f32.mrf.mxu0
        %v3588 = vadd.f32 %v3529, %v3587
        %3589 = vmatmul.f32.gmra.mxu0 %v3509
        %v3590 = vpop.f32.mrf.mxu0
        %v3591 = vadd.f32 %v3529, %v3590
        %3592 = vmatmul.f32.gmra.mxu0 %v3510
        %v3593 = vpop.f32.mrf.mxu0
        %v3594 = vadd.f32 %v3529, %v3593
        %3595 = vdwg.mxu0
        %v3596 = vld [vmem:[#allocation13] sm:$0xff]
        %v3597 = vld [vmem:[#allocation13 + $0x8] sm:$0xff]
        %v3598 = vld [vmem:[#allocation13 + $0x10] sm:$0xff]
        %v3599 = vld [vmem:[#allocation13 + $0x18] sm:$0xff]
        %v3600 = vld [vmem:[#allocation13 + $0x20] sm:$0xff]
        %v3601 = vld [vmem:[#allocation13 + $0x28] sm:$0xff]
        %v3602 = vld [vmem:[#allocation13 + $0x30] sm:$0xff]
        %v3603 = vld [vmem:[#allocation13 + $0x38] sm:$0xff]
        %v3604 = vld [vmem:[#allocation13 + $0x40] sm:$0xff]
        %v3605 = vld [vmem:[#allocation13 + $0x48] sm:$0xff]
        %v3606 = vld [vmem:[#allocation13 + $0x50] sm:$0xff]
        %v3607 = vld [vmem:[#allocation13 + $0x58] sm:$0xff]
        %v3608 = vld [vmem:[#allocation13 + $0x60] sm:$0xff]
        %v3609 = vld [vmem:[#allocation13 + $0x68] sm:$0xff]
        %v3610 = vld [vmem:[#allocation13 + $0x70] sm:$0xff]
        %v3611 = vld [vmem:[#allocation13 + $0x78] sm:$0xff]
        %v3612 = vld [vmem:[%s9] sm:$0x1]
        %v3614 = vperm.slane %v3612, 0
        %3616 = vmatpush.msra.mxu0 %v3611
        %3617 = vmatpush.msra.mxu0 %v3610
        %3618 = vmatpush.msra.mxu0 %v3609
        %3619 = vmatpush.msra.mxu0 %v3608
        %3620 = vmatpush.msra.mxu0 %v3607
        %3621 = vmatpush.msra.mxu0 %v3606
        %3622 = vmatpush.msra.mxu0 %v3605
        %3623 = vmatpush.msra.mxu0 %v3604
        %3624 = vmatpush.msra.mxu0 %v3603
        %3625 = vmatpush.msra.mxu0 %v3602
        %3626 = vmatpush.msra.mxu0 %v3601
        %3627 = vmatpush.msra.mxu0 %v3600
        %3628 = vmatpush.msra.mxu0 %v3599
        %3629 = vmatpush.msra.mxu0 %v3598
        %3630 = vmatpush.msra.mxu0 %v3597
        %3631 = vmatpush.msra.mxu0 %v3596
        %3632 = vmatmul.f32.gmra.mxu0 %v3549
        %v3633 = vpop.f32.mrf.mxu0
        %v3634 = vadd.f32 %v3614, %v3633
        %3635 = vmatmul.f32.gmra.mxu0 %v3552
        %v3636 = vpop.f32.mrf.mxu0
        %v3637 = vadd.f32 %v3614, %v3636
        %3638 = vmatmul.f32.gmra.mxu0 %v3555
        %v3639 = vpop.f32.mrf.mxu0
        %v3640 = vadd.f32 %v3614, %v3639
        %3641 = vmatmul.f32.gmra.mxu0 %v3558
        %v3642 = vpop.f32.mrf.mxu0
        %v3643 = vadd.f32 %v3614, %v3642
        %3644 = vmatmul.f32.gmra.mxu0 %v3561
        %v3645 = vpop.f32.mrf.mxu0
        %v3646 = vadd.f32 %v3614, %v3645
        %3647 = vmatmul.f32.gmra.mxu0 %v3564
        %v3648 = vpop.f32.mrf.mxu0
        %v3649 = vadd.f32 %v3614, %v3648
        %3650 = vmatmul.f32.gmra.mxu0 %v3567
        %v3651 = vpop.f32.mrf.mxu0
        %v3652 = vadd.f32 %v3614, %v3651
        %3653 = vmatmul.f32.gmra.mxu0 %v3570
        %v3654 = vpop.f32.mrf.mxu0
        %v3655 = vadd.f32 %v3614, %v3654
        %3656 = vmatmul.f32.gmra.mxu0 %v3573
        %v3657 = vpop.f32.mrf.mxu0
        %v3658 = vadd.f32 %v3614, %v3657
        %3659 = vmatmul.f32.gmra.mxu0 %v3576
        %v3660 = vpop.f32.mrf.mxu0
        %v3661 = vadd.f32 %v3614, %v3660
        %3662 = vmatmul.f32.gmra.mxu0 %v3579
        %v3663 = vpop.f32.mrf.mxu0
        %v3664 = vadd.f32 %v3614, %v3663
        %3665 = vmatmul.f32.gmra.mxu0 %v3582
        %v3666 = vpop.f32.mrf.mxu0
        %v3667 = vadd.f32 %v3614, %v3666
        %3668 = vmatmul.f32.gmra.mxu0 %v3585
        %v3669 = vpop.f32.mrf.mxu0
        %v3670 = vadd.f32 %v3614, %v3669
        %3671 = vmatmul.f32.gmra.mxu0 %v3588
        %v3672 = vpop.f32.mrf.mxu0
        %v3673 = vadd.f32 %v3614, %v3672
        %3674 = vmatmul.f32.gmra.mxu0 %v3591
        %v3675 = vpop.f32.mrf.mxu0
        %v3676 = vadd.f32 %v3614, %v3675
        %3677 = vmatmul.f32.gmra.mxu0 %v3594
        %v3678 = vpop.f32.mrf.mxu0
        %v3679 = vadd.f32 %v3614, %v3678
        %3680 = vdwg.mxu0
        %vm3681 = vcmp.ge.f32.partialorder %v3634, 0.0
        %vm3682 = vcmp.ge.f32.partialorder %v3637, 0.0
        %vm3683 = vcmp.ge.f32.partialorder %v3640, 0.0
        %vm3684 = vcmp.ge.f32.partialorder %v3643, 0.0
        %vm3685 = vcmp.ge.f32.partialorder %v3646, 0.0
        %vm3686 = vcmp.ge.f32.partialorder %v3649, 0.0
        %vm3687 = vcmp.ge.f32.partialorder %v3652, 0.0
        %vm3688 = vcmp.ge.f32.partialorder %v3655, 0.0
        %vm3689 = vcmp.ge.f32.partialorder %v3658, 0.0
        %vm3690 = vcmp.ge.f32.partialorder %v3661, 0.0
        %vm3691 = vcmp.ge.f32.partialorder %v3664, 0.0
        %vm3692 = vcmp.ge.f32.partialorder %v3667, 0.0
        %vm3693 = vcmp.ge.f32.partialorder %v3670, 0.0
        %vm3694 = vcmp.ge.f32.partialorder %v3673, 0.0
        %vm3695 = vcmp.ge.f32.partialorder %v3676, 0.0
        %vm3696 = vcmp.ge.f32.partialorder %v3679, 0.0
        %v3697 = vmul.f32 %v3634, 0.01
        %v3698 = vmul.f32 %v3637, 0.01
        %v3699 = vmul.f32 %v3640, 0.01
        %v3700 = vmul.f32 %v3643, 0.01
        %v3701 = vmul.f32 %v3646, 0.01
        %v3702 = vmul.f32 %v3649, 0.01
        %v3703 = vmul.f32 %v3652, 0.01
        %v3704 = vmul.f32 %v3655, 0.01
        %v3705 = vmul.f32 %v3658, 0.01
        %v3706 = vmul.f32 %v3661, 0.01
        %v3707 = vmul.f32 %v3664, 0.01
        %v3708 = vmul.f32 %v3667, 0.01
        %v3709 = vmul.f32 %v3670, 0.01
        %v3710 = vmul.f32 %v3673, 0.01
        %v3711 = vmul.f32 %v3676, 0.01
        %v3712 = vmul.f32 %v3679, 0.01
        %v3713 = vsel %vm3681, %v3634, %v3697
        %v3714 = vsel %vm3682, %v3637, %v3698
        %v3715 = vsel %vm3683, %v3640, %v3699
        %v3716 = vsel %vm3684, %v3643, %v3700
        %v3717 = vsel %vm3685, %v3646, %v3701
        %v3718 = vsel %vm3686, %v3649, %v3702
        %v3719 = vsel %vm3687, %v3652, %v3703
        %v3720 = vsel %vm3688, %v3655, %v3704
        %v3721 = vsel %vm3689, %v3658, %v3705
        %v3722 = vsel %vm3690, %v3661, %v3706
        %v3723 = vsel %vm3691, %v3664, %v3707
        %v3724 = vsel %vm3692, %v3667, %v3708
        %v3725 = vsel %vm3693, %v3670, %v3709
        %v3726 = vsel %vm3694, %v3673, %v3710
        %v3727 = vsel %vm3695, %v3676, %v3711
        %v3728 = vsel %vm3696, %v3679, %v3712
        %v3729 = vadd.f32 %v520, %v3713
        %v3730 = vadd.f32 %v521, %v3714
        %v3731 = vadd.f32 %v522, %v3715
        %v3732 = vadd.f32 %v523, %v3716
        %v3733 = vadd.f32 %v524, %v3717
        %v3734 = vadd.f32 %v525, %v3718
        %v3735 = vadd.f32 %v526, %v3719
        %v3736 = vadd.f32 %v527, %v3720
        %v3737 = vadd.f32 %v528, %v3721
        %v3738 = vadd.f32 %v529, %v3722
        %v3739 = vadd.f32 %v530, %v3723
        %v3740 = vadd.f32 %v531, %v3724
        %v3741 = vadd.f32 %v532, %v3725
        %v3742 = vadd.f32 %v533, %v3726
        %v3743 = vadd.f32 %v534, %v3727
        %v3744 = vadd.f32 %v535, %v3728
        %3745 = vadd.xlane.f32.xlu0 %v3729
        %v3746 = vpop.xlane.xlu0 %3745
        %3747 = vadd.xlane.f32.xlu0 %v3730
        %v3748 = vpop.xlane.xlu0 %3747
        %3749 = vadd.xlane.f32.xlu0 %v3731
        %v3750 = vpop.xlane.xlu0 %3749
        %3751 = vadd.xlane.f32.xlu0 %v3732
        %v3752 = vpop.xlane.xlu0 %3751
        %3753 = vadd.xlane.f32.xlu0 %v3733
        %v3754 = vpop.xlane.xlu0 %3753
        %3755 = vadd.xlane.f32.xlu0 %v3734
        %v3756 = vpop.xlane.xlu0 %3755
        %3757 = vadd.xlane.f32.xlu0 %v3735
        %v3758 = vpop.xlane.xlu0 %3757
        %3759 = vadd.xlane.f32.xlu0 %v3736
        %v3760 = vpop.xlane.xlu0 %3759
        %3761 = vadd.xlane.f32.xlu0 %v3737
        %v3762 = vpop.xlane.xlu0 %3761
        %3763 = vadd.xlane.f32.xlu0 %v3738
        %v3764 = vpop.xlane.xlu0 %3763
        %3765 = vadd.xlane.f32.xlu0 %v3739
        %v3766 = vpop.xlane.xlu0 %3765
        %3767 = vadd.xlane.f32.xlu0 %v3740
        %v3768 = vpop.xlane.xlu0 %3767
        %3769 = vadd.xlane.f32.xlu0 %v3741
        %v3770 = vpop.xlane.xlu0 %3769
        %3771 = vadd.xlane.f32.xlu0 %v3742
        %v3772 = vpop.xlane.xlu0 %3771
        %3773 = vadd.xlane.f32.xlu0 %v3743
        %v3774 = vpop.xlane.xlu0 %3773
        %3775 = vadd.xlane.f32.xlu0 %v3744
        %v3776 = vpop.xlane.xlu0 %3775
        %v3777 = vrcp.pop 128.0
        %v3778 = vmul.f32 128.0, %v3777
        %v3779 = vsub.f32 1.0, %v3778
        %v3780 = vmul.f32 %v3777, %v3779
        %v3781 = vadd.f32 %v3777, %v3780
        %vm3782 = vweird.f32 %v3777
        %v3783 = vsel %vm3782, %v3777, %v3781
        %v3784 = vmul.f32 %v3746, %v3783
        %v3785 = vmul.f32 %v3748, %v3783
        %v3786 = vmul.f32 %v3750, %v3783
        %v3787 = vmul.f32 %v3752, %v3783
        %v3788 = vmul.f32 %v3754, %v3783
        %v3789 = vmul.f32 %v3756, %v3783
        %v3790 = vmul.f32 %v3758, %v3783
        %v3791 = vmul.f32 %v3760, %v3783
        %v3792 = vmul.f32 %v3762, %v3783
        %v3793 = vmul.f32 %v3764, %v3783
        %v3794 = vmul.f32 %v3766, %v3783
        %v3795 = vmul.f32 %v3768, %v3783
        %v3796 = vmul.f32 %v3770, %v3783
        %v3797 = vmul.f32 %v3772, %v3783
        %v3798 = vmul.f32 %v3774, %v3783
        %v3799 = vmul.f32 %v3776, %v3783
        %v3800 = vsub.f32 %v3729, %v3784
        %v3801 = vsub.f32 %v3730, %v3785
        %v3802 = vsub.f32 %v3731, %v3786
        %v3803 = vsub.f32 %v3732, %v3787
        %v3804 = vsub.f32 %v3733, %v3788
        %v3805 = vsub.f32 %v3734, %v3789
        %v3806 = vsub.f32 %v3735, %v3790
        %v3807 = vsub.f32 %v3736, %v3791
        %v3808 = vsub.f32 %v3737, %v3792
        %v3809 = vsub.f32 %v3738, %v3793
        %v3810 = vsub.f32 %v3739, %v3794
        %v3811 = vsub.f32 %v3740, %v3795
        %v3812 = vsub.f32 %v3741, %v3796
        %v3813 = vsub.f32 %v3742, %v3797
        %v3814 = vsub.f32 %v3743, %v3798
        %v3815 = vsub.f32 %v3744, %v3799
        %v3816 = vmul.f32 %v3800, %v3800
        %v3817 = vmul.f32 %v3801, %v3801
        %v3818 = vmul.f32 %v3802, %v3802
        %v3819 = vmul.f32 %v3803, %v3803
        %v3820 = vmul.f32 %v3804, %v3804
        %v3821 = vmul.f32 %v3805, %v3805
        %v3822 = vmul.f32 %v3806, %v3806
        %v3823 = vmul.f32 %v3807, %v3807
        %v3824 = vmul.f32 %v3808, %v3808
        %v3825 = vmul.f32 %v3809, %v3809
        %v3826 = vmul.f32 %v3810, %v3810
        %v3827 = vmul.f32 %v3811, %v3811
        %v3828 = vmul.f32 %v3812, %v3812
        %v3829 = vmul.f32 %v3813, %v3813
        %v3830 = vmul.f32 %v3814, %v3814
        %v3831 = vmul.f32 %v3815, %v3815
        %3832 = vadd.xlane.f32.xlu0 %v3816
        %v3833 = vpop.xlane.xlu0 %3832
        %3834 = vadd.xlane.f32.xlu0 %v3817
        %v3835 = vpop.xlane.xlu0 %3834
        %3836 = vadd.xlane.f32.xlu0 %v3818
        %v3837 = vpop.xlane.xlu0 %3836
        %3838 = vadd.xlane.f32.xlu0 %v3819
        %v3839 = vpop.xlane.xlu0 %3838
        %3840 = vadd.xlane.f32.xlu0 %v3820
        %v3841 = vpop.xlane.xlu0 %3840
        %3842 = vadd.xlane.f32.xlu0 %v3821
        %v3843 = vpop.xlane.xlu0 %3842
        %3844 = vadd.xlane.f32.xlu0 %v3822
        %v3845 = vpop.xlane.xlu0 %3844
        %3846 = vadd.xlane.f32.xlu0 %v3823
        %v3847 = vpop.xlane.xlu0 %3846
        %3848 = vadd.xlane.f32.xlu0 %v3824
        %v3849 = vpop.xlane.xlu0 %3848
        %3850 = vadd.xlane.f32.xlu0 %v3825
        %v3851 = vpop.xlane.xlu0 %3850
        %3852 = vadd.xlane.f32.xlu0 %v3826
        %v3853 = vpop.xlane.xlu0 %3852
        %3854 = vadd.xlane.f32.xlu0 %v3827
        %v3855 = vpop.xlane.xlu0 %3854
        %3856 = vadd.xlane.f32.xlu0 %v3828
        %v3857 = vpop.xlane.xlu0 %3856
        %3858 = vadd.xlane.f32.xlu0 %v3829
        %v3859 = vpop.xlane.xlu0 %3858
        %3860 = vadd.xlane.f32.xlu0 %v3830
        %v3861 = vpop.xlane.xlu0 %3860
        %3862 = vadd.xlane.f32.xlu0 %v3831
        %v3863 = vpop.xlane.xlu0 %3862
        %v3864 = vmul.f32 %v3833, %v3783
        %v3865 = vmul.f32 %v3835, %v3783
        %v3866 = vmul.f32 %v3837, %v3783
        %v3867 = vmul.f32 %v3839, %v3783
        %v3868 = vmul.f32 %v3841, %v3783
        %v3869 = vmul.f32 %v3843, %v3783
        %v3870 = vmul.f32 %v3845, %v3783
        %v3871 = vmul.f32 %v3847, %v3783
        %v3872 = vmul.f32 %v3849, %v3783
        %v3873 = vmul.f32 %v3851, %v3783
        %v3874 = vmul.f32 %v3853, %v3783
        %v3875 = vmul.f32 %v3855, %v3783
        %v3876 = vmul.f32 %v3857, %v3783
        %v3877 = vmul.f32 %v3859, %v3783
        %v3878 = vmul.f32 %v3861, %v3783
        %v3879 = vmul.f32 %v3863, %v3783
        %v3880 = vadd.f32 %v3864, 1e-05
        %v3881 = vadd.f32 %v3865, 1e-05
        %v3882 = vadd.f32 %v3866, 1e-05
        %v3883 = vadd.f32 %v3867, 1e-05
        %v3884 = vadd.f32 %v3868, 1e-05
        %v3885 = vadd.f32 %v3869, 1e-05
        %v3886 = vadd.f32 %v3870, 1e-05
        %v3887 = vadd.f32 %v3871, 1e-05
        %v3888 = vadd.f32 %v3872, 1e-05
        %v3889 = vadd.f32 %v3873, 1e-05
        %v3890 = vadd.f32 %v3874, 1e-05
        %v3891 = vadd.f32 %v3875, 1e-05
        %v3892 = vadd.f32 %v3876, 1e-05
        %v3893 = vadd.f32 %v3877, 1e-05
        %v3894 = vadd.f32 %v3878, 1e-05
        %v3895 = vadd.f32 %v3879, 1e-05
        %v3896 = vrsqrt.pop %v3880
        %v3897 = vmul.f32 %v3896, %v3880
        %v3898 = vmul.f32 %v3897, %v3896
        %v3899 = vmul.f32 0.5, %v3898
        %v3900 = vsub.f32 1.5, %v3899
        %v3901 = vmul.f32 %v3896, %v3900
        %vm3902 = vweird.f32 %v3880
        %vm3903 = vweird.f32 %v3896
        %vm3904 = vmor %vm3902, %vm3903
        %v3905 = vsel %vm3904, %v3896, %v3901
        %v3906 = vrsqrt.pop %v3881
        %v3907 = vmul.f32 %v3906, %v3881
        %v3908 = vmul.f32 %v3907, %v3906
        %v3909 = vmul.f32 0.5, %v3908
        %v3910 = vsub.f32 1.5, %v3909
        %v3911 = vmul.f32 %v3906, %v3910
        %vm3912 = vweird.f32 %v3881
        %vm3913 = vweird.f32 %v3906
        %vm3914 = vmor %vm3912, %vm3913
        %v3915 = vsel %vm3914, %v3906, %v3911
        %v3916 = vrsqrt.pop %v3882
        %v3917 = vmul.f32 %v3916, %v3882
        %v3918 = vmul.f32 %v3917, %v3916
        %v3919 = vmul.f32 0.5, %v3918
        %v3920 = vsub.f32 1.5, %v3919
        %v3921 = vmul.f32 %v3916, %v3920
        %vm3922 = vweird.f32 %v3882
        %vm3923 = vweird.f32 %v3916
        %vm3924 = vmor %vm3922, %vm3923
        %v3925 = vsel %vm3924, %v3916, %v3921
        %v3926 = vrsqrt.pop %v3883
        %v3927 = vmul.f32 %v3926, %v3883
        %v3928 = vmul.f32 %v3927, %v3926
        %v3929 = vmul.f32 0.5, %v3928
        %v3930 = vsub.f32 1.5, %v3929
        %v3931 = vmul.f32 %v3926, %v3930
        %vm3932 = vweird.f32 %v3883
        %vm3933 = vweird.f32 %v3926
        %vm3934 = vmor %vm3932, %vm3933
        %v3935 = vsel %vm3934, %v3926, %v3931
        %v3936 = vrsqrt.pop %v3884
        %v3937 = vmul.f32 %v3936, %v3884
        %v3938 = vmul.f32 %v3937, %v3936
        %v3939 = vmul.f32 0.5, %v3938
        %v3940 = vsub.f32 1.5, %v3939
        %v3941 = vmul.f32 %v3936, %v3940
        %vm3942 = vweird.f32 %v3884
        %vm3943 = vweird.f32 %v3936
        %vm3944 = vmor %vm3942, %vm3943
        %v3945 = vsel %vm3944, %v3936, %v3941
        %v3946 = vrsqrt.pop %v3885
        %v3947 = vmul.f32 %v3946, %v3885
        %v3948 = vmul.f32 %v3947, %v3946
        %v3949 = vmul.f32 0.5, %v3948
        %v3950 = vsub.f32 1.5, %v3949
        %v3951 = vmul.f32 %v3946, %v3950
        %vm3952 = vweird.f32 %v3885
        %vm3953 = vweird.f32 %v3946
        %vm3954 = vmor %vm3952, %vm3953
        %v3955 = vsel %vm3954, %v3946, %v3951
        %v3956 = vrsqrt.pop %v3886
        %v3957 = vmul.f32 %v3956, %v3886
        %v3958 = vmul.f32 %v3957, %v3956
        %v3959 = vmul.f32 0.5, %v3958
        %v3960 = vsub.f32 1.5, %v3959
        %v3961 = vmul.f32 %v3956, %v3960
        %vm3962 = vweird.f32 %v3886
        %vm3963 = vweird.f32 %v3956
        %vm3964 = vmor %vm3962, %vm3963
        %v3965 = vsel %vm3964, %v3956, %v3961
        %v3966 = vrsqrt.pop %v3887
        %v3967 = vmul.f32 %v3966, %v3887
        %v3968 = vmul.f32 %v3967, %v3966
        %v3969 = vmul.f32 0.5, %v3968
        %v3970 = vsub.f32 1.5, %v3969
        %v3971 = vmul.f32 %v3966, %v3970
        %vm3972 = vweird.f32 %v3887
        %vm3973 = vweird.f32 %v3966
        %vm3974 = vmor %vm3972, %vm3973
        %v3975 = vsel %vm3974, %v3966, %v3971
        %v3976 = vrsqrt.pop %v3888
        %v3977 = vmul.f32 %v3976, %v3888
        %v3978 = vmul.f32 %v3977, %v3976
        %v3979 = vmul.f32 0.5, %v3978
        %v3980 = vsub.f32 1.5, %v3979
        %v3981 = vmul.f32 %v3976, %v3980
        %vm3982 = vweird.f32 %v3888
        %vm3983 = vweird.f32 %v3976
        %vm3984 = vmor %vm3982, %vm3983
        %v3985 = vsel %vm3984, %v3976, %v3981
        %v3986 = vrsqrt.pop %v3889
        %v3987 = vmul.f32 %v3986, %v3889
        %v3988 = vmul.f32 %v3987, %v3986
        %v3989 = vmul.f32 0.5, %v3988
        %v3990 = vsub.f32 1.5, %v3989
        %v3991 = vmul.f32 %v3986, %v3990
        %vm3992 = vweird.f32 %v3889
        %vm3993 = vweird.f32 %v3986
        %vm3994 = vmor %vm3992, %vm3993
        %v3995 = vsel %vm3994, %v3986, %v3991
        %v3996 = vrsqrt.pop %v3890
        %v3997 = vmul.f32 %v3996, %v3890
        %v3998 = vmul.f32 %v3997, %v3996
        %v3999 = vmul.f32 0.5, %v3998
        %v4000 = vsub.f32 1.5, %v3999
        %v4001 = vmul.f32 %v3996, %v4000
        %vm4002 = vweird.f32 %v3890
        %vm4003 = vweird.f32 %v3996
        %vm4004 = vmor %vm4002, %vm4003
        %v4005 = vsel %vm4004, %v3996, %v4001
        %v4006 = vrsqrt.pop %v3891
        %v4007 = vmul.f32 %v4006, %v3891
        %v4008 = vmul.f32 %v4007, %v4006
        %v4009 = vmul.f32 0.5, %v4008
        %v4010 = vsub.f32 1.5, %v4009
        %v4011 = vmul.f32 %v4006, %v4010
        %vm4012 = vweird.f32 %v3891
        %vm4013 = vweird.f32 %v4006
        %vm4014 = vmor %vm4012, %vm4013
        %v4015 = vsel %vm4014, %v4006, %v4011
        %v4016 = vrsqrt.pop %v3892
        %v4017 = vmul.f32 %v4016, %v3892
        %v4018 = vmul.f32 %v4017, %v4016
        %v4019 = vmul.f32 0.5, %v4018
        %v4020 = vsub.f32 1.5, %v4019
        %v4021 = vmul.f32 %v4016, %v4020
        %vm4022 = vweird.f32 %v3892
        %vm4023 = vweird.f32 %v4016
        %vm4024 = vmor %vm4022, %vm4023
        %v4025 = vsel %vm4024, %v4016, %v4021
        %v4026 = vrsqrt.pop %v3893
        %v4027 = vmul.f32 %v4026, %v3893
        %v4028 = vmul.f32 %v4027, %v4026
        %v4029 = vmul.f32 0.5, %v4028
        %v4030 = vsub.f32 1.5, %v4029
        %v4031 = vmul.f32 %v4026, %v4030
        %vm4032 = vweird.f32 %v3893
        %vm4033 = vweird.f32 %v4026
        %vm4034 = vmor %vm4032, %vm4033
        %v4035 = vsel %vm4034, %v4026, %v4031
        %v4036 = vrsqrt.pop %v3894
        %v4037 = vmul.f32 %v4036, %v3894
        %v4038 = vmul.f32 %v4037, %v4036
        %v4039 = vmul.f32 0.5, %v4038
        %v4040 = vsub.f32 1.5, %v4039
        %v4041 = vmul.f32 %v4036, %v4040
        %vm4042 = vweird.f32 %v3894
        %vm4043 = vweird.f32 %v4036
        %vm4044 = vmor %vm4042, %vm4043
        %v4045 = vsel %vm4044, %v4036, %v4041
        %v4046 = vrsqrt.pop %v3895
        %v4047 = vmul.f32 %v4046, %v3895
        %v4048 = vmul.f32 %v4047, %v4046
        %v4049 = vmul.f32 0.5, %v4048
        %v4050 = vsub.f32 1.5, %v4049
        %v4051 = vmul.f32 %v4046, %v4050
        %vm4052 = vweird.f32 %v3895
        %vm4053 = vweird.f32 %v4046
        %vm4054 = vmor %vm4052, %vm4053
        %v4055 = vsel %vm4054, %v4046, %v4051
        %v4056 = vmul.f32 %v3800, %v3905
        %v4057 = vmul.f32 %v3801, %v3915
        %v4058 = vmul.f32 %v3802, %v3925
        %v4059 = vmul.f32 %v3803, %v3935
        %v4060 = vmul.f32 %v3804, %v3945
        %v4061 = vmul.f32 %v3805, %v3955
        %v4062 = vmul.f32 %v3806, %v3965
        %v4063 = vmul.f32 %v3807, %v3975
        %v4064 = vmul.f32 %v3808, %v3985
        %v4065 = vmul.f32 %v3809, %v3995
        %v4066 = vmul.f32 %v3810, %v4005
        %v4067 = vmul.f32 %v3811, %v4015
        %v4068 = vmul.f32 %v3812, %v4025
        %v4069 = vmul.f32 %v3813, %v4035
        %v4070 = vmul.f32 %v3814, %v4045
        %v4071 = vmul.f32 %v3815, %v4055
        %v4072 = vld [vmem:[%s10] sm:$0x1]
        %v4074 = vperm.slane %v4072, 0
        %v4076 = vmul.f32 %v4056, %v4074
        %v4077 = vmul.f32 %v4057, %v4074
        %v4078 = vmul.f32 %v4058, %v4074
        %v4079 = vmul.f32 %v4059, %v4074
        %v4080 = vmul.f32 %v4060, %v4074
        %v4081 = vmul.f32 %v4061, %v4074
        %v4082 = vmul.f32 %v4062, %v4074
        %v4083 = vmul.f32 %v4063, %v4074
        %v4084 = vmul.f32 %v4064, %v4074
        %v4085 = vmul.f32 %v4065, %v4074
        %v4086 = vmul.f32 %v4066, %v4074
        %v4087 = vmul.f32 %v4067, %v4074
        %v4088 = vmul.f32 %v4068, %v4074
        %v4089 = vmul.f32 %v4069, %v4074
        %v4090 = vmul.f32 %v4070, %v4074
        %v4091 = vmul.f32 %v4071, %v4074
        %v4092 = vld [vmem:[%s11] sm:$0x1]
        %v4094 = vperm.slane %v4092, 0
        %v4096 = vadd.f32 %v4076, %v4094
        %v4097 = vadd.f32 %v4077, %v4094
        %v4098 = vadd.f32 %v4078, %v4094
        %v4099 = vadd.f32 %v4079, %v4094
        %v4100 = vadd.f32 %v4080, %v4094
        %v4101 = vadd.f32 %v4081, %v4094
        %v4102 = vadd.f32 %v4082, %v4094
        %v4103 = vadd.f32 %v4083, %v4094
        %v4104 = vadd.f32 %v4084, %v4094
        %v4105 = vadd.f32 %v4085, %v4094
        %v4106 = vadd.f32 %v4086, %v4094
        %v4107 = vadd.f32 %v4087, %v4094
        %v4108 = vadd.f32 %v4088, %v4094
        %v4109 = vadd.f32 %v4089, %v4094
        %v4110 = vadd.f32 %v4090, %v4094
        %v4111 = vadd.f32 %v4091, %v4094
        %4112 = vst [vmem:[%s517] sm:$0xff] %v4096
        %4113 = vst [vmem:[%s517 + $0x8] sm:$0xff] %v4097
        %4114 = vst [vmem:[%s517 + $0x10] sm:$0xff] %v4098
        %4115 = vst [vmem:[%s517 + $0x18] sm:$0xff] %v4099
        %4116 = vst [vmem:[%s517 + $0x20] sm:$0xff] %v4100
        %4117 = vst [vmem:[%s517 + $0x28] sm:$0xff] %v4101
        %4118 = vst [vmem:[%s517 + $0x30] sm:$0xff] %v4102
        %4119 = vst [vmem:[%s517 + $0x38] sm:$0xff] %v4103
        %4120 = vst [vmem:[%s517 + $0x40] sm:$0xff] %v4104
        %4121 = vst [vmem:[%s517 + $0x48] sm:$0xff] %v4105
        %4122 = vst [vmem:[%s517 + $0x50] sm:$0xff] %v4106
        %4123 = vst [vmem:[%s517 + $0x58] sm:$0xff] %v4107
        %4124 = vst [vmem:[%s517 + $0x60] sm:$0xff] %v4108
        %4125 = vst [vmem:[%s517 + $0x68] sm:$0xff] %v4109
        %4126 = vst [vmem:[%s517 + $0x70] sm:$0xff] %v4110
        %4127 = vst [vmem:[%s517 + $0x78] sm:$0xff] %v4111
        %s4128 = sand.u32 %s297, 1
        %s4129 = scalar_lea.sflag [#allocation6], %s4128
        %s4130 = sand.u32 %s297, 1
        %s4131 = smul.addr %s4130, 128
        %s4132 = scalar_lea.vmem [#allocation15], %s4131
        // Predicated region
        $region93: #{tpu_custom_call.1} parent=67 // pred_check
          %p4133 = pneg %p307
        $region94: #{tpu_custom_call.1} parent=67 // pred_check_branch
          %4135 = sbr.rel (%p4133) target = $region96
        $region95: #{tpu_custom_call.1} parent=67 // pred_region
          %s4136 = smul.u32 2, %s32
          %4138 = vsyncadd %s4129, 0
          %s4139 = smul.addr %s4136, 8
          %s4140 = smul.addr %s4139, 8
          %s4141 = scalar_lea.hbm %s12, %s4140
          %s4142 = sshll.u32 %s4132, 4
          %s4143 = int_to_ptr.vmem [resolvable:$true] %s4142
          %s4144 = sshll.u32 %s4141, 4
          %s4145 = int_to_ptr.hbm [resolvable:$true] %s4144
          %4150 = dma.vmem_to_hbm [thread:$0]  %s4143, 2048, %s4145, %s4129, 128, 128, 8
        $region96: #{tpu_custom_call.1} parent=67 // pred_fallthru
          _
      $region68: #{tpu_custom_call.1} parent=5 // pred_fallthru
        _
      %p4151 = scmp.le.s32.totalorder 2, %s27
      // Predicated region
      $region97: #{tpu_custom_call.1} parent=5 // pred_check
        %p4152 = pneg %p4151
      $region98: #{tpu_custom_call.1} parent=5 // pred_check_branch
        %4154 = sbr.rel (%p4152) target = $region100
      $region99: #{tpu_custom_call.1} parent=5 // pred_region
        %s4155 = ssub.s32 %s27, 2
        // Predicated region
        $region101: #{tpu_custom_call.1} parent=99 // pred_check
          %p4156 = pneg %p313
        $region102: #{tpu_custom_call.1} parent=99 // pred_check_branch
          %4158 = sbr.rel (%p4156) target = $region104
        $region103: #{tpu_custom_call.1} parent=99 // pred_region
          %s4159 = sand.u32 %s298, 1
          %s4160 = scalar_lea.sflag [#allocation6], %s4159
          %s4161 = sand.u32 %s298, 1
          %s4162 = smul.addr %s4161, 128
          %s4163 = scalar_lea.vmem [#allocation15], %s4162
          %4165 = dma.done %s4160, 2048
        $region104: #{tpu_custom_call.1} parent=99 // pred_fallthru
          _
      $region100: #{tpu_custom_call.1} parent=5 // pred_fallthru
        _
    $region6: #{tpu_custom_call.1} parent=1 // loop_footer
      %s31 = sadd.s32 1, %s27
    $region7: #{tpu_custom_call.1} parent=1 // loop_footer_branch
      %26 = sbr.rel target = $region3
    $region8: #{tpu_custom_call.1} parent=1 // loop_exit
      _
    %4166 = vsyncpa [#allocation5], 1
    %s4167 = scalar_lea.sflag [#allocation5], 1
    %4168 = vsyncpa %s4167, 1
    %4169 = vsyncpa [#allocation8], 1
    %4170 = vsyncpa [#allocation11], 1
    %4171 = vsyncpa [#allocation14], 1
    %4172 = vsyncpa [#allocation6], 1
    %s4173 = scalar_lea.sflag [#allocation6], 1
    %4174 = vsyncpa %s4173, 1

// kernel: tpu_custom_call.1
$region0: #{tpu_custom_call.1}
  #allocation0 [shape = 'u32[]', space=smem, size = 0x4, offset = 0x4, fixed_abs, tag = 'smem constant byte address 0x4 - core index']
  #allocation1 [shape = 'u32[72,128]{1,0:T(1,128)}', space=vmem, size = 0x9000, scoped, tag = 'internal scratch']
  #allocation2 [shape = 'f32[2,64,384]{2,1,0:T(8,128)}', space=vmem, size = 0x30000, scoped, tag = 'scratch operand']
  #allocation3 [shape = 'f32[2,64,128]{2,1,0:T(8,128)}', space=vmem, size = 0x10000, scoped, tag = 'scratch operand']
  %s0 = inlined_call_operand.hbm [shape: f32[4,64,128], index: 0, kind: input, shape index: {}]
  %s1 = inlined_call_operand.hbm [shape: f32[64,128], index: 1, kind: input, shape index: {}]
  %s2 = inlined_call_operand.hbm [shape: f32[128,128], index: 2, kind: input, shape index: {}]
  %s3 = inlined_call_operand.vmem [shape: f32[1,128], index: 3, kind: input, shape index: {}]
  %s4 = inlined_call_operand.hbm [shape: f32[128,384], index: 4, kind: input, shape index: {}]
  %s5 = inlined_call_operand.vmem [shape: f32[1,384], index: 5, kind: input, shape index: {}]
  %s6 = inlined_call_operand.hbm [shape: f32[128,128], index: 6, kind: input, shape index: {}]
  %s7 = inlined_call_operand.vmem [shape: f32[1,128], index: 7, kind: input, shape index: {}]
  %s8 = inlined_call_operand.hbm [shape: f32[128,128], index: 8, kind: input, shape index: {}]
  %s9 = inlined_call_operand.vmem [shape: f32[1,128], index: 9, kind: input, shape index: {}]
  %s10 = inlined_call_operand.vmem [shape: f32[1,128], index: 10, kind: input, shape index: {}]
  %s11 = inlined_call_operand.vmem [shape: f32[1,128], index: 11, kind: input, shape index: {}]
  %s12 = inlined_call_operand.hbm [shape: f32[4,64,128], index: 12, kind: output, shape index: {}]
  %s13 = sld [smem:[#allocation0]]
  $region105: #{tpu_custom_call.1} parent=0
    _
  %s15 = ssub.s32 1, %s13
  %s16 = scalar_select 0, %s15, %s13
  $region1: #{tpu_custom_call.1} parent=0
    #allocation4 [shape = 'u8[131072]{0}', space=vmem, size = 0x20000, scoped, tag = 'input window, operand 0']
    #allocation5 [shape = 's32[2]{0}', space=sflag, size = 0x8, scoped, tag = 'scoped memory for tpu_custom_call.1']
    #allocation6 [shape = 's32[2]{0}', space=sflag, size = 0x8, scoped, tag = 'scoped memory for tpu_custom_call.1']
    #allocation7 [shape = 'u8[32768]{0}', space=vmem, size = 0x8000, scoped, tag = 'input window, operand 1, single buffered']
    #allocation8 [shape = 's32[1]{0}', space=sflag, size = 0x4, scoped, tag = 'scoped memory for tpu_custom_call.1']
    #allocation9 [shape = 'u8[65536]{0}', space=vmem, size = 0x10000, scoped, tag = 'input window, operand 2, single buffered']
    #allocation10 [shape = 'u8[196608]{0}', space=vmem, size = 0x30000, scoped, tag = 'input window, operand 4, single buffered']
    #allocation11 [shape = 's32[1]{0}', space=sflag, size = 0x4, scoped, tag = 'scoped memory for tpu_custom_call.1']
    #allocation12 [shape = 'u8[65536]{0}', space=vmem, size = 0x10000, scoped, tag = 'input window, operand 6, single buffered']
    #allocation13 [shape = 'u8[65536]{0}', space=vmem, size = 0x10000, scoped, tag = 'input window, operand 8, single buffered']
    #allocation14 [shape = 's32[1]{0}', space=sflag, size = 0x4, scoped, tag = 'scoped memory for tpu_custom_call.1']
    #allocation15 [shape = 'u8[131072]{0}', space=vmem, size = 0x20000, scoped, tag = 'output window, operand 0']
    %17 = vsyncpa [#allocation5], 0
    %s18 = scalar_lea.sflag [#allocation5], 1
    %19 = vsyncpa %s18, 0
    %20 = vsyncpa [#allocation8], 0
    %21 = vsyncpa [#allocation11], 0
    %22 = vsyncpa [#allocation14], 0
    %23 = vsyncpa [#allocation6], 0
    %s24 = scalar_lea.sflag [#allocation6], 1
    %25 = vsyncpa %s24, 0
    loop: start=0, step=1, limit=4
    $region2: #{tpu_custom_call.1} parent=1 // loop_pre_header
      _
    $region3: #{tpu_custom_call.1} parent=1 // loop_header
      %s27 = sphi 0, %s31
      %p28 = scmp.ge.s32.totalorder %s27, 4
      %s37 = sphi 0, %s39
      %s40 = sphi 0, %s37
      %s41 = sphi 0, %s40
      %s57 = sphi 0, %s41
      %s61 = sphi 0, %s61
      %s63 = sphi 0, %s61
      %s64 = sphi 0, %s63
      %s78 = sphi 0, %s64
      %s82 = sphi 0, %s82
      %s84 = sphi 0, %s82
      %s85 = sphi 0, %s84
      %s99 = sphi 0, %s85
      %s103 = sphi 0, %s103
      %s105 = sphi 0, %s103
      %s106 = sphi 0, %s105
      %s120 = sphi 0, %s106
      %s124 = sphi 0, %s124
      %s126 = sphi 0, %s124
      %s127 = sphi 0, %s126
      %s141 = sphi 0, %s127
      %s145 = sphi 0, %s145
      %s147 = sphi 0, %s145
      %s148 = sphi 0, %s147
      %s162 = sphi 0, %s148
      %s166 = sphi 0, %s166
      %s168 = sphi 0, %s166
      %s169 = sphi 0, %s168
      %s183 = sphi 0, %s169
      %s187 = sphi 0, %s187
      %s189 = sphi 0, %s187
      %s190 = sphi 0, %s189
      %s204 = sphi 0, %s190
      %s208 = sphi 0, %s208
      %s210 = sphi 0, %s208
      %s211 = sphi 0, %s210
      %s225 = sphi 0, %s211
      %s229 = sphi 0, %s229
      %s231 = sphi 0, %s229
      %s232 = sphi 0, %s231
      %s246 = sphi 0, %s232
      %s250 = sphi 0, %s250
      %s252 = sphi 0, %s250
      %s253 = sphi 0, %s252
      %s267 = sphi 0, %s253
      %s271 = sphi 0, %s271
      %s273 = sphi 0, %s271
      %s274 = sphi 0, %s273
      %s288 = sphi 0, %s274
      %s294 = sphi 0, %s296
      %s297 = sphi 0, %s294
      %s298 = sphi 0, %s297
      %s314 = sphi 0, %s298
    $region4: #{tpu_custom_call.1} parent=1 // loop_header_branch
      %30 = sbr.rel (%p28) target = $region8
    $region5: #{tpu_custom_call.1} parent=1 // loop_body
      %s32 = ssub.s32 %s27, 1
      %s33 = ssub.s32 %s27, 2
      %s34 = sadd.s32 %s27, 1
      %s35 = ssub.s32 %s27, %s34
      %p36 = scmp.eq.s32.totalorder %s35, 0
      %s38 = sadd.s32 %s37, 1
      %s39 = scalar_select %p36, %s37, %s38
      %p42 = pneg %p36
      %p43 = scmp.eq.s32.totalorder %s27, 1
      %p44 = por %p42, %p43
      %p45 = scmp.ne.s32.totalorder %s37, %s40
      %p46 = scmp.eq.s32.totalorder %s27, 0
      %p47 = por %p45, %p46
      %p48 = scmp.ne.s32.totalorder %s37, %s40
      %p49 = scmp.eq.s32.totalorder %s32, 1
      %p50 = por %p48, %p49
      %p51 = scmp.ne.s32.totalorder %s40, %s41
      %p52 = scmp.eq.s32.totalorder %s32, 0
      %p53 = por %p51, %p52
      %p54 = scmp.ne.s32.totalorder %s40, %s41
      %p55 = scmp.eq.s32.totalorder %s33, 1
      %p56 = por %p54, %p55
      %p58 = scmp.ne.s32.totalorder %s41, %s57
      %p59 = scmp.eq.s32.totalorder %s33, 0
      %p60 = por %p58, %p59
      %s62 = sadd.s32 %s61, 1
      %p65 = scmp.eq.s32.totalorder %s27, 1
      %p66 = scmp.ne.s32.totalorder %s61, %s63
      %p67 = scmp.eq.s32.totalorder %s27, 0
      %p68 = por %p66, %p67
      %p69 = scmp.ne.s32.totalorder %s61, %s63
      %p70 = scmp.eq.s32.totalorder %s32, 1
      %p71 = por %p69, %p70
      %p72 = scmp.ne.s32.totalorder %s63, %s64
      %p73 = scmp.eq.s32.totalorder %s32, 0
      %p74 = por %p72, %p73
      %p75 = scmp.ne.s32.totalorder %s63, %s64
      %p76 = scmp.eq.s32.totalorder %s33, 1
      %p77 = por %p75, %p76
      %p79 = scmp.ne.s32.totalorder %s64, %s78
      %p80 = scmp.eq.s32.totalorder %s33, 0
      %p81 = por %p79, %p80
      %s83 = sadd.s32 %s82, 1
      %p86 = scmp.eq.s32.totalorder %s27, 1
      %p87 = scmp.ne.s32.totalorder %s82, %s84
      %p88 = scmp.eq.s32.totalorder %s27, 0
      %p89 = por %p87, %p88
      %p90 = scmp.ne.s32.totalorder %s82, %s84
      %p91 = scmp.eq.s32.totalorder %s32, 1
      %p92 = por %p90, %p91
      %p93 = scmp.ne.s32.totalorder %s84, %s85
      %p94 = scmp.eq.s32.totalorder %s32, 0
      %p95 = por %p93, %p94
      %p96 = scmp.ne.s32.totalorder %s84, %s85
      %p97 = scmp.eq.s32.totalorder %s33, 1
      %p98 = por %p96, %p97
      %p100 = scmp.ne.s32.totalorder %s85, %s99
      %p101 = scmp.eq.s32.totalorder %s33, 0
      %p102 = por %p100, %p101
      %s104 = sadd.s32 %s103, 1
      %p107 = scmp.eq.s32.totalorder %s27, 1
      %p108 = scmp.ne.s32.totalorder %s103, %s105
      %p109 = scmp.eq.s32.totalorder %s27, 0
      %p110 = por %p108, %p109
      %p111 = scmp.ne.s32.totalorder %s103, %s105
      %p112 = scmp.eq.s32.totalorder %s32, 1
      %p113 = por %p111, %p112
      %p114 = scmp.ne.s32.totalorder %s105, %s106
      %p115 = scmp.eq.s32.totalorder %s32, 0
      %p116 = por %p114, %p115
      %p117 = scmp.ne.s32.totalorder %s105, %s106
      %p118 = scmp.eq.s32.totalorder %s33, 1
      %p119 = por %p117, %p118
      %p121 = scmp.ne.s32.totalorder %s106, %s120
      %p122 = scmp.eq.s32.totalorder %s33, 0
      %p123 = por %p121, %p122
      %s125 = sadd.s32 %s124, 1
      %p128 = scmp.eq.s32.totalorder %s27, 1
      %p129 = scmp.ne.s32.totalorder %s124, %s126
      %p130 = scmp.eq.s32.totalorder %s27, 0
      %p131 = por %p129, %p130
      %p132 = scmp.ne.s32.totalorder %s124, %s126
      %p133 = scmp.eq.s32.totalorder %s32, 1
      %p134 = por %p132, %p133
      %p135 = scmp.ne.s32.totalorder %s126, %s127
      %p136 = scmp.eq.s32.totalorder %s32, 0
      %p137 = por %p135, %p136
      %p138 = scmp.ne.s32.totalorder %s126, %s127
      %p139 = scmp.eq.s32.totalorder %s33, 1
      %p140 = por %p138, %p139
      %p142 = scmp.ne.s32.totalorder %s127, %s141
      %p143 = scmp.eq.s32.totalorder %s33, 0
      %p144 = por %p142, %p143
      %s146 = sadd.s32 %s145, 1
      %p149 = scmp.eq.s32.totalorder %s27, 1
      %p150 = scmp.ne.s32.totalorder %s145, %s147
      %p151 = scmp.eq.s32.totalorder %s27, 0
      %p152 = por %p150, %p151
      %p153 = scmp.ne.s32.totalorder %s145, %s147
      %p154 = scmp.eq.s32.totalorder %s32, 1
      %p155 = por %p153, %p154
      %p156 = scmp.ne.s32.totalorder %s147, %s148
      %p157 = scmp.eq.s32.totalorder %s32, 0
      %p158 = por %p156, %p157
      %p159 = scmp.ne.s32.totalorder %s147, %s148
      %p160 = scmp.eq.s32.totalorder %s33, 1
      %p161 = por %p159, %p160
      %p163 = scmp.ne.s32.totalorder %s148, %s162
      %p164 = scmp.eq.s32.totalorder %s33, 0
      %p165 = por %p163, %p164
      %s167 = sadd.s32 %s166, 1
      %p170 = scmp.eq.s32.totalorder %s27, 1
      %p171 = scmp.ne.s32.totalorder %s166, %s168
      %p172 = scmp.eq.s32.totalorder %s27, 0
      %p173 = por %p171, %p172
      %p174 = scmp.ne.s32.totalorder %s166, %s168
      %p175 = scmp.eq.s32.totalorder %s32, 1
      %p176 = por %p174, %p175
      %p177 = scmp.ne.s32.totalorder %s168, %s169
      %p178 = scmp.eq.s32.totalorder %s32, 0
      %p179 = por %p177, %p178
      %p180 = scmp.ne.s32.totalorder %s168, %s169
      %p181 = scmp.eq.s32.totalorder %s33, 1
      %p182 = por %p180, %p181
      %p184 = scmp.ne.s32.totalorder %s169, %s183
      %p185 = scmp.eq.s32.totalorder %s33, 0
      %p186 = por %p184, %p185
      %s188 = sadd.s32 %s187, 1
      %p191 = scmp.eq.s32.totalorder %s27, 1
      %p192 = scmp.ne.s32.totalorder %s187, %s189
      %p193 = scmp.eq.s32.totalorder %s27, 0
      %p194 = por %p192, %p193
      %p195 = scmp.ne.s32.totalorder %s187, %s189
      %p196 = scmp.eq.s32.totalorder %s32, 1
      %p197 = por %p195, %p196
      %p198 = scmp.ne.s32.totalorder %s189, %s190
      %p199 = scmp.eq.s32.totalorder %s32, 0
      %p200 = por %p198, %p199
      %p201 = scmp.ne.s32.totalorder %s189, %s190
      %p202 = scmp.eq.s32.totalorder %s33, 1
      %p203 = por %p201, %p202
      %p205 = scmp.ne.s32.totalorder %s190, %s204
      %p206 = scmp.eq.s32.totalorder %s33, 0
      %p207 = por %p205, %p206
      %s209 = sadd.s32 %s208, 1
      %p212 = scmp.eq.s32.totalorder %s27, 1
      %p213 = scmp.ne.s32.totalorder %s208, %s210
      %p214 = scmp.eq.s32.totalorder %s27, 0
      %p215 = por %p213, %p214
      %p216 = scmp.ne.s32.totalorder %s208, %s210
      %p217 = scmp.eq.s32.totalorder %s32, 1
      %p218 = por %p216, %p217
      %p219 = scmp.ne.s32.totalorder %s210, %s211
      %p220 = scmp.eq.s32.totalorder %s32, 0
      %p221 = por %p219, %p220
      %p222 = scmp.ne.s32.totalorder %s210, %s211
      %p223 = scmp.eq.s32.totalorder %s33, 1
      %p224 = por %p222, %p223
      %p226 = scmp.ne.s32.totalorder %s211, %s225
      %p227 = scmp.eq.s32.totalorder %s33, 0
      %p228 = por %p226, %p227
      %s230 = sadd.s32 %s229, 1
      %p233 = scmp.eq.s32.totalorder %s27, 1
      %p234 = scmp.ne.s32.totalorder %s229, %s231
      %p235 = scmp.eq.s32.totalorder %s27, 0
      %p236 = por %p234, %p235
      %p237 = scmp.ne.s32.totalorder %s229, %s231
      %p238 = scmp.eq.s32.totalorder %s32, 1
      %p239 = por %p237, %p238
      %p240 = scmp.ne.s32.totalorder %s231, %s232
      %p241 = scmp.eq.s32.totalorder %s32, 0
      %p242 = por %p240, %p241
      %p243 = scmp.ne.s32.totalorder %s231, %s232
      %p244 = scmp.eq.s32.totalorder %s33, 1
      %p245 = por %p243, %p244
      %p247 = scmp.ne.s32.totalorder %s232, %s246
      %p248 = scmp.eq.s32.totalorder %s33, 0
      %p249 = por %p247, %p248
      %s251 = sadd.s32 %s250, 1
      %p254 = scmp.eq.s32.totalorder %s27, 1
      %p255 = scmp.ne.s32.totalorder %s250, %s252
      %p256 = scmp.eq.s32.totalorder %s27, 0
      %p257 = por %p255, %p256
      %p258 = scmp.ne.s32.totalorder %s250, %s252
      %p259 = scmp.eq.s32.totalorder %s32, 1
      %p260 = por %p258, %p259
      %p261 = scmp.ne.s32.totalorder %s252, %s253
      %p262 = scmp.eq.s32.totalorder %s32, 0
      %p263 = por %p261, %p262
      %p264 = scmp.ne.s32.totalorder %s252, %s253
      %p265 = scmp.eq.s32.totalorder %s33, 1
      %p266 = por %p264, %p265
      %p268 = scmp.ne.s32.totalorder %s253, %s267
      %p269 = scmp.eq.s32.totalorder %s33, 0
      %p270 = por %p268, %p269
      %s272 = sadd.s32 %s271, 1
      %p275 = scmp.eq.s32.totalorder %s27, 1
      %p276 = scmp.ne.s32.totalorder %s271, %s273
      %p277 = scmp.eq.s32.totalorder %s27, 0
      %p278 = por %p276, %p277
      %p279 = scmp.ne.s32.totalorder %s271, %s273
      %p280 = scmp.eq.s32.totalorder %s32, 1
      %p281 = por %p279, %p280
      %p282 = scmp.ne.s32.totalorder %s273, %s274
      %p283 = scmp.eq.s32.totalorder %s32, 0
      %p284 = por %p282, %p283
      %p285 = scmp.ne.s32.totalorder %s273, %s274
      %p286 = scmp.eq.s32.totalorder %s33, 1
      %p287 = por %p285, %p286
      %p289 = scmp.ne.s32.totalorder %s274, %s288
      %p290 = scmp.eq.s32.totalorder %s33, 0
      %p291 = por %p289, %p290
      %s292 = ssub.s32 %s27, %s34
      %p293 = scmp.eq.s32.totalorder %s292, 0
      %s295 = sadd.s32 %s294, 1
      %s296 = scalar_select %p293, %s294, %s295
      %p299 = pneg %p293
      %p300 = scmp.eq.s32.totalorder %s27, 1
      %p301 = por %p299, %p300
      %p302 = scmp.ne.s32.totalorder %s294, %s297
      %p303 = scmp.eq.s32.totalorder %s27, 0
      %p304 = por %p302, %p303
      %p305 = scmp.ne.s32.totalorder %s294, %s297
      %p306 = scmp.eq.s32.totalorder %s32, 1
      %p307 = por %p305, %p306
      %p308 = scmp.ne.s32.totalorder %s297, %s298
      %p309 = scmp.eq.s32.totalorder %s32, 0
      %p310 = por %p308, %p309
      %p311 = scmp.ne.s32.totalorder %s297, %s298
      %p312 = scmp.eq.s32.totalorder %s33, 1
      %p313 = por %p311, %p312
      %p315 = scmp.ne.s32.totalorder %s298, %s314
      %p316 = scmp.eq.s32.totalorder %s33, 0
      %p317 = por %p315, %p316
      %p318 = scmp.le.s32.totalorder 1, %s27
      %p319 = scmp.lt.s32.totalorder %s27, 3
      %p320 = pnand %p318, %p319
      %p321 = pneg %p320
      // Predicated region
      $region9: #{tpu_custom_call.1} parent=5 // pred_check
        _
      $region10: #{tpu_custom_call.1} parent=5 // pred_check_branch
        %323 = sbr.rel (%p320) target = $region12
      $region11: #{tpu_custom_call.1} parent=5 // pred_region
        %s324 = ssub.s32 %s27, 1
        // Predicated region
        $region13: #{tpu_custom_call.1} parent=11 // pred_check
          %p325 = pneg %p74
        $region14: #{tpu_custom_call.1} parent=11 // pred_check_branch
          %327 = sbr.rel (%p325) target = $region16
        $region15: #{tpu_custom_call.1} parent=11 // pred_region
          %329 = vsyncadd [#allocation8], 0
          %s330 = sshll.u32 %s1, 4
          %s331 = int_to_ptr.hbm [resolvable:$true] %s330
          %s332 = sshll.u32 [#allocation7], 4
          %s333 = int_to_ptr.vmem [resolvable:$true] %s332
          %338 = dma.hbm_to_vmem [thread:$0]  %s331, 1024, %s333, [#allocation8], 128, 128, 8
        $region16: #{tpu_custom_call.1} parent=11 // pred_fallthru
          _
        // Predicated region
        $region17: #{tpu_custom_call.1} parent=11 // pred_check
          %p339 = pneg %p95
        $region18: #{tpu_custom_call.1} parent=11 // pred_check_branch
          %341 = sbr.rel (%p339) target = $region20
        $region19: #{tpu_custom_call.1} parent=11 // pred_region
          %343 = vsyncadd [#allocation8], 0
          %s344 = sshll.u32 %s2, 4
          %s345 = int_to_ptr.hbm [resolvable:$true] %s344
          %s346 = sshll.u32 [#allocation9], 4
          %s347 = int_to_ptr.vmem [resolvable:$true] %s346
          %352 = dma.hbm_to_vmem [thread:$0]  %s345, 2048, %s347, [#allocation8], 128, 128, 8
        $region20: #{tpu_custom_call.1} parent=11 // pred_fallthru
          _
        // Predicated region
        $region21: #{tpu_custom_call.1} parent=11 // pred_check
          %p353 = pneg %p116
        $region22: #{tpu_custom_call.1} parent=11 // pred_check_branch
          %355 = sbr.rel (%p353) target = $region24
        $region23: #{tpu_custom_call.1} parent=11 // pred_region
          _
        $region24: #{tpu_custom_call.1} parent=11 // pred_fallthru
          _
        // Predicated region
        $region25: #{tpu_custom_call.1} parent=11 // pred_check
          %p356 = pneg %p137
        $region26: #{tpu_custom_call.1} parent=11 // pred_check_branch
          %358 = sbr.rel (%p356) target = $region28
        $region27: #{tpu_custom_call.1} parent=11 // pred_region
          %360 = vsyncadd [#allocation11], 0
          %s361 = sshll.u32 %s4, 4
          %s362 = int_to_ptr.hbm [resolvable:$true] %s361
          %s363 = sshll.u32 [#allocation10], 4
          %s364 = int_to_ptr.vmem [resolvable:$true] %s363
          %369 = dma.hbm_to_vmem [thread:$0]  %s362, 6144, %s364, [#allocation11], 384, 384, 24
        $region28: #{tpu_custom_call.1} parent=11 // pred_fallthru
          _
        // Predicated region
        $region29: #{tpu_custom_call.1} parent=11 // pred_check
          %p370 = pneg %p158
        $region30: #{tpu_custom_call.1} parent=11 // pred_check_branch
          %372 = sbr.rel (%p370) target = $region32
        $region31: #{tpu_custom_call.1} parent=11 // pred_region
          _
        $region32: #{tpu_custom_call.1} parent=11 // pred_fallthru
          _
        // Predicated region
        $region33: #{tpu_custom_call.1} parent=11 // pred_check
          %p373 = pneg %p179
        $region34: #{tpu_custom_call.1} parent=11 // pred_check_branch
          %375 = sbr.rel (%p373) target = $region36
        $region35: #{tpu_custom_call.1} parent=11 // pred_region
          %377 = vsyncadd [#allocation11], 0
          %s378 = sshll.u32 %s6, 4
          %s379 = int_to_ptr.hbm [resolvable:$true] %s378
          %s380 = sshll.u32 [#allocation12], 4
          %s381 = int_to_ptr.vmem [resolvable:$true] %s380
          %386 = dma.hbm_to_vmem [thread:$0]  %s379, 2048, %s381, [#allocation11], 128, 128, 8
        $region36: #{tpu_custom_call.1} parent=11 // pred_fallthru
          _
        // Predicated region
        $region37: #{tpu_custom_call.1} parent=11 // pred_check
          %p387 = pneg %p200
        $region38: #{tpu_custom_call.1} parent=11 // pred_check_branch
          %389 = sbr.rel (%p387) target = $region40
        $region39: #{tpu_custom_call.1} parent=11 // pred_region
          _
        $region40: #{tpu_custom_call.1} parent=11 // pred_fallthru
          _
        // Predicated region
        $region41: #{tpu_custom_call.1} parent=11 // pred_check
          %p390 = pneg %p221
        $region42: #{tpu_custom_call.1} parent=11 // pred_check_branch
          %392 = sbr.rel (%p390) target = $region44
        $region43: #{tpu_custom_call.1} parent=11 // pred_region
          %394 = vsyncadd [#allocation14], 0
          %s395 = sshll.u32 %s8, 4
          %s396 = int_to_ptr.hbm [resolvable:$true] %s395
          %s397 = sshll.u32 [#allocation13], 4
          %s398 = int_to_ptr.vmem [resolvable:$true] %s397
          %403 = dma.hbm_to_vmem [thread:$0]  %s396, 2048, %s398, [#allocation14], 128, 128, 8
        $region44: #{tpu_custom_call.1} parent=11 // pred_fallthru
          _
        // Predicated region
        $region45: #{tpu_custom_call.1} parent=11 // pred_check
          %p404 = pneg %p242
        $region46: #{tpu_custom_call.1} parent=11 // pred_check_branch
          %406 = sbr.rel (%p404) target = $region48
        $region47: #{tpu_custom_call.1} parent=11 // pred_region
          _
        $region48: #{tpu_custom_call.1} parent=11 // pred_fallthru
          _
        // Predicated region
        $region49: #{tpu_custom_call.1} parent=11 // pred_check
          %p407 = pneg %p263
        $region50: #{tpu_custom_call.1} parent=11 // pred_check_branch
          %409 = sbr.rel (%p407) target = $region52
        $region51: #{tpu_custom_call.1} parent=11 // pred_region
          _
        $region52: #{tpu_custom_call.1} parent=11 // pred_fallthru
          _
        // Predicated region
        $region53: #{tpu_custom_call.1} parent=11 // pred_check
          %p410 = pneg %p284
        $region54: #{tpu_custom_call.1} parent=11 // pred_check_branch
          %412 = sbr.rel (%p410) target = $region56
        $region55: #{tpu_custom_call.1} parent=11 // pred_region
          _
        $region56: #{tpu_custom_call.1} parent=11 // pred_fallthru
          _
      $region12: #{tpu_custom_call.1} parent=5 // pred_fallthru
        _
      %p413 = scmp.lt.s32.totalorder %s27, 2
      // Predicated region
      $region57: #{tpu_custom_call.1} parent=5 // pred_check
        %p414 = pneg %p413
      $region58: #{tpu_custom_call.1} parent=5 // pred_check_branch
        %416 = sbr.rel (%p414) target = $region60
      $region59: #{tpu_custom_call.1} parent=5 // pred_region
        // Predicated region
        $region61: #{tpu_custom_call.1} parent=59 // pred_check
          %p417 = pneg %p47
        $region62: #{tpu_custom_call.1} parent=59 // pred_check_branch
          %419 = sbr.rel (%p417) target = $region64
        $region63: #{tpu_custom_call.1} parent=59 // pred_region
          %s420 = sand.u32 %s37, 1
          %s421 = scalar_lea.sflag [#allocation5], %s420
          %s422 = sand.u32 %s37, 1
          %s423 = smul.addr %s422, 128
          %s424 = scalar_lea.vmem [#allocation4], %s423
          %s425 = smul.u32 2, %s27
          %427 = vsyncadd %s421, 0
          %s428 = smul.addr %s425, 8
          %s429 = smul.addr %s428, 8
          %s430 = scalar_lea.hbm %s0, %s429
          %s431 = sshll.u32 %s430, 4
          %s432 = int_to_ptr.hbm [resolvable:$true] %s431
          %s433 = sshll.u32 %s424, 4
          %s434 = int_to_ptr.vmem [resolvable:$true] %s433
          %439 = dma.hbm_to_vmem [thread:$0]  %s432, 2048, %s434, %s421, 128, 128, 8
        $region64: #{tpu_custom_call.1} parent=59 // pred_fallthru
          _
      $region60: #{tpu_custom_call.1} parent=5 // pred_fallthru
        _
      %p440 = scmp.le.s32.totalorder 1, %s27
      %p441 = scmp.lt.s32.totalorder %s27, 3
      %p442 = pnand %p440, %p441
      %p443 = pneg %p442
      // Predicated region
      $region65: #{tpu_custom_call.1} parent=5 // pred_check
        _
      $region66: #{tpu_custom_call.1} parent=5 // pred_check_branch
        %445 = sbr.rel (%p442) target = $region68
      $region67: #{tpu_custom_call.1} parent=5 // pred_region
        %s446 = ssub.s32 %s27, 1
        %s447 = sand.u32 %s40, 1
        %s448 = scalar_lea.sflag [#allocation5], %s447
        %s449 = sand.u32 %s40, 1
        %s450 = smul.addr %s449, 128
        %s451 = scalar_lea.vmem [#allocation4], %s450
        // Predicated region
        $region69: #{tpu_custom_call.1} parent=67 // pred_check
          %p452 = pneg %p53
        $region70: #{tpu_custom_call.1} parent=67 // pred_check_branch
          %454 = sbr.rel (%p452) target = $region72
        $region71: #{tpu_custom_call.1} parent=67 // pred_region
          %456 = dma.done %s448, 2048
        $region72: #{tpu_custom_call.1} parent=67 // pred_fallthru
          _
        // Predicated region
        $region73: #{tpu_custom_call.1} parent=67 // pred_check
          %p457 = pneg %p74
        $region74: #{tpu_custom_call.1} parent=67 // pred_check_branch
          %459 = sbr.rel (%p457) target = $region76
        $region75: #{tpu_custom_call.1} parent=67 // pred_region
          %461 = dma.done [#allocation8], 1024
        $region76: #{tpu_custom_call.1} parent=67 // pred_fallthru
          _
        // Predicated region
        $region77: #{tpu_custom_call.1} parent=67 // pred_check
          %p462 = pneg %p95
        $region78: #{tpu_custom_call.1} parent=67 // pred_check_branch
          %464 = sbr.rel (%p462) target = $region80
        $region79: #{tpu_custom_call.1} parent=67 // pred_region
          %466 = dma.done [#allocation8], 2048
        $region80: #{tpu_custom_call.1} parent=67 // pred_fallthru
          _
        // Predicated region
        $region81: #{tpu_custom_call.1} parent=67 // pred_check
          %p467 = pneg %p137
        $region82: #{tpu_custom_call.1} parent=67 // pred_check_branch
          %469 = sbr.rel (%p467) target = $region84
        $region83: #{tpu_custom_call.1} parent=67 // pred_region
          %471 = dma.done [#allocation11], 6144
        $region84: #{tpu_custom_call.1} parent=67 // pred_fallthru
          _
        // Predicated region
        $region85: #{tpu_custom_call.1} parent=67 // pred_check
          %p472 = pneg %p179
        $region86: #{tpu_custom_call.1} parent=67 // pred_check_branch
          %474 = sbr.rel (%p472) target = $region88
        $region87: #{tpu_custom_call.1} parent=67 // pred_region
          %476 = dma.done [#allocation11], 2048
        $region88: #{tpu_custom_call.1} parent=67 // pred_fallthru
          _
        // Predicated region
        $region89: #{tpu_custom_call.1} parent=67 // pred_check
          %p477 = pneg %p221
        $region90: #{tpu_custom_call.1} parent=67 // pred_check_branch
          %479 = sbr.rel (%p477) target = $region92
        $region91: #{tpu_custom_call.1} parent=67 // pred_region
          %481 = dma.done [#allocation14], 2048
        $region92: #{tpu_custom_call.1} parent=67 // pred_fallthru
          _
        %s482 = sand.u32 %s40, 1
        %s483 = scalar_lea.sflag [#allocation5], %s482
        %s484 = sand.u32 %s40, 1
        %s485 = smul.addr %s484, 128
        %s486 = scalar_lea.vmem [#allocation4], %s485
        %p487 = pneg %p53
        %p488 = pneg %p50
        %p489 = pneg %p74
        %p490 = pneg %p71
        %p491 = pneg %p95
        %p492 = pneg %p92
        %p493 = pneg %p116
        %p494 = pneg %p113
        %p495 = pneg %p137
        %p496 = pneg %p134
        %p497 = pneg %p158
        %p498 = pneg %p155
        %p499 = pneg %p179
        %p500 = pneg %p176
        %p501 = pneg %p200
        %p502 = pneg %p197
        %p503 = pneg %p221
        %p504 = pneg %p218
        %p505 = pneg %p242
        %p506 = pneg %p239
        %p507 = pneg %p263
        %p508 = pneg %p260
        %p509 = pneg %p284
        %p510 = pneg %p281
        %p511 = pneg %p310
        %p512 = pneg %p307
        %s513 = sand.u32 %s297, 1
        %s514 = scalar_lea.sflag [#allocation6], %s513
        %s515 = sand.u32 %s297, 1
        %s516 = smul.addr %s515, 128
        %s517 = scalar_lea.vmem [#allocation15], %s516
        %s518 = smul.u32 2, %s32
        %s519 = smul.u32 2, %s32
        %v520 = vld [vmem:[%s451] sm:$0xff]
        %v521 = vld [vmem:[%s451 + $0x8] sm:$0xff]
        %v522 = vld [vmem:[%s451 + $0x10] sm:$0xff]
        %v523 = vld [vmem:[%s451 + $0x18] sm:$0xff]
        %v524 = vld [vmem:[%s451 + $0x20] sm:$0xff]
        %v525 = vld [vmem:[%s451 + $0x28] sm:$0xff]
        %v526 = vld [vmem:[%s451 + $0x30] sm:$0xff]
        %v527 = vld [vmem:[%s451 + $0x38] sm:$0xff]
        %v528 = vld [vmem:[%s451 + $0x40] sm:$0xff]
        %v529 = vld [vmem:[%s451 + $0x48] sm:$0xff]
        %v530 = vld [vmem:[%s451 + $0x50] sm:$0xff]
        %v531 = vld [vmem:[%s451 + $0x58] sm:$0xff]
        %v532 = vld [vmem:[%s451 + $0x60] sm:$0xff]
        %v533 = vld [vmem:[%s451 + $0x68] sm:$0xff]
        %v534 = vld [vmem:[%s451 + $0x70] sm:$0xff]
        %v535 = vld [vmem:[%s451 + $0x78] sm:$0xff]
        %v536 = vld [vmem:[#allocation7] sm:$0xff]
        %v537 = vld [vmem:[#allocation7 + $0x8] sm:$0xff]
        %v538 = vld [vmem:[#allocation7 + $0x10] sm:$0xff]
        %v539 = vld [vmem:[#allocation7 + $0x18] sm:$0xff]
        %v540 = vld [vmem:[#allocation7 + $0x20] sm:$0xff]
        %v541 = vld [vmem:[#allocation7 + $0x28] sm:$0xff]
        %v542 = vld [vmem:[#allocation7 + $0x30] sm:$0xff]
        %v543 = vld [vmem:[#allocation7 + $0x38] sm:$0xff]
        %v544 = vadd.f32 %v520, %v536
        %v545 = vadd.f32 %v521, %v537
        %v546 = vadd.f32 %v522, %v538
        %v547 = vadd.f32 %v523, %v539
        %v548 = vadd.f32 %v524, %v540
        %v549 = vadd.f32 %v525, %v541
        %v550 = vadd.f32 %v526, %v542
        %v551 = vadd.f32 %v527, %v543
        %v552 = vadd.f32 %v528, %v536
        %v553 = vadd.f32 %v529, %v537
        %v554 = vadd.f32 %v530, %v538
        %v555 = vadd.f32 %v531, %v539
        %v556 = vadd.f32 %v532, %v540
        %v557 = vadd.f32 %v533, %v541
        %v558 = vadd.f32 %v534, %v542
        %v559 = vadd.f32 %v535, %v543
        %v560 = vld [vmem:[#allocation9] sm:$0xff]
        %v561 = vld [vmem:[#allocation9 + $0x8] sm:$0xff]
        %v562 = vld [vmem:[#allocation9 + $0x10] sm:$0xff]
        %v563 = vld [vmem:[#allocation9 + $0x18] sm:$0xff]
        %v564 = vld [vmem:[#allocation9 + $0x20] sm:$0xff]
        %v565 = vld [vmem:[#allocation9 + $0x28] sm:$0xff]
        %v566 = vld [vmem:[#allocation9 + $0x30] sm:$0xff]
        %v567 = vld [vmem:[#allocation9 + $0x38] sm:$0xff]
        %v568 = vld [vmem:[#allocation9 + $0x40] sm:$0xff]
        %v569 = vld [vmem:[#allocation9 + $0x48] sm:$0xff]
        %v570 = vld [vmem:[#allocation9 + $0x50] sm:$0xff]
        %v571 = vld [vmem:[#allocation9 + $0x58] sm:$0xff]
        %v572 = vld [vmem:[#allocation9 + $0x60] sm:$0xff]
        %v573 = vld [vmem:[#allocation9 + $0x68] sm:$0xff]
        %v574 = vld [vmem:[#allocation9 + $0x70] sm:$0xff]
        %v575 = vld [vmem:[#allocation9 + $0x78] sm:$0xff]
        %v576 = vld [vmem:[%s3] sm:$0x1]
        %v578 = vperm.slane %v576, 0
        %580 = vmatpush.msra.mxu0 %v575
        %581 = vmatpush.msra.mxu0 %v574
        %582 = vmatpush.msra.mxu0 %v573
        %583 = vmatpush.msra.mxu0 %v572
        %584 = vmatpush.msra.mxu0 %v571
        %585 = vmatpush.msra.mxu0 %v570
        %586 = vmatpush.msra.mxu0 %v569
        %587 = vmatpush.msra.mxu0 %v568
        %588 = vmatpush.msra.mxu0 %v567
        %589 = vmatpush.msra.mxu0 %v566
        %590 = vmatpush.msra.mxu0 %v565
        %591 = vmatpush.msra.mxu0 %v564
        %592 = vmatpush.msra.mxu0 %v563
        %593 = vmatpush.msra.mxu0 %v562
        %594 = vmatpush.msra.mxu0 %v561
        %595 = vmatpush.msra.mxu0 %v560
        %596 = vmatmul.f32.gmra.mxu0 %v544
        %v597 = vpop.f32.mrf.mxu0
        %v598 = vadd.f32 %v578, %v597
        %599 = vmatmul.f32.gmra.mxu0 %v545
        %v600 = vpop.f32.mrf.mxu0
        %v601 = vadd.f32 %v578, %v600
        %602 = vmatmul.f32.gmra.mxu0 %v546
        %v603 = vpop.f32.mrf.mxu0
        %v604 = vadd.f32 %v578, %v603
        %605 = vmatmul.f32.gmra.mxu0 %v547
        %v606 = vpop.f32.mrf.mxu0
        %v607 = vadd.f32 %v578, %v606
        %608 = vmatmul.f32.gmra.mxu0 %v548
        %v609 = vpop.f32.mrf.mxu0
        %v610 = vadd.f32 %v578, %v609
        %611 = vmatmul.f32.gmra.mxu0 %v549
        %v612 = vpop.f32.mrf.mxu0
        %v613 = vadd.f32 %v578, %v612
        %614 = vmatmul.f32.gmra.mxu0 %v550
        %v615 = vpop.f32.mrf.mxu0
        %v616 = vadd.f32 %v578, %v615
        %617 = vmatmul.f32.gmra.mxu0 %v551
        %v618 = vpop.f32.mrf.mxu0
        %v619 = vadd.f32 %v578, %v618
        %620 = vmatmul.f32.gmra.mxu0 %v552
        %v621 = vpop.f32.mrf.mxu0
        %v622 = vadd.f32 %v578, %v621
        %623 = vmatmul.f32.gmra.mxu0 %v553
        %v624 = vpop.f32.mrf.mxu0
        %v625 = vadd.f32 %v578, %v624
        %626 = vmatmul.f32.gmra.mxu0 %v554
        %v627 = vpop.f32.mrf.mxu0
        %v628 = vadd.f32 %v578, %v627
        %629 = vmatmul.f32.gmra.mxu0 %v555
        %v630 = vpop.f32.mrf.mxu0
        %v631 = vadd.f32 %v578, %v630
        %632 = vmatmul.f32.gmra.mxu0 %v556
        %v633 = vpop.f32.mrf.mxu0
        %v634 = vadd.f32 %v578, %v633
        %635 = vmatmul.f32.gmra.mxu0 %v557
        %v636 = vpop.f32.mrf.mxu0
        %v637 = vadd.f32 %v578, %v636
        %638 = vmatmul.f32.gmra.mxu0 %v558
        %v639 = vpop.f32.mrf.mxu0
        %v640 = vadd.f32 %v578, %v639
        %641 = vmatmul.f32.gmra.mxu0 %v559
        %v642 = vpop.f32.mrf.mxu0
        %v643 = vadd.f32 %v578, %v642
        %644 = vdwg.mxu0
        %vm645 = vcmp.ge.f32.partialorder %v598, 0.0
        %vm646 = vcmp.ge.f32.partialorder %v601, 0.0
        %vm647 = vcmp.ge.f32.partialorder %v604, 0.0
        %vm648 = vcmp.ge.f32.partialorder %v607, 0.0
        %vm649 = vcmp.ge.f32.partialorder %v610, 0.0
        %vm650 = vcmp.ge.f32.partialorder %v613, 0.0
        %vm651 = vcmp.ge.f32.partialorder %v616, 0.0
        %vm652 = vcmp.ge.f32.partialorder %v619, 0.0
        %vm653 = vcmp.ge.f32.partialorder %v622, 0.0
        %vm654 = vcmp.ge.f32.partialorder %v625, 0.0
        %vm655 = vcmp.ge.f32.partialorder %v628, 0.0
        %vm656 = vcmp.ge.f32.partialorder %v631, 0.0
        %vm657 = vcmp.ge.f32.partialorder %v634, 0.0
        %vm658 = vcmp.ge.f32.partialorder %v637, 0.0
        %vm659 = vcmp.ge.f32.partialorder %v640, 0.0
        %vm660 = vcmp.ge.f32.partialorder %v643, 0.0
        %v661 = vmul.f32 %v598, 0.01
        %v662 = vmul.f32 %v601, 0.01
        %v663 = vmul.f32 %v604, 0.01
        %v664 = vmul.f32 %v607, 0.01
        %v665 = vmul.f32 %v610, 0.01
        %v666 = vmul.f32 %v613, 0.01
        %v667 = vmul.f32 %v616, 0.01
        %v668 = vmul.f32 %v619, 0.01
        %v669 = vmul.f32 %v622, 0.01
        %v670 = vmul.f32 %v625, 0.01
        %v671 = vmul.f32 %v628, 0.01
        %v672 = vmul.f32 %v631, 0.01
        %v673 = vmul.f32 %v634, 0.01
        %v674 = vmul.f32 %v637, 0.01
        %v675 = vmul.f32 %v640, 0.01
        %v676 = vmul.f32 %v643, 0.01
        %v677 = vsel %vm645, %v598, %v661
        %v678 = vsel %vm646, %v601, %v662
        %v679 = vsel %vm647, %v604, %v663
        %v680 = vsel %vm648, %v607, %v664
        %v681 = vsel %vm649, %v610, %v665
        %v682 = vsel %vm650, %v613, %v666
        %v683 = vsel %vm651, %v616, %v667
        %v684 = vsel %vm652, %v619, %v668
        %v685 = vsel %vm653, %v622, %v669
        %v686 = vsel %vm654, %v625, %v670
        %v687 = vsel %vm655, %v628, %v671
        %v688 = vsel %vm656, %v631, %v672
        %v689 = vsel %vm657, %v634, %v673
        %v690 = vsel %vm658, %v637, %v674
        %v691 = vsel %vm659, %v640, %v675
        %v692 = vsel %vm660, %v643, %v676
        %v693 = vld [vmem:[#allocation10] sm:$0xff]
        %v694 = vld [vmem:[#allocation10 + $0x8] sm:$0xff]
        %v695 = vld [vmem:[#allocation10 + $0x10] sm:$0xff]
        %v696 = vld [vmem:[#allocation10 + $0x18] sm:$0xff]
        %v697 = vld [vmem:[#allocation10 + $0x20] sm:$0xff]
        %v698 = vld [vmem:[#allocation10 + $0x28] sm:$0xff]
        %v699 = vld [vmem:[#allocation10 + $0x30] sm:$0xff]
        %v700 = vld [vmem:[#allocation10 + $0x38] sm:$0xff]
        %v701 = vld [vmem:[#allocation10 + $0x40] sm:$0xff]
        %v702 = vld [vmem:[#allocation10 + $0x48] sm:$0xff]
        %v703 = vld [vmem:[#allocation10 + $0x50] sm:$0xff]
        %v704 = vld [vmem:[#allocation10 + $0x58] sm:$0xff]
        %v705 = vld [vmem:[#allocation10 + $0x60] sm:$0xff]
        %v706 = vld [vmem:[#allocation10 + $0x68] sm:$0xff]
        %v707 = vld [vmem:[#allocation10 + $0x70] sm:$0xff]
        %v708 = vld [vmem:[#allocation10 + $0x78] sm:$0xff]
        %v709 = vld [vmem:[#allocation10 + $0x80] sm:$0xff]
        %v710 = vld [vmem:[#allocation10 + $0x88] sm:$0xff]
        %v711 = vld [vmem:[#allocation10 + $0x90] sm:$0xff]
        %v712 = vld [vmem:[#allocation10 + $0x98] sm:$0xff]
        %v713 = vld [vmem:[#allocation10 + $0xa0] sm:$0xff]
        %v714 = vld [vmem:[#allocation10 + $0xa8] sm:$0xff]
        %v715 = vld [vmem:[#allocation10 + $0xb0] sm:$0xff]
        %v716 = vld [vmem:[#allocation10 + $0xb8] sm:$0xff]
        %v717 = vld [vmem:[#allocation10 + $0xc0] sm:$0xff]
        %v718 = vld [vmem:[#allocation10 + $0xc8] sm:$0xff]
        %v719 = vld [vmem:[#allocation10 + $0xd0] sm:$0xff]
        %v720 = vld [vmem:[#allocation10 + $0xd8] sm:$0xff]
        %v721 = vld [vmem:[#allocation10 + $0xe0] sm:$0xff]
        %v722 = vld [vmem:[#allocation10 + $0xe8] sm:$0xff]
        %v723 = vld [vmem:[#allocation10 + $0xf0] sm:$0xff]
        %v724 = vld [vmem:[#allocation10 + $0xf8] sm:$0xff]
        %v725 = vld [vmem:[#allocation10 + $0x100] sm:$0xff]
        %v726 = vld [vmem:[#allocation10 + $0x108] sm:$0xff]
        %v727 = vld [vmem:[#allocation10 + $0x110] sm:$0xff]
        %v728 = vld [vmem:[#allocation10 + $0x118] sm:$0xff]
        %v729 = vld [vmem:[#allocation10 + $0x120] sm:$0xff]
        %v730 = vld [vmem:[#allocation10 + $0x128] sm:$0xff]
        %v731 = vld [vmem:[#allocation10 + $0x130] sm:$0xff]
        %v732 = vld [vmem:[#allocation10 + $0x138] sm:$0xff]
        %v733 = vld [vmem:[#allocation10 + $0x140] sm:$0xff]
        %v734 = vld [vmem:[#allocation10 + $0x148] sm:$0xff]
        %v735 = vld [vmem:[#allocation10 + $0x150] sm:$0xff]
        %v736 = vld [vmem:[#allocation10 + $0x158] sm:$0xff]
        %v737 = vld [vmem:[#allocation10 + $0x160] sm:$0xff]
        %v738 = vld [vmem:[#allocation10 + $0x168] sm:$0xff]
        %v739 = vld [vmem:[#allocation10 + $0x170] sm:$0xff]
        %v740 = vld [vmem:[#allocation10 + $0x178] sm:$0xff]
        %v741 = vld [vmem:[%s5] sm:$0x7]
        %v743 = vperm.slane %v741, 0
        %v744 = vperm.slane %v741, 1
        %v745 = vperm.slane %v741, 2
        %749 = vmatpush.msra.mxu0 %v738
        %750 = vmatpush.msra.mxu0 %v735
        %751 = vmatpush.msra.mxu0 %v732
        %752 = vmatpush.msra.mxu0 %v729
        %753 = vmatpush.msra.mxu0 %v726
        %754 = vmatpush.msra.mxu0 %v723
        %755 = vmatpush.msra.mxu0 %v720
        %756 = vmatpush.msra.mxu0 %v717
        %757 = vmatpush.msra.mxu0 %v714
        %758 = vmatpush.msra.mxu0 %v711
        %759 = vmatpush.msra.mxu0 %v708
        %760 = vmatpush.msra.mxu0 %v705
        %761 = vmatpush.msra.mxu0 %v702
        %762 = vmatpush.msra.mxu0 %v699
        %763 = vmatpush.msra.mxu0 %v696
        %764 = vmatpush.msra.mxu0 %v693
        %765 = vmatmul.f32.gmra.mxu0 %v677
        %v766 = vpop.f32.mrf.mxu0
        %v767 = vadd.f32 %v743, %v766
        %768 = vmatmul.f32.gmra.mxu0 %v678
        %v769 = vpop.f32.mrf.mxu0
        %v770 = vadd.f32 %v743, %v769
        %771 = vmatmul.f32.gmra.mxu0 %v679
        %v772 = vpop.f32.mrf.mxu0
        %v773 = vadd.f32 %v743, %v772
        %774 = vmatmul.f32.gmra.mxu0 %v680
        %v775 = vpop.f32.mrf.mxu0
        %v776 = vadd.f32 %v743, %v775
        %777 = vmatmul.f32.gmra.mxu0 %v681
        %v778 = vpop.f32.mrf.mxu0
        %v779 = vadd.f32 %v743, %v778
        %780 = vmatmul.f32.gmra.mxu0 %v682
        %v781 = vpop.f32.mrf.mxu0
        %v782 = vadd.f32 %v743, %v781
        %783 = vmatmul.f32.gmra.mxu0 %v683
        %v784 = vpop.f32.mrf.mxu0
        %v785 = vadd.f32 %v743, %v784
        %786 = vmatmul.f32.gmra.mxu0 %v684
        %v787 = vpop.f32.mrf.mxu0
        %v788 = vadd.f32 %v743, %v787
        %789 = vmatmul.f32.gmra.mxu0 %v685
        %v790 = vpop.f32.mrf.mxu0
        %v791 = vadd.f32 %v743, %v790
        %792 = vmatmul.f32.gmra.mxu0 %v686
        %v793 = vpop.f32.mrf.mxu0
        %v794 = vadd.f32 %v743, %v793
        %795 = vmatmul.f32.gmra.mxu0 %v687
        %v796 = vpop.f32.mrf.mxu0
        %v797 = vadd.f32 %v743, %v796
        %798 = vmatmul.f32.gmra.mxu0 %v688
        %v799 = vpop.f32.mrf.mxu0
        %v800 = vadd.f32 %v743, %v799
        %801 = vmatmul.f32.gmra.mxu0 %v689
        %v802 = vpop.f32.mrf.mxu0
        %v803 = vadd.f32 %v743, %v802
        %804 = vmatmul.f32.gmra.mxu0 %v690
        %v805 = vpop.f32.mrf.mxu0
        %v806 = vadd.f32 %v743, %v805
        %807 = vmatmul.f32.gmra.mxu0 %v691
        %v808 = vpop.f32.mrf.mxu0
        %v809 = vadd.f32 %v743, %v808
        %810 = vmatmul.f32.gmra.mxu0 %v692
        %v811 = vpop.f32.mrf.mxu0
        %v812 = vadd.f32 %v743, %v811
        %813 = vdwg.mxu0
        %814 = vmatpush.msra.mxu0 %v739
        %815 = vmatpush.msra.mxu0 %v736
        %816 = vmatpush.msra.mxu0 %v733
        %817 = vmatpush.msra.mxu0 %v730
        %818 = vmatpush.msra.mxu0 %v727
        %819 = vmatpush.msra.mxu0 %v724
        %820 = vmatpush.msra.mxu0 %v721
        %821 = vmatpush.msra.mxu0 %v718
        %822 = vmatpush.msra.mxu0 %v715
        %823 = vmatpush.msra.mxu0 %v712
        %824 = vmatpush.msra.mxu0 %v709
        %825 = vmatpush.msra.mxu0 %v706
        %826 = vmatpush.msra.mxu0 %v703
        %827 = vmatpush.msra.mxu0 %v700
        %828 = vmatpush.msra.mxu0 %v697
        %829 = vmatpush.msra.mxu0 %v694
        %830 = vmatmul.f32.gmra.mxu0 %v677
        %v831 = vpop.f32.mrf.mxu0
        %v832 = vadd.f32 %v744, %v831
        %833 = vmatmul.f32.gmra.mxu0 %v678
        %v834 = vpop.f32.mrf.mxu0
        %v835 = vadd.f32 %v744, %v834
        %836 = vmatmul.f32.gmra.mxu0 %v679
        %v837 = vpop.f32.mrf.mxu0
        %v838 = vadd.f32 %v744, %v837
        %839 = vmatmul.f32.gmra.mxu0 %v680
        %v840 = vpop.f32.mrf.mxu0
        %v841 = vadd.f32 %v744, %v840
        %842 = vmatmul.f32.gmra.mxu0 %v681
        %v843 = vpop.f32.mrf.mxu0
        %v844 = vadd.f32 %v744, %v843
        %845 = vmatmul.f32.gmra.mxu0 %v682
        %v846 = vpop.f32.mrf.mxu0
        %v847 = vadd.f32 %v744, %v846
        %848 = vmatmul.f32.gmra.mxu0 %v683
        %v849 = vpop.f32.mrf.mxu0
        %v850 = vadd.f32 %v744, %v849
        %851 = vmatmul.f32.gmra.mxu0 %v684
        %v852 = vpop.f32.mrf.mxu0
        %v853 = vadd.f32 %v744, %v852
        %854 = vmatmul.f32.gmra.mxu0 %v685
        %v855 = vpop.f32.mrf.mxu0
        %v856 = vadd.f32 %v744, %v855
        %857 = vmatmul.f32.gmra.mxu0 %v686
        %v858 = vpop.f32.mrf.mxu0
        %v859 = vadd.f32 %v744, %v858
        %860 = vmatmul.f32.gmra.mxu0 %v687
        %v861 = vpop.f32.mrf.mxu0
        %v862 = vadd.f32 %v744, %v861
        %863 = vmatmul.f32.gmra.mxu0 %v688
        %v864 = vpop.f32.mrf.mxu0
        %v865 = vadd.f32 %v744, %v864
        %866 = vmatmul.f32.gmra.mxu0 %v689
        %v867 = vpop.f32.mrf.mxu0
        %v868 = vadd.f32 %v744, %v867
        %869 = vmatmul.f32.gmra.mxu0 %v690
        %v870 = vpop.f32.mrf.mxu0
        %v871 = vadd.f32 %v744, %v870
        %872 = vmatmul.f32.gmra.mxu0 %v691
        %v873 = vpop.f32.mrf.mxu0
        %v874 = vadd.f32 %v744, %v873
        %875 = vmatmul.f32.gmra.mxu0 %v692
        %v876 = vpop.f32.mrf.mxu0
        %v877 = vadd.f32 %v744, %v876
        %878 = vdwg.mxu0
        %879 = vmatpush.msra.mxu0 %v740
        %880 = vmatpush.msra.mxu0 %v737
        %881 = vmatpush.msra.mxu0 %v734
        %882 = vmatpush.msra.mxu0 %v731
        %883 = vmatpush.msra.mxu0 %v728
        %884 = vmatpush.msra.mxu0 %v725
        %885 = vmatpush.msra.mxu0 %v722
        %886 = vmatpush.msra.mxu0 %v719
        %887 = vmatpush.msra.mxu0 %v716
        %888 = vmatpush.msra.mxu0 %v713
        %889 = vmatpush.msra.mxu0 %v710
        %890 = vmatpush.msra.mxu0 %v707
        %891 = vmatpush.msra.mxu0 %v704
        %892 = vmatpush.msra.mxu0 %v701
        %893 = vmatpush.msra.mxu0 %v698
        %894 = vmatpush.msra.mxu0 %v695
        %895 = vmatmul.f32.gmra.mxu0 %v677
        %v896 = vpop.f32.mrf.mxu0
        %v897 = vadd.f32 %v745, %v896
        %898 = vmatmul.f32.gmra.mxu0 %v678
        %v899 = vpop.f32.mrf.mxu0
        %v900 = vadd.f32 %v745, %v899
        %901 = vmatmul.f32.gmra.mxu0 %v679
        %v902 = vpop.f32.mrf.mxu0
        %v903 = vadd.f32 %v745, %v902
        %904 = vmatmul.f32.gmra.mxu0 %v680
        %v905 = vpop.f32.mrf.mxu0
        %v906 = vadd.f32 %v745, %v905
        %907 = vmatmul.f32.gmra.mxu0 %v681
        %v908 = vpop.f32.mrf.mxu0
        %v909 = vadd.f32 %v745, %v908
        %910 = vmatmul.f32.gmra.mxu0 %v682
        %v911 = vpop.f32.mrf.mxu0
        %v912 = vadd.f32 %v745, %v911
        %913 = vmatmul.f32.gmra.mxu0 %v683
        %v914 = vpop.f32.mrf.mxu0
        %v915 = vadd.f32 %v745, %v914
        %916 = vmatmul.f32.gmra.mxu0 %v684
        %v917 = vpop.f32.mrf.mxu0
        %v918 = vadd.f32 %v745, %v917
        %919 = vmatmul.f32.gmra.mxu0 %v685
        %v920 = vpop.f32.mrf.mxu0
        %v921 = vadd.f32 %v745, %v920
        %922 = vmatmul.f32.gmra.mxu0 %v686
        %v923 = vpop.f32.mrf.mxu0
        %v924 = vadd.f32 %v745, %v923
        %925 = vmatmul.f32.gmra.mxu0 %v687
        %v926 = vpop.f32.mrf.mxu0
        %v927 = vadd.f32 %v745, %v926
        %928 = vmatmul.f32.gmra.mxu0 %v688
        %v929 = vpop.f32.mrf.mxu0
        %v930 = vadd.f32 %v745, %v929
        %931 = vmatmul.f32.gmra.mxu0 %v689
        %v932 = vpop.f32.mrf.mxu0
        %v933 = vadd.f32 %v745, %v932
        %934 = vmatmul.f32.gmra.mxu0 %v690
        %v935 = vpop.f32.mrf.mxu0
        %v936 = vadd.f32 %v745, %v935
        %937 = vmatmul.f32.gmra.mxu0 %v691
        %v938 = vpop.f32.mrf.mxu0
        %v939 = vadd.f32 %v745, %v938
        %940 = vmatmul.f32.gmra.mxu0 %v692
        %v941 = vpop.f32.mrf.mxu0
        %v942 = vadd.f32 %v745, %v941
        %943 = vdwg.mxu0
        %944 = vst [vmem:[#allocation2] sm:$0xff] %v767
        %945 = vst [vmem:[#allocation2 + $0x8] sm:$0xff] %v832
        %946 = vst [vmem:[#allocation2 + $0x10] sm:$0xff] %v897
        %947 = vst [vmem:[#allocation2 + $0x18] sm:$0xff] %v770
        %948 = vst [vmem:[#allocation2 + $0x20] sm:$0xff] %v835
        %949 = vst [vmem:[#allocation2 + $0x28] sm:$0xff] %v900
        %950 = vst [vmem:[#allocation2 + $0x30] sm:$0xff] %v773
        %951 = vst [vmem:[#allocation2 + $0x38] sm:$0xff] %v838
        %952 = vst [vmem:[#allocation2 + $0x40] sm:$0xff] %v903
        %953 = vst [vmem:[#allocation2 + $0x48] sm:$0xff] %v776
        %954 = vst [vmem:[#allocation2 + $0x50] sm:$0xff] %v841
        %955 = vst [vmem:[#allocation2 + $0x58] sm:$0xff] %v906
        %956 = vst [vmem:[#allocation2 + $0x60] sm:$0xff] %v779
        %957 = vst [vmem:[#allocation2 + $0x68] sm:$0xff] %v844
        %958 = vst [vmem:[#allocation2 + $0x70] sm:$0xff] %v909
        %959 = vst [vmem:[#allocation2 + $0x78] sm:$0xff] %v782
        %960 = vst [vmem:[#allocation2 + $0x80] sm:$0xff] %v847
        %961 = vst [vmem:[#allocation2 + $0x88] sm:$0xff] %v912
        %962 = vst [vmem:[#allocation2 + $0x90] sm:$0xff] %v785
        %963 = vst [vmem:[#allocation2 + $0x98] sm:$0xff] %v850
        %964 = vst [vmem:[#allocation2 + $0xa0] sm:$0xff] %v915
        %965 = vst [vmem:[#allocation2 + $0xa8] sm:$0xff] %v788
        %966 = vst [vmem:[#allocation2 + $0xb0] sm:$0xff] %v853
        %967 = vst [vmem:[#allocation2 + $0xb8] sm:$0xff] %v918
        %968 = vst [vmem:[#allocation2 + $0xc0] sm:$0xff] %v791
        %969 = vst [vmem:[#allocation2 + $0xc8] sm:$0xff] %v856
        %970 = vst [vmem:[#allocation2 + $0xd0] sm:$0xff] %v921
        %971 = vst [vmem:[#allocation2 + $0xd8] sm:$0xff] %v794
        %972 = vst [vmem:[#allocation2 + $0xe0] sm:$0xff] %v859
        %973 = vst [vmem:[#allocation2 + $0xe8] sm:$0xff] %v924
        %974 = vst [vmem:[#allocation2 + $0xf0] sm:$0xff] %v797
        %975 = vst [vmem:[#allocation2 + $0xf8] sm:$0xff] %v862
        %976 = vst [vmem:[#allocation2 + $0x100] sm:$0xff] %v927
        %977 = vst [vmem:[#allocation2 + $0x108] sm:$0xff] %v800
        %978 = vst [vmem:[#allocation2 + $0x110] sm:$0xff] %v865
        %979 = vst [vmem:[#allocation2 + $0x118] sm:$0xff] %v930
        %980 = vst [vmem:[#allocation2 + $0x120] sm:$0xff] %v803
        %981 = vst [vmem:[#allocation2 + $0x128] sm:$0xff] %v868
        %982 = vst [vmem:[#allocation2 + $0x130] sm:$0xff] %v933
        %983 = vst [vmem:[#allocation2 + $0x138] sm:$0xff] %v806
        %984 = vst [vmem:[#allocation2 + $0x140] sm:$0xff] %v871
        %985 = vst [vmem:[#allocation2 + $0x148] sm:$0xff] %v936
        %986 = vst [vmem:[#allocation2 + $0x150] sm:$0xff] %v809
        %987 = vst [vmem:[#allocation2 + $0x158] sm:$0xff] %v874
        %988 = vst [vmem:[#allocation2 + $0x160] sm:$0xff] %v939
        %989 = vst [vmem:[#allocation2 + $0x168] sm:$0xff] %v812
        %990 = vst [vmem:[#allocation2 + $0x170] sm:$0xff] %v877
        %991 = vst [vmem:[#allocation2 + $0x178] sm:$0xff] %v942
        %v992 = vld [vmem:[#allocation2] sm:$0xff]
        %v993 = vld [vmem:[#allocation2 + $0x8] sm:$0xff]
        %v994 = vld [vmem:[#allocation2 + $0x10] sm:$0xff]
        %v995 = vld [vmem:[#allocation2 + $0x18] sm:$0xff]
        %v996 = vld [vmem:[#allocation2 + $0x20] sm:$0xff]
        %v997 = vld [vmem:[#allocation2 + $0x28] sm:$0xff]
        %v998 = vld [vmem:[#allocation2 + $0x30] sm:$0xff]
        %v999 = vld [vmem:[#allocation2 + $0x38] sm:$0xff]
        %v1000 = vld [vmem:[#allocation2 + $0x40] sm:$0xff]
        %v1001 = vld [vmem:[#allocation2 + $0x48] sm:$0xff]
        %v1002 = vld [vmem:[#allocation2 + $0x50] sm:$0xff]
        %v1003 = vld [vmem:[#allocation2 + $0x58] sm:$0xff]
        %v1004 = vld [vmem:[#allocation2 + $0x60] sm:$0xff]
        %v1005 = vld [vmem:[#allocation2 + $0x68] sm:$0xff]
        %v1006 = vld [vmem:[#allocation2 + $0x70] sm:$0xff]
        %v1007 = vld [vmem:[#allocation2 + $0x78] sm:$0xff]
        %v1008 = vld [vmem:[#allocation2 + $0x80] sm:$0xff]
        %v1009 = vld [vmem:[#allocation2 + $0x88] sm:$0xff]
        %v1010 = vld [vmem:[#allocation2 + $0x90] sm:$0xff]
        %v1011 = vld [vmem:[#allocation2 + $0x98] sm:$0xff]
        %v1012 = vld [vmem:[#allocation2 + $0xa0] sm:$0xff]
        %v1013 = vld [vmem:[#allocation2 + $0xa8] sm:$0xff]
        %v1014 = vld [vmem:[#allocation2 + $0xb0] sm:$0xff]
        %v1015 = vld [vmem:[#allocation2 + $0xb8] sm:$0xff]
        %vm1016 = vcmask 261120
        %v1018 = vsel %vm1016, %v992, 0
        %v1021 = vsel %vm1016, %v995, 0
        %v1024 = vsel %vm1016, %v998, 0
        %v1027 = vsel %vm1016, %v1001, 0
        %v1030 = vsel %vm1016, %v1004, 0
        %v1033 = vsel %vm1016, %v1007, 0
        %v1036 = vsel %vm1016, %v1010, 0
        %v1039 = vsel %vm1016, %v1013, 0
        %v1042 = vsel %vm1016, %v993, 0
        %v1045 = vsel %vm1016, %v996, 0
        %v1048 = vsel %vm1016, %v999, 0
        %v1051 = vsel %vm1016, %v1002, 0
        %v1054 = vsel %vm1016, %v1005, 0
        %v1057 = vsel %vm1016, %v1008, 0
        %v1060 = vsel %vm1016, %v1011, 0
        %v1063 = vsel %vm1016, %v1014, 0
        %1065 = vmatpush.xpose.msra.mxu0 0.0
        %1066 = vmatpush.xpose.msra.mxu0 0.0
        %1067 = vmatpush.xpose.msra.mxu0 0.0
        %1068 = vmatpush.xpose.msra.mxu0 0.0
        %1069 = vmatpush.xpose.msra.mxu0 0.0
        %1070 = vmatpush.xpose.msra.mxu0 0.0
        %1071 = vmatpush.xpose.msra.mxu0 0.0
        %1072 = vmatpush.xpose.msra.mxu0 0.0
        %1073 = vmatpush.xpose.msra.mxu0 %v1063
        %1074 = vmatpush.xpose.msra.mxu0 %v1060
        %1075 = vmatpush.xpose.msra.mxu0 %v1057
        %1076 = vmatpush.xpose.msra.mxu0 %v1054
        %1077 = vmatpush.xpose.msra.mxu0 %v1051
        %1078 = vmatpush.xpose.msra.mxu0 %v1048
        %1079 = vmatpush.xpose.msra.mxu0 %v1045
        %1080 = vmatpush.xpose.msra.mxu0 %v1042
        %1081 = vmatmul.f32.gmra.mxu0 %v1018
        %v1082 = vpop.f32.mrf.mxu0
        %v1083 = vadd.f32 0.0, %v1082
        %1084 = vmatmul.f32.gmra.mxu0 %v1021
        %v1085 = vpop.f32.mrf.mxu0
        %v1086 = vadd.f32 0.0, %v1085
        %1087 = vmatmul.f32.gmra.mxu0 %v1024
        %v1088 = vpop.f32.mrf.mxu0
        %v1089 = vadd.f32 0.0, %v1088
        %1090 = vmatmul.f32.gmra.mxu0 %v1027
        %v1091 = vpop.f32.mrf.mxu0
        %v1092 = vadd.f32 0.0, %v1091
        %1093 = vmatmul.f32.gmra.mxu0 %v1030
        %v1094 = vpop.f32.mrf.mxu0
        %v1095 = vadd.f32 0.0, %v1094
        %1096 = vmatmul.f32.gmra.mxu0 %v1033
        %v1097 = vpop.f32.mrf.mxu0
        %v1098 = vadd.f32 0.0, %v1097
        %1099 = vmatmul.f32.gmra.mxu0 %v1036
        %v1100 = vpop.f32.mrf.mxu0
        %v1101 = vadd.f32 0.0, %v1100
        %1102 = vmatmul.f32.gmra.mxu0 %v1039
        %v1103 = vpop.f32.mrf.mxu0
        %v1104 = vadd.f32 0.0, %v1103
        %1105 = vdwg.mxu0
        %vm1106 = vcmask 523264
        %v1107 = vsel %vm1106, %v1083, -inf
        %1108 = vmax.xlane.f32.xlu0 %v1107
        %v1109 = vpop.xlane.xlu0 %1108
        %v1110 = vsel %vm1106, %v1086, -inf
        %1111 = vmax.xlane.f32.xlu0 %v1110
        %v1112 = vpop.xlane.xlu0 %1111
        %v1113 = vsel %vm1106, %v1089, -inf
        %1114 = vmax.xlane.f32.xlu0 %v1113
        %v1115 = vpop.xlane.xlu0 %1114
        %v1116 = vsel %vm1106, %v1092, -inf
        %1117 = vmax.xlane.f32.xlu0 %v1116
        %v1118 = vpop.xlane.xlu0 %1117
        %v1119 = vsel %vm1106, %v1095, -inf
        %1120 = vmax.xlane.f32.xlu0 %v1119
        %v1121 = vpop.xlane.xlu0 %1120
        %v1122 = vsel %vm1106, %v1098, -inf
        %1123 = vmax.xlane.f32.xlu0 %v1122
        %v1124 = vpop.xlane.xlu0 %1123
        %v1125 = vsel %vm1106, %v1101, -inf
        %1126 = vmax.xlane.f32.xlu0 %v1125
        %v1127 = vpop.xlane.xlu0 %1126
        %v1128 = vsel %vm1106, %v1104, -inf
        %1129 = vmax.xlane.f32.xlu0 %v1128
        %v1130 = vpop.xlane.xlu0 %1129
        %v1131 = vsub.f32 %v1083, %v1109
        %v1132 = vsub.f32 %v1086, %v1112
        %v1133 = vsub.f32 %v1089, %v1115
        %v1134 = vsub.f32 %v1092, %v1118
        %v1135 = vsub.f32 %v1095, %v1121
        %v1136 = vsub.f32 %v1098, %v1124
        %v1137 = vsub.f32 %v1101, %v1127
        %v1138 = vsub.f32 %v1104, %v1130
        %v1139 = vmul.f32 %v1131, 1.442695
        %v1140 = vpow.pop %v1139
        %v1141 = vmul.f32 %v1132, 1.442695
        %v1142 = vpow.pop %v1141
        %v1143 = vmul.f32 %v1133, 1.442695
        %v1144 = vpow.pop %v1143
        %v1145 = vmul.f32 %v1134, 1.442695
        %v1146 = vpow.pop %v1145
        %v1147 = vmul.f32 %v1135, 1.442695
        %v1148 = vpow.pop %v1147
        %v1149 = vmul.f32 %v1136, 1.442695
        %v1150 = vpow.pop %v1149
        %v1151 = vmul.f32 %v1137, 1.442695
        %v1152 = vpow.pop %v1151
        %v1153 = vmul.f32 %v1138, 1.442695
        %v1154 = vpow.pop %v1153
        %v1155 = vsel %vm1106, %v1140, 0.0
        %1156 = vadd.xlane.f32.xlu0 %v1155
        %v1157 = vpop.xlane.xlu0 %1156
        %v1158 = vsel %vm1106, %v1142, 0.0
        %1159 = vadd.xlane.f32.xlu0 %v1158
        %v1160 = vpop.xlane.xlu0 %1159
        %v1161 = vsel %vm1106, %v1144, 0.0
        %1162 = vadd.xlane.f32.xlu0 %v1161
        %v1163 = vpop.xlane.xlu0 %1162
        %v1164 = vsel %vm1106, %v1146, 0.0
        %1165 = vadd.xlane.f32.xlu0 %v1164
        %v1166 = vpop.xlane.xlu0 %1165
        %v1167 = vsel %vm1106, %v1148, 0.0
        %1168 = vadd.xlane.f32.xlu0 %v1167
        %v1169 = vpop.xlane.xlu0 %1168
        %v1170 = vsel %vm1106, %v1150, 0.0
        %1171 = vadd.xlane.f32.xlu0 %v1170
        %v1172 = vpop.xlane.xlu0 %1171
        %v1173 = vsel %vm1106, %v1152, 0.0
        %1174 = vadd.xlane.f32.xlu0 %v1173
        %v1175 = vpop.xlane.xlu0 %1174
        %v1176 = vsel %vm1106, %v1154, 0.0
        %1177 = vadd.xlane.f32.xlu0 %v1176
        %v1178 = vpop.xlane.xlu0 %1177
        %v1179 = vrcp.pop %v1157
        %v1180 = vrcp.pop %v1160
        %v1181 = vrcp.pop %v1163
        %v1182 = vrcp.pop %v1166
        %v1183 = vrcp.pop %v1169
        %v1184 = vrcp.pop %v1172
        %v1185 = vrcp.pop %v1175
        %v1186 = vrcp.pop %v1178
        %v1187 = vmul.f32 %v1140, %v1179
        %v1188 = vmul.f32 %v1142, %v1180
        %v1189 = vmul.f32 %v1144, %v1181
        %v1190 = vmul.f32 %v1146, %v1182
        %v1191 = vmul.f32 %v1148, %v1183
        %v1192 = vmul.f32 %v1150, %v1184
        %v1193 = vmul.f32 %v1152, %v1185
        %v1194 = vmul.f32 %v1154, %v1186
        %v1196 = vsel %vm1106, %v1187, 0
        %v1199 = vsel %vm1106, %v1188, 0
        %v1202 = vsel %vm1106, %v1189, 0
        %v1205 = vsel %vm1106, %v1190, 0
        %v1208 = vsel %vm1106, %v1191, 0
        %v1211 = vsel %vm1106, %v1192, 0
        %v1214 = vsel %vm1106, %v1193, 0
        %v1217 = vsel %vm1106, %v1194, 0
        %1219 = vmatpush.msra.mxu0 0.0
        %1220 = vmatpush.msra.mxu0 0.0
        %1221 = vmatpush.msra.mxu0 0.0
        %1222 = vmatpush.msra.mxu0 0.0
        %1223 = vmatpush.msra.mxu0 0.0
        %1224 = vmatpush.msra.mxu0 0.0
        %1225 = vmatpush.msra.mxu0 0.0
        %1226 = vmatpush.msra.mxu0 0.0
        %1227 = vmatpush.msra.mxu0 %v1015
        %1228 = vmatpush.msra.mxu0 %v1012
        %1229 = vmatpush.msra.mxu0 %v1009
        %1230 = vmatpush.msra.mxu0 %v1006
        %1231 = vmatpush.msra.mxu0 %v1003
        %1232 = vmatpush.msra.mxu0 %v1000
        %1233 = vmatpush.msra.mxu0 %v997
        %1234 = vmatpush.msra.mxu0 %v994
        %1235 = vmatmul.f32.gmra.mxu0 %v1196
        %v1236 = vpop.f32.mrf.mxu0
        %v1237 = vadd.f32 0.0, %v1236
        %1238 = vmatmul.f32.gmra.mxu0 %v1199
        %v1239 = vpop.f32.mrf.mxu0
        %v1240 = vadd.f32 0.0, %v1239
        %1241 = vmatmul.f32.gmra.mxu0 %v1202
        %v1242 = vpop.f32.mrf.mxu0
        %v1243 = vadd.f32 0.0, %v1242
        %1244 = vmatmul.f32.gmra.mxu0 %v1205
        %v1245 = vpop.f32.mrf.mxu0
        %v1246 = vadd.f32 0.0, %v1245
        %1247 = vmatmul.f32.gmra.mxu0 %v1208
        %v1248 = vpop.f32.mrf.mxu0
        %v1249 = vadd.f32 0.0, %v1248
        %1250 = vmatmul.f32.gmra.mxu0 %v1211
        %v1251 = vpop.f32.mrf.mxu0
        %v1252 = vadd.f32 0.0, %v1251
        %1253 = vmatmul.f32.gmra.mxu0 %v1214
        %v1254 = vpop.f32.mrf.mxu0
        %v1255 = vadd.f32 0.0, %v1254
        %1256 = vmatmul.f32.gmra.mxu0 %v1217
        %v1257 = vpop.f32.mrf.mxu0
        %v1258 = vadd.f32 0.0, %v1257
        %1259 = vdwg.mxu0
        %1260 = vst.msk [vmem:[#allocation3] sm:$0xff] %vm1016, %v1237
        %1261 = vst.msk [vmem:[#allocation3 + $0x8] sm:$0xff] %vm1016, %v1240
        %1262 = vst.msk [vmem:[#allocation3 + $0x10] sm:$0xff] %vm1016, %v1243
        %1263 = vst.msk [vmem:[#allocation3 + $0x18] sm:$0xff] %vm1016, %v1246
        %1264 = vst.msk [vmem:[#allocation3 + $0x20] sm:$0xff] %vm1016, %v1249
        %1265 = vst.msk [vmem:[#allocation3 + $0x28] sm:$0xff] %vm1016, %v1252
        %1266 = vst.msk [vmem:[#allocation3 + $0x30] sm:$0xff] %vm1016, %v1255
        %1267 = vst.msk [vmem:[#allocation3 + $0x38] sm:$0xff] %vm1016, %v1258
        %1268 = vrot.lane.b32.xlu0 %v992, 96
        %v1269 = vpop.permute.xlu0 %1268
        %1270 = vrot.lane.b32.xlu0 %v995, 96
        %v1271 = vpop.permute.xlu0 %1270
        %1272 = vrot.lane.b32.xlu0 %v998, 96
        %v1273 = vpop.permute.xlu0 %1272
        %1274 = vrot.lane.b32.xlu0 %v1001, 96
        %v1275 = vpop.permute.xlu0 %1274
        %1276 = vrot.lane.b32.xlu0 %v1004, 96
        %v1277 = vpop.permute.xlu0 %1276
        %1278 = vrot.lane.b32.xlu0 %v1007, 96
        %v1279 = vpop.permute.xlu0 %1278
        %1280 = vrot.lane.b32.xlu0 %v1010, 96
        %v1281 = vpop.permute.xlu0 %1280
        %1282 = vrot.lane.b32.xlu0 %v1013, 96
        %v1283 = vpop.permute.xlu0 %1282
        %1284 = vrot.lane.b32.xlu0 %v993, 96
        %v1285 = vpop.permute.xlu0 %1284
        %1286 = vrot.lane.b32.xlu0 %v996, 96
        %v1287 = vpop.permute.xlu0 %1286
        %1288 = vrot.lane.b32.xlu0 %v999, 96
        %v1289 = vpop.permute.xlu0 %1288
        %1290 = vrot.lane.b32.xlu0 %v1002, 96
        %v1291 = vpop.permute.xlu0 %1290
        %1292 = vrot.lane.b32.xlu0 %v1005, 96
        %v1293 = vpop.permute.xlu0 %1292
        %1294 = vrot.lane.b32.xlu0 %v1008, 96
        %v1295 = vpop.permute.xlu0 %1294
        %1296 = vrot.lane.b32.xlu0 %v1011, 96
        %v1297 = vpop.permute.xlu0 %1296
        %1298 = vrot.lane.b32.xlu0 %v1014, 96
        %v1299 = vpop.permute.xlu0 %1298
        %v1300 = vsel %vm1016, %v1269, 0
        %v1302 = vsel %vm1016, %v1271, 0
        %v1304 = vsel %vm1016, %v1273, 0
        %v1306 = vsel %vm1016, %v1275, 0
        %v1308 = vsel %vm1016, %v1277, 0
        %v1310 = vsel %vm1016, %v1279, 0
        %v1312 = vsel %vm1016, %v1281, 0
        %v1314 = vsel %vm1016, %v1283, 0
        %v1316 = vsel %vm1016, %v1285, 0
        %v1318 = vsel %vm1016, %v1287, 0
        %v1320 = vsel %vm1016, %v1289, 0
        %v1322 = vsel %vm1016, %v1291, 0
        %v1324 = vsel %vm1016, %v1293, 0
        %v1326 = vsel %vm1016, %v1295, 0
        %v1328 = vsel %vm1016, %v1297, 0
        %v1330 = vsel %vm1016, %v1299, 0
        %1332 = vmatpush.xpose.msra.mxu0 0.0
        %1333 = vmatpush.xpose.msra.mxu0 0.0
        %1334 = vmatpush.xpose.msra.mxu0 0.0
        %1335 = vmatpush.xpose.msra.mxu0 0.0
        %1336 = vmatpush.xpose.msra.mxu0 0.0
        %1337 = vmatpush.xpose.msra.mxu0 0.0
        %1338 = vmatpush.xpose.msra.mxu0 0.0
        %1339 = vmatpush.xpose.msra.mxu0 0.0
        %1340 = vmatpush.xpose.msra.mxu0 %v1330
        %1341 = vmatpush.xpose.msra.mxu0 %v1328
        %1342 = vmatpush.xpose.msra.mxu0 %v1326
        %1343 = vmatpush.xpose.msra.mxu0 %v1324
        %1344 = vmatpush.xpose.msra.mxu0 %v1322
        %1345 = vmatpush.xpose.msra.mxu0 %v1320
        %1346 = vmatpush.xpose.msra.mxu0 %v1318
        %1347 = vmatpush.xpose.msra.mxu0 %v1316
        %1348 = vmatmul.f32.gmra.mxu0 %v1300
        %v1349 = vpop.f32.mrf.mxu0
        %v1350 = vadd.f32 0.0, %v1349
        %1351 = vmatmul.f32.gmra.mxu0 %v1302
        %v1352 = vpop.f32.mrf.mxu0
        %v1353 = vadd.f32 0.0, %v1352
        %1354 = vmatmul.f32.gmra.mxu0 %v1304
        %v1355 = vpop.f32.mrf.mxu0
        %v1356 = vadd.f32 0.0, %v1355
        %1357 = vmatmul.f32.gmra.mxu0 %v1306
        %v1358 = vpop.f32.mrf.mxu0
        %v1359 = vadd.f32 0.0, %v1358
        %1360 = vmatmul.f32.gmra.mxu0 %v1308
        %v1361 = vpop.f32.mrf.mxu0
        %v1362 = vadd.f32 0.0, %v1361
        %1363 = vmatmul.f32.gmra.mxu0 %v1310
        %v1364 = vpop.f32.mrf.mxu0
        %v1365 = vadd.f32 0.0, %v1364
        %1366 = vmatmul.f32.gmra.mxu0 %v1312
        %v1367 = vpop.f32.mrf.mxu0
        %v1368 = vadd.f32 0.0, %v1367
        %1369 = vmatmul.f32.gmra.mxu0 %v1314
        %v1370 = vpop.f32.mrf.mxu0
        %v1371 = vadd.f32 0.0, %v1370
        %1372 = vdwg.mxu0
        %v1373 = vsel %vm1106, %v1350, -inf
        %1374 = vmax.xlane.f32.xlu0 %v1373
        %v1375 = vpop.xlane.xlu0 %1374
        %v1376 = vsel %vm1106, %v1353, -inf
        %1377 = vmax.xlane.f32.xlu0 %v1376
        %v1378 = vpop.xlane.xlu0 %1377
        %v1379 = vsel %vm1106, %v1356, -inf
        %1380 = vmax.xlane.f32.xlu0 %v1379
        %v1381 = vpop.xlane.xlu0 %1380
        %v1382 = vsel %vm1106, %v1359, -inf
        %1383 = vmax.xlane.f32.xlu0 %v1382
        %v1384 = vpop.xlane.xlu0 %1383
        %v1385 = vsel %vm1106, %v1362, -inf
        %1386 = vmax.xlane.f32.xlu0 %v1385
        %v1387 = vpop.xlane.xlu0 %1386
        %v1388 = vsel %vm1106, %v1365, -inf
        %1389 = vmax.xlane.f32.xlu0 %v1388
        %v1390 = vpop.xlane.xlu0 %1389
        %v1391 = vsel %vm1106, %v1368, -inf
        %1392 = vmax.xlane.f32.xlu0 %v1391
        %v1393 = vpop.xlane.xlu0 %1392
        %v1394 = vsel %vm1106, %v1371, -inf
        %1395 = vmax.xlane.f32.xlu0 %v1394
        %v1396 = vpop.xlane.xlu0 %1395
        %v1397 = vsub.f32 %v1350, %v1375
        %v1398 = vsub.f32 %v1353, %v1378
        %v1399 = vsub.f32 %v1356, %v1381
        %v1400 = vsub.f32 %v1359, %v1384
        %v1401 = vsub.f32 %v1362, %v1387
        %v1402 = vsub.f32 %v1365, %v1390
        %v1403 = vsub.f32 %v1368, %v1393
        %v1404 = vsub.f32 %v1371, %v1396
        %v1405 = vmul.f32 %v1397, 1.442695
        %v1406 = vpow.pop %v1405
        %v1407 = vmul.f32 %v1398, 1.442695
        %v1408 = vpow.pop %v1407
        %v1409 = vmul.f32 %v1399, 1.442695
        %v1410 = vpow.pop %v1409
        %v1411 = vmul.f32 %v1400, 1.442695
        %v1412 = vpow.pop %v1411
        %v1413 = vmul.f32 %v1401, 1.442695
        %v1414 = vpow.pop %v1413
        %v1415 = vmul.f32 %v1402, 1.442695
        %v1416 = vpow.pop %v1415
        %v1417 = vmul.f32 %v1403, 1.442695
        %v1418 = vpow.pop %v1417
        %v1419 = vmul.f32 %v1404, 1.442695
        %v1420 = vpow.pop %v1419
        %v1421 = vsel %vm1106, %v1406, 0.0
        %1422 = vadd.xlane.f32.xlu0 %v1421
        %v1423 = vpop.xlane.xlu0 %1422
        %v1424 = vsel %vm1106, %v1408, 0.0
        %1425 = vadd.xlane.f32.xlu0 %v1424
        %v1426 = vpop.xlane.xlu0 %1425
        %v1427 = vsel %vm1106, %v1410, 0.0
        %1428 = vadd.xlane.f32.xlu0 %v1427
        %v1429 = vpop.xlane.xlu0 %1428
        %v1430 = vsel %vm1106, %v1412, 0.0
        %1431 = vadd.xlane.f32.xlu0 %v1430
        %v1432 = vpop.xlane.xlu0 %1431
        %v1433 = vsel %vm1106, %v1414, 0.0
        %1434 = vadd.xlane.f32.xlu0 %v1433
        %v1435 = vpop.xlane.xlu0 %1434
        %v1436 = vsel %vm1106, %v1416, 0.0
        %1437 = vadd.xlane.f32.xlu0 %v1436
        %v1438 = vpop.xlane.xlu0 %1437
        %v1439 = vsel %vm1106, %v1418, 0.0
        %1440 = vadd.xlane.f32.xlu0 %v1439
        %v1441 = vpop.xlane.xlu0 %1440
        %v1442 = vsel %vm1106, %v1420, 0.0
        %1443 = vadd.xlane.f32.xlu0 %v1442
        %v1444 = vpop.xlane.xlu0 %1443
        %v1445 = vrcp.pop %v1423
        %v1446 = vrcp.pop %v1426
        %v1447 = vrcp.pop %v1429
        %v1448 = vrcp.pop %v1432
        %v1449 = vrcp.pop %v1435
        %v1450 = vrcp.pop %v1438
        %v1451 = vrcp.pop %v1441
        %v1452 = vrcp.pop %v1444
        %v1453 = vmul.f32 %v1406, %v1445
        %v1454 = vmul.f32 %v1408, %v1446
        %v1455 = vmul.f32 %v1410, %v1447
        %v1456 = vmul.f32 %v1412, %v1448
        %v1457 = vmul.f32 %v1414, %v1449
        %v1458 = vmul.f32 %v1416, %v1450
        %v1459 = vmul.f32 %v1418, %v1451
        %v1460 = vmul.f32 %v1420, %v1452
        %1469 = vrot.lane.b32.xlu0 %v994, 96
        %v1470 = vpop.permute.xlu0 %1469
        %1471 = vrot.lane.b32.xlu0 %v997, 96
        %v1472 = vpop.permute.xlu0 %1471
        %1473 = vrot.lane.b32.xlu0 %v1000, 96
        %v1474 = vpop.permute.xlu0 %1473
        %1475 = vrot.lane.b32.xlu0 %v1003, 96
        %v1476 = vpop.permute.xlu0 %1475
        %1477 = vrot.lane.b32.xlu0 %v1006, 96
        %v1478 = vpop.permute.xlu0 %1477
        %1479 = vrot.lane.b32.xlu0 %v1009, 96
        %v1480 = vpop.permute.xlu0 %1479
        %1481 = vrot.lane.b32.xlu0 %v1012, 96
        %v1482 = vpop.permute.xlu0 %1481
        %1483 = vrot.lane.b32.xlu0 %v1015, 96
        %v1484 = vpop.permute.xlu0 %1483
        %v1494 = vsel %vm1106, %v1453, 0
        %v1497 = vsel %vm1106, %v1454, 0
        %v1500 = vsel %vm1106, %v1455, 0
        %v1503 = vsel %vm1106, %v1456, 0
        %v1506 = vsel %vm1106, %v1457, 0
        %v1509 = vsel %vm1106, %v1458, 0
        %v1512 = vsel %vm1106, %v1459, 0
        %v1515 = vsel %vm1106, %v1460, 0
        %1517 = vmatpush.msra.mxu0 0.0
        %1518 = vmatpush.msra.mxu0 0.0
        %1519 = vmatpush.msra.mxu0 0.0
        %1520 = vmatpush.msra.mxu0 0.0
        %1521 = vmatpush.msra.mxu0 0.0
        %1522 = vmatpush.msra.mxu0 0.0
        %1523 = vmatpush.msra.mxu0 0.0
        %1524 = vmatpush.msra.mxu0 0.0
        %1525 = vmatpush.msra.mxu0 %v1484
        %1526 = vmatpush.msra.mxu0 %v1482
        %1527 = vmatpush.msra.mxu0 %v1480
        %1528 = vmatpush.msra.mxu0 %v1478
        %1529 = vmatpush.msra.mxu0 %v1476
        %1530 = vmatpush.msra.mxu0 %v1474
        %1531 = vmatpush.msra.mxu0 %v1472
        %1532 = vmatpush.msra.mxu0 %v1470
        %1533 = vmatmul.f32.gmra.mxu0 %v1494
        %v1534 = vpop.f32.mrf.mxu0
        %v1535 = vadd.f32 0.0, %v1534
        %1536 = vmatmul.f32.gmra.mxu0 %v1497
        %v1537 = vpop.f32.mrf.mxu0
        %v1538 = vadd.f32 0.0, %v1537
        %1539 = vmatmul.f32.gmra.mxu0 %v1500
        %v1540 = vpop.f32.mrf.mxu0
        %v1541 = vadd.f32 0.0, %v1540
        %1542 = vmatmul.f32.gmra.mxu0 %v1503
        %v1543 = vpop.f32.mrf.mxu0
        %v1544 = vadd.f32 0.0, %v1543
        %1545 = vmatmul.f32.gmra.mxu0 %v1506
        %v1546 = vpop.f32.mrf.mxu0
        %v1547 = vadd.f32 0.0, %v1546
        %1548 = vmatmul.f32.gmra.mxu0 %v1509
        %v1549 = vpop.f32.mrf.mxu0
        %v1550 = vadd.f32 0.0, %v1549
        %1551 = vmatmul.f32.gmra.mxu0 %v1512
        %v1552 = vpop.f32.mrf.mxu0
        %v1553 = vadd.f32 0.0, %v1552
        %1554 = vmatmul.f32.gmra.mxu0 %v1515
        %v1555 = vpop.f32.mrf.mxu0
        %v1556 = vadd.f32 0.0, %v1555
        %1557 = vdwg.mxu0
        %1566 = vrot.lane.b32.xlu0 %v1535, 32
        %v1567 = vpop.permute.xlu0 %1566
        %1568 = vrot.lane.b32.xlu0 %v1538, 32
        %v1569 = vpop.permute.xlu0 %1568
        %1570 = vrot.lane.b32.xlu0 %v1541, 32
        %v1571 = vpop.permute.xlu0 %1570
        %1572 = vrot.lane.b32.xlu0 %v1544, 32
        %v1573 = vpop.permute.xlu0 %1572
        %1574 = vrot.lane.b32.xlu0 %v1547, 32
        %v1575 = vpop.permute.xlu0 %1574
        %1576 = vrot.lane.b32.xlu0 %v1550, 32
        %v1577 = vpop.permute.xlu0 %1576
        %1578 = vrot.lane.b32.xlu0 %v1553, 32
        %v1579 = vpop.permute.xlu0 %1578
        %1580 = vrot.lane.b32.xlu0 %v1556, 32
        %v1581 = vpop.permute.xlu0 %1580
        %vm1590 = vcmask 523520
        %1591 = vst.msk [vmem:[#allocation3] sm:$0xff] %vm1590, %v1567
        %1592 = vst.msk [vmem:[#allocation3 + $0x8] sm:$0xff] %vm1590, %v1569
        %1593 = vst.msk [vmem:[#allocation3 + $0x10] sm:$0xff] %vm1590, %v1571
        %1594 = vst.msk [vmem:[#allocation3 + $0x18] sm:$0xff] %vm1590, %v1573
        %1595 = vst.msk [vmem:[#allocation3 + $0x20] sm:$0xff] %vm1590, %v1575
        %1596 = vst.msk [vmem:[#allocation3 + $0x28] sm:$0xff] %vm1590, %v1577
        %1597 = vst.msk [vmem:[#allocation3 + $0x30] sm:$0xff] %vm1590, %v1579
        %1598 = vst.msk [vmem:[#allocation3 + $0x38] sm:$0xff] %vm1590, %v1581
        %1599 = vrot.lane.b32.xlu0 %v992, 64
        %v1600 = vpop.permute.xlu0 %1599
        %1601 = vrot.lane.b32.xlu0 %v995, 64
        %v1602 = vpop.permute.xlu0 %1601
        %1603 = vrot.lane.b32.xlu0 %v998, 64
        %v1604 = vpop.permute.xlu0 %1603
        %1605 = vrot.lane.b32.xlu0 %v1001, 64
        %v1606 = vpop.permute.xlu0 %1605
        %1607 = vrot.lane.b32.xlu0 %v1004, 64
        %v1608 = vpop.permute.xlu0 %1607
        %1609 = vrot.lane.b32.xlu0 %v1007, 64
        %v1610 = vpop.permute.xlu0 %1609
        %1611 = vrot.lane.b32.xlu0 %v1010, 64
        %v1612 = vpop.permute.xlu0 %1611
        %1613 = vrot.lane.b32.xlu0 %v1013, 64
        %v1614 = vpop.permute.xlu0 %1613
        %1615 = vrot.lane.b32.xlu0 %v993, 64
        %v1616 = vpop.permute.xlu0 %1615
        %1617 = vrot.lane.b32.xlu0 %v996, 64
        %v1618 = vpop.permute.xlu0 %1617
        %1619 = vrot.lane.b32.xlu0 %v999, 64
        %v1620 = vpop.permute.xlu0 %1619
        %1621 = vrot.lane.b32.xlu0 %v1002, 64
        %v1622 = vpop.permute.xlu0 %1621
        %1623 = vrot.lane.b32.xlu0 %v1005, 64
        %v1624 = vpop.permute.xlu0 %1623
        %1625 = vrot.lane.b32.xlu0 %v1008, 64
        %v1626 = vpop.permute.xlu0 %1625
        %1627 = vrot.lane.b32.xlu0 %v1011, 64
        %v1628 = vpop.permute.xlu0 %1627
        %1629 = vrot.lane.b32.xlu0 %v1014, 64
        %v1630 = vpop.permute.xlu0 %1629
        %v1631 = vsel %vm1016, %v1600, 0
        %v1633 = vsel %vm1016, %v1602, 0
        %v1635 = vsel %vm1016, %v1604, 0
        %v1637 = vsel %vm1016, %v1606, 0
        %v1639 = vsel %vm1016, %v1608, 0
        %v1641 = vsel %vm1016, %v1610, 0
        %v1643 = vsel %vm1016, %v1612, 0
        %v1645 = vsel %vm1016, %v1614, 0
        %v1647 = vsel %vm1016, %v1616, 0
        %v1649 = vsel %vm1016, %v1618, 0
        %v1651 = vsel %vm1016, %v1620, 0
        %v1653 = vsel %vm1016, %v1622, 0
        %v1655 = vsel %vm1016, %v1624, 0
        %v1657 = vsel %vm1016, %v1626, 0
        %v1659 = vsel %vm1016, %v1628, 0
        %v1661 = vsel %vm1016, %v1630, 0
        %1663 = vmatpush.xpose.msra.mxu0 0.0
        %1664 = vmatpush.xpose.msra.mxu0 0.0
        %1665 = vmatpush.xpose.msra.mxu0 0.0
        %1666 = vmatpush.xpose.msra.mxu0 0.0
        %1667 = vmatpush.xpose.msra.mxu0 0.0
        %1668 = vmatpush.xpose.msra.mxu0 0.0
        %1669 = vmatpush.xpose.msra.mxu0 0.0
        %1670 = vmatpush.xpose.msra.mxu0 0.0
        %1671 = vmatpush.xpose.msra.mxu0 %v1661
        %1672 = vmatpush.xpose.msra.mxu0 %v1659
        %1673 = vmatpush.xpose.msra.mxu0 %v1657
        %1674 = vmatpush.xpose.msra.mxu0 %v1655
        %1675 = vmatpush.xpose.msra.mxu0 %v1653
        %1676 = vmatpush.xpose.msra.mxu0 %v1651
        %1677 = vmatpush.xpose.msra.mxu0 %v1649
        %1678 = vmatpush.xpose.msra.mxu0 %v1647
        %1679 = vmatmul.f32.gmra.mxu0 %v1631
        %v1680 = vpop.f32.mrf.mxu0
        %v1681 = vadd.f32 0.0, %v1680
        %1682 = vmatmul.f32.gmra.mxu0 %v1633
        %v1683 = vpop.f32.mrf.mxu0
        %v1684 = vadd.f32 0.0, %v1683
        %1685 = vmatmul.f32.gmra.mxu0 %v1635
        %v1686 = vpop.f32.mrf.mxu0
        %v1687 = vadd.f32 0.0, %v1686
        %1688 = vmatmul.f32.gmra.mxu0 %v1637
        %v1689 = vpop.f32.mrf.mxu0
        %v1690 = vadd.f32 0.0, %v1689
        %1691 = vmatmul.f32.gmra.mxu0 %v1639
        %v1692 = vpop.f32.mrf.mxu0
        %v1693 = vadd.f32 0.0, %v1692
        %1694 = vmatmul.f32.gmra.mxu0 %v1641
        %v1695 = vpop.f32.mrf.mxu0
        %v1696 = vadd.f32 0.0, %v1695
        %1697 = vmatmul.f32.gmra.mxu0 %v1643
        %v1698 = vpop.f32.mrf.mxu0
        %v1699 = vadd.f32 0.0, %v1698
        %1700 = vmatmul.f32.gmra.mxu0 %v1645
        %v1701 = vpop.f32.mrf.mxu0
        %v1702 = vadd.f32 0.0, %v1701
        %1703 = vdwg.mxu0
        %v1704 = vsel %vm1106, %v1681, -inf
        %1705 = vmax.xlane.f32.xlu0 %v1704
        %v1706 = vpop.xlane.xlu0 %1705
        %v1707 = vsel %vm1106, %v1684, -inf
        %1708 = vmax.xlane.f32.xlu0 %v1707
        %v1709 = vpop.xlane.xlu0 %1708
        %v1710 = vsel %vm1106, %v1687, -inf
        %1711 = vmax.xlane.f32.xlu0 %v1710
        %v1712 = vpop.xlane.xlu0 %1711
        %v1713 = vsel %vm1106, %v1690, -inf
        %1714 = vmax.xlane.f32.xlu0 %v1713
        %v1715 = vpop.xlane.xlu0 %1714
        %v1716 = vsel %vm1106, %v1693, -inf
        %1717 = vmax.xlane.f32.xlu0 %v1716
        %v1718 = vpop.xlane.xlu0 %1717
        %v1719 = vsel %vm1106, %v1696, -inf
        %1720 = vmax.xlane.f32.xlu0 %v1719
        %v1721 = vpop.xlane.xlu0 %1720
        %v1722 = vsel %vm1106, %v1699, -inf
        %1723 = vmax.xlane.f32.xlu0 %v1722
        %v1724 = vpop.xlane.xlu0 %1723
        %v1725 = vsel %vm1106, %v1702, -inf
        %1726 = vmax.xlane.f32.xlu0 %v1725
        %v1727 = vpop.xlane.xlu0 %1726
        %v1728 = vsub.f32 %v1681, %v1706
        %v1729 = vsub.f32 %v1684, %v1709
        %v1730 = vsub.f32 %v1687, %v1712
        %v1731 = vsub.f32 %v1690, %v1715
        %v1732 = vsub.f32 %v1693, %v1718
        %v1733 = vsub.f32 %v1696, %v1721
        %v1734 = vsub.f32 %v1699, %v1724
        %v1735 = vsub.f32 %v1702, %v1727
        %v1736 = vmul.f32 %v1728, 1.442695
        %v1737 = vpow.pop %v1736
        %v1738 = vmul.f32 %v1729, 1.442695
        %v1739 = vpow.pop %v1738
        %v1740 = vmul.f32 %v1730, 1.442695
        %v1741 = vpow.pop %v1740
        %v1742 = vmul.f32 %v1731, 1.442695
        %v1743 = vpow.pop %v1742
        %v1744 = vmul.f32 %v1732, 1.442695
        %v1745 = vpow.pop %v1744
        %v1746 = vmul.f32 %v1733, 1.442695
        %v1747 = vpow.pop %v1746
        %v1748 = vmul.f32 %v1734, 1.442695
        %v1749 = vpow.pop %v1748
        %v1750 = vmul.f32 %v1735, 1.442695
        %v1751 = vpow.pop %v1750
        %v1752 = vsel %vm1106, %v1737, 0.0
        %1753 = vadd.xlane.f32.xlu0 %v1752
        %v1754 = vpop.xlane.xlu0 %1753
        %v1755 = vsel %vm1106, %v1739, 0.0
        %1756 = vadd.xlane.f32.xlu0 %v1755
        %v1757 = vpop.xlane.xlu0 %1756
        %v1758 = vsel %vm1106, %v1741, 0.0
        %1759 = vadd.xlane.f32.xlu0 %v1758
        %v1760 = vpop.xlane.xlu0 %1759
        %v1761 = vsel %vm1106, %v1743, 0.0
        %1762 = vadd.xlane.f32.xlu0 %v1761
        %v1763 = vpop.xlane.xlu0 %1762
        %v1764 = vsel %vm1106, %v1745, 0.0
        %1765 = vadd.xlane.f32.xlu0 %v1764
        %v1766 = vpop.xlane.xlu0 %1765
        %v1767 = vsel %vm1106, %v1747, 0.0
        %1768 = vadd.xlane.f32.xlu0 %v1767
        %v1769 = vpop.xlane.xlu0 %1768
        %v1770 = vsel %vm1106, %v1749, 0.0
        %1771 = vadd.xlane.f32.xlu0 %v1770
        %v1772 = vpop.xlane.xlu0 %1771
        %v1773 = vsel %vm1106, %v1751, 0.0
        %1774 = vadd.xlane.f32.xlu0 %v1773
        %v1775 = vpop.xlane.xlu0 %1774
        %v1776 = vrcp.pop %v1754
        %v1777 = vrcp.pop %v1757
        %v1778 = vrcp.pop %v1760
        %v1779 = vrcp.pop %v1763
        %v1780 = vrcp.pop %v1766
        %v1781 = vrcp.pop %v1769
        %v1782 = vrcp.pop %v1772
        %v1783 = vrcp.pop %v1775
        %v1784 = vmul.f32 %v1737, %v1776
        %v1785 = vmul.f32 %v1739, %v1777
        %v1786 = vmul.f32 %v1741, %v1778
        %v1787 = vmul.f32 %v1743, %v1779
        %v1788 = vmul.f32 %v1745, %v1780
        %v1789 = vmul.f32 %v1747, %v1781
        %v1790 = vmul.f32 %v1749, %v1782
        %v1791 = vmul.f32 %v1751, %v1783
        %1792 = vrot.lane.b32.xlu0 %v994, 64
        %v1793 = vpop.permute.xlu0 %1792
        %1794 = vrot.lane.b32.xlu0 %v997, 64
        %v1795 = vpop.permute.xlu0 %1794
        %1796 = vrot.lane.b32.xlu0 %v1000, 64
        %v1797 = vpop.permute.xlu0 %1796
        %1798 = vrot.lane.b32.xlu0 %v1003, 64
        %v1799 = vpop.permute.xlu0 %1798
        %1800 = vrot.lane.b32.xlu0 %v1006, 64
        %v1801 = vpop.permute.xlu0 %1800
        %1802 = vrot.lane.b32.xlu0 %v1009, 64
        %v1803 = vpop.permute.xlu0 %1802
        %1804 = vrot.lane.b32.xlu0 %v1012, 64
        %v1805 = vpop.permute.xlu0 %1804
        %1806 = vrot.lane.b32.xlu0 %v1015, 64
        %v1807 = vpop.permute.xlu0 %1806
        %v1817 = vsel %vm1106, %v1784, 0
        %v1820 = vsel %vm1106, %v1785, 0
        %v1823 = vsel %vm1106, %v1786, 0
        %v1826 = vsel %vm1106, %v1787, 0
        %v1829 = vsel %vm1106, %v1788, 0
        %v1832 = vsel %vm1106, %v1789, 0
        %v1835 = vsel %vm1106, %v1790, 0
        %v1838 = vsel %vm1106, %v1791, 0
        %1840 = vmatpush.msra.mxu0 0.0
        %1841 = vmatpush.msra.mxu0 0.0
        %1842 = vmatpush.msra.mxu0 0.0
        %1843 = vmatpush.msra.mxu0 0.0
        %1844 = vmatpush.msra.mxu0 0.0
        %1845 = vmatpush.msra.mxu0 0.0
        %1846 = vmatpush.msra.mxu0 0.0
        %1847 = vmatpush.msra.mxu0 0.0
        %1848 = vmatpush.msra.mxu0 %v1807
        %1849 = vmatpush.msra.mxu0 %v1805
        %1850 = vmatpush.msra.mxu0 %v1803
        %1851 = vmatpush.msra.mxu0 %v1801
        %1852 = vmatpush.msra.mxu0 %v1799
        %1853 = vmatpush.msra.mxu0 %v1797
        %1854 = vmatpush.msra.mxu0 %v1795
        %1855 = vmatpush.msra.mxu0 %v1793
        %1856 = vmatmul.f32.gmra.mxu0 %v1817
        %v1857 = vpop.f32.mrf.mxu0
        %v1858 = vadd.f32 0.0, %v1857
        %1859 = vmatmul.f32.gmra.mxu0 %v1820
        %v1860 = vpop.f32.mrf.mxu0
        %v1861 = vadd.f32 0.0, %v1860
        %1862 = vmatmul.f32.gmra.mxu0 %v1823
        %v1863 = vpop.f32.mrf.mxu0
        %v1864 = vadd.f32 0.0, %v1863
        %1865 = vmatmul.f32.gmra.mxu0 %v1826
        %v1866 = vpop.f32.mrf.mxu0
        %v1867 = vadd.f32 0.0, %v1866
        %1868 = vmatmul.f32.gmra.mxu0 %v1829
        %v1869 = vpop.f32.mrf.mxu0
        %v1870 = vadd.f32 0.0, %v1869
        %1871 = vmatmul.f32.gmra.mxu0 %v1832
        %v1872 = vpop.f32.mrf.mxu0
        %v1873 = vadd.f32 0.0, %v1872
        %1874 = vmatmul.f32.gmra.mxu0 %v1835
        %v1875 = vpop.f32.mrf.mxu0
        %v1876 = vadd.f32 0.0, %v1875
        %1877 = vmatmul.f32.gmra.mxu0 %v1838
        %v1878 = vpop.f32.mrf.mxu0
        %v1879 = vadd.f32 0.0, %v1878
        %1880 = vdwg.mxu0
        %1889 = vrot.lane.b32.xlu0 %v1858, 64
        %v1890 = vpop.permute.xlu0 %1889
        %1891 = vrot.lane.b32.xlu0 %v1861, 64
        %v1892 = vpop.permute.xlu0 %1891
        %1893 = vrot.lane.b32.xlu0 %v1864, 64
        %v1894 = vpop.permute.xlu0 %1893
        %1895 = vrot.lane.b32.xlu0 %v1867, 64
        %v1896 = vpop.permute.xlu0 %1895
        %1897 = vrot.lane.b32.xlu0 %v1870, 64
        %v1898 = vpop.permute.xlu0 %1897
        %1899 = vrot.lane.b32.xlu0 %v1873, 64
        %v1900 = vpop.permute.xlu0 %1899
        %1901 = vrot.lane.b32.xlu0 %v1876, 64
        %v1902 = vpop.permute.xlu0 %1901
        %1903 = vrot.lane.b32.xlu0 %v1879, 64
        %v1904 = vpop.permute.xlu0 %1903
        %vm1913 = vcmask 785920
        %1914 = vst.msk [vmem:[#allocation3] sm:$0xff] %vm1913, %v1890
        %1915 = vst.msk [vmem:[#allocation3 + $0x8] sm:$0xff] %vm1913, %v1892
        %1916 = vst.msk [vmem:[#allocation3 + $0x10] sm:$0xff] %vm1913, %v1894
        %1917 = vst.msk [vmem:[#allocation3 + $0x18] sm:$0xff] %vm1913, %v1896
        %1918 = vst.msk [vmem:[#allocation3 + $0x20] sm:$0xff] %vm1913, %v1898
        %1919 = vst.msk [vmem:[#allocation3 + $0x28] sm:$0xff] %vm1913, %v1900
        %1920 = vst.msk [vmem:[#allocation3 + $0x30] sm:$0xff] %vm1913, %v1902
        %1921 = vst.msk [vmem:[#allocation3 + $0x38] sm:$0xff] %vm1913, %v1904
        %1922 = vrot.lane.b32.xlu0 %v992, 32
        %v1923 = vpop.permute.xlu0 %1922
        %1924 = vrot.lane.b32.xlu0 %v995, 32
        %v1925 = vpop.permute.xlu0 %1924
        %1926 = vrot.lane.b32.xlu0 %v998, 32
        %v1927 = vpop.permute.xlu0 %1926
        %1928 = vrot.lane.b32.xlu0 %v1001, 32
        %v1929 = vpop.permute.xlu0 %1928
        %1930 = vrot.lane.b32.xlu0 %v1004, 32
        %v1931 = vpop.permute.xlu0 %1930
        %1932 = vrot.lane.b32.xlu0 %v1007, 32
        %v1933 = vpop.permute.xlu0 %1932
        %1934 = vrot.lane.b32.xlu0 %v1010, 32
        %v1935 = vpop.permute.xlu0 %1934
        %1936 = vrot.lane.b32.xlu0 %v1013, 32
        %v1937 = vpop.permute.xlu0 %1936
        %1938 = vrot.lane.b32.xlu0 %v993, 32
        %v1939 = vpop.permute.xlu0 %1938
        %1940 = vrot.lane.b32.xlu0 %v996, 32
        %v1941 = vpop.permute.xlu0 %1940
        %1942 = vrot.lane.b32.xlu0 %v999, 32
        %v1943 = vpop.permute.xlu0 %1942
        %1944 = vrot.lane.b32.xlu0 %v1002, 32
        %v1945 = vpop.permute.xlu0 %1944
        %1946 = vrot.lane.b32.xlu0 %v1005, 32
        %v1947 = vpop.permute.xlu0 %1946
        %1948 = vrot.lane.b32.xlu0 %v1008, 32
        %v1949 = vpop.permute.xlu0 %1948
        %1950 = vrot.lane.b32.xlu0 %v1011, 32
        %v1951 = vpop.permute.xlu0 %1950
        %1952 = vrot.lane.b32.xlu0 %v1014, 32
        %v1953 = vpop.permute.xlu0 %1952
        %v1954 = vsel %vm1016, %v1923, 0
        %v1956 = vsel %vm1016, %v1925, 0
        %v1958 = vsel %vm1016, %v1927, 0
        %v1960 = vsel %vm1016, %v1929, 0
        %v1962 = vsel %vm1016, %v1931, 0
        %v1964 = vsel %vm1016, %v1933, 0
        %v1966 = vsel %vm1016, %v1935, 0
        %v1968 = vsel %vm1016, %v1937, 0
        %v1970 = vsel %vm1016, %v1939, 0
        %v1972 = vsel %vm1016, %v1941, 0
        %v1974 = vsel %vm1016, %v1943, 0
        %v1976 = vsel %vm1016, %v1945, 0
        %v1978 = vsel %vm1016, %v1947, 0
        %v1980 = vsel %vm1016, %v1949, 0
        %v1982 = vsel %vm1016, %v1951, 0
        %v1984 = vsel %vm1016, %v1953, 0
        %1986 = vmatpush.xpose.msra.mxu0 0.0
        %1987 = vmatpush.xpose.msra.mxu0 0.0
        %1988 = vmatpush.xpose.msra.mxu0 0.0
        %1989 = vmatpush.xpose.msra.mxu0 0.0
        %1990 = vmatpush.xpose.msra.mxu0 0.0
        %1991 = vmatpush.xpose.msra.mxu0 0.0
        %1992 = vmatpush.xpose.msra.mxu0 0.0
        %1993 = vmatpush.xpose.msra.mxu0 0.0
        %1994 = vmatpush.xpose.msra.mxu0 %v1984
        %1995 = vmatpush.xpose.msra.mxu0 %v1982
        %1996 = vmatpush.xpose.msra.mxu0 %v1980
        %1997 = vmatpush.xpose.msra.mxu0 %v1978
        %1998 = vmatpush.xpose.msra.mxu0 %v1976
        %1999 = vmatpush.xpose.msra.mxu0 %v1974
        %2000 = vmatpush.xpose.msra.mxu0 %v1972
        %2001 = vmatpush.xpose.msra.mxu0 %v1970
        %2002 = vmatmul.f32.gmra.mxu0 %v1954
        %v2003 = vpop.f32.mrf.mxu0
        %v2004 = vadd.f32 0.0, %v2003
        %2005 = vmatmul.f32.gmra.mxu0 %v1956
        %v2006 = vpop.f32.mrf.mxu0
        %v2007 = vadd.f32 0.0, %v2006
        %2008 = vmatmul.f32.gmra.mxu0 %v1958
        %v2009 = vpop.f32.mrf.mxu0
        %v2010 = vadd.f32 0.0, %v2009
        %2011 = vmatmul.f32.gmra.mxu0 %v1960
        %v2012 = vpop.f32.mrf.mxu0
        %v2013 = vadd.f32 0.0, %v2012
        %2014 = vmatmul.f32.gmra.mxu0 %v1962
        %v2015 = vpop.f32.mrf.mxu0
        %v2016 = vadd.f32 0.0, %v2015
        %2017 = vmatmul.f32.gmra.mxu0 %v1964
        %v2018 = vpop.f32.mrf.mxu0
        %v2019 = vadd.f32 0.0, %v2018
        %2020 = vmatmul.f32.gmra.mxu0 %v1966
        %v2021 = vpop.f32.mrf.mxu0
        %v2022 = vadd.f32 0.0, %v2021
        %2023 = vmatmul.f32.gmra.mxu0 %v1968
        %v2024 = vpop.f32.mrf.mxu0
        %v2025 = vadd.f32 0.0, %v2024
        %2026 = vdwg.mxu0
        %v2027 = vsel %vm1106, %v2004, -inf
        %2028 = vmax.xlane.f32.xlu0 %v2027
        %v2029 = vpop.xlane.xlu0 %2028
        %v2030 = vsel %vm1106, %v2007, -inf
        %2031 = vmax.xlane.f32.xlu0 %v2030
        %v2032 = vpop.xlane.xlu0 %2031
        %v2033 = vsel %vm1106, %v2010, -inf
        %2034 = vmax.xlane.f32.xlu0 %v2033
        %v2035 = vpop.xlane.xlu0 %2034
        %v2036 = vsel %vm1106, %v2013, -inf
        %2037 = vmax.xlane.f32.xlu0 %v2036
        %v2038 = vpop.xlane.xlu0 %2037
        %v2039 = vsel %vm1106, %v2016, -inf
        %2040 = vmax.xlane.f32.xlu0 %v2039
        %v2041 = vpop.xlane.xlu0 %2040
        %v2042 = vsel %vm1106, %v2019, -inf
        %2043 = vmax.xlane.f32.xlu0 %v2042
        %v2044 = vpop.xlane.xlu0 %2043
        %v2045 = vsel %vm1106, %v2022, -inf
        %2046 = vmax.xlane.f32.xlu0 %v2045
        %v2047 = vpop.xlane.xlu0 %2046
        %v2048 = vsel %vm1106, %v2025, -inf
        %2049 = vmax.xlane.f32.xlu0 %v2048
        %v2050 = vpop.xlane.xlu0 %2049
        %v2051 = vsub.f32 %v2004, %v2029
        %v2052 = vsub.f32 %v2007, %v2032
        %v2053 = vsub.f32 %v2010, %v2035
        %v2054 = vsub.f32 %v2013, %v2038
        %v2055 = vsub.f32 %v2016, %v2041
        %v2056 = vsub.f32 %v2019, %v2044
        %v2057 = vsub.f32 %v2022, %v2047
        %v2058 = vsub.f32 %v2025, %v2050
        %v2059 = vmul.f32 %v2051, 1.442695
        %v2060 = vpow.pop %v2059
        %v2061 = vmul.f32 %v2052, 1.442695
        %v2062 = vpow.pop %v2061
        %v2063 = vmul.f32 %v2053, 1.442695
        %v2064 = vpow.pop %v2063
        %v2065 = vmul.f32 %v2054, 1.442695
        %v2066 = vpow.pop %v2065
        %v2067 = vmul.f32 %v2055, 1.442695
        %v2068 = vpow.pop %v2067
        %v2069 = vmul.f32 %v2056, 1.442695
        %v2070 = vpow.pop %v2069
        %v2071 = vmul.f32 %v2057, 1.442695
        %v2072 = vpow.pop %v2071
        %v2073 = vmul.f32 %v2058, 1.442695
        %v2074 = vpow.pop %v2073
        %v2075 = vsel %vm1106, %v2060, 0.0
        %2076 = vadd.xlane.f32.xlu0 %v2075
        %v2077 = vpop.xlane.xlu0 %2076
        %v2078 = vsel %vm1106, %v2062, 0.0
        %2079 = vadd.xlane.f32.xlu0 %v2078
        %v2080 = vpop.xlane.xlu0 %2079
        %v2081 = vsel %vm1106, %v2064, 0.0
        %2082 = vadd.xlane.f32.xlu0 %v2081
        %v2083 = vpop.xlane.xlu0 %2082
        %v2084 = vsel %vm1106, %v2066, 0.0
        %2085 = vadd.xlane.f32.xlu0 %v2084
        %v2086 = vpop.xlane.xlu0 %2085
        %v2087 = vsel %vm1106, %v2068, 0.0
        %2088 = vadd.xlane.f32.xlu0 %v2087
        %v2089 = vpop.xlane.xlu0 %2088
        %v2090 = vsel %vm1106, %v2070, 0.0
        %2091 = vadd.xlane.f32.xlu0 %v2090
        %v2092 = vpop.xlane.xlu0 %2091
        %v2093 = vsel %vm1106, %v2072, 0.0
        %2094 = vadd.xlane.f32.xlu0 %v2093
        %v2095 = vpop.xlane.xlu0 %2094
        %v2096 = vsel %vm1106, %v2074, 0.0
        %2097 = vadd.xlane.f32.xlu0 %v2096
        %v2098 = vpop.xlane.xlu0 %2097
        %v2099 = vrcp.pop %v2077
        %v2100 = vrcp.pop %v2080
        %v2101 = vrcp.pop %v2083
        %v2102 = vrcp.pop %v2086
        %v2103 = vrcp.pop %v2089
        %v2104 = vrcp.pop %v2092
        %v2105 = vrcp.pop %v2095
        %v2106 = vrcp.pop %v2098
        %v2107 = vmul.f32 %v2060, %v2099
        %v2108 = vmul.f32 %v2062, %v2100
        %v2109 = vmul.f32 %v2064, %v2101
        %v2110 = vmul.f32 %v2066, %v2102
        %v2111 = vmul.f32 %v2068, %v2103
        %v2112 = vmul.f32 %v2070, %v2104
        %v2113 = vmul.f32 %v2072, %v2105
        %v2114 = vmul.f32 %v2074, %v2106
        %2115 = vrot.lane.b32.xlu0 %v994, 32
        %v2116 = vpop.permute.xlu0 %2115
        %2117 = vrot.lane.b32.xlu0 %v997, 32
        %v2118 = vpop.permute.xlu0 %2117
        %2119 = vrot.lane.b32.xlu0 %v1000, 32
        %v2120 = vpop.permute.xlu0 %2119
        %2121 = vrot.lane.b32.xlu0 %v1003, 32
        %v2122 = vpop.permute.xlu0 %2121
        %2123 = vrot.lane.b32.xlu0 %v1006, 32
        %v2124 = vpop.permute.xlu0 %2123
        %2125 = vrot.lane.b32.xlu0 %v1009, 32
        %v2126 = vpop.permute.xlu0 %2125
        %2127 = vrot.lane.b32.xlu0 %v1012, 32
        %v2128 = vpop.permute.xlu0 %2127
        %2129 = vrot.lane.b32.xlu0 %v1015, 32
        %v2130 = vpop.permute.xlu0 %2129
        %v2140 = vsel %vm1106, %v2107, 0
        %v2143 = vsel %vm1106, %v2108, 0
        %v2146 = vsel %vm1106, %v2109, 0
        %v2149 = vsel %vm1106, %v2110, 0
        %v2152 = vsel %vm1106, %v2111, 0
        %v2155 = vsel %vm1106, %v2112, 0
        %v2158 = vsel %vm1106, %v2113, 0
        %v2161 = vsel %vm1106, %v2114, 0
        %2163 = vmatpush.msra.mxu0 0.0
        %2164 = vmatpush.msra.mxu0 0.0
        %2165 = vmatpush.msra.mxu0 0.0
        %2166 = vmatpush.msra.mxu0 0.0
        %2167 = vmatpush.msra.mxu0 0.0
        %2168 = vmatpush.msra.mxu0 0.0
        %2169 = vmatpush.msra.mxu0 0.0
        %2170 = vmatpush.msra.mxu0 0.0
        %2171 = vmatpush.msra.mxu0 %v2130
        %2172 = vmatpush.msra.mxu0 %v2128
        %2173 = vmatpush.msra.mxu0 %v2126
        %2174 = vmatpush.msra.mxu0 %v2124
        %2175 = vmatpush.msra.mxu0 %v2122
        %2176 = vmatpush.msra.mxu0 %v2120
        %2177 = vmatpush.msra.mxu0 %v2118
        %2178 = vmatpush.msra.mxu0 %v2116
        %2179 = vmatmul.f32.gmra.mxu0 %v2140
        %v2180 = vpop.f32.mrf.mxu0
        %v2181 = vadd.f32 0.0, %v2180
        %2182 = vmatmul.f32.gmra.mxu0 %v2143
        %v2183 = vpop.f32.mrf.mxu0
        %v2184 = vadd.f32 0.0, %v2183
        %2185 = vmatmul.f32.gmra.mxu0 %v2146
        %v2186 = vpop.f32.mrf.mxu0
        %v2187 = vadd.f32 0.0, %v2186
        %2188 = vmatmul.f32.gmra.mxu0 %v2149
        %v2189 = vpop.f32.mrf.mxu0
        %v2190 = vadd.f32 0.0, %v2189
        %2191 = vmatmul.f32.gmra.mxu0 %v2152
        %v2192 = vpop.f32.mrf.mxu0
        %v2193 = vadd.f32 0.0, %v2192
        %2194 = vmatmul.f32.gmra.mxu0 %v2155
        %v2195 = vpop.f32.mrf.mxu0
        %v2196 = vadd.f32 0.0, %v2195
        %2197 = vmatmul.f32.gmra.mxu0 %v2158
        %v2198 = vpop.f32.mrf.mxu0
        %v2199 = vadd.f32 0.0, %v2198
        %2200 = vmatmul.f32.gmra.mxu0 %v2161
        %v2201 = vpop.f32.mrf.mxu0
        %v2202 = vadd.f32 0.0, %v2201
        %2203 = vdwg.mxu0
        %2212 = vrot.lane.b32.xlu0 %v2181, 96
        %v2213 = vpop.permute.xlu0 %2212
        %2214 = vrot.lane.b32.xlu0 %v2184, 96
        %v2215 = vpop.permute.xlu0 %2214
        %2216 = vrot.lane.b32.xlu0 %v2187, 96
        %v2217 = vpop.permute.xlu0 %2216
        %2218 = vrot.lane.b32.xlu0 %v2190, 96
        %v2219 = vpop.permute.xlu0 %2218
        %2220 = vrot.lane.b32.xlu0 %v2193, 96
        %v2221 = vpop.permute.xlu0 %2220
        %2222 = vrot.lane.b32.xlu0 %v2196, 96
        %v2223 = vpop.permute.xlu0 %2222
        %2224 = vrot.lane.b32.xlu0 %v2199, 96
        %v2225 = vpop.permute.xlu0 %2224
        %2226 = vrot.lane.b32.xlu0 %v2202, 96
        %v2227 = vpop.permute.xlu0 %2226
        %vm2236 = vcmask 1048320
        %2237 = vst.msk [vmem:[#allocation3] sm:$0xff] %vm2236, %v2213
        %2238 = vst.msk [vmem:[#allocation3 + $0x8] sm:$0xff] %vm2236, %v2215
        %2239 = vst.msk [vmem:[#allocation3 + $0x10] sm:$0xff] %vm2236, %v2217
        %2240 = vst.msk [vmem:[#allocation3 + $0x18] sm:$0xff] %vm2236, %v2219
        %2241 = vst.msk [vmem:[#allocation3 + $0x20] sm:$0xff] %vm2236, %v2221
        %2242 = vst.msk [vmem:[#allocation3 + $0x28] sm:$0xff] %vm2236, %v2223
        %2243 = vst.msk [vmem:[#allocation3 + $0x30] sm:$0xff] %vm2236, %v2225
        %2244 = vst.msk [vmem:[#allocation3 + $0x38] sm:$0xff] %vm2236, %v2227
        %s2245 = scalar_lea.vmem [#allocation2], 192
        %v2246 = vld [vmem:[%s2245] sm:$0xff]
        %v2247 = vld [vmem:[%s2245 + $0x8] sm:$0xff]
        %v2248 = vld [vmem:[%s2245 + $0x10] sm:$0xff]
        %v2249 = vld [vmem:[%s2245 + $0x18] sm:$0xff]
        %v2250 = vld [vmem:[%s2245 + $0x20] sm:$0xff]
        %v2251 = vld [vmem:[%s2245 + $0x28] sm:$0xff]
        %v2252 = vld [vmem:[%s2245 + $0x30] sm:$0xff]
        %v2253 = vld [vmem:[%s2245 + $0x38] sm:$0xff]
        %v2254 = vld [vmem:[%s2245 + $0x40] sm:$0xff]
        %v2255 = vld [vmem:[%s2245 + $0x48] sm:$0xff]
        %v2256 = vld [vmem:[%s2245 + $0x50] sm:$0xff]
        %v2257 = vld [vmem:[%s2245 + $0x58] sm:$0xff]
        %v2258 = vld [vmem:[%s2245 + $0x60] sm:$0xff]
        %v2259 = vld [vmem:[%s2245 + $0x68] sm:$0xff]
        %v2260 = vld [vmem:[%s2245 + $0x70] sm:$0xff]
        %v2261 = vld [vmem:[%s2245 + $0x78] sm:$0xff]
        %v2262 = vld [vmem:[%s2245 + $0x80] sm:$0xff]
        %v2263 = vld [vmem:[%s2245 + $0x88] sm:$0xff]
        %v2264 = vld [vmem:[%s2245 + $0x90] sm:$0xff]
        %v2265 = vld [vmem:[%s2245 + $0x98] sm:$0xff]
        %v2266 = vld [vmem:[%s2245 + $0xa0] sm:$0xff]
        %v2267 = vld [vmem:[%s2245 + $0xa8] sm:$0xff]
        %v2268 = vld [vmem:[%s2245 + $0xb0] sm:$0xff]
        %v2269 = vld [vmem:[%s2245 + $0xb8] sm:$0xff]
        %v2271 = vsel %vm1016, %v2246, 0
        %v2274 = vsel %vm1016, %v2249, 0
        %v2277 = vsel %vm1016, %v2252, 0
        %v2280 = vsel %vm1016, %v2255, 0
        %v2283 = vsel %vm1016, %v2258, 0
        %v2286 = vsel %vm1016, %v2261, 0
        %v2289 = vsel %vm1016, %v2264, 0
        %v2292 = vsel %vm1016, %v2267, 0
        %v2295 = vsel %vm1016, %v2247, 0
        %v2298 = vsel %vm1016, %v2250, 0
        %v2301 = vsel %vm1016, %v2253, 0
        %v2304 = vsel %vm1016, %v2256, 0
        %v2307 = vsel %vm1016, %v2259, 0
        %v2310 = vsel %vm1016, %v2262, 0
        %v2313 = vsel %vm1016, %v2265, 0
        %v2316 = vsel %vm1016, %v2268, 0
        %2318 = vmatpush.xpose.msra.mxu0 0.0
        %2319 = vmatpush.xpose.msra.mxu0 0.0
        %2320 = vmatpush.xpose.msra.mxu0 0.0
        %2321 = vmatpush.xpose.msra.mxu0 0.0
        %2322 = vmatpush.xpose.msra.mxu0 0.0
        %2323 = vmatpush.xpose.msra.mxu0 0.0
        %2324 = vmatpush.xpose.msra.mxu0 0.0
        %2325 = vmatpush.xpose.msra.mxu0 0.0
        %2326 = vmatpush.xpose.msra.mxu0 %v2316
        %2327 = vmatpush.xpose.msra.mxu0 %v2313
        %2328 = vmatpush.xpose.msra.mxu0 %v2310
        %2329 = vmatpush.xpose.msra.mxu0 %v2307
        %2330 = vmatpush.xpose.msra.mxu0 %v2304
        %2331 = vmatpush.xpose.msra.mxu0 %v2301
        %2332 = vmatpush.xpose.msra.mxu0 %v2298
        %2333 = vmatpush.xpose.msra.mxu0 %v2295
        %2334 = vmatmul.f32.gmra.mxu0 %v2271
        %v2335 = vpop.f32.mrf.mxu0
        %v2336 = vadd.f32 0.0, %v2335
        %2337 = vmatmul.f32.gmra.mxu0 %v2274
        %v2338 = vpop.f32.mrf.mxu0
        %v2339 = vadd.f32 0.0, %v2338
        %2340 = vmatmul.f32.gmra.mxu0 %v2277
        %v2341 = vpop.f32.mrf.mxu0
        %v2342 = vadd.f32 0.0, %v2341
        %2343 = vmatmul.f32.gmra.mxu0 %v2280
        %v2344 = vpop.f32.mrf.mxu0
        %v2345 = vadd.f32 0.0, %v2344
        %2346 = vmatmul.f32.gmra.mxu0 %v2283
        %v2347 = vpop.f32.mrf.mxu0
        %v2348 = vadd.f32 0.0, %v2347
        %2349 = vmatmul.f32.gmra.mxu0 %v2286
        %v2350 = vpop.f32.mrf.mxu0
        %v2351 = vadd.f32 0.0, %v2350
        %2352 = vmatmul.f32.gmra.mxu0 %v2289
        %v2353 = vpop.f32.mrf.mxu0
        %v2354 = vadd.f32 0.0, %v2353
        %2355 = vmatmul.f32.gmra.mxu0 %v2292
        %v2356 = vpop.f32.mrf.mxu0
        %v2357 = vadd.f32 0.0, %v2356
        %2358 = vdwg.mxu0
        %v2359 = vsel %vm1106, %v2336, -inf
        %2360 = vmax.xlane.f32.xlu0 %v2359
        %v2361 = vpop.xlane.xlu0 %2360
        %v2362 = vsel %vm1106, %v2339, -inf
        %2363 = vmax.xlane.f32.xlu0 %v2362
        %v2364 = vpop.xlane.xlu0 %2363
        %v2365 = vsel %vm1106, %v2342, -inf
        %2366 = vmax.xlane.f32.xlu0 %v2365
        %v2367 = vpop.xlane.xlu0 %2366
        %v2368 = vsel %vm1106, %v2345, -inf
        %2369 = vmax.xlane.f32.xlu0 %v2368
        %v2370 = vpop.xlane.xlu0 %2369
        %v2371 = vsel %vm1106, %v2348, -inf
        %2372 = vmax.xlane.f32.xlu0 %v2371
        %v2373 = vpop.xlane.xlu0 %2372
        %v2374 = vsel %vm1106, %v2351, -inf
        %2375 = vmax.xlane.f32.xlu0 %v2374
        %v2376 = vpop.xlane.xlu0 %2375
        %v2377 = vsel %vm1106, %v2354, -inf
        %2378 = vmax.xlane.f32.xlu0 %v2377
        %v2379 = vpop.xlane.xlu0 %2378
        %v2380 = vsel %vm1106, %v2357, -inf
        %2381 = vmax.xlane.f32.xlu0 %v2380
        %v2382 = vpop.xlane.xlu0 %2381
        %v2383 = vsub.f32 %v2336, %v2361
        %v2384 = vsub.f32 %v2339, %v2364
        %v2385 = vsub.f32 %v2342, %v2367
        %v2386 = vsub.f32 %v2345, %v2370
        %v2387 = vsub.f32 %v2348, %v2373
        %v2388 = vsub.f32 %v2351, %v2376
        %v2389 = vsub.f32 %v2354, %v2379
        %v2390 = vsub.f32 %v2357, %v2382
        %v2391 = vmul.f32 %v2383, 1.442695
        %v2392 = vpow.pop %v2391
        %v2393 = vmul.f32 %v2384, 1.442695
        %v2394 = vpow.pop %v2393
        %v2395 = vmul.f32 %v2385, 1.442695
        %v2396 = vpow.pop %v2395
        %v2397 = vmul.f32 %v2386, 1.442695
        %v2398 = vpow.pop %v2397
        %v2399 = vmul.f32 %v2387, 1.442695
        %v2400 = vpow.pop %v2399
        %v2401 = vmul.f32 %v2388, 1.442695
        %v2402 = vpow.pop %v2401
        %v2403 = vmul.f32 %v2389, 1.442695
        %v2404 = vpow.pop %v2403
        %v2405 = vmul.f32 %v2390, 1.442695
        %v2406 = vpow.pop %v2405
        %v2407 = vsel %vm1106, %v2392, 0.0
        %2408 = vadd.xlane.f32.xlu0 %v2407
        %v2409 = vpop.xlane.xlu0 %2408
        %v2410 = vsel %vm1106, %v2394, 0.0
        %2411 = vadd.xlane.f32.xlu0 %v2410
        %v2412 = vpop.xlane.xlu0 %2411
        %v2413 = vsel %vm1106, %v2396, 0.0
        %2414 = vadd.xlane.f32.xlu0 %v2413
        %v2415 = vpop.xlane.xlu0 %2414
        %v2416 = vsel %vm1106, %v2398, 0.0
        %2417 = vadd.xlane.f32.xlu0 %v2416
        %v2418 = vpop.xlane.xlu0 %2417
        %v2419 = vsel %vm1106, %v2400, 0.0
        %2420 = vadd.xlane.f32.xlu0 %v2419
        %v2421 = vpop.xlane.xlu0 %2420
        %v2422 = vsel %vm1106, %v2402, 0.0
        %2423 = vadd.xlane.f32.xlu0 %v2422
        %v2424 = vpop.xlane.xlu0 %2423
        %v2425 = vsel %vm1106, %v2404, 0.0
        %2426 = vadd.xlane.f32.xlu0 %v2425
        %v2427 = vpop.xlane.xlu0 %2426
        %v2428 = vsel %vm1106, %v2406, 0.0
        %2429 = vadd.xlane.f32.xlu0 %v2428
        %v2430 = vpop.xlane.xlu0 %2429
        %v2431 = vrcp.pop %v2409
        %v2432 = vrcp.pop %v2412
        %v2433 = vrcp.pop %v2415
        %v2434 = vrcp.pop %v2418
        %v2435 = vrcp.pop %v2421
        %v2436 = vrcp.pop %v2424
        %v2437 = vrcp.pop %v2427
        %v2438 = vrcp.pop %v2430
        %v2439 = vmul.f32 %v2392, %v2431
        %v2440 = vmul.f32 %v2394, %v2432
        %v2441 = vmul.f32 %v2396, %v2433
        %v2442 = vmul.f32 %v2398, %v2434
        %v2443 = vmul.f32 %v2400, %v2435
        %v2444 = vmul.f32 %v2402, %v2436
        %v2445 = vmul.f32 %v2404, %v2437
        %v2446 = vmul.f32 %v2406, %v2438
        %v2448 = vsel %vm1106, %v2439, 0
        %v2451 = vsel %vm1106, %v2440, 0
        %v2454 = vsel %vm1106, %v2441, 0
        %v2457 = vsel %vm1106, %v2442, 0
        %v2460 = vsel %vm1106, %v2443, 0
        %v2463 = vsel %vm1106, %v2444, 0
        %v2466 = vsel %vm1106, %v2445, 0
        %v2469 = vsel %vm1106, %v2446, 0
        %2471 = vmatpush.msra.mxu0 0.0
        %2472 = vmatpush.msra.mxu0 0.0
        %2473 = vmatpush.msra.mxu0 0.0
        %2474 = vmatpush.msra.mxu0 0.0
        %2475 = vmatpush.msra.mxu0 0.0
        %2476 = vmatpush.msra.mxu0 0.0
        %2477 = vmatpush.msra.mxu0 0.0
        %2478 = vmatpush.msra.mxu0 0.0
        %2479 = vmatpush.msra.mxu0 %v2269
        %2480 = vmatpush.msra.mxu0 %v2266
        %2481 = vmatpush.msra.mxu0 %v2263
        %2482 = vmatpush.msra.mxu0 %v2260
        %2483 = vmatpush.msra.mxu0 %v2257
        %2484 = vmatpush.msra.mxu0 %v2254
        %2485 = vmatpush.msra.mxu0 %v2251
        %2486 = vmatpush.msra.mxu0 %v2248
        %2487 = vmatmul.f32.gmra.mxu0 %v2448
        %v2488 = vpop.f32.mrf.mxu0
        %v2489 = vadd.f32 0.0, %v2488
        %2490 = vmatmul.f32.gmra.mxu0 %v2451
        %v2491 = vpop.f32.mrf.mxu0
        %v2492 = vadd.f32 0.0, %v2491
        %2493 = vmatmul.f32.gmra.mxu0 %v2454
        %v2494 = vpop.f32.mrf.mxu0
        %v2495 = vadd.f32 0.0, %v2494
        %2496 = vmatmul.f32.gmra.mxu0 %v2457
        %v2497 = vpop.f32.mrf.mxu0
        %v2498 = vadd.f32 0.0, %v2497
        %2499 = vmatmul.f32.gmra.mxu0 %v2460
        %v2500 = vpop.f32.mrf.mxu0
        %v2501 = vadd.f32 0.0, %v2500
        %2502 = vmatmul.f32.gmra.mxu0 %v2463
        %v2503 = vpop.f32.mrf.mxu0
        %v2504 = vadd.f32 0.0, %v2503
        %2505 = vmatmul.f32.gmra.mxu0 %v2466
        %v2506 = vpop.f32.mrf.mxu0
        %v2507 = vadd.f32 0.0, %v2506
        %2508 = vmatmul.f32.gmra.mxu0 %v2469
        %v2509 = vpop.f32.mrf.mxu0
        %v2510 = vadd.f32 0.0, %v2509
        %2511 = vdwg.mxu0
        %s2512 = scalar_lea.vmem [#allocation3], 64
        %2513 = vst.msk [vmem:[%s2512] sm:$0xff] %vm1016, %v2489
        %2514 = vst.msk [vmem:[%s2512 + $0x8] sm:$0xff] %vm1016, %v2492
        %2515 = vst.msk [vmem:[%s2512 + $0x10] sm:$0xff] %vm1016, %v2495
        %2516 = vst.msk [vmem:[%s2512 + $0x18] sm:$0xff] %vm1016, %v2498
        %2517 = vst.msk [vmem:[%s2512 + $0x20] sm:$0xff] %vm1016, %v2501
        %2518 = vst.msk [vmem:[%s2512 + $0x28] sm:$0xff] %vm1016, %v2504
        %2519 = vst.msk [vmem:[%s2512 + $0x30] sm:$0xff] %vm1016, %v2507
        %2520 = vst.msk [vmem:[%s2512 + $0x38] sm:$0xff] %vm1016, %v2510
        %2521 = vrot.lane.b32.xlu0 %v2246, 96
        %v2522 = vpop.permute.xlu0 %2521
        %2523 = vrot.lane.b32.xlu0 %v2249, 96
        %v2524 = vpop.permute.xlu0 %2523
        %2525 = vrot.lane.b32.xlu0 %v2252, 96
        %v2526 = vpop.permute.xlu0 %2525
        %2527 = vrot.lane.b32.xlu0 %v2255, 96
        %v2528 = vpop.permute.xlu0 %2527
        %2529 = vrot.lane.b32.xlu0 %v2258, 96
        %v2530 = vpop.permute.xlu0 %2529
        %2531 = vrot.lane.b32.xlu0 %v2261, 96
        %v2532 = vpop.permute.xlu0 %2531
        %2533 = vrot.lane.b32.xlu0 %v2264, 96
        %v2534 = vpop.permute.xlu0 %2533
        %2535 = vrot.lane.b32.xlu0 %v2267, 96
        %v2536 = vpop.permute.xlu0 %2535
        %2537 = vrot.lane.b32.xlu0 %v2247, 96
        %v2538 = vpop.permute.xlu0 %2537
        %2539 = vrot.lane.b32.xlu0 %v2250, 96
        %v2540 = vpop.permute.xlu0 %2539
        %2541 = vrot.lane.b32.xlu0 %v2253, 96
        %v2542 = vpop.permute.xlu0 %2541
        %2543 = vrot.lane.b32.xlu0 %v2256, 96
        %v2544 = vpop.permute.xlu0 %2543
        %2545 = vrot.lane.b32.xlu0 %v2259, 96
        %v2546 = vpop.permute.xlu0 %2545
        %2547 = vrot.lane.b32.xlu0 %v2262, 96
        %v2548 = vpop.permute.xlu0 %2547
        %2549 = vrot.lane.b32.xlu0 %v2265, 96
        %v2550 = vpop.permute.xlu0 %2549
        %2551 = vrot.lane.b32.xlu0 %v2268, 96
        %v2552 = vpop.permute.xlu0 %2551
        %v2553 = vsel %vm1016, %v2522, 0
        %v2555 = vsel %vm1016, %v2524, 0
        %v2557 = vsel %vm1016, %v2526, 0
        %v2559 = vsel %vm1016, %v2528, 0
        %v2561 = vsel %vm1016, %v2530, 0
        %v2563 = vsel %vm1016, %v2532, 0
        %v2565 = vsel %vm1016, %v2534, 0
        %v2567 = vsel %vm1016, %v2536, 0
        %v2569 = vsel %vm1016, %v2538, 0
        %v2571 = vsel %vm1016, %v2540, 0
        %v2573 = vsel %vm1016, %v2542, 0
        %v2575 = vsel %vm1016, %v2544, 0
        %v2577 = vsel %vm1016, %v2546, 0
        %v2579 = vsel %vm1016, %v2548, 0
        %v2581 = vsel %vm1016, %v2550, 0
        %v2583 = vsel %vm1016, %v2552, 0
        %2585 = vmatpush.xpose.msra.mxu0 0.0
        %2586 = vmatpush.xpose.msra.mxu0 0.0
        %2587 = vmatpush.xpose.msra.mxu0 0.0
        %2588 = vmatpush.xpose.msra.mxu0 0.0
        %2589 = vmatpush.xpose.msra.mxu0 0.0
        %2590 = vmatpush.xpose.msra.mxu0 0.0
        %2591 = vmatpush.xpose.msra.mxu0 0.0
        %2592 = vmatpush.xpose.msra.mxu0 0.0
        %2593 = vmatpush.xpose.msra.mxu0 %v2583
        %2594 = vmatpush.xpose.msra.mxu0 %v2581
        %2595 = vmatpush.xpose.msra.mxu0 %v2579
        %2596 = vmatpush.xpose.msra.mxu0 %v2577
        %2597 = vmatpush.xpose.msra.mxu0 %v2575
        %2598 = vmatpush.xpose.msra.mxu0 %v2573
        %2599 = vmatpush.xpose.msra.mxu0 %v2571
        %2600 = vmatpush.xpose.msra.mxu0 %v2569
        %2601 = vmatmul.f32.gmra.mxu0 %v2553
        %v2602 = vpop.f32.mrf.mxu0
        %v2603 = vadd.f32 0.0, %v2602
        %2604 = vmatmul.f32.gmra.mxu0 %v2555
        %v2605 = vpop.f32.mrf.mxu0
        %v2606 = vadd.f32 0.0, %v2605
        %2607 = vmatmul.f32.gmra.mxu0 %v2557
        %v2608 = vpop.f32.mrf.mxu0
        %v2609 = vadd.f32 0.0, %v2608
        %2610 = vmatmul.f32.gmra.mxu0 %v2559
        %v2611 = vpop.f32.mrf.mxu0
        %v2612 = vadd.f32 0.0, %v2611
        %2613 = vmatmul.f32.gmra.mxu0 %v2561
        %v2614 = vpop.f32.mrf.mxu0
        %v2615 = vadd.f32 0.0, %v2614
        %2616 = vmatmul.f32.gmra.mxu0 %v2563
        %v2617 = vpop.f32.mrf.mxu0
        %v2618 = vadd.f32 0.0, %v2617
        %2619 = vmatmul.f32.gmra.mxu0 %v2565
        %v2620 = vpop.f32.mrf.mxu0
        %v2621 = vadd.f32 0.0, %v2620
        %2622 = vmatmul.f32.gmra.mxu0 %v2567
        %v2623 = vpop.f32.mrf.mxu0
        %v2624 = vadd.f32 0.0, %v2623
        %2625 = vdwg.mxu0
        %v2626 = vsel %vm1106, %v2603, -inf
        %2627 = vmax.xlane.f32.xlu0 %v2626
        %v2628 = vpop.xlane.xlu0 %2627
        %v2629 = vsel %vm1106, %v2606, -inf
        %2630 = vmax.xlane.f32.xlu0 %v2629
        %v2631 = vpop.xlane.xlu0 %2630
        %v2632 = vsel %vm1106, %v2609, -inf
        %2633 = vmax.xlane.f32.xlu0 %v2632
        %v2634 = vpop.xlane.xlu0 %2633
        %v2635 = vsel %vm1106, %v2612, -inf
        %2636 = vmax.xlane.f32.xlu0 %v2635
        %v2637 = vpop.xlane.xlu0 %2636
        %v2638 = vsel %vm1106, %v2615, -inf
        %2639 = vmax.xlane.f32.xlu0 %v2638
        %v2640 = vpop.xlane.xlu0 %2639
        %v2641 = vsel %vm1106, %v2618, -inf
        %2642 = vmax.xlane.f32.xlu0 %v2641
        %v2643 = vpop.xlane.xlu0 %2642
        %v2644 = vsel %vm1106, %v2621, -inf
        %2645 = vmax.xlane.f32.xlu0 %v2644
        %v2646 = vpop.xlane.xlu0 %2645
        %v2647 = vsel %vm1106, %v2624, -inf
        %2648 = vmax.xlane.f32.xlu0 %v2647
        %v2649 = vpop.xlane.xlu0 %2648
        %v2650 = vsub.f32 %v2603, %v2628
        %v2651 = vsub.f32 %v2606, %v2631
        %v2652 = vsub.f32 %v2609, %v2634
        %v2653 = vsub.f32 %v2612, %v2637
        %v2654 = vsub.f32 %v2615, %v2640
        %v2655 = vsub.f32 %v2618, %v2643
        %v2656 = vsub.f32 %v2621, %v2646
        %v2657 = vsub.f32 %v2624, %v2649
        %v2658 = vmul.f32 %v2650, 1.442695
        %v2659 = vpow.pop %v2658
        %v2660 = vmul.f32 %v2651, 1.442695
        %v2661 = vpow.pop %v2660
        %v2662 = vmul.f32 %v2652, 1.442695
        %v2663 = vpow.pop %v2662
        %v2664 = vmul.f32 %v2653, 1.442695
        %v2665 = vpow.pop %v2664
        %v2666 = vmul.f32 %v2654, 1.442695
        %v2667 = vpow.pop %v2666
        %v2668 = vmul.f32 %v2655, 1.442695
        %v2669 = vpow.pop %v2668
        %v2670 = vmul.f32 %v2656, 1.442695
        %v2671 = vpow.pop %v2670
        %v2672 = vmul.f32 %v2657, 1.442695
        %v2673 = vpow.pop %v2672
        %v2674 = vsel %vm1106, %v2659, 0.0
        %2675 = vadd.xlane.f32.xlu0 %v2674
        %v2676 = vpop.xlane.xlu0 %2675
        %v2677 = vsel %vm1106, %v2661, 0.0
        %2678 = vadd.xlane.f32.xlu0 %v2677
        %v2679 = vpop.xlane.xlu0 %2678
        %v2680 = vsel %vm1106, %v2663, 0.0
        %2681 = vadd.xlane.f32.xlu0 %v2680
        %v2682 = vpop.xlane.xlu0 %2681
        %v2683 = vsel %vm1106, %v2665, 0.0
        %2684 = vadd.xlane.f32.xlu0 %v2683
        %v2685 = vpop.xlane.xlu0 %2684
        %v2686 = vsel %vm1106, %v2667, 0.0
        %2687 = vadd.xlane.f32.xlu0 %v2686
        %v2688 = vpop.xlane.xlu0 %2687
        %v2689 = vsel %vm1106, %v2669, 0.0
        %2690 = vadd.xlane.f32.xlu0 %v2689
        %v2691 = vpop.xlane.xlu0 %2690
        %v2692 = vsel %vm1106, %v2671, 0.0
        %2693 = vadd.xlane.f32.xlu0 %v2692
        %v2694 = vpop.xlane.xlu0 %2693
        %v2695 = vsel %vm1106, %v2673, 0.0
        %2696 = vadd.xlane.f32.xlu0 %v2695
        %v2697 = vpop.xlane.xlu0 %2696
        %v2698 = vrcp.pop %v2676
        %v2699 = vrcp.pop %v2679
        %v2700 = vrcp.pop %v2682
        %v2701 = vrcp.pop %v2685
        %v2702 = vrcp.pop %v2688
        %v2703 = vrcp.pop %v2691
        %v2704 = vrcp.pop %v2694
        %v2705 = vrcp.pop %v2697
        %v2706 = vmul.f32 %v2659, %v2698
        %v2707 = vmul.f32 %v2661, %v2699
        %v2708 = vmul.f32 %v2663, %v2700
        %v2709 = vmul.f32 %v2665, %v2701
        %v2710 = vmul.f32 %v2667, %v2702
        %v2711 = vmul.f32 %v2669, %v2703
        %v2712 = vmul.f32 %v2671, %v2704
        %v2713 = vmul.f32 %v2673, %v2705
        %2722 = vrot.lane.b32.xlu0 %v2248, 96
        %v2723 = vpop.permute.xlu0 %2722
        %2724 = vrot.lane.b32.xlu0 %v2251, 96
        %v2725 = vpop.permute.xlu0 %2724
        %2726 = vrot.lane.b32.xlu0 %v2254, 96
        %v2727 = vpop.permute.xlu0 %2726
        %2728 = vrot.lane.b32.xlu0 %v2257, 96
        %v2729 = vpop.permute.xlu0 %2728
        %2730 = vrot.lane.b32.xlu0 %v2260, 96
        %v2731 = vpop.permute.xlu0 %2730
        %2732 = vrot.lane.b32.xlu0 %v2263, 96
        %v2733 = vpop.permute.xlu0 %2732
        %2734 = vrot.lane.b32.xlu0 %v2266, 96
        %v2735 = vpop.permute.xlu0 %2734
        %2736 = vrot.lane.b32.xlu0 %v2269, 96
        %v2737 = vpop.permute.xlu0 %2736
        %v2747 = vsel %vm1106, %v2706, 0
        %v2750 = vsel %vm1106, %v2707, 0
        %v2753 = vsel %vm1106, %v2708, 0
        %v2756 = vsel %vm1106, %v2709, 0
        %v2759 = vsel %vm1106, %v2710, 0
        %v2762 = vsel %vm1106, %v2711, 0
        %v2765 = vsel %vm1106, %v2712, 0
        %v2768 = vsel %vm1106, %v2713, 0
        %2770 = vmatpush.msra.mxu0 0.0
        %2771 = vmatpush.msra.mxu0 0.0
        %2772 = vmatpush.msra.mxu0 0.0
        %2773 = vmatpush.msra.mxu0 0.0
        %2774 = vmatpush.msra.mxu0 0.0
        %2775 = vmatpush.msra.mxu0 0.0
        %2776 = vmatpush.msra.mxu0 0.0
        %2777 = vmatpush.msra.mxu0 0.0
        %2778 = vmatpush.msra.mxu0 %v2737
        %2779 = vmatpush.msra.mxu0 %v2735
        %2780 = vmatpush.msra.mxu0 %v2733
        %2781 = vmatpush.msra.mxu0 %v2731
        %2782 = vmatpush.msra.mxu0 %v2729
        %2783 = vmatpush.msra.mxu0 %v2727
        %2784 = vmatpush.msra.mxu0 %v2725
        %2785 = vmatpush.msra.mxu0 %v2723
        %2786 = vmatmul.f32.gmra.mxu0 %v2747
        %v2787 = vpop.f32.mrf.mxu0
        %v2788 = vadd.f32 0.0, %v2787
        %2789 = vmatmul.f32.gmra.mxu0 %v2750
        %v2790 = vpop.f32.mrf.mxu0
        %v2791 = vadd.f32 0.0, %v2790
        %2792 = vmatmul.f32.gmra.mxu0 %v2753
        %v2793 = vpop.f32.mrf.mxu0
        %v2794 = vadd.f32 0.0, %v2793
        %2795 = vmatmul.f32.gmra.mxu0 %v2756
        %v2796 = vpop.f32.mrf.mxu0
        %v2797 = vadd.f32 0.0, %v2796
        %2798 = vmatmul.f32.gmra.mxu0 %v2759
        %v2799 = vpop.f32.mrf.mxu0
        %v2800 = vadd.f32 0.0, %v2799
        %2801 = vmatmul.f32.gmra.mxu0 %v2762
        %v2802 = vpop.f32.mrf.mxu0
        %v2803 = vadd.f32 0.0, %v2802
        %2804 = vmatmul.f32.gmra.mxu0 %v2765
        %v2805 = vpop.f32.mrf.mxu0
        %v2806 = vadd.f32 0.0, %v2805
        %2807 = vmatmul.f32.gmra.mxu0 %v2768
        %v2808 = vpop.f32.mrf.mxu0
        %v2809 = vadd.f32 0.0, %v2808
        %2810 = vdwg.mxu0
        %2819 = vrot.lane.b32.xlu0 %v2788, 32
        %v2820 = vpop.permute.xlu0 %2819
        %2821 = vrot.lane.b32.xlu0 %v2791, 32
        %v2822 = vpop.permute.xlu0 %2821
        %2823 = vrot.lane.b32.xlu0 %v2794, 32
        %v2824 = vpop.permute.xlu0 %2823
        %2825 = vrot.lane.b32.xlu0 %v2797, 32
        %v2826 = vpop.permute.xlu0 %2825
        %2827 = vrot.lane.b32.xlu0 %v2800, 32
        %v2828 = vpop.permute.xlu0 %2827
        %2829 = vrot.lane.b32.xlu0 %v2803, 32
        %v2830 = vpop.permute.xlu0 %2829
        %2831 = vrot.lane.b32.xlu0 %v2806, 32
        %v2832 = vpop.permute.xlu0 %2831
        %2833 = vrot.lane.b32.xlu0 %v2809, 32
        %v2834 = vpop.permute.xlu0 %2833
        %2843 = vst.msk [vmem:[%s2512] sm:$0xff] %vm1590, %v2820
        %2844 = vst.msk [vmem:[%s2512 + $0x8] sm:$0xff] %vm1590, %v2822
        %2845 = vst.msk [vmem:[%s2512 + $0x10] sm:$0xff] %vm1590, %v2824
        %2846 = vst.msk [vmem:[%s2512 + $0x18] sm:$0xff] %vm1590, %v2826
        %2847 = vst.msk [vmem:[%s2512 + $0x20] sm:$0xff] %vm1590, %v2828
        %2848 = vst.msk [vmem:[%s2512 + $0x28] sm:$0xff] %vm1590, %v2830
        %2849 = vst.msk [vmem:[%s2512 + $0x30] sm:$0xff] %vm1590, %v2832
        %2850 = vst.msk [vmem:[%s2512 + $0x38] sm:$0xff] %vm1590, %v2834
        %2851 = vrot.lane.b32.xlu0 %v2246, 64
        %v2852 = vpop.permute.xlu0 %2851
        %2853 = vrot.lane.b32.xlu0 %v2249, 64
        %v2854 = vpop.permute.xlu0 %2853
        %2855 = vrot.lane.b32.xlu0 %v2252, 64
        %v2856 = vpop.permute.xlu0 %2855
        %2857 = vrot.lane.b32.xlu0 %v2255, 64
        %v2858 = vpop.permute.xlu0 %2857
        %2859 = vrot.lane.b32.xlu0 %v2258, 64
        %v2860 = vpop.permute.xlu0 %2859
        %2861 = vrot.lane.b32.xlu0 %v2261, 64
        %v2862 = vpop.permute.xlu0 %2861
        %2863 = vrot.lane.b32.xlu0 %v2264, 64
        %v2864 = vpop.permute.xlu0 %2863
        %2865 = vrot.lane.b32.xlu0 %v2267, 64
        %v2866 = vpop.permute.xlu0 %2865
        %2867 = vrot.lane.b32.xlu0 %v2247, 64
        %v2868 = vpop.permute.xlu0 %2867
        %2869 = vrot.lane.b32.xlu0 %v2250, 64
        %v2870 = vpop.permute.xlu0 %2869
        %2871 = vrot.lane.b32.xlu0 %v2253, 64
        %v2872 = vpop.permute.xlu0 %2871
        %2873 = vrot.lane.b32.xlu0 %v2256, 64
        %v2874 = vpop.permute.xlu0 %2873
        %2875 = vrot.lane.b32.xlu0 %v2259, 64
        %v2876 = vpop.permute.xlu0 %2875
        %2877 = vrot.lane.b32.xlu0 %v2262, 64
        %v2878 = vpop.permute.xlu0 %2877
        %2879 = vrot.lane.b32.xlu0 %v2265, 64
        %v2880 = vpop.permute.xlu0 %2879
        %2881 = vrot.lane.b32.xlu0 %v2268, 64
        %v2882 = vpop.permute.xlu0 %2881
        %v2883 = vsel %vm1016, %v2852, 0
        %v2885 = vsel %vm1016, %v2854, 0
        %v2887 = vsel %vm1016, %v2856, 0
        %v2889 = vsel %vm1016, %v2858, 0
        %v2891 = vsel %vm1016, %v2860, 0
        %v2893 = vsel %vm1016, %v2862, 0
        %v2895 = vsel %vm1016, %v2864, 0
        %v2897 = vsel %vm1016, %v2866, 0
        %v2899 = vsel %vm1016, %v2868, 0
        %v2901 = vsel %vm1016, %v2870, 0
        %v2903 = vsel %vm1016, %v2872, 0
        %v2905 = vsel %vm1016, %v2874, 0
        %v2907 = vsel %vm1016, %v2876, 0
        %v2909 = vsel %vm1016, %v2878, 0
        %v2911 = vsel %vm1016, %v2880, 0
        %v2913 = vsel %vm1016, %v2882, 0
        %2915 = vmatpush.xpose.msra.mxu0 0.0
        %2916 = vmatpush.xpose.msra.mxu0 0.0
        %2917 = vmatpush.xpose.msra.mxu0 0.0
        %2918 = vmatpush.xpose.msra.mxu0 0.0
        %2919 = vmatpush.xpose.msra.mxu0 0.0
        %2920 = vmatpush.xpose.msra.mxu0 0.0
        %2921 = vmatpush.xpose.msra.mxu0 0.0
        %2922 = vmatpush.xpose.msra.mxu0 0.0
        %2923 = vmatpush.xpose.msra.mxu0 %v2913
        %2924 = vmatpush.xpose.msra.mxu0 %v2911
        %2925 = vmatpush.xpose.msra.mxu0 %v2909
        %2926 = vmatpush.xpose.msra.mxu0 %v2907
        %2927 = vmatpush.xpose.msra.mxu0 %v2905
        %2928 = vmatpush.xpose.msra.mxu0 %v2903
        %2929 = vmatpush.xpose.msra.mxu0 %v2901
        %2930 = vmatpush.xpose.msra.mxu0 %v2899
        %2931 = vmatmul.f32.gmra.mxu0 %v2883
        %v2932 = vpop.f32.mrf.mxu0
        %v2933 = vadd.f32 0.0, %v2932
        %2934 = vmatmul.f32.gmra.mxu0 %v2885
        %v2935 = vpop.f32.mrf.mxu0
        %v2936 = vadd.f32 0.0, %v2935
        %2937 = vmatmul.f32.gmra.mxu0 %v2887
        %v2938 = vpop.f32.mrf.mxu0
        %v2939 = vadd.f32 0.0, %v2938
        %2940 = vmatmul.f32.gmra.mxu0 %v2889
        %v2941 = vpop.f32.mrf.mxu0
        %v2942 = vadd.f32 0.0, %v2941
        %2943 = vmatmul.f32.gmra.mxu0 %v2891
        %v2944 = vpop.f32.mrf.mxu0
        %v2945 = vadd.f32 0.0, %v2944
        %2946 = vmatmul.f32.gmra.mxu0 %v2893
        %v2947 = vpop.f32.mrf.mxu0
        %v2948 = vadd.f32 0.0, %v2947
        %2949 = vmatmul.f32.gmra.mxu0 %v2895
        %v2950 = vpop.f32.mrf.mxu0
        %v2951 = vadd.f32 0.0, %v2950
        %2952 = vmatmul.f32.gmra.mxu0 %v2897
        %v2953 = vpop.f32.mrf.mxu0
        %v2954 = vadd.f32 0.0, %v2953
        %2955 = vdwg.mxu0
        %v2956 = vsel %vm1106, %v2933, -inf
        %2957 = vmax.xlane.f32.xlu0 %v2956
        %v2958 = vpop.xlane.xlu0 %2957
        %v2959 = vsel %vm1106, %v2936, -inf
        %2960 = vmax.xlane.f32.xlu0 %v2959
        %v2961 = vpop.xlane.xlu0 %2960
        %v2962 = vsel %vm1106, %v2939, -inf
        %2963 = vmax.xlane.f32.xlu0 %v2962
        %v2964 = vpop.xlane.xlu0 %2963
        %v2965 = vsel %vm1106, %v2942, -inf
        %2966 = vmax.xlane.f32.xlu0 %v2965
        %v2967 = vpop.xlane.xlu0 %2966
        %v2968 = vsel %vm1106, %v2945, -inf
        %2969 = vmax.xlane.f32.xlu0 %v2968
        %v2970 = vpop.xlane.xlu0 %2969
        %v2971 = vsel %vm1106, %v2948, -inf
        %2972 = vmax.xlane.f32.xlu0 %v2971
        %v2973 = vpop.xlane.xlu0 %2972
        %v2974 = vsel %vm1106, %v2951, -inf
        %2975 = vmax.xlane.f32.xlu0 %v2974
        %v2976 = vpop.xlane.xlu0 %2975
        %v2977 = vsel %vm1106, %v2954, -inf
        %2978 = vmax.xlane.f32.xlu0 %v2977
        %v2979 = vpop.xlane.xlu0 %2978
        %v2980 = vsub.f32 %v2933, %v2958
        %v2981 = vsub.f32 %v2936, %v2961
        %v2982 = vsub.f32 %v2939, %v2964
        %v2983 = vsub.f32 %v2942, %v2967
        %v2984 = vsub.f32 %v2945, %v2970
        %v2985 = vsub.f32 %v2948, %v2973
        %v2986 = vsub.f32 %v2951, %v2976
        %v2987 = vsub.f32 %v2954, %v2979
        %v2988 = vmul.f32 %v2980, 1.442695
        %v2989 = vpow.pop %v2988
        %v2990 = vmul.f32 %v2981, 1.442695
        %v2991 = vpow.pop %v2990
        %v2992 = vmul.f32 %v2982, 1.442695
        %v2993 = vpow.pop %v2992
        %v2994 = vmul.f32 %v2983, 1.442695
        %v2995 = vpow.pop %v2994
        %v2996 = vmul.f32 %v2984, 1.442695
        %v2997 = vpow.pop %v2996
        %v2998 = vmul.f32 %v2985, 1.442695
        %v2999 = vpow.pop %v2998
        %v3000 = vmul.f32 %v2986, 1.442695
        %v3001 = vpow.pop %v3000
        %v3002 = vmul.f32 %v2987, 1.442695
        %v3003 = vpow.pop %v3002
        %v3004 = vsel %vm1106, %v2989, 0.0
        %3005 = vadd.xlane.f32.xlu0 %v3004
        %v3006 = vpop.xlane.xlu0 %3005
        %v3007 = vsel %vm1106, %v2991, 0.0
        %3008 = vadd.xlane.f32.xlu0 %v3007
        %v3009 = vpop.xlane.xlu0 %3008
        %v3010 = vsel %vm1106, %v2993, 0.0
        %3011 = vadd.xlane.f32.xlu0 %v3010
        %v3012 = vpop.xlane.xlu0 %3011
        %v3013 = vsel %vm1106, %v2995, 0.0
        %3014 = vadd.xlane.f32.xlu0 %v3013
        %v3015 = vpop.xlane.xlu0 %3014
        %v3016 = vsel %vm1106, %v2997, 0.0
        %3017 = vadd.xlane.f32.xlu0 %v3016
        %v3018 = vpop.xlane.xlu0 %3017
        %v3019 = vsel %vm1106, %v2999, 0.0
        %3020 = vadd.xlane.f32.xlu0 %v3019
        %v3021 = vpop.xlane.xlu0 %3020
        %v3022 = vsel %vm1106, %v3001, 0.0
        %3023 = vadd.xlane.f32.xlu0 %v3022
        %v3024 = vpop.xlane.xlu0 %3023
        %v3025 = vsel %vm1106, %v3003, 0.0
        %3026 = vadd.xlane.f32.xlu0 %v3025
        %v3027 = vpop.xlane.xlu0 %3026
        %v3028 = vrcp.pop %v3006
        %v3029 = vrcp.pop %v3009
        %v3030 = vrcp.pop %v3012
        %v3031 = vrcp.pop %v3015
        %v3032 = vrcp.pop %v3018
        %v3033 = vrcp.pop %v3021
        %v3034 = vrcp.pop %v3024
        %v3035 = vrcp.pop %v3027
        %v3036 = vmul.f32 %v2989, %v3028
        %v3037 = vmul.f32 %v2991, %v3029
        %v3038 = vmul.f32 %v2993, %v3030
        %v3039 = vmul.f32 %v2995, %v3031
        %v3040 = vmul.f32 %v2997, %v3032
        %v3041 = vmul.f32 %v2999, %v3033
        %v3042 = vmul.f32 %v3001, %v3034
        %v3043 = vmul.f32 %v3003, %v3035
        %3044 = vrot.lane.b32.xlu0 %v2248, 64
        %v3045 = vpop.permute.xlu0 %3044
        %3046 = vrot.lane.b32.xlu0 %v2251, 64
        %v3047 = vpop.permute.xlu0 %3046
        %3048 = vrot.lane.b32.xlu0 %v2254, 64
        %v3049 = vpop.permute.xlu0 %3048
        %3050 = vrot.lane.b32.xlu0 %v2257, 64
        %v3051 = vpop.permute.xlu0 %3050
        %3052 = vrot.lane.b32.xlu0 %v2260, 64
        %v3053 = vpop.permute.xlu0 %3052
        %3054 = vrot.lane.b32.xlu0 %v2263, 64
        %v3055 = vpop.permute.xlu0 %3054
        %3056 = vrot.lane.b32.xlu0 %v2266, 64
        %v3057 = vpop.permute.xlu0 %3056
        %3058 = vrot.lane.b32.xlu0 %v2269, 64
        %v3059 = vpop.permute.xlu0 %3058
        %v3069 = vsel %vm1106, %v3036, 0
        %v3072 = vsel %vm1106, %v3037, 0
        %v3075 = vsel %vm1106, %v3038, 0
        %v3078 = vsel %vm1106, %v3039, 0
        %v3081 = vsel %vm1106, %v3040, 0
        %v3084 = vsel %vm1106, %v3041, 0
        %v3087 = vsel %vm1106, %v3042, 0
        %v3090 = vsel %vm1106, %v3043, 0
        %3092 = vmatpush.msra.mxu0 0.0
        %3093 = vmatpush.msra.mxu0 0.0
        %3094 = vmatpush.msra.mxu0 0.0
        %3095 = vmatpush.msra.mxu0 0.0
        %3096 = vmatpush.msra.mxu0 0.0
        %3097 = vmatpush.msra.mxu0 0.0
        %3098 = vmatpush.msra.mxu0 0.0
        %3099 = vmatpush.msra.mxu0 0.0
        %3100 = vmatpush.msra.mxu0 %v3059
        %3101 = vmatpush.msra.mxu0 %v3057
        %3102 = vmatpush.msra.mxu0 %v3055
        %3103 = vmatpush.msra.mxu0 %v3053
        %3104 = vmatpush.msra.mxu0 %v3051
        %3105 = vmatpush.msra.mxu0 %v3049
        %3106 = vmatpush.msra.mxu0 %v3047
        %3107 = vmatpush.msra.mxu0 %v3045
        %3108 = vmatmul.f32.gmra.mxu0 %v3069
        %v3109 = vpop.f32.mrf.mxu0
        %v3110 = vadd.f32 0.0, %v3109
        %3111 = vmatmul.f32.gmra.mxu0 %v3072
        %v3112 = vpop.f32.mrf.mxu0
        %v3113 = vadd.f32 0.0, %v3112
        %3114 = vmatmul.f32.gmra.mxu0 %v3075
        %v3115 = vpop.f32.mrf.mxu0
        %v3116 = vadd.f32 0.0, %v3115
        %3117 = vmatmul.f32.gmra.mxu0 %v3078
        %v3118 = vpop.f32.mrf.mxu0
        %v3119 = vadd.f32 0.0, %v3118
        %3120 = vmatmul.f32.gmra.mxu0 %v3081
        %v3121 = vpop.f32.mrf.mxu0
        %v3122 = vadd.f32 0.0, %v3121
        %3123 = vmatmul.f32.gmra.mxu0 %v3084
        %v3124 = vpop.f32.mrf.mxu0
        %v3125 = vadd.f32 0.0, %v3124
        %3126 = vmatmul.f32.gmra.mxu0 %v3087
        %v3127 = vpop.f32.mrf.mxu0
        %v3128 = vadd.f32 0.0, %v3127
        %3129 = vmatmul.f32.gmra.mxu0 %v3090
        %v3130 = vpop.f32.mrf.mxu0
        %v3131 = vadd.f32 0.0, %v3130
        %3132 = vdwg.mxu0
        %3141 = vrot.lane.b32.xlu0 %v3110, 64
        %v3142 = vpop.permute.xlu0 %3141
        %3143 = vrot.lane.b32.xlu0 %v3113, 64
        %v3144 = vpop.permute.xlu0 %3143
        %3145 = vrot.lane.b32.xlu0 %v3116, 64
        %v3146 = vpop.permute.xlu0 %3145
        %3147 = vrot.lane.b32.xlu0 %v3119, 64
        %v3148 = vpop.permute.xlu0 %3147
        %3149 = vrot.lane.b32.xlu0 %v3122, 64
        %v3150 = vpop.permute.xlu0 %3149
        %3151 = vrot.lane.b32.xlu0 %v3125, 64
        %v3152 = vpop.permute.xlu0 %3151
        %3153 = vrot.lane.b32.xlu0 %v3128, 64
        %v3154 = vpop.permute.xlu0 %3153
        %3155 = vrot.lane.b32.xlu0 %v3131, 64
        %v3156 = vpop.permute.xlu0 %3155
        %3165 = vst.msk [vmem:[%s2512] sm:$0xff] %vm1913, %v3142
        %3166 = vst.msk [vmem:[%s2512 + $0x8] sm:$0xff] %vm1913, %v3144
        %3167 = vst.msk [vmem:[%s2512 + $0x10] sm:$0xff] %vm1913, %v3146
        %3168 = vst.msk [vmem:[%s2512 + $0x18] sm:$0xff] %vm1913, %v3148
        %3169 = vst.msk [vmem:[%s2512 + $0x20] sm:$0xff] %vm1913, %v3150
        %3170 = vst.msk [vmem:[%s2512 + $0x28] sm:$0xff] %vm1913, %v3152
        %3171 = vst.msk [vmem:[%s2512 + $0x30] sm:$0xff] %vm1913, %v3154
        %3172 = vst.msk [vmem:[%s2512 + $0x38] sm:$0xff] %vm1913, %v3156
        %3173 = vrot.lane.b32.xlu0 %v2246, 32
        %v3174 = vpop.permute.xlu0 %3173
        %3175 = vrot.lane.b32.xlu0 %v2249, 32
        %v3176 = vpop.permute.xlu0 %3175
        %3177 = vrot.lane.b32.xlu0 %v2252, 32
        %v3178 = vpop.permute.xlu0 %3177
        %3179 = vrot.lane.b32.xlu0 %v2255, 32
        %v3180 = vpop.permute.xlu0 %3179
        %3181 = vrot.lane.b32.xlu0 %v2258, 32
        %v3182 = vpop.permute.xlu0 %3181
        %3183 = vrot.lane.b32.xlu0 %v2261, 32
        %v3184 = vpop.permute.xlu0 %3183
        %3185 = vrot.lane.b32.xlu0 %v2264, 32
        %v3186 = vpop.permute.xlu0 %3185
        %3187 = vrot.lane.b32.xlu0 %v2267, 32
        %v3188 = vpop.permute.xlu0 %3187
        %3189 = vrot.lane.b32.xlu0 %v2247, 32
        %v3190 = vpop.permute.xlu0 %3189
        %3191 = vrot.lane.b32.xlu0 %v2250, 32
        %v3192 = vpop.permute.xlu0 %3191
        %3193 = vrot.lane.b32.xlu0 %v2253, 32
        %v3194 = vpop.permute.xlu0 %3193
        %3195 = vrot.lane.b32.xlu0 %v2256, 32
        %v3196 = vpop.permute.xlu0 %3195
        %3197 = vrot.lane.b32.xlu0 %v2259, 32
        %v3198 = vpop.permute.xlu0 %3197
        %3199 = vrot.lane.b32.xlu0 %v2262, 32
        %v3200 = vpop.permute.xlu0 %3199
        %3201 = vrot.lane.b32.xlu0 %v2265, 32
        %v3202 = vpop.permute.xlu0 %3201
        %3203 = vrot.lane.b32.xlu0 %v2268, 32
        %v3204 = vpop.permute.xlu0 %3203
        %v3205 = vsel %vm1016, %v3174, 0
        %v3207 = vsel %vm1016, %v3176, 0
        %v3209 = vsel %vm1016, %v3178, 0
        %v3211 = vsel %vm1016, %v3180, 0
        %v3213 = vsel %vm1016, %v3182, 0
        %v3215 = vsel %vm1016, %v3184, 0
        %v3217 = vsel %vm1016, %v3186, 0
        %v3219 = vsel %vm1016, %v3188, 0
        %v3221 = vsel %vm1016, %v3190, 0
        %v3223 = vsel %vm1016, %v3192, 0
        %v3225 = vsel %vm1016, %v3194, 0
        %v3227 = vsel %vm1016, %v3196, 0
        %v3229 = vsel %vm1016, %v3198, 0
        %v3231 = vsel %vm1016, %v3200, 0
        %v3233 = vsel %vm1016, %v3202, 0
        %v3235 = vsel %vm1016, %v3204, 0
        %3237 = vmatpush.xpose.msra.mxu0 0.0
        %3238 = vmatpush.xpose.msra.mxu0 0.0
        %3239 = vmatpush.xpose.msra.mxu0 0.0
        %3240 = vmatpush.xpose.msra.mxu0 0.0
        %3241 = vmatpush.xpose.msra.mxu0 0.0
        %3242 = vmatpush.xpose.msra.mxu0 0.0
        %3243 = vmatpush.xpose.msra.mxu0 0.0
        %3244 = vmatpush.xpose.msra.mxu0 0.0
        %3245 = vmatpush.xpose.msra.mxu0 %v3235
        %3246 = vmatpush.xpose.msra.mxu0 %v3233
        %3247 = vmatpush.xpose.msra.mxu0 %v3231
        %3248 = vmatpush.xpose.msra.mxu0 %v3229
        %3249 = vmatpush.xpose.msra.mxu0 %v3227
        %3250 = vmatpush.xpose.msra.mxu0 %v3225
        %3251 = vmatpush.xpose.msra.mxu0 %v3223
        %3252 = vmatpush.xpose.msra.mxu0 %v3221
        %3253 = vmatmul.f32.gmra.mxu0 %v3205
        %v3254 = vpop.f32.mrf.mxu0
        %v3255 = vadd.f32 0.0, %v3254
        %3256 = vmatmul.f32.gmra.mxu0 %v3207
        %v3257 = vpop.f32.mrf.mxu0
        %v3258 = vadd.f32 0.0, %v3257
        %3259 = vmatmul.f32.gmra.mxu0 %v3209
        %v3260 = vpop.f32.mrf.mxu0
        %v3261 = vadd.f32 0.0, %v3260
        %3262 = vmatmul.f32.gmra.mxu0 %v3211
        %v3263 = vpop.f32.mrf.mxu0
        %v3264 = vadd.f32 0.0, %v3263
        %3265 = vmatmul.f32.gmra.mxu0 %v3213
        %v3266 = vpop.f32.mrf.mxu0
        %v3267 = vadd.f32 0.0, %v3266
        %3268 = vmatmul.f32.gmra.mxu0 %v3215
        %v3269 = vpop.f32.mrf.mxu0
        %v3270 = vadd.f32 0.0, %v3269
        %3271 = vmatmul.f32.gmra.mxu0 %v3217
        %v3272 = vpop.f32.mrf.mxu0
        %v3273 = vadd.f32 0.0, %v3272
        %3274 = vmatmul.f32.gmra.mxu0 %v3219
        %v3275 = vpop.f32.mrf.mxu0
        %v3276 = vadd.f32 0.0, %v3275
        %3277 = vdwg.mxu0
        %v3278 = vsel %vm1106, %v3255, -inf
        %3279 = vmax.xlane.f32.xlu0 %v3278
        %v3280 = vpop.xlane.xlu0 %3279
        %v3281 = vsel %vm1106, %v3258, -inf
        %3282 = vmax.xlane.f32.xlu0 %v3281
        %v3283 = vpop.xlane.xlu0 %3282
        %v3284 = vsel %vm1106, %v3261, -inf
        %3285 = vmax.xlane.f32.xlu0 %v3284
        %v3286 = vpop.xlane.xlu0 %3285
        %v3287 = vsel %vm1106, %v3264, -inf
        %3288 = vmax.xlane.f32.xlu0 %v3287
        %v3289 = vpop.xlane.xlu0 %3288
        %v3290 = vsel %vm1106, %v3267, -inf
        %3291 = vmax.xlane.f32.xlu0 %v3290
        %v3292 = vpop.xlane.xlu0 %3291
        %v3293 = vsel %vm1106, %v3270, -inf
        %3294 = vmax.xlane.f32.xlu0 %v3293
        %v3295 = vpop.xlane.xlu0 %3294
        %v3296 = vsel %vm1106, %v3273, -inf
        %3297 = vmax.xlane.f32.xlu0 %v3296
        %v3298 = vpop.xlane.xlu0 %3297
        %v3299 = vsel %vm1106, %v3276, -inf
        %3300 = vmax.xlane.f32.xlu0 %v3299
        %v3301 = vpop.xlane.xlu0 %3300
        %v3302 = vsub.f32 %v3255, %v3280
        %v3303 = vsub.f32 %v3258, %v3283
        %v3304 = vsub.f32 %v3261, %v3286
        %v3305 = vsub.f32 %v3264, %v3289
        %v3306 = vsub.f32 %v3267, %v3292
        %v3307 = vsub.f32 %v3270, %v3295
        %v3308 = vsub.f32 %v3273, %v3298
        %v3309 = vsub.f32 %v3276, %v3301
        %v3310 = vmul.f32 %v3302, 1.442695
        %v3311 = vpow.pop %v3310
        %v3312 = vmul.f32 %v3303, 1.442695
        %v3313 = vpow.pop %v3312
        %v3314 = vmul.f32 %v3304, 1.442695
        %v3315 = vpow.pop %v3314
        %v3316 = vmul.f32 %v3305, 1.442695
        %v3317 = vpow.pop %v3316
        %v3318 = vmul.f32 %v3306, 1.442695
        %v3319 = vpow.pop %v3318
        %v3320 = vmul.f32 %v3307, 1.442695
        %v3321 = vpow.pop %v3320
        %v3322 = vmul.f32 %v3308, 1.442695
        %v3323 = vpow.pop %v3322
        %v3324 = vmul.f32 %v3309, 1.442695
        %v3325 = vpow.pop %v3324
        %v3326 = vsel %vm1106, %v3311, 0.0
        %3327 = vadd.xlane.f32.xlu0 %v3326
        %v3328 = vpop.xlane.xlu0 %3327
        %v3329 = vsel %vm1106, %v3313, 0.0
        %3330 = vadd.xlane.f32.xlu0 %v3329
        %v3331 = vpop.xlane.xlu0 %3330
        %v3332 = vsel %vm1106, %v3315, 0.0
        %3333 = vadd.xlane.f32.xlu0 %v3332
        %v3334 = vpop.xlane.xlu0 %3333
        %v3335 = vsel %vm1106, %v3317, 0.0
        %3336 = vadd.xlane.f32.xlu0 %v3335
        %v3337 = vpop.xlane.xlu0 %3336
        %v3338 = vsel %vm1106, %v3319, 0.0
        %3339 = vadd.xlane.f32.xlu0 %v3338
        %v3340 = vpop.xlane.xlu0 %3339
        %v3341 = vsel %vm1106, %v3321, 0.0
        %3342 = vadd.xlane.f32.xlu0 %v3341
        %v3343 = vpop.xlane.xlu0 %3342
        %v3344 = vsel %vm1106, %v3323, 0.0
        %3345 = vadd.xlane.f32.xlu0 %v3344
        %v3346 = vpop.xlane.xlu0 %3345
        %v3347 = vsel %vm1106, %v3325, 0.0
        %3348 = vadd.xlane.f32.xlu0 %v3347
        %v3349 = vpop.xlane.xlu0 %3348
        %v3350 = vrcp.pop %v3328
        %v3351 = vrcp.pop %v3331
        %v3352 = vrcp.pop %v3334
        %v3353 = vrcp.pop %v3337
        %v3354 = vrcp.pop %v3340
        %v3355 = vrcp.pop %v3343
        %v3356 = vrcp.pop %v3346
        %v3357 = vrcp.pop %v3349
        %v3358 = vmul.f32 %v3311, %v3350
        %v3359 = vmul.f32 %v3313, %v3351
        %v3360 = vmul.f32 %v3315, %v3352
        %v3361 = vmul.f32 %v3317, %v3353
        %v3362 = vmul.f32 %v3319, %v3354
        %v3363 = vmul.f32 %v3321, %v3355
        %v3364 = vmul.f32 %v3323, %v3356
        %v3365 = vmul.f32 %v3325, %v3357
        %3366 = vrot.lane.b32.xlu0 %v2248, 32
        %v3367 = vpop.permute.xlu0 %3366
        %3368 = vrot.lane.b32.xlu0 %v2251, 32
        %v3369 = vpop.permute.xlu0 %3368
        %3370 = vrot.lane.b32.xlu0 %v2254, 32
        %v3371 = vpop.permute.xlu0 %3370
        %3372 = vrot.lane.b32.xlu0 %v2257, 32
        %v3373 = vpop.permute.xlu0 %3372
        %3374 = vrot.lane.b32.xlu0 %v2260, 32
        %v3375 = vpop.permute.xlu0 %3374
        %3376 = vrot.lane.b32.xlu0 %v2263, 32
        %v3377 = vpop.permute.xlu0 %3376
        %3378 = vrot.lane.b32.xlu0 %v2266, 32
        %v3379 = vpop.permute.xlu0 %3378
        %3380 = vrot.lane.b32.xlu0 %v2269, 32
        %v3381 = vpop.permute.xlu0 %3380
        %v3391 = vsel %vm1106, %v3358, 0
        %v3394 = vsel %vm1106, %v3359, 0
        %v3397 = vsel %vm1106, %v3360, 0
        %v3400 = vsel %vm1106, %v3361, 0
        %v3403 = vsel %vm1106, %v3362, 0
        %v3406 = vsel %vm1106, %v3363, 0
        %v3409 = vsel %vm1106, %v3364, 0
        %v3412 = vsel %vm1106, %v3365, 0
        %3414 = vmatpush.msra.mxu0 0.0
        %3415 = vmatpush.msra.mxu0 0.0
        %3416 = vmatpush.msra.mxu0 0.0
        %3417 = vmatpush.msra.mxu0 0.0
        %3418 = vmatpush.msra.mxu0 0.0
        %3419 = vmatpush.msra.mxu0 0.0
        %3420 = vmatpush.msra.mxu0 0.0
        %3421 = vmatpush.msra.mxu0 0.0
        %3422 = vmatpush.msra.mxu0 %v3381
        %3423 = vmatpush.msra.mxu0 %v3379
        %3424 = vmatpush.msra.mxu0 %v3377
        %3425 = vmatpush.msra.mxu0 %v3375
        %3426 = vmatpush.msra.mxu0 %v3373
        %3427 = vmatpush.msra.mxu0 %v3371
        %3428 = vmatpush.msra.mxu0 %v3369
        %3429 = vmatpush.msra.mxu0 %v3367
        %3430 = vmatmul.f32.gmra.mxu0 %v3391
        %v3431 = vpop.f32.mrf.mxu0
        %v3432 = vadd.f32 0.0, %v3431
        %3433 = vmatmul.f32.gmra.mxu0 %v3394
        %v3434 = vpop.f32.mrf.mxu0
        %v3435 = vadd.f32 0.0, %v3434
        %3436 = vmatmul.f32.gmra.mxu0 %v3397
        %v3437 = vpop.f32.mrf.mxu0
        %v3438 = vadd.f32 0.0, %v3437
        %3439 = vmatmul.f32.gmra.mxu0 %v3400
        %v3440 = vpop.f32.mrf.mxu0
        %v3441 = vadd.f32 0.0, %v3440
        %3442 = vmatmul.f32.gmra.mxu0 %v3403
        %v3443 = vpop.f32.mrf.mxu0
        %v3444 = vadd.f32 0.0, %v3443
        %3445 = vmatmul.f32.gmra.mxu0 %v3406
        %v3446 = vpop.f32.mrf.mxu0
        %v3447 = vadd.f32 0.0, %v3446
        %3448 = vmatmul.f32.gmra.mxu0 %v3409
        %v3449 = vpop.f32.mrf.mxu0
        %v3450 = vadd.f32 0.0, %v3449
        %3451 = vmatmul.f32.gmra.mxu0 %v3412
        %v3452 = vpop.f32.mrf.mxu0
        %v3453 = vadd.f32 0.0, %v3452
        %3454 = vdwg.mxu0
        %3463 = vrot.lane.b32.xlu0 %v3432, 96
        %v3464 = vpop.permute.xlu0 %3463
        %3465 = vrot.lane.b32.xlu0 %v3435, 96
        %v3466 = vpop.permute.xlu0 %3465
        %3467 = vrot.lane.b32.xlu0 %v3438, 96
        %v3468 = vpop.permute.xlu0 %3467
        %3469 = vrot.lane.b32.xlu0 %v3441, 96
        %v3470 = vpop.permute.xlu0 %3469
        %3471 = vrot.lane.b32.xlu0 %v3444, 96
        %v3472 = vpop.permute.xlu0 %3471
        %3473 = vrot.lane.b32.xlu0 %v3447, 96
        %v3474 = vpop.permute.xlu0 %3473
        %3475 = vrot.lane.b32.xlu0 %v3450, 96
        %v3476 = vpop.permute.xlu0 %3475
        %3477 = vrot.lane.b32.xlu0 %v3453, 96
        %v3478 = vpop.permute.xlu0 %3477
        %3487 = vst.msk [vmem:[%s2512] sm:$0xff] %vm2236, %v3464
        %3488 = vst.msk [vmem:[%s2512 + $0x8] sm:$0xff] %vm2236, %v3466
        %3489 = vst.msk [vmem:[%s2512 + $0x10] sm:$0xff] %vm2236, %v3468
        %3490 = vst.msk [vmem:[%s2512 + $0x18] sm:$0xff] %vm2236, %v3470
        %3491 = vst.msk [vmem:[%s2512 + $0x20] sm:$0xff] %vm2236, %v3472
        %3492 = vst.msk [vmem:[%s2512 + $0x28] sm:$0xff] %vm2236, %v3474
        %3493 = vst.msk [vmem:[%s2512 + $0x30] sm:$0xff] %vm2236, %v3476
        %3494 = vst.msk [vmem:[%s2512 + $0x38] sm:$0xff] %vm2236, %v3478
        %v3495 = vld [vmem:[#allocation3] sm:$0xff]
        %v3496 = vld [vmem:[#allocation3 + $0x8] sm:$0xff]
        %v3497 = vld [vmem:[#allocation3 + $0x10] sm:$0xff]
        %v3498 = vld [vmem:[#allocation3 + $0x18] sm:$0xff]
        %v3499 = vld [vmem:[#allocation3 + $0x20] sm:$0xff]
        %v3500 = vld [vmem:[#allocation3 + $0x28] sm:$0xff]
        %v3501 = vld [vmem:[#allocation3 + $0x30] sm:$0xff]
        %v3502 = vld [vmem:[#allocation3 + $0x38] sm:$0xff]
        %v3503 = vld [vmem:[#allocation3 + $0x40] sm:$0xff]
        %v3504 = vld [vmem:[#allocation3 + $0x48] sm:$0xff]
        %v3505 = vld [vmem:[#allocation3 + $0x50] sm:$0xff]
        %v3506 = vld [vmem:[#allocation3 + $0x58] sm:$0xff]
        %v3507 = vld [vmem:[#allocation3 + $0x60] sm:$0xff]
        %v3508 = vld [vmem:[#allocation3 + $0x68] sm:$0xff]
        %v3509 = vld [vmem:[#allocation3 + $0x70] sm:$0xff]
        %v3510 = vld [vmem:[#allocation3 + $0x78] sm:$0xff]
        %v3511 = vld [vmem:[#allocation12] sm:$0xff]
        %v3512 = vld [vmem:[#allocation12 + $0x8] sm:$0xff]
        %v3513 = vld [vmem:[#allocation12 + $0x10] sm:$0xff]
        %v3514 = vld [vmem:[#allocation12 + $0x18] sm:$0xff]
        %v3515 = vld [vmem:[#allocation12 + $0x20] sm:$0xff]
        %v3516 = vld [vmem:[#allocation12 + $0x28] sm:$0xff]
        %v3517 = vld [vmem:[#allocation12 + $0x30] sm:$0xff]
        %v3518 = vld [vmem:[#allocation12 + $0x38] sm:$0xff]
        %v3519 = vld [vmem:[#allocation12 + $0x40] sm:$0xff]
        %v3520 = vld [vmem:[#allocation12 + $0x48] sm:$0xff]
        %v3521 = vld [vmem:[#allocation12 + $0x50] sm:$0xff]
        %v3522 = vld [vmem:[#allocation12 + $0x58] sm:$0xff]
        %v3523 = vld [vmem:[#allocation12 + $0x60] sm:$0xff]
        %v3524 = vld [vmem:[#allocation12 + $0x68] sm:$0xff]
        %v3525 = vld [vmem:[#allocation12 + $0x70] sm:$0xff]
        %v3526 = vld [vmem:[#allocation12 + $0x78] sm:$0xff]
        %v3527 = vld [vmem:[%s7] sm:$0x1]
        %v3529 = vperm.slane %v3527, 0
        %3531 = vmatpush.msra.mxu0 %v3526
        %3532 = vmatpush.msra.mxu0 %v3525
        %3533 = vmatpush.msra.mxu0 %v3524
        %3534 = vmatpush.msra.mxu0 %v3523
        %3535 = vmatpush.msra.mxu0 %v3522
        %3536 = vmatpush.msra.mxu0 %v3521
        %3537 = vmatpush.msra.mxu0 %v3520
        %3538 = vmatpush.msra.mxu0 %v3519
        %3539 = vmatpush.msra.mxu0 %v3518
        %3540 = vmatpush.msra.mxu0 %v3517
        %3541 = vmatpush.msra.mxu0 %v3516
        %3542 = vmatpush.msra.mxu0 %v3515
        %3543 = vmatpush.msra.mxu0 %v3514
        %3544 = vmatpush.msra.mxu0 %v3513
        %3545 = vmatpush.msra.mxu0 %v3512
        %3546 = vmatpush.msra.mxu0 %v3511
        %3547 = vmatmul.f32.gmra.mxu0 %v3495
        %v3548 = vpop.f32.mrf.mxu0
        %v3549 = vadd.f32 %v3529, %v3548
        %3550 = vmatmul.f32.gmra.mxu0 %v3496
        %v3551 = vpop.f32.mrf.mxu0
        %v3552 = vadd.f32 %v3529, %v3551
        %3553 = vmatmul.f32.gmra.mxu0 %v3497
        %v3554 = vpop.f32.mrf.mxu0
        %v3555 = vadd.f32 %v3529, %v3554
        %3556 = vmatmul.f32.gmra.mxu0 %v3498
        %v3557 = vpop.f32.mrf.mxu0
        %v3558 = vadd.f32 %v3529, %v3557
        %3559 = vmatmul.f32.gmra.mxu0 %v3499
        %v3560 = vpop.f32.mrf.mxu0
        %v3561 = vadd.f32 %v3529, %v3560
        %3562 = vmatmul.f32.gmra.mxu0 %v3500
        %v3563 = vpop.f32.mrf.mxu0
        %v3564 = vadd.f32 %v3529, %v3563
        %3565 = vmatmul.f32.gmra.mxu0 %v3501
        %v3566 = vpop.f32.mrf.mxu0
        %v3567 = vadd.f32 %v3529, %v3566
        %3568 = vmatmul.f32.gmra.mxu0 %v3502
        %v3569 = vpop.f32.mrf.mxu0
        %v3570 = vadd.f32 %v3529, %v3569
        %3571 = vmatmul.f32.gmra.mxu0 %v3503
        %v3572 = vpop.f32.mrf.mxu0
        %v3573 = vadd.f32 %v3529, %v3572
        %3574 = vmatmul.f32.gmra.mxu0 %v3504
        %v3575 = vpop.f32.mrf.mxu0
        %v3576 = vadd.f32 %v3529, %v3575
        %3577 = vmatmul.f32.gmra.mxu0 %v3505
        %v3578 = vpop.f32.mrf.mxu0
        %v3579 = vadd.f32 %v3529, %v3578
        %3580 = vmatmul.f32.gmra.mxu0 %v3506
        %v3581 = vpop.f32.mrf.mxu0
        %v3582 = vadd.f32 %v3529, %v3581
        %3583 = vmatmul.f32.gmra.mxu0 %v3507
        %v3584 = vpop.f32.mrf.mxu0
        %v3585 = vadd.f32 %v3529, %v3584
        %3586 = vmatmul.f32.gmra.mxu0 %v3508
        %v3587 = vpop.f32.mrf.mxu0
        %v3588 = vadd.f32 %v3529, %v3587
        %3589 = vmatmul.f32.gmra.mxu0 %v3509
        %v3590 = vpop.f32.mrf.mxu0
        %v3591 = vadd.f32 %v3529, %v3590
        %3592 = vmatmul.f32.gmra.mxu0 %v3510
        %v3593 = vpop.f32.mrf.mxu0
        %v3594 = vadd.f32 %v3529, %v3593
        %3595 = vdwg.mxu0
        %v3596 = vld [vmem:[#allocation13] sm:$0xff]
        %v3597 = vld [vmem:[#allocation13 + $0x8] sm:$0xff]
        %v3598 = vld [vmem:[#allocation13 + $0x10] sm:$0xff]
        %v3599 = vld [vmem:[#allocation13 + $0x18] sm:$0xff]
        %v3600 = vld [vmem:[#allocation13 + $0x20] sm:$0xff]
        %v3601 = vld [vmem:[#allocation13 + $0x28] sm:$0xff]
        %v3602 = vld [vmem:[#allocation13 + $0x30] sm:$0xff]
        %v3603 = vld [vmem:[#allocation13 + $0x38] sm:$0xff]
        %v3604 = vld [vmem:[#allocation13 + $0x40] sm:$0xff]
        %v3605 = vld [vmem:[#allocation13 + $0x48] sm:$0xff]
        %v3606 = vld [vmem:[#allocation13 + $0x50] sm:$0xff]
        %v3607 = vld [vmem:[#allocation13 + $0x58] sm:$0xff]
        %v3608 = vld [vmem:[#allocation13 + $0x60] sm:$0xff]
        %v3609 = vld [vmem:[#allocation13 + $0x68] sm:$0xff]
        %v3610 = vld [vmem:[#allocation13 + $0x70] sm:$0xff]
        %v3611 = vld [vmem:[#allocation13 + $0x78] sm:$0xff]
        %v3612 = vld [vmem:[%s9] sm:$0x1]
        %v3614 = vperm.slane %v3612, 0
        %3616 = vmatpush.msra.mxu0 %v3611
        %3617 = vmatpush.msra.mxu0 %v3610
        %3618 = vmatpush.msra.mxu0 %v3609
        %3619 = vmatpush.msra.mxu0 %v3608
        %3620 = vmatpush.msra.mxu0 %v3607
        %3621 = vmatpush.msra.mxu0 %v3606
        %3622 = vmatpush.msra.mxu0 %v3605
        %3623 = vmatpush.msra.mxu0 %v3604
        %3624 = vmatpush.msra.mxu0 %v3603
        %3625 = vmatpush.msra.mxu0 %v3602
        %3626 = vmatpush.msra.mxu0 %v3601
        %3627 = vmatpush.msra.mxu0 %v3600
        %3628 = vmatpush.msra.mxu0 %v3599
        %3629 = vmatpush.msra.mxu0 %v3598
        %3630 = vmatpush.msra.mxu0 %v3597
        %3631 = vmatpush.msra.mxu0 %v3596
        %3632 = vmatmul.f32.gmra.mxu0 %v3549
        %v3633 = vpop.f32.mrf.mxu0
        %v3634 = vadd.f32 %v3614, %v3633
        %3635 = vmatmul.f32.gmra.mxu0 %v3552
        %v3636 = vpop.f32.mrf.mxu0
        %v3637 = vadd.f32 %v3614, %v3636
        %3638 = vmatmul.f32.gmra.mxu0 %v3555
        %v3639 = vpop.f32.mrf.mxu0
        %v3640 = vadd.f32 %v3614, %v3639
        %3641 = vmatmul.f32.gmra.mxu0 %v3558
        %v3642 = vpop.f32.mrf.mxu0
        %v3643 = vadd.f32 %v3614, %v3642
        %3644 = vmatmul.f32.gmra.mxu0 %v3561
        %v3645 = vpop.f32.mrf.mxu0
        %v3646 = vadd.f32 %v3614, %v3645
        %3647 = vmatmul.f32.gmra.mxu0 %v3564
        %v3648 = vpop.f32.mrf.mxu0
        %v3649 = vadd.f32 %v3614, %v3648
        %3650 = vmatmul.f32.gmra.mxu0 %v3567
        %v3651 = vpop.f32.mrf.mxu0
        %v3652 = vadd.f32 %v3614, %v3651
        %3653 = vmatmul.f32.gmra.mxu0 %v3570
        %v3654 = vpop.f32.mrf.mxu0
        %v3655 = vadd.f32 %v3614, %v3654
        %3656 = vmatmul.f32.gmra.mxu0 %v3573
        %v3657 = vpop.f32.mrf.mxu0
        %v3658 = vadd.f32 %v3614, %v3657
        %3659 = vmatmul.f32.gmra.mxu0 %v3576
        %v3660 = vpop.f32.mrf.mxu0
        %v3661 = vadd.f32 %v3614, %v3660
        %3662 = vmatmul.f32.gmra.mxu0 %v3579
        %v3663 = vpop.f32.mrf.mxu0
        %v3664 = vadd.f32 %v3614, %v3663
        %3665 = vmatmul.f32.gmra.mxu0 %v3582
        %v3666 = vpop.f32.mrf.mxu0
        %v3667 = vadd.f32 %v3614, %v3666
        %3668 = vmatmul.f32.gmra.mxu0 %v3585
        %v3669 = vpop.f32.mrf.mxu0
        %v3670 = vadd.f32 %v3614, %v3669
        %3671 = vmatmul.f32.gmra.mxu0 %v3588
        %v3672 = vpop.f32.mrf.mxu0
        %v3673 = vadd.f32 %v3614, %v3672
        %3674 = vmatmul.f32.gmra.mxu0 %v3591
        %v3675 = vpop.f32.mrf.mxu0
        %v3676 = vadd.f32 %v3614, %v3675
        %3677 = vmatmul.f32.gmra.mxu0 %v3594
        %v3678 = vpop.f32.mrf.mxu0
        %v3679 = vadd.f32 %v3614, %v3678
        %3680 = vdwg.mxu0
        %vm3681 = vcmp.ge.f32.partialorder %v3634, 0.0
        %vm3682 = vcmp.ge.f32.partialorder %v3637, 0.0
        %vm3683 = vcmp.ge.f32.partialorder %v3640, 0.0
        %vm3684 = vcmp.ge.f32.partialorder %v3643, 0.0
        %vm3685 = vcmp.ge.f32.partialorder %v3646, 0.0
        %vm3686 = vcmp.ge.f32.partialorder %v3649, 0.0
        %vm3687 = vcmp.ge.f32.partialorder %v3652, 0.0
        %vm3688 = vcmp.ge.f32.partialorder %v3655, 0.0
        %vm3689 = vcmp.ge.f32.partialorder %v3658, 0.0
        %vm3690 = vcmp.ge.f32.partialorder %v3661, 0.0
        %vm3691 = vcmp.ge.f32.partialorder %v3664, 0.0
        %vm3692 = vcmp.ge.f32.partialorder %v3667, 0.0
        %vm3693 = vcmp.ge.f32.partialorder %v3670, 0.0
        %vm3694 = vcmp.ge.f32.partialorder %v3673, 0.0
        %vm3695 = vcmp.ge.f32.partialorder %v3676, 0.0
        %vm3696 = vcmp.ge.f32.partialorder %v3679, 0.0
        %v3697 = vmul.f32 %v3634, 0.01
        %v3698 = vmul.f32 %v3637, 0.01
        %v3699 = vmul.f32 %v3640, 0.01
        %v3700 = vmul.f32 %v3643, 0.01
        %v3701 = vmul.f32 %v3646, 0.01
        %v3702 = vmul.f32 %v3649, 0.01
        %v3703 = vmul.f32 %v3652, 0.01
        %v3704 = vmul.f32 %v3655, 0.01
        %v3705 = vmul.f32 %v3658, 0.01
        %v3706 = vmul.f32 %v3661, 0.01
        %v3707 = vmul.f32 %v3664, 0.01
        %v3708 = vmul.f32 %v3667, 0.01
        %v3709 = vmul.f32 %v3670, 0.01
        %v3710 = vmul.f32 %v3673, 0.01
        %v3711 = vmul.f32 %v3676, 0.01
        %v3712 = vmul.f32 %v3679, 0.01
        %v3713 = vsel %vm3681, %v3634, %v3697
        %v3714 = vsel %vm3682, %v3637, %v3698
        %v3715 = vsel %vm3683, %v3640, %v3699
        %v3716 = vsel %vm3684, %v3643, %v3700
        %v3717 = vsel %vm3685, %v3646, %v3701
        %v3718 = vsel %vm3686, %v3649, %v3702
        %v3719 = vsel %vm3687, %v3652, %v3703
        %v3720 = vsel %vm3688, %v3655, %v3704
        %v3721 = vsel %vm3689, %v3658, %v3705
        %v3722 = vsel %vm3690, %v3661, %v3706
        %v3723 = vsel %vm3691, %v3664, %v3707
        %v3724 = vsel %vm3692, %v3667, %v3708
        %v3725 = vsel %vm3693, %v3670, %v3709
        %v3726 = vsel %vm3694, %v3673, %v3710
        %v3727 = vsel %vm3695, %v3676, %v3711
        %v3728 = vsel %vm3696, %v3679, %v3712
        %v3729 = vadd.f32 %v520, %v3713
        %v3730 = vadd.f32 %v521, %v3714
        %v3731 = vadd.f32 %v522, %v3715
        %v3732 = vadd.f32 %v523, %v3716
        %v3733 = vadd.f32 %v524, %v3717
        %v3734 = vadd.f32 %v525, %v3718
        %v3735 = vadd.f32 %v526, %v3719
        %v3736 = vadd.f32 %v527, %v3720
        %v3737 = vadd.f32 %v528, %v3721
        %v3738 = vadd.f32 %v529, %v3722
        %v3739 = vadd.f32 %v530, %v3723
        %v3740 = vadd.f32 %v531, %v3724
        %v3741 = vadd.f32 %v532, %v3725
        %v3742 = vadd.f32 %v533, %v3726
        %v3743 = vadd.f32 %v534, %v3727
        %v3744 = vadd.f32 %v535, %v3728
        %3745 = vadd.xlane.f32.xlu0 %v3729
        %v3746 = vpop.xlane.xlu0 %3745
        %3747 = vadd.xlane.f32.xlu0 %v3730
        %v3748 = vpop.xlane.xlu0 %3747
        %3749 = vadd.xlane.f32.xlu0 %v3731
        %v3750 = vpop.xlane.xlu0 %3749
        %3751 = vadd.xlane.f32.xlu0 %v3732
        %v3752 = vpop.xlane.xlu0 %3751
        %3753 = vadd.xlane.f32.xlu0 %v3733
        %v3754 = vpop.xlane.xlu0 %3753
        %3755 = vadd.xlane.f32.xlu0 %v3734
        %v3756 = vpop.xlane.xlu0 %3755
        %3757 = vadd.xlane.f32.xlu0 %v3735
        %v3758 = vpop.xlane.xlu0 %3757
        %3759 = vadd.xlane.f32.xlu0 %v3736
        %v3760 = vpop.xlane.xlu0 %3759
        %3761 = vadd.xlane.f32.xlu0 %v3737
        %v3762 = vpop.xlane.xlu0 %3761
        %3763 = vadd.xlane.f32.xlu0 %v3738
        %v3764 = vpop.xlane.xlu0 %3763
        %3765 = vadd.xlane.f32.xlu0 %v3739
        %v3766 = vpop.xlane.xlu0 %3765
        %3767 = vadd.xlane.f32.xlu0 %v3740
        %v3768 = vpop.xlane.xlu0 %3767
        %3769 = vadd.xlane.f32.xlu0 %v3741
        %v3770 = vpop.xlane.xlu0 %3769
        %3771 = vadd.xlane.f32.xlu0 %v3742
        %v3772 = vpop.xlane.xlu0 %3771
        %3773 = vadd.xlane.f32.xlu0 %v3743
        %v3774 = vpop.xlane.xlu0 %3773
        %3775 = vadd.xlane.f32.xlu0 %v3744
        %v3776 = vpop.xlane.xlu0 %3775
        %v3777 = vrcp.pop 128.0
        %v3778 = vmul.f32 128.0, %v3777
        %v3779 = vsub.f32 1.0, %v3778
        %v3780 = vmul.f32 %v3777, %v3779
        %v3781 = vadd.f32 %v3777, %v3780
        %vm3782 = vweird.f32 %v3777
        %v3783 = vsel %vm3782, %v3777, %v3781
        %v3784 = vmul.f32 %v3746, %v3783
        %v3785 = vmul.f32 %v3748, %v3783
        %v3786 = vmul.f32 %v3750, %v3783
        %v3787 = vmul.f32 %v3752, %v3783
        %v3788 = vmul.f32 %v3754, %v3783
        %v3789 = vmul.f32 %v3756, %v3783
        %v3790 = vmul.f32 %v3758, %v3783
        %v3791 = vmul.f32 %v3760, %v3783
        %v3792 = vmul.f32 %v3762, %v3783
        %v3793 = vmul.f32 %v3764, %v3783
        %v3794 = vmul.f32 %v3766, %v3783
        %v3795 = vmul.f32 %v3768, %v3783
        %v3796 = vmul.f32 %v3770, %v3783
        %v3797 = vmul.f32 %v3772, %v3783
        %v3798 = vmul.f32 %v3774, %v3783
        %v3799 = vmul.f32 %v3776, %v3783
        %v3800 = vsub.f32 %v3729, %v3784
        %v3801 = vsub.f32 %v3730, %v3785
        %v3802 = vsub.f32 %v3731, %v3786
        %v3803 = vsub.f32 %v3732, %v3787
        %v3804 = vsub.f32 %v3733, %v3788
        %v3805 = vsub.f32 %v3734, %v3789
        %v3806 = vsub.f32 %v3735, %v3790
        %v3807 = vsub.f32 %v3736, %v3791
        %v3808 = vsub.f32 %v3737, %v3792
        %v3809 = vsub.f32 %v3738, %v3793
        %v3810 = vsub.f32 %v3739, %v3794
        %v3811 = vsub.f32 %v3740, %v3795
        %v3812 = vsub.f32 %v3741, %v3796
        %v3813 = vsub.f32 %v3742, %v3797
        %v3814 = vsub.f32 %v3743, %v3798
        %v3815 = vsub.f32 %v3744, %v3799
        %v3816 = vmul.f32 %v3800, %v3800
        %v3817 = vmul.f32 %v3801, %v3801
        %v3818 = vmul.f32 %v3802, %v3802
        %v3819 = vmul.f32 %v3803, %v3803
        %v3820 = vmul.f32 %v3804, %v3804
        %v3821 = vmul.f32 %v3805, %v3805
        %v3822 = vmul.f32 %v3806, %v3806
        %v3823 = vmul.f32 %v3807, %v3807
        %v3824 = vmul.f32 %v3808, %v3808
        %v3825 = vmul.f32 %v3809, %v3809
        %v3826 = vmul.f32 %v3810, %v3810
        %v3827 = vmul.f32 %v3811, %v3811
        %v3828 = vmul.f32 %v3812, %v3812
        %v3829 = vmul.f32 %v3813, %v3813
        %v3830 = vmul.f32 %v3814, %v3814
        %v3831 = vmul.f32 %v3815, %v3815
        %3832 = vadd.xlane.f32.xlu0 %v3816
        %v3833 = vpop.xlane.xlu0 %3832
        %3834 = vadd.xlane.f32.xlu0 %v3817
        %v3835 = vpop.xlane.xlu0 %3834
        %3836 = vadd.xlane.f32.xlu0 %v3818
        %v3837 = vpop.xlane.xlu0 %3836
        %3838 = vadd.xlane.f32.xlu0 %v3819
        %v3839 = vpop.xlane.xlu0 %3838
        %3840 = vadd.xlane.f32.xlu0 %v3820
        %v3841 = vpop.xlane.xlu0 %3840
        %3842 = vadd.xlane.f32.xlu0 %v3821
        %v3843 = vpop.xlane.xlu0 %3842
        %3844 = vadd.xlane.f32.xlu0 %v3822
        %v3845 = vpop.xlane.xlu0 %3844
        %3846 = vadd.xlane.f32.xlu0 %v3823
        %v3847 = vpop.xlane.xlu0 %3846
        %3848 = vadd.xlane.f32.xlu0 %v3824
        %v3849 = vpop.xlane.xlu0 %3848
        %3850 = vadd.xlane.f32.xlu0 %v3825
        %v3851 = vpop.xlane.xlu0 %3850
        %3852 = vadd.xlane.f32.xlu0 %v3826
        %v3853 = vpop.xlane.xlu0 %3852
        %3854 = vadd.xlane.f32.xlu0 %v3827
        %v3855 = vpop.xlane.xlu0 %3854
        %3856 = vadd.xlane.f32.xlu0 %v3828
        %v3857 = vpop.xlane.xlu0 %3856
        %3858 = vadd.xlane.f32.xlu0 %v3829
        %v3859 = vpop.xlane.xlu0 %3858
        %3860 = vadd.xlane.f32.xlu0 %v3830
        %v3861 = vpop.xlane.xlu0 %3860
        %3862 = vadd.xlane.f32.xlu0 %v3831
        %v3863 = vpop.xlane.xlu0 %3862
        %v3864 = vmul.f32 %v3833, %v3783
        %v3865 = vmul.f32 %v3835, %v3783
        %v3866 = vmul.f32 %v3837, %v3783
        %v3867 = vmul.f32 %v3839, %v3783
        %v3868 = vmul.f32 %v3841, %v3783
        %v3869 = vmul.f32 %v3843, %v3783
        %v3870 = vmul.f32 %v3845, %v3783
        %v3871 = vmul.f32 %v3847, %v3783
        %v3872 = vmul.f32 %v3849, %v3783
        %v3873 = vmul.f32 %v3851, %v3783
        %v3874 = vmul.f32 %v3853, %v3783
        %v3875 = vmul.f32 %v3855, %v3783
        %v3876 = vmul.f32 %v3857, %v3783
        %v3877 = vmul.f32 %v3859, %v3783
        %v3878 = vmul.f32 %v3861, %v3783
        %v3879 = vmul.f32 %v3863, %v3783
        %v3880 = vadd.f32 %v3864, 1e-05
        %v3881 = vadd.f32 %v3865, 1e-05
        %v3882 = vadd.f32 %v3866, 1e-05
        %v3883 = vadd.f32 %v3867, 1e-05
        %v3884 = vadd.f32 %v3868, 1e-05
        %v3885 = vadd.f32 %v3869, 1e-05
        %v3886 = vadd.f32 %v3870, 1e-05
        %v3887 = vadd.f32 %v3871, 1e-05
        %v3888 = vadd.f32 %v3872, 1e-05
        %v3889 = vadd.f32 %v3873, 1e-05
        %v3890 = vadd.f32 %v3874, 1e-05
        %v3891 = vadd.f32 %v3875, 1e-05
        %v3892 = vadd.f32 %v3876, 1e-05
        %v3893 = vadd.f32 %v3877, 1e-05
        %v3894 = vadd.f32 %v3878, 1e-05
        %v3895 = vadd.f32 %v3879, 1e-05
        %v3896 = vrsqrt.pop %v3880
        %v3897 = vmul.f32 %v3896, %v3880
        %v3898 = vmul.f32 %v3897, %v3896
        %v3899 = vmul.f32 0.5, %v3898
        %v3900 = vsub.f32 1.5, %v3899
        %v3901 = vmul.f32 %v3896, %v3900
        %vm3902 = vweird.f32 %v3880
        %vm3903 = vweird.f32 %v3896
        %vm3904 = vmor %vm3902, %vm3903
        %v3905 = vsel %vm3904, %v3896, %v3901
        %v3906 = vrsqrt.pop %v3881
        %v3907 = vmul.f32 %v3906, %v3881
        %v3908 = vmul.f32 %v3907, %v3906
        %v3909 = vmul.f32 0.5, %v3908
        %v3910 = vsub.f32 1.5, %v3909
        %v3911 = vmul.f32 %v3906, %v3910
        %vm3912 = vweird.f32 %v3881
        %vm3913 = vweird.f32 %v3906
        %vm3914 = vmor %vm3912, %vm3913
        %v3915 = vsel %vm3914, %v3906, %v3911
        %v3916 = vrsqrt.pop %v3882
        %v3917 = vmul.f32 %v3916, %v3882
        %v3918 = vmul.f32 %v3917, %v3916
        %v3919 = vmul.f32 0.5, %v3918
        %v3920 = vsub.f32 1.5, %v3919
        %v3921 = vmul.f32 %v3916, %v3920
        %vm3922 = vweird.f32 %v3882
        %vm3923 = vweird.f32 %v3916
        %vm3924 = vmor %vm3922, %vm3923
        %v3925 = vsel %vm3924, %v3916, %v3921
        %v3926 = vrsqrt.pop %v3883
        %v3927 = vmul.f32 %v3926, %v3883
        %v3928 = vmul.f32 %v3927, %v3926
        %v3929 = vmul.f32 0.5, %v3928
        %v3930 = vsub.f32 1.5, %v3929
        %v3931 = vmul.f32 %v3926, %v3930
        %vm3932 = vweird.f32 %v3883
        %vm3933 = vweird.f32 %v3926
        %vm3934 = vmor %vm3932, %vm3933
        %v3935 = vsel %vm3934, %v3926, %v3931
        %v3936 = vrsqrt.pop %v3884
        %v3937 = vmul.f32 %v3936, %v3884
        %v3938 = vmul.f32 %v3937, %v3936
        %v3939 = vmul.f32 0.5, %v3938
        %v3940 = vsub.f32 1.5, %v3939
        %v3941 = vmul.f32 %v3936, %v3940
        %vm3942 = vweird.f32 %v3884
        %vm3943 = vweird.f32 %v3936
        %vm3944 = vmor %vm3942, %vm3943
        %v3945 = vsel %vm3944, %v3936, %v3941
        %v3946 = vrsqrt.pop %v3885
        %v3947 = vmul.f32 %v3946, %v3885
        %v3948 = vmul.f32 %v3947, %v3946
        %v3949 = vmul.f32 0.5, %v3948
        %v3950 = vsub.f32 1.5, %v3949
        %v3951 = vmul.f32 %v3946, %v3950
        %vm3952 = vweird.f32 %v3885
        %vm3953 = vweird.f32 %v3946
        %vm3954 = vmor %vm3952, %vm3953
        %v3955 = vsel %vm3954, %v3946, %v3951
        %v3956 = vrsqrt.pop %v3886
        %v3957 = vmul.f32 %v3956, %v3886
        %v3958 = vmul.f32 %v3957, %v3956
        %v3959 = vmul.f32 0.5, %v3958
        %v3960 = vsub.f32 1.5, %v3959
        %v3961 = vmul.f32 %v3956, %v3960
        %vm3962 = vweird.f32 %v3886
        %vm3963 = vweird.f32 %v3956
        %vm3964 = vmor %vm3962, %vm3963
        %v3965 = vsel %vm3964, %v3956, %v3961
        %v3966 = vrsqrt.pop %v3887
        %v3967 = vmul.f32 %v3966, %v3887
        %v3968 = vmul.f32 %v3967, %v3966
        %v3969 = vmul.f32 0.5, %v3968
        %v3970 = vsub.f32 1.5, %v3969
        %v3971 = vmul.f32 %v3966, %v3970
        %vm3972 = vweird.f32 %v3887
        %vm3973 = vweird.f32 %v3966
        %vm3974 = vmor %vm3972, %vm3973
        %v3975 = vsel %vm3974, %v3966, %v3971
        %v3976 = vrsqrt.pop %v3888
        %v3977 = vmul.f32 %v3976, %v3888
        %v3978 = vmul.f32 %v3977, %v3976
        %v3979 = vmul.f32 0.5, %v3978
        %v3980 = vsub.f32 1.5, %v3979
        %v3981 = vmul.f32 %v3976, %v3980
        %vm3982 = vweird.f32 %v3888
        %vm3983 = vweird.f32 %v3976
        %vm3984 = vmor %vm3982, %vm3983
        %v3985 = vsel %vm3984, %v3976, %v3981
        %v3986 = vrsqrt.pop %v3889
        %v3987 = vmul.f32 %v3986, %v3889
        %v3988 = vmul.f32 %v3987, %v3986
        %v3989 = vmul.f32 0.5, %v3988
        %v3990 = vsub.f32 1.5, %v3989
        %v3991 = vmul.f32 %v3986, %v3990
        %vm3992 = vweird.f32 %v3889
        %vm3993 = vweird.f32 %v3986
        %vm3994 = vmor %vm3992, %vm3993
        %v3995 = vsel %vm3994, %v3986, %v3991
        %v3996 = vrsqrt.pop %v3890
        %v3997 = vmul.f32 %v3996, %v3890
        %v3998 = vmul.f32 %v3997, %v3996
        %v3999 = vmul.f32 0.5, %v3998
        %v4000 = vsub.f32 1.5, %v3999
        %v4001 = vmul.f32 %v3996, %v4000
        %vm4002 = vweird.f32 %v3890
        %vm4003 = vweird.f32 %v3996
        %vm4004 = vmor %vm4002, %vm4003
        %v4005 = vsel %vm4004, %v3996, %v4001
        %v4006 = vrsqrt.pop %v3891
        %v4007 = vmul.f32 %v4006, %v3891
        %v4008 = vmul.f32 %v4007, %v4006
        %v4009 = vmul.f32 0.5, %v4008
        %v4010 = vsub.f32 1.5, %v4009
        %v4011 = vmul.f32 %v4006, %v4010
        %vm4012 = vweird.f32 %v3891
        %vm4013 = vweird.f32 %v4006
        %vm4014 = vmor %vm4012, %vm4013
        %v4015 = vsel %vm4014, %v4006, %v4011
        %v4016 = vrsqrt.pop %v3892
        %v4017 = vmul.f32 %v4016, %v3892
        %v4018 = vmul.f32 %v4017, %v4016
        %v4019 = vmul.f32 0.5, %v4018
        %v4020 = vsub.f32 1.5, %v4019
        %v4021 = vmul.f32 %v4016, %v4020
        %vm4022 = vweird.f32 %v3892
        %vm4023 = vweird.f32 %v4016
        %vm4024 = vmor %vm4022, %vm4023
        %v4025 = vsel %vm4024, %v4016, %v4021
        %v4026 = vrsqrt.pop %v3893
        %v4027 = vmul.f32 %v4026, %v3893
        %v4028 = vmul.f32 %v4027, %v4026
        %v4029 = vmul.f32 0.5, %v4028
        %v4030 = vsub.f32 1.5, %v4029
        %v4031 = vmul.f32 %v4026, %v4030
        %vm4032 = vweird.f32 %v3893
        %vm4033 = vweird.f32 %v4026
        %vm4034 = vmor %vm4032, %vm4033
        %v4035 = vsel %vm4034, %v4026, %v4031
        %v4036 = vrsqrt.pop %v3894
        %v4037 = vmul.f32 %v4036, %v3894
        %v4038 = vmul.f32 %v4037, %v4036
        %v4039 = vmul.f32 0.5, %v4038
        %v4040 = vsub.f32 1.5, %v4039
        %v4041 = vmul.f32 %v4036, %v4040
        %vm4042 = vweird.f32 %v3894
        %vm4043 = vweird.f32 %v4036
        %vm4044 = vmor %vm4042, %vm4043
        %v4045 = vsel %vm4044, %v4036, %v4041
        %v4046 = vrsqrt.pop %v3895
        %v4047 = vmul.f32 %v4046, %v3895
        %v4048 = vmul.f32 %v4047, %v4046
        %v4049 = vmul.f32 0.5, %v4048
        %v4050 = vsub.f32 1.5, %v4049
        %v4051 = vmul.f32 %v4046, %v4050
        %vm4052 = vweird.f32 %v3895
        %vm4053 = vweird.f32 %v4046
        %vm4054 = vmor %vm4052, %vm4053
        %v4055 = vsel %vm4054, %v4046, %v4051
        %v4056 = vmul.f32 %v3800, %v3905
        %v4057 = vmul.f32 %v3801, %v3915
        %v4058 = vmul.f32 %v3802, %v3925
        %v4059 = vmul.f32 %v3803, %v3935
        %v4060 = vmul.f32 %v3804, %v3945
        %v4061 = vmul.f32 %v3805, %v3955
        %v4062 = vmul.f32 %v3806, %v3965
        %v4063 = vmul.f32 %v3807, %v3975
        %v4064 = vmul.f32 %v3808, %v3985
        %v4065 = vmul.f32 %v3809, %v3995
        %v4066 = vmul.f32 %v3810, %v4005
        %v4067 = vmul.f32 %v3811, %v4015
        %v4068 = vmul.f32 %v3812, %v4025
        %v4069 = vmul.f32 %v3813, %v4035
        %v4070 = vmul.f32 %v3814, %v4045
        %v4071 = vmul.f32 %v3815, %v4055
        %v4072 = vld [vmem:[%s10] sm:$0x1]
        %v4074 = vperm.slane %v4072, 0
        %v4076 = vmul.f32 %v4056, %v4074
        %v4077 = vmul.f32 %v4057, %v4074
        %v4078 = vmul.f32 %v4058, %v4074
        %v4079 = vmul.f32 %v4059, %v4074
        %v4080 = vmul.f32 %v4060, %v4074
        %v4081 = vmul.f32 %v4061, %v4074
        %v4082 = vmul.f32 %v4062, %v4074
        %v4083 = vmul.f32 %v4063, %v4074
        %v4084 = vmul.f32 %v4064, %v4074
        %v4085 = vmul.f32 %v4065, %v4074
        %v4086 = vmul.f32 %v4066, %v4074
        %v4087 = vmul.f32 %v4067, %v4074
        %v4088 = vmul.f32 %v4068, %v4074
        %v4089 = vmul.f32 %v4069, %v4074
        %v4090 = vmul.f32 %v4070, %v4074
        %v4091 = vmul.f32 %v4071, %v4074
        %v4092 = vld [vmem:[%s11] sm:$0x1]
        %v4094 = vperm.slane %v4092, 0
        %v4096 = vadd.f32 %v4076, %v4094
        %v4097 = vadd.f32 %v4077, %v4094
        %v4098 = vadd.f32 %v4078, %v4094
        %v4099 = vadd.f32 %v4079, %v4094
        %v4100 = vadd.f32 %v4080, %v4094
        %v4101 = vadd.f32 %v4081, %v4094
        %v4102 = vadd.f32 %v4082, %v4094
        %v4103 = vadd.f32 %v4083, %v4094
        %v4104 = vadd.f32 %v4084, %v4094
        %v4105 = vadd.f32 %v4085, %v4094
        %v4106 = vadd.f32 %v4086, %v4094
        %v4107 = vadd.f32 %v4087, %v4094
        %v4108 = vadd.f32 %v4088, %v4094
        %v4109 = vadd.f32 %v4089, %v4094
        %v4110 = vadd.f32 %v4090, %v4094
        %v4111 = vadd.f32 %v4091, %v4094
        %4112 = vst [vmem:[%s517] sm:$0xff] %v4096
        %4113 = vst [vmem:[%s517 + $0x8] sm:$0xff] %v4097
        %4114 = vst [vmem:[%s517 + $0x10] sm:$0xff] %v4098
        %4115 = vst [vmem:[%s517 + $0x18] sm:$0xff] %v4099
        %4116 = vst [vmem:[%s517 + $0x20] sm:$0xff] %v4100
        %4117 = vst [vmem:[%s517 + $0x28] sm:$0xff] %v4101
        %4118 = vst [vmem:[%s517 + $0x30] sm:$0xff] %v4102
        %4119 = vst [vmem:[%s517 + $0x38] sm:$0xff] %v4103
        %4120 = vst [vmem:[%s517 + $0x40] sm:$0xff] %v4104
        %4121 = vst [vmem:[%s517 + $0x48] sm:$0xff] %v4105
        %4122 = vst [vmem:[%s517 + $0x50] sm:$0xff] %v4106
        %4123 = vst [vmem:[%s517 + $0x58] sm:$0xff] %v4107
        %4124 = vst [vmem:[%s517 + $0x60] sm:$0xff] %v4108
        %4125 = vst [vmem:[%s517 + $0x68] sm:$0xff] %v4109
        %4126 = vst [vmem:[%s517 + $0x70] sm:$0xff] %v4110
        %4127 = vst [vmem:[%s517 + $0x78] sm:$0xff] %v4111
        %s4128 = sand.u32 %s297, 1
        %s4129 = scalar_lea.sflag [#allocation6], %s4128
        %s4130 = sand.u32 %s297, 1
        %s4131 = smul.addr %s4130, 128
        %s4132 = scalar_lea.vmem [#allocation15], %s4131
        // Predicated region
        $region93: #{tpu_custom_call.1} parent=67 // pred_check
          %p4133 = pneg %p307
        $region94: #{tpu_custom_call.1} parent=67 // pred_check_branch
          %4135 = sbr.rel (%p4133) target = $region96
        $region95: #{tpu_custom_call.1} parent=67 // pred_region
          %s4136 = smul.u32 2, %s32
          %4138 = vsyncadd %s4129, 0
          %s4139 = smul.addr %s4136, 8
          %s4140 = smul.addr %s4139, 8
          %s4141 = scalar_lea.hbm %s12, %s4140
          %s4142 = sshll.u32 %s4132, 4
          %s4143 = int_to_ptr.vmem [resolvable:$true] %s4142
          %s4144 = sshll.u32 %s4141, 4
          %s4145 = int_to_ptr.hbm [resolvable:$true] %s4144
          %4150 = dma.vmem_to_hbm [thread:$0]  %s4143, 2048, %s4145, %s4129, 128, 128, 8
        $region96: #{tpu_custom_call.1} parent=67 // pred_fallthru
          _
      $region68: #{tpu_custom_call.1} parent=5 // pred_fallthru
        _
      %p4151 = scmp.le.s32.totalorder 2, %s27
      // Predicated region
      $region97: #{tpu_custom_call.1} parent=5 // pred_check
        %p4152 = pneg %p4151
      $region98: #{tpu_custom_call.1} parent=5 // pred_check_branch
        %4154 = sbr.rel (%p4152) target = $region100
      $region99: #{tpu_custom_call.1} parent=5 // pred_region
        %s4155 = ssub.s32 %s27, 2
        // Predicated region
        $region101: #{tpu_custom_call.1} parent=99 // pred_check
          %p4156 = pneg %p313
        $region102: #{tpu_custom_call.1} parent=99 // pred_check_branch
          %4158 = sbr.rel (%p4156) target = $region104
        $region103: #{tpu_custom_call.1} parent=99 // pred_region
          %s4159 = sand.u32 %s298, 1
          %s4160 = scalar_lea.sflag [#allocation6], %s4159
          %s4161 = sand.u32 %s298, 1
          %s4162 = smul.addr %s4161, 128
          %s4163 = scalar_lea.vmem [#allocation15], %s4162
          %4165 = dma.done %s4160, 2048
        $region104: #{tpu_custom_call.1} parent=99 // pred_fallthru
          _
      $region100: #{tpu_custom_call.1} parent=5 // pred_fallthru
        _
    $region6: #{tpu_custom_call.1} parent=1 // loop_footer
      %s31 = sadd.s32 1, %s27
    $region7: #{tpu_custom_call.1} parent=1 // loop_footer_branch
      %26 = sbr.rel target = $region3
    $region8: #{tpu_custom_call.1} parent=1 // loop_exit
      _
    %4166 = vsyncpa [#allocation5], 1
    %s4167 = scalar_lea.sflag [#allocation5], 1
    %4168 = vsyncpa %s4167, 1
    %4169 = vsyncpa [#allocation8], 1
    %4170 = vsyncpa [#allocation11], 1
    %4171 = vsyncpa [#allocation14], 1
    %4172 = vsyncpa [#allocation6], 1
    %s4173 = scalar_lea.sflag [#allocation6], 1
    %4174 = vsyncpa %s4173, 1

</llo_original>
